<compile_context>
chip_gen: v6e
topology: v6e:2x2x1
jax: 0.10.0
libtpu: 0.0.40
codegen_flags: <defaults>
</compile_context>

<pallas_src>
import math

import jax
import jax.numpy as jnp
from jax.experimental import pallas as pl
from jax.experimental.pallas import tpu as pltpu

LEAKY_SLOPE = 0.01   # PyTorch nn.LeakyReLU() default negative_slope
_PAD = 8             # left/right column margin of the padded scratch
                     # (8 => interior store is sublane-aligned; >=1 needed)


def _fused_double_conv_kernel(x_ref, w1_ref, b1_ref, w2_ref, b2_ref, o_ref,
                              xp1_ref, xp2_ref, acc_ref):
    """Fused [conv3x3(stride1, pad1) + bias + LeakyReLU] x 2 for one NHWC image.

    x_ref  : (1, H, W, Cin)           input image block (VMEM)
    w1_ref : (9, Cin, Cout)           layer-1 weights, tap k = 3*dy + dx
    b1_ref : (1, Cout)                layer-1 bias
    w2_ref : (9, Cout, Cout)          layer-2 weights
    b2_ref : (1, Cout)                layer-2 bias
    o_ref  : (1, H, W, Cout)          output block
    xp1_ref: (H+2, W+2*_PAD, Cin)     zero-padded layer-1 input  (VMEM scratch)
    xp2_ref: (H+2, W+2*_PAD, Cout)    zero-padded intermediate   (VMEM scratch)
    acc_ref: (H*W, Cout) f32          matmul accumulator         (VMEM scratch)
    """
    _, H, W, Cin = x_ref.shape
    Cout = w1_ref.shape[-1]

    def conv3x3_lrelu(xp_ref, w_ref, b_ref, cin):
        # 3x3 conv as 9 shifted MXU matmuls, f32 accumulation in VMEM scratch,
        # then bias + LeakyReLU (VPU).
        acc_ref[...] = jnp.zeros_like(acc_ref)
        xp = xp_ref[...]                                  # (H+2, W+2*_PAD, cin)
        for k in range(9):
            dy, dx = k // 3, k % 3
            patch = xp[dy:dy + H, _PAD - 1 + dx:_PAD - 1 + dx + W, :]
            acc_ref[...] += jnp.dot(patch.reshape(H * W, cin), w_ref[k],
                                    preferred_element_type=jnp.float32)
        y = acc_ref[...] + b_ref[...].astype(jnp.float32)
        return jnp.where(y > 0, y, LEAKY_SLOPE * y)       # (H*W, Cout) f32

    # ---- layer 1: zero-pad the input inside the kernel ---------------------
    xp1_ref[...] = jnp.zeros_like(xp1_ref)
    xp1_ref[1:H + 1, _PAD:_PAD + W, :] = x_ref[0].astype(jnp.float32)
    y1 = conv3x3_lrelu(xp1_ref, w1_ref, b1_ref, Cin)

    # ---- layer 2: intermediate activation stays in VMEM --------------------
    xp2_ref[...] = jnp.zeros_like(xp2_ref)
    xp2_ref[1:H + 1, _PAD:_PAD + W, :] = y1.reshape(H, W, Cout)
    y2 = conv3x3_lrelu(xp2_ref, w2_ref, b2_ref, Cout)

    o_ref[0] = y2.reshape(H, W, Cout).astype(o_ref.dtype)


def double_conv3x3_lrelu_nhwc(x_nhwc, w1_hwio, b1, w2_hwio, b2):
    """Fused (Conv2d 3x3 s1 p1 + LeakyReLU) x 2 — NHWC in / NHWC out."""
    N, H, W, Cin = x_nhwc.shape
    Cout = w1_hwio.shape[-1]
    assert W % 8 == 0, "W must be a multiple of 8 (sublane-aligned interior)"

    # Host-side glue: flatten the 3x3 taps (k = 3*dy + dx) and 2D-ify biases.
    w1_9 = w1_hwio.reshape(9, Cin, Cout)
    w2_9 = w2_hwio.reshape(9, Cout, Cout)
    b1_2 = b1.reshape(1, Cout)
    b2_2 = b2.reshape(1, Cout)

    Wp = W + 2 * _PAD
    grid_spec = pltpu.PrefetchScalarGridSpec(
        num_scalar_prefetch=0,
        grid=(N,),                                    # one image per grid step
        in_specs=[
            pl.BlockSpec((1, H, W, Cin), lambda n: (n, 0, 0, 0)),
            # weights / biases: constant index_map -> resident across steps
            pl.BlockSpec((9, Cin, Cout), lambda n: (0, 0, 0)),
            pl.BlockSpec((1, Cout), lambda n: (0, 0)),
            pl.BlockSpec((9, Cout, Cout), lambda n: (0, 0, 0)),
            pl.BlockSpec((1, Cout), lambda n: (0, 0)),
        ],
        out_specs=pl.BlockSpec((1, H, W, Cout), lambda n: (n, 0, 0, 0)),
        scratch_shapes=[
            pltpu.VMEM((H + 2, Wp, Cin), jnp.float32),   # padded layer-1 input
            pltpu.VMEM((H + 2, Wp, Cout), jnp.float32),  # padded intermediate
            pltpu.VMEM((H * W, Cout), jnp.float32),      # f32 accumulator
        ],
    )
    return pl.pallas_call(
        _fused_double_conv_kernel,
        out_shape=jax.ShapeDtypeStruct((N, H, W, Cout), x_nhwc.dtype),
        grid_spec=grid_spec,
        compiler_params=pltpu.CompilerParams(
            # batch axis is independent -> shard across v7x's 2 TensorCores
            dimension_semantics=("parallel",),
            vmem_limit_bytes=32 * 1024 * 1024,
        ),
    )(x_nhwc, w1_9, b1_2, w2_9, b2_2)


class ConvPallas:
    """Pallas equivalent of the PyTorch `Conv(C_in, C_out)` module."""

    def __init__(self, C_in, C_out, key):
        k1, k2, k3, k4 = jax.random.split(key, 4)
        # PyTorch Conv2d default init: U(-b, b), b = 1/sqrt(fan_in), fan_in = Cin*3*3.
        b1 = 1.0 / math.sqrt(C_in * 9)
        b2 = 1.0 / math.sqrt(C_out * 9)
        # Weights stored in PyTorch layout (Cout, Cin, 3, 3).
        self.w1_oihw = jax.random.uniform(k1, (C_out, C_in, 3, 3), jnp.float32, -b1, b1)
        self.b1 = jax.random.uniform(k2, (C_out,), jnp.float32, -b1, b1)
        self.w2_oihw = jax.random.uniform(k3, (C_out, C_out, 3, 3), jnp.float32, -b2, b2)
        self.b2 = jax.random.uniform(k4, (C_out,), jnp.float32, -b2, b2)

    def __call__(self, x_nchw):
        # NCHW -> NHWC (channels on the 128-lane axis inside the kernel)
        x = jnp.transpose(x_nchw, (0, 2, 3, 1))
        w1 = jnp.transpose(self.w1_oihw, (2, 3, 1, 0))   # (3,3,Cin,Cout)
        w2 = jnp.transpose(self.w2_oihw, (2, 3, 1, 0))   # (3,3,Cout,Cout)
        y = double_conv3x3_lrelu_nhwc(x, w1, self.b1, w2, self.b2)
        # NHWC -> NCHW
        return jnp.transpose(y, (0, 3, 1, 2))


def _reference_forward(x_nchw, mod):
    """Pure-JAX reference (lax conv) for a correctness check."""
    def conv(x, w_oihw, b):
        y = jax.lax.conv_general_dilated(
            x, w_oihw, window_strides=(1, 1), padding=((1, 1), (1, 1)),
            dimension_numbers=("NCHW", "OIHW", "NCHW"))
        y = y + b[None, :, None, None]
        return jnp.where(y > 0, y, LEAKY_SLOPE * y)
    y = conv(x_nchw, mod.w1_oihw, mod.b1)
    y = conv(y, mod.w2_oihw, mod.b2)
    return y


if __name__ == "__main__":
    key = jax.random.PRNGKey(0)
    kx, kp = jax.random.split(key)

    N, C_in, H, W = 2, 4, 16, 16
    C_out = 8

    x = jax.random.normal(kx, (N, C_in, H, W), jnp.float32)   # NCHW, like PyTorch
    mod = ConvPallas(C_in, C_out, kp)

    out = jax.jit(mod.__call__)(x)
    out = jax.block_until_ready(out)

    assert out.shape == (N, C_out, H, W), out.shape

    ref = _reference_forward(x, mod)
    assert jnp.allclose(out, ref, atol=1e-4, rtol=1e-4), float(jnp.max(jnp.abs(out - ref)))

    print("KERNEL_OK")
</pallas_src>

<mosaic_0001>
module attributes {stable_mosaic.version = 11 : i64} {
  func.func @_fused_double_conv_kernel(%arg0: i32, %arg1: memref<1x16x16x4xf32, #tpu.memory_space<vmem>>, %arg2: memref<9x4x8xf32, #tpu.memory_space<vmem>>, %arg3: memref<1x8xf32, #tpu.memory_space<vmem>>, %arg4: memref<9x8x8xf32, #tpu.memory_space<vmem>>, %arg5: memref<1x8xf32, #tpu.memory_space<vmem>>, %arg6: memref<1x16x16x8xf32, #tpu.memory_space<vmem>>, %arg7: memref<18x32x4xf32, #tpu.memory_space<vmem>>, %arg8: memref<18x32x8xf32, #tpu.memory_space<vmem>>, %arg9: memref<256x8xf32, #tpu.memory_space<vmem>>) attributes {dimension_semantics = [#tpu.dimension_semantics<parallel>], iteration_bounds = array<i64: 2>, scalar_prefetch = 0 : i64, scratch_operands = 3 : i64, tpu.core_type = #tpu.core_type<tc>, window_params = [{transform_indices = @transform_0, window_bounds = array<i64: 1, 16, 16, 4>}, {pipeline_mode = #tpu.pipeline_mode<synchronous>, transform_indices = @transform_1, window_bounds = array<i64: 9, 4, 8>}, {pipeline_mode = #tpu.pipeline_mode<synchronous>, transform_indices = @transform_2, window_bounds = array<i64: 1, 8>}, {pipeline_mode = #tpu.pipeline_mode<synchronous>, transform_indices = @transform_3, window_bounds = array<i64: 9, 8, 8>}, {pipeline_mode = #tpu.pipeline_mode<synchronous>, transform_indices = @transform_4, window_bounds = array<i64: 1, 8>}, {transform_indices = @transform_5, window_bounds = array<i64: 1, 16, 16, 8>}]} {
    %cst = arith.constant 0.000000e+00 : f32
    %0 = vector.broadcast %cst : f32 to vector<18x32x4xf32>
    %c0 = arith.constant 0 : index
    %c0_0 = arith.constant 0 : index
    %c0_1 = arith.constant 0 : index
    %1 = vector.load %arg7[%c0, %c0_0, %c0_1] : memref<18x32x4xf32, #tpu.memory_space<vmem>>, vector<18x32x4xf32>
    tpu.vector_store %arg7[%c0, %c0_0, %c0_1], %0 {strides = array<i32>} : memref<18x32x4xf32, #tpu.memory_space<vmem>>, vector<18x32x4xf32>,
    %c0_2 = arith.constant 0 : index
    %c0_3 = arith.constant 0 : index
    %c0_4 = arith.constant 0 : index
    %c0_5 = arith.constant 0 : index
    %2 = vector.load %arg1[%c0_2, %c0_3, %c0_4, %c0_5] : memref<1x16x16x4xf32, #tpu.memory_space<vmem>>, vector<1x16x16x4xf32>
    %3 = vector.shape_cast %2 : vector<1x16x16x4xf32> to vector<16x16x4xf32>
    %c1 = arith.constant 1 : index
    %c8 = arith.constant 8 : index
    %c0_6 = arith.constant 0 : index
    %4 = vector.load %arg7[%c1, %c8, %c0_6] : memref<18x32x4xf32, #tpu.memory_space<vmem>>, vector<16x16x4xf32>
    tpu.vector_store %arg7[%c1, %c8, %c0_6], %3 {strides = array<i32>} : memref<18x32x4xf32, #tpu.memory_space<vmem>>, vector<16x16x4xf32>,
    %cst_7 = arith.constant 0.000000e+00 : f32
    %5 = vector.broadcast %cst_7 : f32 to vector<256x8xf32>
    %c0_8 = arith.constant 0 : index
    %c0_9 = arith.constant 0 : index
    %6 = vector.load %arg9[%c0_8, %c0_9] : memref<256x8xf32, #tpu.memory_space<vmem>>, vector<256x8xf32>
    tpu.vector_store %arg9[%c0_8, %c0_9], %5 {strides = array<i32>} : memref<256x8xf32, #tpu.memory_space<vmem>>, vector<256x8xf32>,
    %c0_10 = arith.constant 0 : index
    %c0_11 = arith.constant 0 : index
    %c0_12 = arith.constant 0 : index
    %7 = vector.load %arg7[%c0_10, %c0_11, %c0_12] : memref<18x32x4xf32, #tpu.memory_space<vmem>>, vector<18x32x4xf32>
    %8 = vector.extract_strided_slice %7 {offsets = [0, 7, 0], sizes = [16, 16, 4], strides = [1, 1, 1]} : vector<18x32x4xf32> to vector<16x16x4xf32>
    %c0_13 = arith.constant 0 : index
    %c0_14 = arith.constant 0 : index
    %9 = vector.load %arg9[%c0_13, %c0_14] : memref<256x8xf32, #tpu.memory_space<vmem>>, vector<256x8xf32>
    %10 = vector.shape_cast %8 : vector<16x16x4xf32> to vector<256x4xf32>
    %c0_15 = arith.constant 0 : index
    %c0_16 = arith.constant 0 : index
    %c0_17 = arith.constant 0 : index
    %11 = vector.load %arg2[%c0_15, %c0_16, %c0_17] : memref<9x4x8xf32, #tpu.memory_space<vmem>>, vector<1x4x8xf32>
    %12 = vector.shape_cast %11 : vector<1x4x8xf32> to vector<4x8xf32>
    %cst_18 = arith.constant dense<0.000000e+00> : vector<256x8xf32>
    %13 = tpu.matmul %10, %12, %cst_18 {dimension_numbers = #tpu.dot_dimension_numbers<[1], [0], [0], [1], [0, 0, 1, 1], [], []>} : vector<256x4xf32>, vector<4x8xf32>, vector<256x8xf32> -> vector<256x8xf32>
    %14 = arith.addf %9, %13 : vector<256x8xf32>
    %c0_19 = arith.constant 0 : index
    %c0_20 = arith.constant 0 : index
    %15 = vector.load %arg9[%c0_19, %c0_20] : memref<256x8xf32, #tpu.memory_space<vmem>>, vector<256x8xf32>
    tpu.vector_store %arg9[%c0_19, %c0_20], %14 {strides = array<i32>} : memref<256x8xf32, #tpu.memory_space<vmem>>, vector<256x8xf32>,
    %16 = vector.extract_strided_slice %7 {offsets = [0, 8, 0], sizes = [16, 16, 4], strides = [1, 1, 1]} : vector<18x32x4xf32> to vector<16x16x4xf32>
    %c0_21 = arith.constant 0 : index
    %c0_22 = arith.constant 0 : index
    %17 = vector.load %arg9[%c0_21, %c0_22] : memref<256x8xf32, #tpu.memory_space<vmem>>, vector<256x8xf32>
    %18 = vector.shape_cast %16 : vector<16x16x4xf32> to vector<256x4xf32>
    %c1_23 = arith.constant 1 : index
    %c0_24 = arith.constant 0 : index
    %c0_25 = arith.constant 0 : index
    %19 = vector.load %arg2[%c1_23, %c0_24, %c0_25] : memref<9x4x8xf32, #tpu.memory_space<vmem>>, vector<1x4x8xf32>
    %20 = vector.shape_cast %19 : vector<1x4x8xf32> to vector<4x8xf32>
    %cst_26 = arith.constant dense<0.000000e+00> : vector<256x8xf32>
    %21 = tpu.matmul %18, %20, %cst_26 {dimension_numbers = #tpu.dot_dimension_numbers<[1], [0], [0], [1], [0, 0, 1, 1], [], []>} : vector<256x4xf32>, vector<4x8xf32>, vector<256x8xf32> -> vector<256x8xf32>
    %22 = arith.addf %17, %21 : vector<256x8xf32>
    %c0_27 = arith.constant 0 : index
    %c0_28 = arith.constant 0 : index
    %23 = vector.load %arg9[%c0_27, %c0_28] : memref<256x8xf32, #tpu.memory_space<vmem>>, vector<256x8xf32>
    tpu.vector_store %arg9[%c0_27, %c0_28], %22 {strides = array<i32>} : memref<256x8xf32, #tpu.memory_space<vmem>>, vector<256x8xf32>,
    %24 = vector.extract_strided_slice %7 {offsets = [0, 9, 0], sizes = [16, 16, 4], strides = [1, 1, 1]} : vector<18x32x4xf32> to vector<16x16x4xf32>
    %c0_29 = arith.constant 0 : index
    %c0_30 = arith.constant 0 : index
    %25 = vector.load %arg9[%c0_29, %c0_30] : memref<256x8xf32, #tpu.memory_space<vmem>>, vector<256x8xf32>
    %26 = vector.shape_cast %24 : vector<16x16x4xf32> to vector<256x4xf32>
    %c2 = arith.constant 2 : index
    %c0_31 = arith.constant 0 : index
    %c0_32 = arith.constant 0 : index
    %27 = vector.load %arg2[%c2, %c0_31, %c0_32] : memref<9x4x8xf32, #tpu.memory_space<vmem>>, vector<1x4x8xf32>
    %28 = vector.shape_cast %27 : vector<1x4x8xf32> to vector<4x8xf32>
    %cst_33 = arith.constant dense<0.000000e+00> : vector<256x8xf32>
    %29 = tpu.matmul %26, %28, %cst_33 {dimension_numbers = #tpu.dot_dimension_numbers<[1], [0], [0], [1], [0, 0, 1, 1], [], []>} : vector<256x4xf32>, vector<4x8xf32>, vector<256x8xf32> -> vector<256x8xf32>
    %30 = arith.addf %25, %29 : vector<256x8xf32>
    %c0_34 = arith.constant 0 : index
    %c0_35 = arith.constant 0 : index
    %31 = vector.load %arg9[%c0_34, %c0_35] : memref<256x8xf32, #tpu.memory_space<vmem>>, vector<256x8xf32>
    tpu.vector_store %arg9[%c0_34, %c0_35], %30 {strides = array<i32>} : memref<256x8xf32, #tpu.memory_space<vmem>>, vector<256x8xf32>,
    %32 = vector.extract_strided_slice %7 {offsets = [1, 7, 0], sizes = [16, 16, 4], strides = [1, 1, 1]} : vector<18x32x4xf32> to vector<16x16x4xf32>
    %c0_36 = arith.constant 0 : index
    %c0_37 = arith.constant 0 : index
    %33 = vector.load %arg9[%c0_36, %c0_37] : memref<256x8xf32, #tpu.memory_space<vmem>>, vector<256x8xf32>
    %34 = vector.shape_cast %32 : vector<16x16x4xf32> to vector<256x4xf32>
    %c3 = arith.constant 3 : index
    %c0_38 = arith.constant 0 : index
    %c0_39 = arith.constant 0 : index
    %35 = vector.load %arg2[%c3, %c0_38, %c0_39] : memref<9x4x8xf32, #tpu.memory_space<vmem>>, vector<1x4x8xf32>
    %36 = vector.shape_cast %35 : vector<1x4x8xf32> to vector<4x8xf32>
    %cst_40 = arith.constant dense<0.000000e+00> : vector<256x8xf32>
    %37 = tpu.matmul %34, %36, %cst_40 {dimension_numbers = #tpu.dot_dimension_numbers<[1], [0], [0], [1], [0, 0, 1, 1], [], []>} : vector<256x4xf32>, vector<4x8xf32>, vector<256x8xf32> -> vector<256x8xf32>
    %38 = arith.addf %33, %37 : vector<256x8xf32>
    %c0_41 = arith.constant 0 : index
    %c0_42 = arith.constant 0 : index
    %39 = vector.load %arg9[%c0_41, %c0_42] : memref<256x8xf32, #tpu.memory_space<vmem>>, vector<256x8xf32>
    tpu.vector_store %arg9[%c0_41, %c0_42], %38 {strides = array<i32>} : memref<256x8xf32, #tpu.memory_space<vmem>>, vector<256x8xf32>,
    %40 = vector.extract_strided_slice %7 {offsets = [1, 8, 0], sizes = [16, 16, 4], strides = [1, 1, 1]} : vector<18x32x4xf32> to vector<16x16x4xf32>
    %c0_43 = arith.constant 0 : index
    %c0_44 = arith.constant 0 : index
    %41 = vector.load %arg9[%c0_43, %c0_44] : memref<256x8xf32, #tpu.memory_space<vmem>>, vector<256x8xf32>
    %42 = vector.shape_cast %40 : vector<16x16x4xf32> to vector<256x4xf32>
    %c4 = arith.constant 4 : index
    %c0_45 = arith.constant 0 : index
    %c0_46 = arith.constant 0 : index
    %43 = vector.load %arg2[%c4, %c0_45, %c0_46] : memref<9x4x8xf32, #tpu.memory_space<vmem>>, vector<1x4x8xf32>
    %44 = vector.shape_cast %43 : vector<1x4x8xf32> to vector<4x8xf32>
    %cst_47 = arith.constant dense<0.000000e+00> : vector<256x8xf32>
    %45 = tpu.matmul %42, %44, %cst_47 {dimension_numbers = #tpu.dot_dimension_numbers<[1], [0], [0], [1], [0, 0, 1, 1], [], []>} : vector<256x4xf32>, vector<4x8xf32>, vector<256x8xf32> -> vector<256x8xf32>
    %46 = arith.addf %41, %45 : vector<256x8xf32>
    %c0_48 = arith.constant 0 : index
    %c0_49 = arith.constant 0 : index
    %47 = vector.load %arg9[%c0_48, %c0_49] : memref<256x8xf32, #tpu.memory_space<vmem>>, vector<256x8xf32>
    tpu.vector_store %arg9[%c0_48, %c0_49], %46 {strides = array<i32>} : memref<256x8xf32, #tpu.memory_space<vmem>>, vector<256x8xf32>,
    %48 = vector.extract_strided_slice %7 {offsets = [1, 9, 0], sizes = [16, 16, 4], strides = [1, 1, 1]} : vector<18x32x4xf32> to vector<16x16x4xf32>
    %c0_50 = arith.constant 0 : index
    %c0_51 = arith.constant 0 : index
    %49 = vector.load %arg9[%c0_50, %c0_51] : memref<256x8xf32, #tpu.memory_space<vmem>>, vector<256x8xf32>
    %50 = vector.shape_cast %48 : vector<16x16x4xf32> to vector<256x4xf32>
    %c5 = arith.constant 5 : index
    %c0_52 = arith.constant 0 : index
    %c0_53 = arith.constant 0 : index
    %51 = vector.load %arg2[%c5, %c0_52, %c0_53] : memref<9x4x8xf32, #tpu.memory_space<vmem>>, vector<1x4x8xf32>
    %52 = vector.shape_cast %51 : vector<1x4x8xf32> to vector<4x8xf32>
    %cst_54 = arith.constant dense<0.000000e+00> : vector<256x8xf32>
    %53 = tpu.matmul %50, %52, %cst_54 {dimension_numbers = #tpu.dot_dimension_numbers<[1], [0], [0], [1], [0, 0, 1, 1], [], []>} : vector<256x4xf32>, vector<4x8xf32>, vector<256x8xf32> -> vector<256x8xf32>
    %54 = arith.addf %49, %53 : vector<256x8xf32>
    %c0_55 = arith.constant 0 : index
    %c0_56 = arith.constant 0 : index
    %55 = vector.load %arg9[%c0_55, %c0_56] : memref<256x8xf32, #tpu.memory_space<vmem>>, vector<256x8xf32>
    tpu.vector_store %arg9[%c0_55, %c0_56], %54 {strides = array<i32>} : memref<256x8xf32, #tpu.memory_space<vmem>>, vector<256x8xf32>,
    %56 = vector.extract_strided_slice %7 {offsets = [2, 7, 0], sizes = [16, 16, 4], strides = [1, 1, 1]} : vector<18x32x4xf32> to vector<16x16x4xf32>
    %c0_57 = arith.constant 0 : index
    %c0_58 = arith.constant 0 : index
    %57 = vector.load %arg9[%c0_57, %c0_58] : memref<256x8xf32, #tpu.memory_space<vmem>>, vector<256x8xf32>
    %58 = vector.shape_cast %56 : vector<16x16x4xf32> to vector<256x4xf32>
    %c6 = arith.constant 6 : index
    %c0_59 = arith.constant 0 : index
    %c0_60 = arith.constant 0 : index
    %59 = vector.load %arg2[%c6, %c0_59, %c0_60] : memref<9x4x8xf32, #tpu.memory_space<vmem>>, vector<1x4x8xf32>
    %60 = vector.shape_cast %59 : vector<1x4x8xf32> to vector<4x8xf32>
    %cst_61 = arith.constant dense<0.000000e+00> : vector<256x8xf32>
    %61 = tpu.matmul %58, %60, %cst_61 {dimension_numbers = #tpu.dot_dimension_numbers<[1], [0], [0], [1], [0, 0, 1, 1], [], []>} : vector<256x4xf32>, vector<4x8xf32>, vector<256x8xf32> -> vector<256x8xf32>
    %62 = arith.addf %57, %61 : vector<256x8xf32>
    %c0_62 = arith.constant 0 : index
    %c0_63 = arith.constant 0 : index
    %63 = vector.load %arg9[%c0_62, %c0_63] : memref<256x8xf32, #tpu.memory_space<vmem>>, vector<256x8xf32>
    tpu.vector_store %arg9[%c0_62, %c0_63], %62 {strides = array<i32>} : memref<256x8xf32, #tpu.memory_space<vmem>>, vector<256x8xf32>,
    %64 = vector.extract_strided_slice %7 {offsets = [2, 8, 0], sizes = [16, 16, 4], strides = [1, 1, 1]} : vector<18x32x4xf32> to vector<16x16x4xf32>
    %c0_64 = arith.constant 0 : index
    %c0_65 = arith.constant 0 : index
    %65 = vector.load %arg9[%c0_64, %c0_65] : memref<256x8xf32, #tpu.memory_space<vmem>>, vector<256x8xf32>
    %66 = vector.shape_cast %64 : vector<16x16x4xf32> to vector<256x4xf32>
    %c7 = arith.constant 7 : index
    %c0_66 = arith.constant 0 : index
    %c0_67 = arith.constant 0 : index
    %67 = vector.load %arg2[%c7, %c0_66, %c0_67] : memref<9x4x8xf32, #tpu.memory_space<vmem>>, vector<1x4x8xf32>
    %68 = vector.shape_cast %67 : vector<1x4x8xf32> to vector<4x8xf32>
    %cst_68 = arith.constant dense<0.000000e+00> : vector<256x8xf32>
    %69 = tpu.matmul %66, %68, %cst_68 {dimension_numbers = #tpu.dot_dimension_numbers<[1], [0], [0], [1], [0, 0, 1, 1], [], []>} : vector<256x4xf32>, vector<4x8xf32>, vector<256x8xf32> -> vector<256x8xf32>
    %70 = arith.addf %65, %69 : vector<256x8xf32>
    %c0_69 = arith.constant 0 : index
    %c0_70 = arith.constant 0 : index
    %71 = vector.load %arg9[%c0_69, %c0_70] : memref<256x8xf32, #tpu.memory_space<vmem>>, vector<256x8xf32>
    tpu.vector_store %arg9[%c0_69, %c0_70], %70 {strides = array<i32>} : memref<256x8xf32, #tpu.memory_space<vmem>>, vector<256x8xf32>,
    %72 = vector.extract_strided_slice %7 {offsets = [2, 9, 0], sizes = [16, 16, 4], strides = [1, 1, 1]} : vector<18x32x4xf32> to vector<16x16x4xf32>
    %c0_71 = arith.constant 0 : index
    %c0_72 = arith.constant 0 : index
    %73 = vector.load %arg9[%c0_71, %c0_72] : memref<256x8xf32, #tpu.memory_space<vmem>>, vector<256x8xf32>
    %74 = vector.shape_cast %72 : vector<16x16x4xf32> to vector<256x4xf32>
    %c8_73 = arith.constant 8 : index
    %c0_74 = arith.constant 0 : index
    %c0_75 = arith.constant 0 : index
    %75 = vector.load %arg2[%c8_73, %c0_74, %c0_75] : memref<9x4x8xf32, #tpu.memory_space<vmem>>, vector<1x4x8xf32>
    %76 = vector.shape_cast %75 : vector<1x4x8xf32> to vector<4x8xf32>
    %cst_76 = arith.constant dense<0.000000e+00> : vector<256x8xf32>
    %77 = tpu.matmul %74, %76, %cst_76 {dimension_numbers = #tpu.dot_dimension_numbers<[1], [0], [0], [1], [0, 0, 1, 1], [], []>} : vector<256x4xf32>, vector<4x8xf32>, vector<256x8xf32> -> vector<256x8xf32>
    %78 = arith.addf %73, %77 : vector<256x8xf32>
    %c0_77 = arith.constant 0 : index
    %c0_78 = arith.constant 0 : index
    %79 = vector.load %arg9[%c0_77, %c0_78] : memref<256x8xf32, #tpu.memory_space<vmem>>, vector<256x8xf32>
    tpu.vector_store %arg9[%c0_77, %c0_78], %78 {strides = array<i32>} : memref<256x8xf32, #tpu.memory_space<vmem>>, vector<256x8xf32>,
    %c0_79 = arith.constant 0 : index
    %c0_80 = arith.constant 0 : index
    %80 = vector.load %arg9[%c0_79, %c0_80] : memref<256x8xf32, #tpu.memory_space<vmem>>, vector<256x8xf32>
    %c0_81 = arith.constant 0 : index
    %c0_82 = arith.constant 0 : index
    %81 = vector.load %arg3[%c0_81, %c0_82] : memref<1x8xf32, #tpu.memory_space<vmem>>, vector<1x8xf32>
    %82 = vector.broadcast %81 : vector<1x8xf32> to vector<256x8xf32>
    %83 = arith.addf %80, %82 : vector<256x8xf32>
    %cst_83 = arith.constant 0.000000e+00 : f32
    %84 = vector.broadcast %cst_83 : f32 to vector<256x8xf32>
    %85 = arith.cmpf ogt, %83, %84 : vector<256x8xf32>
    %cst_84 = arith.constant 0.00999999977 : f32
    %86 = vector.broadcast %cst_84 : f32 to vector<256x8xf32>
    %87 = arith.mulf %86, %83 : vector<256x8xf32>
    %88 = arith.select %85, %83, %87 : vector<256x8xi1>, vector<256x8xf32>
    %cst_85 = arith.constant 0.000000e+00 : f32
    %89 = vector.broadcast %cst_85 : f32 to vector<18x32x8xf32>
    %c0_86 = arith.constant 0 : index
    %c0_87 = arith.constant 0 : index
    %c0_88 = arith.constant 0 : index
    %90 = vector.load %arg8[%c0_86, %c0_87, %c0_88] : memref<18x32x8xf32, #tpu.memory_space<vmem>>, vector<18x32x8xf32>
    tpu.vector_store %arg8[%c0_86, %c0_87, %c0_88], %89 {strides = array<i32>} : memref<18x32x8xf32, #tpu.memory_space<vmem>>, vector<18x32x8xf32>,
    %91 = vector.shape_cast %88 : vector<256x8xf32> to vector<16x16x8xf32>
    %c1_89 = arith.constant 1 : index
    %c8_90 = arith.constant 8 : index
    %c0_91 = arith.constant 0 : index
    %92 = vector.load %arg8[%c1_89, %c8_90, %c0_91] : memref<18x32x8xf32, #tpu.memory_space<vmem>>, vector<16x16x8xf32>
    tpu.vector_store %arg8[%c1_89, %c8_90, %c0_91], %91 {strides = array<i32>} : memref<18x32x8xf32, #tpu.memory_space<vmem>>, vector<16x16x8xf32>,
    %cst_92 = arith.constant 0.000000e+00 : f32
    %93 = vector.broadcast %cst_92 : f32 to vector<256x8xf32>
    %c0_93 = arith.constant 0 : index
    %c0_94 = arith.constant 0 : index
    %94 = vector.load %arg9[%c0_93, %c0_94] : memref<256x8xf32, #tpu.memory_space<vmem>>, vector<256x8xf32>
    tpu.vector_store %arg9[%c0_93, %c0_94], %93 {strides = array<i32>} : memref<256x8xf32, #tpu.memory_space<vmem>>, vector<256x8xf32>,
    %c0_95 = arith.constant 0 : index
    %c0_96 = arith.constant 0 : index
    %c0_97 = arith.constant 0 : index
    %95 = vector.load %arg8[%c0_95, %c0_96, %c0_97] : memref<18x32x8xf32, #tpu.memory_space<vmem>>, vector<18x32x8xf32>
    %96 = vector.extract_strided_slice %95 {offsets = [0, 7, 0], sizes = [16, 16, 8], strides = [1, 1, 1]} : vector<18x32x8xf32> to vector<16x16x8xf32>
    %c0_98 = arith.constant 0 : index
    %c0_99 = arith.constant 0 : index
    %97 = vector.load %arg9[%c0_98, %c0_99] : memref<256x8xf32, #tpu.memory_space<vmem>>, vector<256x8xf32>
    %98 = vector.shape_cast %96 : vector<16x16x8xf32> to vector<256x8xf32>
    %c0_100 = arith.constant 0 : index
    %c0_101 = arith.constant 0 : index
    %c0_102 = arith.constant 0 : index
    %99 = vector.load %arg4[%c0_100, %c0_101, %c0_102] : memref<9x8x8xf32, #tpu.memory_space<vmem>>, vector<1x8x8xf32>
    %100 = vector.shape_cast %99 : vector<1x8x8xf32> to vector<8x8xf32>
    %cst_103 = arith.constant dense<0.000000e+00> : vector<256x8xf32>
    %101 = tpu.matmul %98, %100, %cst_103 {dimension_numbers = #tpu.dot_dimension_numbers<[1], [0], [0], [1], [0, 0, 1, 1], [], []>} : vector<256x8xf32>, vector<8x8xf32>, vector<256x8xf32> -> vector<256x8xf32>
    %102 = arith.addf %97, %101 : vector<256x8xf32>
    %c0_104 = arith.constant 0 : index
    %c0_105 = arith.constant 0 : index
    %103 = vector.load %arg9[%c0_104, %c0_105] : memref<256x8xf32, #tpu.memory_space<vmem>>, vector<256x8xf32>
    tpu.vector_store %arg9[%c0_104, %c0_105], %102 {strides = array<i32>} : memref<256x8xf32, #tpu.memory_space<vmem>>, vector<256x8xf32>,
    %104 = vector.extract_strided_slice %95 {offsets = [0, 8, 0], sizes = [16, 16, 8], strides = [1, 1, 1]} : vector<18x32x8xf32> to vector<16x16x8xf32>
    %c0_106 = arith.constant 0 : index
    %c0_107 = arith.constant 0 : index
    %105 = vector.load %arg9[%c0_106, %c0_107] : memref<256x8xf32, #tpu.memory_space<vmem>>, vector<256x8xf32>
    %106 = vector.shape_cast %104 : vector<16x16x8xf32> to vector<256x8xf32>
    %c1_108 = arith.constant 1 : index
    %c0_109 = arith.constant 0 : index
    %c0_110 = arith.constant 0 : index
    %107 = vector.load %arg4[%c1_108, %c0_109, %c0_110] : memref<9x8x8xf32, #tpu.memory_space<vmem>>, vector<1x8x8xf32>
    %108 = vector.shape_cast %107 : vector<1x8x8xf32> to vector<8x8xf32>
    %cst_111 = arith.constant dense<0.000000e+00> : vector<256x8xf32>
    %109 = tpu.matmul %106, %108, %cst_111 {dimension_numbers = #tpu.dot_dimension_numbers<[1], [0], [0], [1], [0, 0, 1, 1], [], []>} : vector<256x8xf32>, vector<8x8xf32>, vector<256x8xf32> -> vector<256x8xf32>
    %110 = arith.addf %105, %109 : vector<256x8xf32>
    %c0_112 = arith.constant 0 : index
    %c0_113 = arith.constant 0 : index
    %111 = vector.load %arg9[%c0_112, %c0_113] : memref<256x8xf32, #tpu.memory_space<vmem>>, vector<256x8xf32>
    tpu.vector_store %arg9[%c0_112, %c0_113], %110 {strides = array<i32>} : memref<256x8xf32, #tpu.memory_space<vmem>>, vector<256x8xf32>,
    %112 = vector.extract_strided_slice %95 {offsets = [0, 9, 0], sizes = [16, 16, 8], strides = [1, 1, 1]} : vector<18x32x8xf32> to vector<16x16x8xf32>
    %c0_114 = arith.constant 0 : index
    %c0_115 = arith.constant 0 : index
    %113 = vector.load %arg9[%c0_114, %c0_115] : memref<256x8xf32, #tpu.memory_space<vmem>>, vector<256x8xf32>
    %114 = vector.shape_cast %112 : vector<16x16x8xf32> to vector<256x8xf32>
    %c2_116 = arith.constant 2 : index
    %c0_117 = arith.constant 0 : index
    %c0_118 = arith.constant 0 : index
    %115 = vector.load %arg4[%c2_116, %c0_117, %c0_118] : memref<9x8x8xf32, #tpu.memory_space<vmem>>, vector<1x8x8xf32>
    %116 = vector.shape_cast %115 : vector<1x8x8xf32> to vector<8x8xf32>
    %cst_119 = arith.constant dense<0.000000e+00> : vector<256x8xf32>
    %117 = tpu.matmul %114, %116, %cst_119 {dimension_numbers = #tpu.dot_dimension_numbers<[1], [0], [0], [1], [0, 0, 1, 1], [], []>} : vector<256x8xf32>, vector<8x8xf32>, vector<256x8xf32> -> vector<256x8xf32>
    %118 = arith.addf %113, %117 : vector<256x8xf32>
    %c0_120 = arith.constant 0 : index
    %c0_121 = arith.constant 0 : index
    %119 = vector.load %arg9[%c0_120, %c0_121] : memref<256x8xf32, #tpu.memory_space<vmem>>, vector<256x8xf32>
    tpu.vector_store %arg9[%c0_120, %c0_121], %118 {strides = array<i32>} : memref<256x8xf32, #tpu.memory_space<vmem>>, vector<256x8xf32>,
    %120 = vector.extract_strided_slice %95 {offsets = [1, 7, 0], sizes = [16, 16, 8], strides = [1, 1, 1]} : vector<18x32x8xf32> to vector<16x16x8xf32>
    %c0_122 = arith.constant 0 : index
    %c0_123 = arith.constant 0 : index
    %121 = vector.load %arg9[%c0_122, %c0_123] : memref<256x8xf32, #tpu.memory_space<vmem>>, vector<256x8xf32>
    %122 = vector.shape_cast %120 : vector<16x16x8xf32> to vector<256x8xf32>
    %c3_124 = arith.constant 3 : index
    %c0_125 = arith.constant 0 : index
    %c0_126 = arith.constant 0 : index
    %123 = vector.load %arg4[%c3_124, %c0_125, %c0_126] : memref<9x8x8xf32, #tpu.memory_space<vmem>>, vector<1x8x8xf32>
    %124 = vector.shape_cast %123 : vector<1x8x8xf32> to vector<8x8xf32>
    %cst_127 = arith.constant dense<0.000000e+00> : vector<256x8xf32>
    %125 = tpu.matmul %122, %124, %cst_127 {dimension_numbers = #tpu.dot_dimension_numbers<[1], [0], [0], [1], [0, 0, 1, 1], [], []>} : vector<256x8xf32>, vector<8x8xf32>, vector<256x8xf32> -> vector<256x8xf32>
    %126 = arith.addf %121, %125 : vector<256x8xf32>
    %c0_128 = arith.constant 0 : index
    %c0_129 = arith.constant 0 : index
    %127 = vector.load %arg9[%c0_128, %c0_129] : memref<256x8xf32, #tpu.memory_space<vmem>>, vector<256x8xf32>
    tpu.vector_store %arg9[%c0_128, %c0_129], %126 {strides = array<i32>} : memref<256x8xf32, #tpu.memory_space<vmem>>, vector<256x8xf32>,
    %128 = vector.extract_strided_slice %95 {offsets = [1, 8, 0], sizes = [16, 16, 8], strides = [1, 1, 1]} : vector<18x32x8xf32> to vector<16x16x8xf32>
    %c0_130 = arith.constant 0 : index
    %c0_131 = arith.constant 0 : index
    %129 = vector.load %arg9[%c0_130, %c0_131] : memref<256x8xf32, #tpu.memory_space<vmem>>, vector<256x8xf32>
    %130 = vector.shape_cast %128 : vector<16x16x8xf32> to vector<256x8xf32>
    %c4_132 = arith.constant 4 : index
    %c0_133 = arith.constant 0 : index
    %c0_134 = arith.constant 0 : index
    %131 = vector.load %arg4[%c4_132, %c0_133, %c0_134] : memref<9x8x8xf32, #tpu.memory_space<vmem>>, vector<1x8x8xf32>
    %132 = vector.shape_cast %131 : vector<1x8x8xf32> to vector<8x8xf32>
    %cst_135 = arith.constant dense<0.000000e+00> : vector<256x8xf32>
    %133 = tpu.matmul %130, %132, %cst_135 {dimension_numbers = #tpu.dot_dimension_numbers<[1], [0], [0], [1], [0, 0, 1, 1], [], []>} : vector<256x8xf32>, vector<8x8xf32>, vector<256x8xf32> -> vector<256x8xf32>
    %134 = arith.addf %129, %133 : vector<256x8xf32>
    %c0_136 = arith.constant 0 : index
    %c0_137 = arith.constant 0 : index
    %135 = vector.load %arg9[%c0_136, %c0_137] : memref<256x8xf32, #tpu.memory_space<vmem>>, vector<256x8xf32>
    tpu.vector_store %arg9[%c0_136, %c0_137], %134 {strides = array<i32>} : memref<256x8xf32, #tpu.memory_space<vmem>>, vector<256x8xf32>,
    %136 = vector.extract_strided_slice %95 {offsets = [1, 9, 0], sizes = [16, 16, 8], strides = [1, 1, 1]} : vector<18x32x8xf32> to vector<16x16x8xf32>
    %c0_138 = arith.constant 0 : index
    %c0_139 = arith.constant 0 : index
    %137 = vector.load %arg9[%c0_138, %c0_139] : memref<256x8xf32, #tpu.memory_space<vmem>>, vector<256x8xf32>
    %138 = vector.shape_cast %136 : vector<16x16x8xf32> to vector<256x8xf32>
    %c5_140 = arith.constant 5 : index
    %c0_141 = arith.constant 0 : index
    %c0_142 = arith.constant 0 : index
    %139 = vector.load %arg4[%c5_140, %c0_141, %c0_142] : memref<9x8x8xf32, #tpu.memory_space<vmem>>, vector<1x8x8xf32>
    %140 = vector.shape_cast %139 : vector<1x8x8xf32> to vector<8x8xf32>
    %cst_143 = arith.constant dense<0.000000e+00> : vector<256x8xf32>
    %141 = tpu.matmul %138, %140, %cst_143 {dimension_numbers = #tpu.dot_dimension_numbers<[1], [0], [0], [1], [0, 0, 1, 1], [], []>} : vector<256x8xf32>, vector<8x8xf32>, vector<256x8xf32> -> vector<256x8xf32>
    %142 = arith.addf %137, %141 : vector<256x8xf32>
    %c0_144 = arith.constant 0 : index
    %c0_145 = arith.constant 0 : index
    %143 = vector.load %arg9[%c0_144, %c0_145] : memref<256x8xf32, #tpu.memory_space<vmem>>, vector<256x8xf32>
    tpu.vector_store %arg9[%c0_144, %c0_145], %142 {strides = array<i32>} : memref<256x8xf32, #tpu.memory_space<vmem>>, vector<256x8xf32>,
    %144 = vector.extract_strided_slice %95 {offsets = [2, 7, 0], sizes = [16, 16, 8], strides = [1, 1, 1]} : vector<18x32x8xf32> to vector<16x16x8xf32>
    %c0_146 = arith.constant 0 : index
    %c0_147 = arith.constant 0 : index
    %145 = vector.load %arg9[%c0_146, %c0_147] : memref<256x8xf32, #tpu.memory_space<vmem>>, vector<256x8xf32>
    %146 = vector.shape_cast %144 : vector<16x16x8xf32> to vector<256x8xf32>
    %c6_148 = arith.constant 6 : index
    %c0_149 = arith.constant 0 : index
    %c0_150 = arith.constant 0 : index
    %147 = vector.load %arg4[%c6_148, %c0_149, %c0_150] : memref<9x8x8xf32, #tpu.memory_space<vmem>>, vector<1x8x8xf32>
    %148 = vector.shape_cast %147 : vector<1x8x8xf32> to vector<8x8xf32>
    %cst_151 = arith.constant dense<0.000000e+00> : vector<256x8xf32>
    %149 = tpu.matmul %146, %148, %cst_151 {dimension_numbers = #tpu.dot_dimension_numbers<[1], [0], [0], [1], [0, 0, 1, 1], [], []>} : vector<256x8xf32>, vector<8x8xf32>, vector<256x8xf32> -> vector<256x8xf32>
    %150 = arith.addf %145, %149 : vector<256x8xf32>
    %c0_152 = arith.constant 0 : index
    %c0_153 = arith.constant 0 : index
    %151 = vector.load %arg9[%c0_152, %c0_153] : memref<256x8xf32, #tpu.memory_space<vmem>>, vector<256x8xf32>
    tpu.vector_store %arg9[%c0_152, %c0_153], %150 {strides = array<i32>} : memref<256x8xf32, #tpu.memory_space<vmem>>, vector<256x8xf32>,
    %152 = vector.extract_strided_slice %95 {offsets = [2, 8, 0], sizes = [16, 16, 8], strides = [1, 1, 1]} : vector<18x32x8xf32> to vector<16x16x8xf32>
    %c0_154 = arith.constant 0 : index
    %c0_155 = arith.constant 0 : index
    %153 = vector.load %arg9[%c0_154, %c0_155] : memref<256x8xf32, #tpu.memory_space<vmem>>, vector<256x8xf32>
    %154 = vector.shape_cast %152 : vector<16x16x8xf32> to vector<256x8xf32>
    %c7_156 = arith.constant 7 : index
    %c0_157 = arith.constant 0 : index
    %c0_158 = arith.constant 0 : index
    %155 = vector.load %arg4[%c7_156, %c0_157, %c0_158] : memref<9x8x8xf32, #tpu.memory_space<vmem>>, vector<1x8x8xf32>
    %156 = vector.shape_cast %155 : vector<1x8x8xf32> to vector<8x8xf32>
    %cst_159 = arith.constant dense<0.000000e+00> : vector<256x8xf32>
    %157 = tpu.matmul %154, %156, %cst_159 {dimension_numbers = #tpu.dot_dimension_numbers<[1], [0], [0], [1], [0, 0, 1, 1], [], []>} : vector<256x8xf32>, vector<8x8xf32>, vector<256x8xf32> -> vector<256x8xf32>
    %158 = arith.addf %153, %157 : vector<256x8xf32>
    %c0_160 = arith.constant 0 : index
    %c0_161 = arith.constant 0 : index
    %159 = vector.load %arg9[%c0_160, %c0_161] : memref<256x8xf32, #tpu.memory_space<vmem>>, vector<256x8xf32>
    tpu.vector_store %arg9[%c0_160, %c0_161], %158 {strides = array<i32>} : memref<256x8xf32, #tpu.memory_space<vmem>>, vector<256x8xf32>,
    %160 = vector.extract_strided_slice %95 {offsets = [2, 9, 0], sizes = [16, 16, 8], strides = [1, 1, 1]} : vector<18x32x8xf32> to vector<16x16x8xf32>
    %c0_162 = arith.constant 0 : index
    %c0_163 = arith.constant 0 : index
    %161 = vector.load %arg9[%c0_162, %c0_163] : memref<256x8xf32, #tpu.memory_space<vmem>>, vector<256x8xf32>
    %162 = vector.shape_cast %160 : vector<16x16x8xf32> to vector<256x8xf32>
    %c8_164 = arith.constant 8 : index
    %c0_165 = arith.constant 0 : index
    %c0_166 = arith.constant 0 : index
    %163 = vector.load %arg4[%c8_164, %c0_165, %c0_166] : memref<9x8x8xf32, #tpu.memory_space<vmem>>, vector<1x8x8xf32>
    %164 = vector.shape_cast %163 : vector<1x8x8xf32> to vector<8x8xf32>
    %cst_167 = arith.constant dense<0.000000e+00> : vector<256x8xf32>
    %165 = tpu.matmul %162, %164, %cst_167 {dimension_numbers = #tpu.dot_dimension_numbers<[1], [0], [0], [1], [0, 0, 1, 1], [], []>} : vector<256x8xf32>, vector<8x8xf32>, vector<256x8xf32> -> vector<256x8xf32>
    %166 = arith.addf %161, %165 : vector<256x8xf32>
    %c0_168 = arith.constant 0 : index
    %c0_169 = arith.constant 0 : index
    %167 = vector.load %arg9[%c0_168, %c0_169] : memref<256x8xf32, #tpu.memory_space<vmem>>, vector<256x8xf32>
    tpu.vector_store %arg9[%c0_168, %c0_169], %166 {strides = array<i32>} : memref<256x8xf32, #tpu.memory_space<vmem>>, vector<256x8xf32>,
    %c0_170 = arith.constant 0 : index
    %c0_171 = arith.constant 0 : index
    %168 = vector.load %arg9[%c0_170, %c0_171] : memref<256x8xf32, #tpu.memory_space<vmem>>, vector<256x8xf32>
    %c0_172 = arith.constant 0 : index
    %c0_173 = arith.constant 0 : index
    %169 = vector.load %arg5[%c0_172, %c0_173] : memref<1x8xf32, #tpu.memory_space<vmem>>, vector<1x8xf32>
    %170 = vector.broadcast %169 : vector<1x8xf32> to vector<256x8xf32>
    %171 = arith.addf %168, %170 : vector<256x8xf32>
    %cst_174 = arith.constant 0.000000e+00 : f32
    %172 = vector.broadcast %cst_174 : f32 to vector<256x8xf32>
    %173 = arith.cmpf ogt, %171, %172 : vector<256x8xf32>
    %cst_175 = arith.constant 0.00999999977 : f32
    %174 = vector.broadcast %cst_175 : f32 to vector<256x8xf32>
    %175 = arith.mulf %174, %171 : vector<256x8xf32>
    %176 = arith.select %173, %171, %175 : vector<256x8xi1>, vector<256x8xf32>
    %177 = vector.shape_cast %176 : vector<256x8xf32> to vector<16x16x8xf32>
    %c0_176 = arith.constant 0 : index
    %c0_177 = arith.constant 0 : index
    %c0_178 = arith.constant 0 : index
    %c0_179 = arith.constant 0 : index
    %178 = vector.load %arg6[%c0_176, %c0_177, %c0_178, %c0_179] : memref<1x16x16x8xf32, #tpu.memory_space<vmem>>, vector<1x16x16x8xf32>
    %179 = vector.shape_cast %178 : vector<1x16x16x8xf32> to vector<16x16x8xf32>
    %180 = vector.shape_cast %177 : vector<16x16x8xf32> to vector<1x16x16x8xf32>
    tpu.vector_store %arg6[%c0_176, %c0_177, %c0_178, %c0_179], %180 {strides = array<i32>} : memref<1x16x16x8xf32, #tpu.memory_space<vmem>>, vector<1x16x16x8xf32>,
    return
  }
  func.func @transform_0(%arg0: i32) -> (i32, i32, i32, i32) {
    %c0_i32 = arith.constant 0 : i32
    %c0_i32_0 = arith.constant 0 : i32
    %c0_i32_1 = arith.constant 0 : i32
    %c0_i32_2 = arith.constant 0 : i32
    return %arg0, %c0_i32, %c0_i32_0, %c0_i32_1 : i32, i32, i32, i32
  }
  func.func @transform_1(%arg0: i32) -> (i32, i32, i32) {
    %c0_i32 = arith.constant 0 : i32
    %c0_i32_0 = arith.constant 0 : i32
    %c0_i32_1 = arith.constant 0 : i32
    %c0_i32_2 = arith.constant 0 : i32
    return %c0_i32, %c0_i32_0, %c0_i32_1 : i32, i32, i32
  }
  func.func @transform_2(%arg0: i32) -> (i32, i32) {
    %c0_i32 = arith.constant 0 : i32
    %c0_i32_0 = arith.constant 0 : i32
    %c0_i32_1 = arith.constant 0 : i32
    return %c0_i32, %c0_i32_0 : i32, i32
  }
  func.func @transform_3(%arg0: i32) -> (i32, i32, i32) {
    %c0_i32 = arith.constant 0 : i32
    %c0_i32_0 = arith.constant 0 : i32
    %c0_i32_1 = arith.constant 0 : i32
    %c0_i32_2 = arith.constant 0 : i32
    return %c0_i32, %c0_i32_0, %c0_i32_1 : i32, i32, i32
  }
  func.func @transform_4(%arg0: i32) -> (i32, i32) {
    %c0_i32 = arith.constant 0 : i32
    %c0_i32_0 = arith.constant 0 : i32
    %c0_i32_1 = arith.constant 0 : i32
    return %c0_i32, %c0_i32_0 : i32, i32
  }
  func.func @transform_5(%arg0: i32) -> (i32, i32, i32, i32) {
    %c0_i32 = arith.constant 0 : i32
    %c0_i32_0 = arith.constant 0 : i32
    %c0_i32_1 = arith.constant 0 : i32
    %c0_i32_2 = arith.constant 0 : i32
    return %arg0, %c0_i32, %c0_i32_0, %c0_i32_1 : i32, i32, i32, i32
  }
}

</mosaic_0001>

<llo_original>
// kernel: a_call__.1
$region0: #{a_call__.1}
  #allocation0 [shape = 'u32[]', space=smem, size = 0x4, offset = 0x4, fixed_abs, tag = 'smem constant byte address 0x4 - core index']
  #allocation1 [shape = 'u32[144,128]{1,0:T(1,128)}', space=vmem, size = 0x12000, scoped, tag = 'internal scratch']
  #allocation2 [shape = 'f32[18,32,4]{2,1,0:T(8,128)}', space=vmem, size = 0x48000, scoped, tag = 'scratch operand']
  #allocation3 [shape = 'f32[18,32,8]{2,1,0:T(8,128)}', space=vmem, size = 0x48000, scoped, tag = 'scratch operand']
  #allocation4 [shape = 'f32[256,8]{1,0:T(8,128)}', space=vmem, size = 0x20000, scoped, tag = 'scratch operand']
  %s0 = inlined_call_operand.vmem [shape: f32[2,16,16,4], index: 0, kind: input, shape index: {}]
  %s1 = inlined_call_operand.vmem [shape: f32[9,4,8], index: 1, kind: input, shape index: {}]
  %s2 = inlined_call_operand.vmem [shape: f32[1,8], index: 2, kind: input, shape index: {}]
  %s3 = inlined_call_operand.vmem [shape: f32[9,8,8], index: 3, kind: input, shape index: {}]
  %s4 = inlined_call_operand.vmem [shape: f32[1,8], index: 4, kind: input, shape index: {}]
  %s5 = inlined_call_operand.vmem [shape: f32[2,16,16,8], index: 5, kind: output, shape index: {}]
  %s6 = sld [smem:[#allocation0]]
  $region53: #{a_call__.1} parent=0
    _
  %s8 = ssub.s32 1, %s6
  %s9 = scalar_select 0, %s8, %s6
  loop: start=0, step=1, limit=4
  $region2: #{a_call__.1} parent=0 // loop_pre_header
    _
  $region3: #{a_call__.1} parent=0 // loop_header
    %s11 = sphi 0, %s15
    %p12 = scmp.ge.s32.totalorder %s11, 4
    %s21 = sphi 0, %s23
    %s24 = sphi 0, %s21
    %s25 = sphi 0, %s24
    %s41 = sphi 0, %s25
    %s45 = sphi 0, %s45
    %s47 = sphi 0, %s45
    %s48 = sphi 0, %s47
    %s62 = sphi 0, %s48
    %s66 = sphi 0, %s66
    %s68 = sphi 0, %s66
    %s69 = sphi 0, %s68
    %s83 = sphi 0, %s69
    %s87 = sphi 0, %s87
    %s89 = sphi 0, %s87
    %s90 = sphi 0, %s89
    %s104 = sphi 0, %s90
    %s108 = sphi 0, %s108
    %s110 = sphi 0, %s108
    %s111 = sphi 0, %s110
    %s125 = sphi 0, %s111
    %s131 = sphi 0, %s133
    %s134 = sphi 0, %s131
    %s135 = sphi 0, %s134
    %s151 = sphi 0, %s135
  $region4: #{a_call__.1} parent=0 // loop_header_branch
    %14 = sbr.rel (%p12) target = $region8
  $region5: #{a_call__.1} parent=0 // loop_body
    %s16 = ssub.s32 %s11, 1
    %s17 = ssub.s32 %s11, 2
    %s18 = sadd.s32 %s11, 1
    %s19 = ssub.s32 %s11, %s18
    %p20 = scmp.eq.s32.totalorder %s19, 0
    %s22 = sadd.s32 %s21, 1
    %s23 = scalar_select %p20, %s21, %s22
    %p26 = pneg %p20
    %p27 = scmp.eq.s32.totalorder %s11, 1
    %p28 = por %p26, %p27
    %p29 = scmp.ne.s32.totalorder %s21, %s24
    %p30 = scmp.eq.s32.totalorder %s11, 0
    %p31 = por %p29, %p30
    %p32 = scmp.ne.s32.totalorder %s21, %s24
    %p33 = scmp.eq.s32.totalorder %s16, 1
    %p34 = por %p32, %p33
    %p35 = scmp.ne.s32.totalorder %s24, %s25
    %p36 = scmp.eq.s32.totalorder %s16, 0
    %p37 = por %p35, %p36
    %p38 = scmp.ne.s32.totalorder %s24, %s25
    %p39 = scmp.eq.s32.totalorder %s17, 1
    %p40 = por %p38, %p39
    %p42 = scmp.ne.s32.totalorder %s25, %s41
    %p43 = scmp.eq.s32.totalorder %s17, 0
    %p44 = por %p42, %p43
    %s46 = sadd.s32 %s45, 1
    %p49 = scmp.eq.s32.totalorder %s11, 1
    %p50 = scmp.ne.s32.totalorder %s45, %s47
    %p51 = scmp.eq.s32.totalorder %s11, 0
    %p52 = por %p50, %p51
    %p53 = scmp.ne.s32.totalorder %s45, %s47
    %p54 = scmp.eq.s32.totalorder %s16, 1
    %p55 = por %p53, %p54
    %p56 = scmp.ne.s32.totalorder %s47, %s48
    %p57 = scmp.eq.s32.totalorder %s16, 0
    %p58 = por %p56, %p57
    %p59 = scmp.ne.s32.totalorder %s47, %s48
    %p60 = scmp.eq.s32.totalorder %s17, 1
    %p61 = por %p59, %p60
    %p63 = scmp.ne.s32.totalorder %s48, %s62
    %p64 = scmp.eq.s32.totalorder %s17, 0
    %p65 = por %p63, %p64
    %s67 = sadd.s32 %s66, 1
    %p70 = scmp.eq.s32.totalorder %s11, 1
    %p71 = scmp.ne.s32.totalorder %s66, %s68
    %p72 = scmp.eq.s32.totalorder %s11, 0
    %p73 = por %p71, %p72
    %p74 = scmp.ne.s32.totalorder %s66, %s68
    %p75 = scmp.eq.s32.totalorder %s16, 1
    %p76 = por %p74, %p75
    %p77 = scmp.ne.s32.totalorder %s68, %s69
    %p78 = scmp.eq.s32.totalorder %s16, 0
    %p79 = por %p77, %p78
    %p80 = scmp.ne.s32.totalorder %s68, %s69
    %p81 = scmp.eq.s32.totalorder %s17, 1
    %p82 = por %p80, %p81
    %p84 = scmp.ne.s32.totalorder %s69, %s83
    %p85 = scmp.eq.s32.totalorder %s17, 0
    %p86 = por %p84, %p85
    %s88 = sadd.s32 %s87, 1
    %p91 = scmp.eq.s32.totalorder %s11, 1
    %p92 = scmp.ne.s32.totalorder %s87, %s89
    %p93 = scmp.eq.s32.totalorder %s11, 0
    %p94 = por %p92, %p93
    %p95 = scmp.ne.s32.totalorder %s87, %s89
    %p96 = scmp.eq.s32.totalorder %s16, 1
    %p97 = por %p95, %p96
    %p98 = scmp.ne.s32.totalorder %s89, %s90
    %p99 = scmp.eq.s32.totalorder %s16, 0
    %p100 = por %p98, %p99
    %p101 = scmp.ne.s32.totalorder %s89, %s90
    %p102 = scmp.eq.s32.totalorder %s17, 1
    %p103 = por %p101, %p102
    %p105 = scmp.ne.s32.totalorder %s90, %s104
    %p106 = scmp.eq.s32.totalorder %s17, 0
    %p107 = por %p105, %p106
    %s109 = sadd.s32 %s108, 1
    %p112 = scmp.eq.s32.totalorder %s11, 1
    %p113 = scmp.ne.s32.totalorder %s108, %s110
    %p114 = scmp.eq.s32.totalorder %s11, 0
    %p115 = por %p113, %p114
    %p116 = scmp.ne.s32.totalorder %s108, %s110
    %p117 = scmp.eq.s32.totalorder %s16, 1
    %p118 = por %p116, %p117
    %p119 = scmp.ne.s32.totalorder %s110, %s111
    %p120 = scmp.eq.s32.totalorder %s16, 0
    %p121 = por %p119, %p120
    %p122 = scmp.ne.s32.totalorder %s110, %s111
    %p123 = scmp.eq.s32.totalorder %s17, 1
    %p124 = por %p122, %p123
    %p126 = scmp.ne.s32.totalorder %s111, %s125
    %p127 = scmp.eq.s32.totalorder %s17, 0
    %p128 = por %p126, %p127
    %s129 = ssub.s32 %s11, %s18
    %p130 = scmp.eq.s32.totalorder %s129, 0
    %s132 = sadd.s32 %s131, 1
    %s133 = scalar_select %p130, %s131, %s132
    %p136 = pneg %p130
    %p137 = scmp.eq.s32.totalorder %s11, 1
    %p138 = por %p136, %p137
    %p139 = scmp.ne.s32.totalorder %s131, %s134
    %p140 = scmp.eq.s32.totalorder %s11, 0
    %p141 = por %p139, %p140
    %p142 = scmp.ne.s32.totalorder %s131, %s134
    %p143 = scmp.eq.s32.totalorder %s16, 1
    %p144 = por %p142, %p143
    %p145 = scmp.ne.s32.totalorder %s134, %s135
    %p146 = scmp.eq.s32.totalorder %s16, 0
    %p147 = por %p145, %p146
    %p148 = scmp.ne.s32.totalorder %s134, %s135
    %p149 = scmp.eq.s32.totalorder %s17, 1
    %p150 = por %p148, %p149
    %p152 = scmp.ne.s32.totalorder %s135, %s151
    %p153 = scmp.eq.s32.totalorder %s17, 0
    %p154 = por %p152, %p153
    %p155 = scmp.le.s32.totalorder 1, %s11
    %p156 = scmp.lt.s32.totalorder %s11, 3
    %p157 = pnand %p155, %p156
    %p158 = pneg %p157
    // Predicated region
    $region9: #{a_call__.1} parent=5 // pred_check
      _
    $region10: #{a_call__.1} parent=5 // pred_check_branch
      %160 = sbr.rel (%p157) target = $region12
    $region11: #{a_call__.1} parent=5 // pred_region
      %s161 = ssub.s32 %s11, 1
      // Predicated region
      $region13: #{a_call__.1} parent=11 // pred_check
        %p162 = pneg %p58
      $region14: #{a_call__.1} parent=11 // pred_check_branch
        %164 = sbr.rel (%p162) target = $region16
      $region15: #{a_call__.1} parent=11 // pred_region
        _
      $region16: #{a_call__.1} parent=11 // pred_fallthru
        _
      // Predicated region
      $region17: #{a_call__.1} parent=11 // pred_check
        %p165 = pneg %p79
      $region18: #{a_call__.1} parent=11 // pred_check_branch
        %167 = sbr.rel (%p165) target = $region20
      $region19: #{a_call__.1} parent=11 // pred_region
        _
      $region20: #{a_call__.1} parent=11 // pred_fallthru
        _
      // Predicated region
      $region21: #{a_call__.1} parent=11 // pred_check
        %p168 = pneg %p100
      $region22: #{a_call__.1} parent=11 // pred_check_branch
        %170 = sbr.rel (%p168) target = $region24
      $region23: #{a_call__.1} parent=11 // pred_region
        _
      $region24: #{a_call__.1} parent=11 // pred_fallthru
        _
      // Predicated region
      $region25: #{a_call__.1} parent=11 // pred_check
        %p171 = pneg %p121
      $region26: #{a_call__.1} parent=11 // pred_check_branch
        %173 = sbr.rel (%p171) target = $region28
      $region27: #{a_call__.1} parent=11 // pred_region
        _
      $region28: #{a_call__.1} parent=11 // pred_fallthru
        _
    $region12: #{a_call__.1} parent=5 // pred_fallthru
      _
    %p174 = scmp.lt.s32.totalorder %s11, 2
    // Predicated region
    $region29: #{a_call__.1} parent=5 // pred_check
      %p175 = pneg %p174
    $region30: #{a_call__.1} parent=5 // pred_check_branch
      %177 = sbr.rel (%p175) target = $region32
    $region31: #{a_call__.1} parent=5 // pred_region
      // Predicated region
      $region33: #{a_call__.1} parent=31 // pred_check
        %p178 = pneg %p31
      $region34: #{a_call__.1} parent=31 // pred_check_branch
        %180 = sbr.rel (%p178) target = $region36
      $region35: #{a_call__.1} parent=31 // pred_region
        %p181 = scmp.lt.s32.totalorder %s11, 1
        %s182 = scalar_select %p181, %s11, 1
        %s183 = smul.addr %s182, 32
        %s184 = smul.addr %s183, 8
        %s185 = scalar_lea.vmem %s0, %s184
      $region36: #{a_call__.1} parent=31 // pred_fallthru
        _
    $region32: #{a_call__.1} parent=5 // pred_fallthru
      _
    %p186 = scmp.le.s32.totalorder 1, %s11
    %p187 = scmp.lt.s32.totalorder %s11, 3
    %p188 = pnand %p186, %p187
    %p189 = pneg %p188
    // Predicated region
    $region37: #{a_call__.1} parent=5 // pred_check
      _
    $region38: #{a_call__.1} parent=5 // pred_check_branch
      %191 = sbr.rel (%p188) target = $region40
    $region39: #{a_call__.1} parent=5 // pred_region
      %s192 = ssub.s32 %s11, 1
      %p193 = scmp.lt.s32.totalorder %s16, 1
      %s194 = scalar_select %p193, %s16, 1
      %s195 = smul.addr %s194, 32
      %s196 = smul.addr %s195, 8
      %s197 = scalar_lea.vmem %s0, %s196
      %p198 = pneg %p37
      %p199 = pneg %p34
      %p200 = pneg %p58
      %p201 = pneg %p55
      %p202 = pneg %p79
      %p203 = pneg %p76
      %p204 = pneg %p100
      %p205 = pneg %p97
      %p206 = pneg %p121
      %p207 = pneg %p118
      %p208 = pneg %p147
      %p209 = pneg %p144
      %p210 = scmp.lt.s32.totalorder %s16, 1
      %s211 = scalar_select %p210, %s16, 1
      %s212 = smul.addr %s211, 32
      %s213 = smul.addr %s212, 8
      %s214 = scalar_lea.vmem %s5, %s213
      %p215 = scmp.lt.s32.totalorder %s16, 1
      %s216 = scalar_select %p215, %s16, 1
      %s217 = smul.addr %s216, 32
      %s218 = smul.addr %s217, 8
      %s219 = scalar_lea.vmem %s0, %s218
      %p220 = scmp.lt.s32.totalorder %s16, 1
      %s221 = scalar_select %p220, %s16, 1
      %s222 = smul.addr %s221, 32
      %s223 = smul.addr %s222, 8
      %s224 = scalar_lea.vmem %s5, %s223
      %vm225 = vcmask 31744
      %226 = vst.msk [vmem:[#allocation2] sm:$0xff] %vm225, 0.0
      %227 = vst.msk [vmem:[#allocation2 + $0x8] sm:$0xff] %vm225, 0.0
      %228 = vst.msk [vmem:[#allocation2 + $0x10] sm:$0xff] %vm225, 0.0
      %229 = vst.msk [vmem:[#allocation2 + $0x18] sm:$0xff] %vm225, 0.0
      %230 = vst.msk [vmem:[#allocation2 + $0x20] sm:$0xff] %vm225, 0.0
      %231 = vst.msk [vmem:[#allocation2 + $0x28] sm:$0xff] %vm225, 0.0
      %232 = vst.msk [vmem:[#allocation2 + $0x30] sm:$0xff] %vm225, 0.0
      %233 = vst.msk [vmem:[#allocation2 + $0x38] sm:$0xff] %vm225, 0.0
      %234 = vst.msk [vmem:[#allocation2 + $0x40] sm:$0xff] %vm225, 0.0
      %235 = vst.msk [vmem:[#allocation2 + $0x48] sm:$0xff] %vm225, 0.0
      %236 = vst.msk [vmem:[#allocation2 + $0x50] sm:$0xff] %vm225, 0.0
      %237 = vst.msk [vmem:[#allocation2 + $0x58] sm:$0xff] %vm225, 0.0
      %238 = vst.msk [vmem:[#allocation2 + $0x60] sm:$0xff] %vm225, 0.0
      %239 = vst.msk [vmem:[#allocation2 + $0x68] sm:$0xff] %vm225, 0.0
      %240 = vst.msk [vmem:[#allocation2 + $0x70] sm:$0xff] %vm225, 0.0
      %241 = vst.msk [vmem:[#allocation2 + $0x78] sm:$0xff] %vm225, 0.0
      %242 = vst.msk [vmem:[#allocation2 + $0x80] sm:$0xff] %vm225, 0.0
      %243 = vst.msk [vmem:[#allocation2 + $0x88] sm:$0xff] %vm225, 0.0
      %244 = vst.msk [vmem:[#allocation2 + $0x90] sm:$0xff] %vm225, 0.0
      %245 = vst.msk [vmem:[#allocation2 + $0x98] sm:$0xff] %vm225, 0.0
      %246 = vst.msk [vmem:[#allocation2 + $0xa0] sm:$0xff] %vm225, 0.0
      %247 = vst.msk [vmem:[#allocation2 + $0xa8] sm:$0xff] %vm225, 0.0
      %248 = vst.msk [vmem:[#allocation2 + $0xb0] sm:$0xff] %vm225, 0.0
      %249 = vst.msk [vmem:[#allocation2 + $0xb8] sm:$0xff] %vm225, 0.0
      %250 = vst.msk [vmem:[#allocation2 + $0xc0] sm:$0xff] %vm225, 0.0
      %251 = vst.msk [vmem:[#allocation2 + $0xc8] sm:$0xff] %vm225, 0.0
      %252 = vst.msk [vmem:[#allocation2 + $0xd0] sm:$0xff] %vm225, 0.0
      %253 = vst.msk [vmem:[#allocation2 + $0xd8] sm:$0xff] %vm225, 0.0
      %254 = vst.msk [vmem:[#allocation2 + $0xe0] sm:$0xff] %vm225, 0.0
      %255 = vst.msk [vmem:[#allocation2 + $0xe8] sm:$0xff] %vm225, 0.0
      %256 = vst.msk [vmem:[#allocation2 + $0xf0] sm:$0xff] %vm225, 0.0
      %257 = vst.msk [vmem:[#allocation2 + $0xf8] sm:$0xff] %vm225, 0.0
      %258 = vst.msk [vmem:[#allocation2 + $0x100] sm:$0xff] %vm225, 0.0
      %259 = vst.msk [vmem:[#allocation2 + $0x108] sm:$0xff] %vm225, 0.0
      %260 = vst.msk [vmem:[#allocation2 + $0x110] sm:$0xff] %vm225, 0.0
      %261 = vst.msk [vmem:[#allocation2 + $0x118] sm:$0xff] %vm225, 0.0
      %262 = vst.msk [vmem:[#allocation2 + $0x120] sm:$0xff] %vm225, 0.0
      %263 = vst.msk [vmem:[#allocation2 + $0x128] sm:$0xff] %vm225, 0.0
      %264 = vst.msk [vmem:[#allocation2 + $0x130] sm:$0xff] %vm225, 0.0
      %265 = vst.msk [vmem:[#allocation2 + $0x138] sm:$0xff] %vm225, 0.0
      %266 = vst.msk [vmem:[#allocation2 + $0x140] sm:$0xff] %vm225, 0.0
      %267 = vst.msk [vmem:[#allocation2 + $0x148] sm:$0xff] %vm225, 0.0
      %268 = vst.msk [vmem:[#allocation2 + $0x150] sm:$0xff] %vm225, 0.0
      %269 = vst.msk [vmem:[#allocation2 + $0x158] sm:$0xff] %vm225, 0.0
      %270 = vst.msk [vmem:[#allocation2 + $0x160] sm:$0xff] %vm225, 0.0
      %271 = vst.msk [vmem:[#allocation2 + $0x168] sm:$0xff] %vm225, 0.0
      %272 = vst.msk [vmem:[#allocation2 + $0x170] sm:$0xff] %vm225, 0.0
      %273 = vst.msk [vmem:[#allocation2 + $0x178] sm:$0xff] %vm225, 0.0
      %274 = vst.msk [vmem:[#allocation2 + $0x180] sm:$0xff] %vm225, 0.0
      %275 = vst.msk [vmem:[#allocation2 + $0x188] sm:$0xff] %vm225, 0.0
      %276 = vst.msk [vmem:[#allocation2 + $0x190] sm:$0xff] %vm225, 0.0
      %277 = vst.msk [vmem:[#allocation2 + $0x198] sm:$0xff] %vm225, 0.0
      %278 = vst.msk [vmem:[#allocation2 + $0x1a0] sm:$0xff] %vm225, 0.0
      %279 = vst.msk [vmem:[#allocation2 + $0x1a8] sm:$0xff] %vm225, 0.0
      %280 = vst.msk [vmem:[#allocation2 + $0x1b0] sm:$0xff] %vm225, 0.0
      %281 = vst.msk [vmem:[#allocation2 + $0x1b8] sm:$0xff] %vm225, 0.0
      %282 = vst.msk [vmem:[#allocation2 + $0x1c0] sm:$0xff] %vm225, 0.0
      %283 = vst.msk [vmem:[#allocation2 + $0x1c8] sm:$0xff] %vm225, 0.0
      %284 = vst.msk [vmem:[#allocation2 + $0x1d0] sm:$0xff] %vm225, 0.0
      %285 = vst.msk [vmem:[#allocation2 + $0x1d8] sm:$0xff] %vm225, 0.0
      %286 = vst.msk [vmem:[#allocation2 + $0x1e0] sm:$0xff] %vm225, 0.0
      %287 = vst.msk [vmem:[#allocation2 + $0x1e8] sm:$0xff] %vm225, 0.0
      %288 = vst.msk [vmem:[#allocation2 + $0x1f0] sm:$0xff] %vm225, 0.0
      %289 = vst.msk [vmem:[#allocation2 + $0x1f8] sm:$0xff] %vm225, 0.0
      %290 = vst.msk [vmem:[#allocation2 + $0x200] sm:$0xff] %vm225, 0.0
      %291 = vst.msk [vmem:[#allocation2 + $0x208] sm:$0xff] %vm225, 0.0
      %292 = vst.msk [vmem:[#allocation2 + $0x210] sm:$0xff] %vm225, 0.0
      %293 = vst.msk [vmem:[#allocation2 + $0x218] sm:$0xff] %vm225, 0.0
      %294 = vst.msk [vmem:[#allocation2 + $0x220] sm:$0xff] %vm225, 0.0
      %295 = vst.msk [vmem:[#allocation2 + $0x228] sm:$0xff] %vm225, 0.0
      %296 = vst.msk [vmem:[#allocation2 + $0x230] sm:$0xff] %vm225, 0.0
      %297 = vst.msk [vmem:[#allocation2 + $0x238] sm:$0xff] %vm225, 0.0
      %v298 = vld [vmem:[%s219] sm:$0xff]
      %v299 = vld [vmem:[%s219 + $0x8] sm:$0xff]
      %v300 = vld [vmem:[%s219 + $0x10] sm:$0xff]
      %v301 = vld [vmem:[%s219 + $0x18] sm:$0xff]
      %v302 = vld [vmem:[%s219 + $0x20] sm:$0xff]
      %v303 = vld [vmem:[%s219 + $0x28] sm:$0xff]
      %v304 = vld [vmem:[%s219 + $0x30] sm:$0xff]
      %v305 = vld [vmem:[%s219 + $0x38] sm:$0xff]
      %v306 = vld [vmem:[%s219 + $0x40] sm:$0xff]
      %v307 = vld [vmem:[%s219 + $0x48] sm:$0xff]
      %v308 = vld [vmem:[%s219 + $0x50] sm:$0xff]
      %v309 = vld [vmem:[%s219 + $0x58] sm:$0xff]
      %v310 = vld [vmem:[%s219 + $0x60] sm:$0xff]
      %v311 = vld [vmem:[%s219 + $0x68] sm:$0xff]
      %v312 = vld [vmem:[%s219 + $0x70] sm:$0xff]
      %v313 = vld [vmem:[%s219 + $0x78] sm:$0xff]
      %v314 = vld [vmem:[%s219 + $0x80] sm:$0xff]
      %v315 = vld [vmem:[%s219 + $0x88] sm:$0xff]
      %v316 = vld [vmem:[%s219 + $0x90] sm:$0xff]
      %v317 = vld [vmem:[%s219 + $0x98] sm:$0xff]
      %v318 = vld [vmem:[%s219 + $0xa0] sm:$0xff]
      %v319 = vld [vmem:[%s219 + $0xa8] sm:$0xff]
      %v320 = vld [vmem:[%s219 + $0xb0] sm:$0xff]
      %v321 = vld [vmem:[%s219 + $0xb8] sm:$0xff]
      %v322 = vld [vmem:[%s219 + $0xc0] sm:$0xff]
      %v323 = vld [vmem:[%s219 + $0xc8] sm:$0xff]
      %v324 = vld [vmem:[%s219 + $0xd0] sm:$0xff]
      %v325 = vld [vmem:[%s219 + $0xd8] sm:$0xff]
      %v326 = vld [vmem:[%s219 + $0xe0] sm:$0xff]
      %v327 = vld [vmem:[%s219 + $0xe8] sm:$0xff]
      %v328 = vld [vmem:[%s219 + $0xf0] sm:$0xff]
      %v329 = vld [vmem:[%s219 + $0xf8] sm:$0xff]
      %s330 = scalar_lea.vmem [#allocation2], 32
      %331 = vst.msk [vmem:[%s330 + $0x8] sm:$0xff] %vm225, %v298
      %332 = vst.msk [vmem:[%s330 + $0x10] sm:$0xff] %vm225, %v299
      %333 = vst.msk [vmem:[%s330 + $0x28] sm:$0xff] %vm225, %v300
      %334 = vst.msk [vmem:[%s330 + $0x30] sm:$0xff] %vm225, %v301
      %335 = vst.msk [vmem:[%s330 + $0x48] sm:$0xff] %vm225, %v302
      %336 = vst.msk [vmem:[%s330 + $0x50] sm:$0xff] %vm225, %v303
      %337 = vst.msk [vmem:[%s330 + $0x68] sm:$0xff] %vm225, %v304
      %338 = vst.msk [vmem:[%s330 + $0x70] sm:$0xff] %vm225, %v305
      %339 = vst.msk [vmem:[%s330 + $0x88] sm:$0xff] %vm225, %v306
      %340 = vst.msk [vmem:[%s330 + $0x90] sm:$0xff] %vm225, %v307
      %341 = vst.msk [vmem:[%s330 + $0xa8] sm:$0xff] %vm225, %v308
      %342 = vst.msk [vmem:[%s330 + $0xb0] sm:$0xff] %vm225, %v309
      %343 = vst.msk [vmem:[%s330 + $0xc8] sm:$0xff] %vm225, %v310
      %344 = vst.msk [vmem:[%s330 + $0xd0] sm:$0xff] %vm225, %v311
      %345 = vst.msk [vmem:[%s330 + $0xe8] sm:$0xff] %vm225, %v312
      %346 = vst.msk [vmem:[%s330 + $0xf0] sm:$0xff] %vm225, %v313
      %347 = vst.msk [vmem:[%s330 + $0x108] sm:$0xff] %vm225, %v314
      %348 = vst.msk [vmem:[%s330 + $0x110] sm:$0xff] %vm225, %v315
      %349 = vst.msk [vmem:[%s330 + $0x128] sm:$0xff] %vm225, %v316
      %350 = vst.msk [vmem:[%s330 + $0x130] sm:$0xff] %vm225, %v317
      %351 = vst.msk [vmem:[%s330 + $0x148] sm:$0xff] %vm225, %v318
      %352 = vst.msk [vmem:[%s330 + $0x150] sm:$0xff] %vm225, %v319
      %353 = vst.msk [vmem:[%s330 + $0x168] sm:$0xff] %vm225, %v320
      %354 = vst.msk [vmem:[%s330 + $0x170] sm:$0xff] %vm225, %v321
      %355 = vst.msk [vmem:[%s330 + $0x188] sm:$0xff] %vm225, %v322
      %356 = vst.msk [vmem:[%s330 + $0x190] sm:$0xff] %vm225, %v323
      %357 = vst.msk [vmem:[%s330 + $0x1a8] sm:$0xff] %vm225, %v324
      %358 = vst.msk [vmem:[%s330 + $0x1b0] sm:$0xff] %vm225, %v325
      %359 = vst.msk [vmem:[%s330 + $0x1c8] sm:$0xff] %vm225, %v326
      %360 = vst.msk [vmem:[%s330 + $0x1d0] sm:$0xff] %vm225, %v327
      %361 = vst.msk [vmem:[%s330 + $0x1e8] sm:$0xff] %vm225, %v328
      %362 = vst.msk [vmem:[%s330 + $0x1f0] sm:$0xff] %vm225, %v329
      %vm363 = vcmask 64512
      %364 = vst.msk [vmem:[#allocation4] sm:$0xff] %vm363, 0.0
      %365 = vst.msk [vmem:[#allocation4 + $0x8] sm:$0xff] %vm363, 0.0
      %366 = vst.msk [vmem:[#allocation4 + $0x10] sm:$0xff] %vm363, 0.0
      %367 = vst.msk [vmem:[#allocation4 + $0x18] sm:$0xff] %vm363, 0.0
      %368 = vst.msk [vmem:[#allocation4 + $0x20] sm:$0xff] %vm363, 0.0
      %369 = vst.msk [vmem:[#allocation4 + $0x28] sm:$0xff] %vm363, 0.0
      %370 = vst.msk [vmem:[#allocation4 + $0x30] sm:$0xff] %vm363, 0.0
      %371 = vst.msk [vmem:[#allocation4 + $0x38] sm:$0xff] %vm363, 0.0
      %372 = vst.msk [vmem:[#allocation4 + $0x40] sm:$0xff] %vm363, 0.0
      %373 = vst.msk [vmem:[#allocation4 + $0x48] sm:$0xff] %vm363, 0.0
      %374 = vst.msk [vmem:[#allocation4 + $0x50] sm:$0xff] %vm363, 0.0
      %375 = vst.msk [vmem:[#allocation4 + $0x58] sm:$0xff] %vm363, 0.0
      %376 = vst.msk [vmem:[#allocation4 + $0x60] sm:$0xff] %vm363, 0.0
      %377 = vst.msk [vmem:[#allocation4 + $0x68] sm:$0xff] %vm363, 0.0
      %378 = vst.msk [vmem:[#allocation4 + $0x70] sm:$0xff] %vm363, 0.0
      %379 = vst.msk [vmem:[#allocation4 + $0x78] sm:$0xff] %vm363, 0.0
      %380 = vst.msk [vmem:[#allocation4 + $0x80] sm:$0xff] %vm363, 0.0
      %381 = vst.msk [vmem:[#allocation4 + $0x88] sm:$0xff] %vm363, 0.0
      %382 = vst.msk [vmem:[#allocation4 + $0x90] sm:$0xff] %vm363, 0.0
      %383 = vst.msk [vmem:[#allocation4 + $0x98] sm:$0xff] %vm363, 0.0
      %384 = vst.msk [vmem:[#allocation4 + $0xa0] sm:$0xff] %vm363, 0.0
      %385 = vst.msk [vmem:[#allocation4 + $0xa8] sm:$0xff] %vm363, 0.0
      %386 = vst.msk [vmem:[#allocation4 + $0xb0] sm:$0xff] %vm363, 0.0
      %387 = vst.msk [vmem:[#allocation4 + $0xb8] sm:$0xff] %vm363, 0.0
      %388 = vst.msk [vmem:[#allocation4 + $0xc0] sm:$0xff] %vm363, 0.0
      %389 = vst.msk [vmem:[#allocation4 + $0xc8] sm:$0xff] %vm363, 0.0
      %390 = vst.msk [vmem:[#allocation4 + $0xd0] sm:$0xff] %vm363, 0.0
      %391 = vst.msk [vmem:[#allocation4 + $0xd8] sm:$0xff] %vm363, 0.0
      %392 = vst.msk [vmem:[#allocation4 + $0xe0] sm:$0xff] %vm363, 0.0
      %393 = vst.msk [vmem:[#allocation4 + $0xe8] sm:$0xff] %vm363, 0.0
      %394 = vst.msk [vmem:[#allocation4 + $0xf0] sm:$0xff] %vm363, 0.0
      %395 = vst.msk [vmem:[#allocation4 + $0xf8] sm:$0xff] %vm363, 0.0
      %v396 = vld [vmem:[#allocation2] sm:$0xff]
      %v397 = vld [vmem:[#allocation2 + $0x8] sm:$0xff]
      %v398 = vld [vmem:[#allocation2 + $0x10] sm:$0xff]
      %v399 = vld [vmem:[#allocation2 + $0x18] sm:$0xff]
      %v400 = vld [vmem:[#allocation2 + $0x20] sm:$0xff]
      %v401 = vld [vmem:[#allocation2 + $0x28] sm:$0xff]
      %v402 = vld [vmem:[#allocation2 + $0x30] sm:$0xff]
      %v403 = vld [vmem:[#allocation2 + $0x38] sm:$0xff]
      %v404 = vld [vmem:[#allocation2 + $0x40] sm:$0xff]
      %v405 = vld [vmem:[#allocation2 + $0x48] sm:$0xff]
      %v406 = vld [vmem:[#allocation2 + $0x50] sm:$0xff]
      %v407 = vld [vmem:[#allocation2 + $0x58] sm:$0xff]
      %v408 = vld [vmem:[#allocation2 + $0x60] sm:$0xff]
      %v409 = vld [vmem:[#allocation2 + $0x68] sm:$0xff]
      %v410 = vld [vmem:[#allocation2 + $0x70] sm:$0xff]
      %v411 = vld [vmem:[#allocation2 + $0x78] sm:$0xff]
      %v412 = vld [vmem:[#allocation2 + $0x80] sm:$0xff]
      %v413 = vld [vmem:[#allocation2 + $0x88] sm:$0xff]
      %v414 = vld [vmem:[#allocation2 + $0x90] sm:$0xff]
      %v415 = vld [vmem:[#allocation2 + $0x98] sm:$0xff]
      %v416 = vld [vmem:[#allocation2 + $0xa0] sm:$0xff]
      %v417 = vld [vmem:[#allocation2 + $0xa8] sm:$0xff]
      %v418 = vld [vmem:[#allocation2 + $0xb0] sm:$0xff]
      %v419 = vld [vmem:[#allocation2 + $0xb8] sm:$0xff]
      %v420 = vld [vmem:[#allocation2 + $0xc0] sm:$0xff]
      %v421 = vld [vmem:[#allocation2 + $0xc8] sm:$0xff]
      %v422 = vld [vmem:[#allocation2 + $0xd0] sm:$0xff]
      %v423 = vld [vmem:[#allocation2 + $0xd8] sm:$0xff]
      %v424 = vld [vmem:[#allocation2 + $0xe0] sm:$0xff]
      %v425 = vld [vmem:[#allocation2 + $0xe8] sm:$0xff]
      %v426 = vld [vmem:[#allocation2 + $0xf0] sm:$0xff]
      %v427 = vld [vmem:[#allocation2 + $0xf8] sm:$0xff]
      %v428 = vld [vmem:[#allocation2 + $0x100] sm:$0xff]
      %v429 = vld [vmem:[#allocation2 + $0x108] sm:$0xff]
      %v430 = vld [vmem:[#allocation2 + $0x110] sm:$0xff]
      %v431 = vld [vmem:[#allocation2 + $0x118] sm:$0xff]
      %v432 = vld [vmem:[#allocation2 + $0x120] sm:$0xff]
      %v433 = vld [vmem:[#allocation2 + $0x128] sm:$0xff]
      %v434 = vld [vmem:[#allocation2 + $0x130] sm:$0xff]
      %v435 = vld [vmem:[#allocation2 + $0x138] sm:$0xff]
      %v436 = vld [vmem:[#allocation2 + $0x140] sm:$0xff]
      %v437 = vld [vmem:[#allocation2 + $0x148] sm:$0xff]
      %v438 = vld [vmem:[#allocation2 + $0x150] sm:$0xff]
      %v439 = vld [vmem:[#allocation2 + $0x158] sm:$0xff]
      %v440 = vld [vmem:[#allocation2 + $0x160] sm:$0xff]
      %v441 = vld [vmem:[#allocation2 + $0x168] sm:$0xff]
      %v442 = vld [vmem:[#allocation2 + $0x170] sm:$0xff]
      %v443 = vld [vmem:[#allocation2 + $0x178] sm:$0xff]
      %v444 = vld [vmem:[#allocation2 + $0x180] sm:$0xff]
      %v445 = vld [vmem:[#allocation2 + $0x188] sm:$0xff]
      %v446 = vld [vmem:[#allocation2 + $0x190] sm:$0xff]
      %v447 = vld [vmem:[#allocation2 + $0x198] sm:$0xff]
      %v448 = vld [vmem:[#allocation2 + $0x1a0] sm:$0xff]
      %v449 = vld [vmem:[#allocation2 + $0x1a8] sm:$0xff]
      %v450 = vld [vmem:[#allocation2 + $0x1b0] sm:$0xff]
      %v451 = vld [vmem:[#allocation2 + $0x1b8] sm:$0xff]
      %v452 = vld [vmem:[#allocation2 + $0x1c0] sm:$0xff]
      %v453 = vld [vmem:[#allocation2 + $0x1c8] sm:$0xff]
      %v454 = vld [vmem:[#allocation2 + $0x1d0] sm:$0xff]
      %v455 = vld [vmem:[#allocation2 + $0x1d8] sm:$0xff]
      %v456 = vld [vmem:[#allocation2 + $0x1e0] sm:$0xff]
      %v457 = vld [vmem:[#allocation2 + $0x1e8] sm:$0xff]
      %v458 = vld [vmem:[#allocation2 + $0x1f0] sm:$0xff]
      %v459 = vld [vmem:[#allocation2 + $0x1f8] sm:$0xff]
      %v460 = vld [vmem:[#allocation2 + $0x200] sm:$0xff]
      %v461 = vld [vmem:[#allocation2 + $0x208] sm:$0xff]
      %v462 = vld [vmem:[#allocation2 + $0x210] sm:$0xff]
      %v463 = vld [vmem:[#allocation2 + $0x218] sm:$0xff]
      %v464 = vld [vmem:[#allocation2 + $0x220] sm:$0xff]
      %v465 = vld [vmem:[#allocation2 + $0x228] sm:$0xff]
      %v466 = vld [vmem:[#allocation2 + $0x230] sm:$0xff]
      %v467 = vld [vmem:[#allocation2 + $0x238] sm:$0xff]
      %v468 = vld [vmem:[#allocation4] sm:$0xff]
      %v469 = vld [vmem:[#allocation4 + $0x8] sm:$0xff]
      %v470 = vld [vmem:[#allocation4 + $0x10] sm:$0xff]
      %v471 = vld [vmem:[#allocation4 + $0x18] sm:$0xff]
      %v472 = vld [vmem:[#allocation4 + $0x20] sm:$0xff]
      %v473 = vld [vmem:[#allocation4 + $0x28] sm:$0xff]
      %v474 = vld [vmem:[#allocation4 + $0x30] sm:$0xff]
      %v475 = vld [vmem:[#allocation4 + $0x38] sm:$0xff]
      %v476 = vld [vmem:[#allocation4 + $0x40] sm:$0xff]
      %v477 = vld [vmem:[#allocation4 + $0x48] sm:$0xff]
      %v478 = vld [vmem:[#allocation4 + $0x50] sm:$0xff]
      %v479 = vld [vmem:[#allocation4 + $0x58] sm:$0xff]
      %v480 = vld [vmem:[#allocation4 + $0x60] sm:$0xff]
      %v481 = vld [vmem:[#allocation4 + $0x68] sm:$0xff]
      %v482 = vld [vmem:[#allocation4 + $0x70] sm:$0xff]
      %v483 = vld [vmem:[#allocation4 + $0x78] sm:$0xff]
      %v484 = vld [vmem:[#allocation4 + $0x80] sm:$0xff]
      %v485 = vld [vmem:[#allocation4 + $0x88] sm:$0xff]
      %v486 = vld [vmem:[#allocation4 + $0x90] sm:$0xff]
      %v487 = vld [vmem:[#allocation4 + $0x98] sm:$0xff]
      %v488 = vld [vmem:[#allocation4 + $0xa0] sm:$0xff]
      %v489 = vld [vmem:[#allocation4 + $0xa8] sm:$0xff]
      %v490 = vld [vmem:[#allocation4 + $0xb0] sm:$0xff]
      %v491 = vld [vmem:[#allocation4 + $0xb8] sm:$0xff]
      %v492 = vld [vmem:[#allocation4 + $0xc0] sm:$0xff]
      %v493 = vld [vmem:[#allocation4 + $0xc8] sm:$0xff]
      %v494 = vld [vmem:[#allocation4 + $0xd0] sm:$0xff]
      %v495 = vld [vmem:[#allocation4 + $0xd8] sm:$0xff]
      %v496 = vld [vmem:[#allocation4 + $0xe0] sm:$0xff]
      %v497 = vld [vmem:[#allocation4 + $0xe8] sm:$0xff]
      %v498 = vld [vmem:[#allocation4 + $0xf0] sm:$0xff]
      %v499 = vld [vmem:[#allocation4 + $0xf8] sm:$0xff]
      %vm548 = vcmask 1040384
      %v549 = vrot.slane %v396, 7
      %v550 = vrot.slane %v397, 7
      %v551 = vsel %vm548, %v549, %v550
      %v552 = vrot.slane %v398, 7
      %v553 = vsel %vm548, %v550, %v552
      %v554 = vrot.slane %v400, 7
      %v555 = vrot.slane %v401, 7
      %v556 = vsel %vm548, %v554, %v555
      %v557 = vrot.slane %v402, 7
      %v558 = vsel %vm548, %v555, %v557
      %v559 = vrot.slane %v404, 7
      %v560 = vrot.slane %v405, 7
      %v561 = vsel %vm548, %v559, %v560
      %v562 = vrot.slane %v406, 7
      %v563 = vsel %vm548, %v560, %v562
      %v564 = vrot.slane %v408, 7
      %v565 = vrot.slane %v409, 7
      %v566 = vsel %vm548, %v564, %v565
      %v567 = vrot.slane %v410, 7
      %v568 = vsel %vm548, %v565, %v567
      %v569 = vrot.slane %v412, 7
      %v570 = vrot.slane %v413, 7
      %v571 = vsel %vm548, %v569, %v570
      %v572 = vrot.slane %v414, 7
      %v573 = vsel %vm548, %v570, %v572
      %v574 = vrot.slane %v416, 7
      %v575 = vrot.slane %v417, 7
      %v576 = vsel %vm548, %v574, %v575
      %v577 = vrot.slane %v418, 7
      %v578 = vsel %vm548, %v575, %v577
      %v579 = vrot.slane %v420, 7
      %v580 = vrot.slane %v421, 7
      %v581 = vsel %vm548, %v579, %v580
      %v582 = vrot.slane %v422, 7
      %v583 = vsel %vm548, %v580, %v582
      %v584 = vrot.slane %v424, 7
      %v585 = vrot.slane %v425, 7
      %v586 = vsel %vm548, %v584, %v585
      %v587 = vrot.slane %v426, 7
      %v588 = vsel %vm548, %v585, %v587
      %v589 = vrot.slane %v428, 7
      %v590 = vrot.slane %v429, 7
      %v591 = vsel %vm548, %v589, %v590
      %v592 = vrot.slane %v430, 7
      %v593 = vsel %vm548, %v590, %v592
      %v594 = vrot.slane %v432, 7
      %v595 = vrot.slane %v433, 7
      %v596 = vsel %vm548, %v594, %v595
      %v597 = vrot.slane %v434, 7
      %v598 = vsel %vm548, %v595, %v597
      %v599 = vrot.slane %v436, 7
      %v600 = vrot.slane %v437, 7
      %v601 = vsel %vm548, %v599, %v600
      %v602 = vrot.slane %v438, 7
      %v603 = vsel %vm548, %v600, %v602
      %v604 = vrot.slane %v440, 7
      %v605 = vrot.slane %v441, 7
      %v606 = vsel %vm548, %v604, %v605
      %v607 = vrot.slane %v442, 7
      %v608 = vsel %vm548, %v605, %v607
      %v609 = vrot.slane %v444, 7
      %v610 = vrot.slane %v445, 7
      %v611 = vsel %vm548, %v609, %v610
      %v612 = vrot.slane %v446, 7
      %v613 = vsel %vm548, %v610, %v612
      %v614 = vrot.slane %v448, 7
      %v615 = vrot.slane %v449, 7
      %v616 = vsel %vm548, %v614, %v615
      %v617 = vrot.slane %v450, 7
      %v618 = vsel %vm548, %v615, %v617
      %v619 = vrot.slane %v452, 7
      %v620 = vrot.slane %v453, 7
      %v621 = vsel %vm548, %v619, %v620
      %v622 = vrot.slane %v454, 7
      %v623 = vsel %vm548, %v620, %v622
      %v624 = vrot.slane %v456, 7
      %v625 = vrot.slane %v457, 7
      %v626 = vsel %vm548, %v624, %v625
      %v627 = vrot.slane %v458, 7
      %v628 = vsel %vm548, %v625, %v627
      %v629 = vld [vmem:[%s1] sm:$0xf]
      %v630 = vsel %vm225, %v551, 0
      %v632 = vsel %vm225, %v553, 0
      %v634 = vsel %vm225, %v556, 0
      %v636 = vsel %vm225, %v558, 0
      %v638 = vsel %vm225, %v561, 0
      %v640 = vsel %vm225, %v563, 0
      %v642 = vsel %vm225, %v566, 0
      %v644 = vsel %vm225, %v568, 0
      %v646 = vsel %vm225, %v571, 0
      %v648 = vsel %vm225, %v573, 0
      %v650 = vsel %vm225, %v576, 0
      %v652 = vsel %vm225, %v578, 0
      %v654 = vsel %vm225, %v581, 0
      %v656 = vsel %vm225, %v583, 0
      %v658 = vsel %vm225, %v586, 0
      %v660 = vsel %vm225, %v588, 0
      %v662 = vsel %vm225, %v591, 0
      %v664 = vsel %vm225, %v593, 0
      %v666 = vsel %vm225, %v596, 0
      %v668 = vsel %vm225, %v598, 0
      %v670 = vsel %vm225, %v601, 0
      %v672 = vsel %vm225, %v603, 0
      %v674 = vsel %vm225, %v606, 0
      %v676 = vsel %vm225, %v608, 0
      %v678 = vsel %vm225, %v611, 0
      %v680 = vsel %vm225, %v613, 0
      %v682 = vsel %vm225, %v616, 0
      %v684 = vsel %vm225, %v618, 0
      %v686 = vsel %vm225, %v621, 0
      %v688 = vsel %vm225, %v623, 0
      %v690 = vsel %vm225, %v626, 0
      %v692 = vsel %vm225, %v628, 0
      %vm694 = vcmask 1043456
      %v696 = vsel %vm694, %v629, 0
      %698 = vmatprep.subr.mxu0 0.0
      %699 = vmatpush1.msra.mxu0 0.0
      %700 = vmatprep.subr.mxu0 0.0
      %701 = vmatpush1.msra.mxu0 0.0
      %702 = vmatprep.subr.mxu0 0.0
      %703 = vmatpush1.msra.mxu0 0.0
      %704 = vmatprep.subr.mxu0 0.0
      %705 = vmatpush1.msra.mxu0 0.0
      %706 = vmatprep.subr.mxu0 0.0
      %707 = vmatpush1.msra.mxu0 0.0
      %708 = vmatprep.subr.mxu0 0.0
      %709 = vmatpush1.msra.mxu0 0.0
      %710 = vmatprep.subr.mxu0 0.0
      %711 = vmatpush1.msra.mxu0 0.0
      %712 = vmatprep.subr.mxu0 0.0
      %713 = vmatpush1.msra.mxu0 0.0
      %714 = vmatprep.subr.mxu0 0.0
      %715 = vmatpush1.msra.mxu0 0.0
      %716 = vmatprep.subr.mxu0 0.0
      %717 = vmatpush1.msra.mxu0 0.0
      %718 = vmatprep.subr.mxu0 0.0
      %719 = vmatpush1.msra.mxu0 0.0
      %720 = vmatprep.subr.mxu0 0.0
      %721 = vmatpush1.msra.mxu0 0.0
      %722 = vmatprep.subr.mxu0 0.0
      %723 = vmatpush1.msra.mxu0 0.0
      %724 = vmatprep.subr.mxu0 0.0
      %725 = vmatpush1.msra.mxu0 0.0
      %726 = vmatprep.subr.mxu0 0.0
      %727 = vmatpush1.msra.mxu0 0.0
      %728 = vmatprep.subr.mxu0 0.0
      %729 = vmatpush1.msra.mxu0 %v696
      %730 = vmatprep.subr.mxu0 0.0
      %731 = vmatpush2.msra.mxu0 0.0
      %732 = vmatprep.subr.mxu0 0.0
      %733 = vmatpush2.msra.mxu0 0.0
      %734 = vmatprep.subr.mxu0 0.0
      %735 = vmatpush2.msra.mxu0 0.0
      %736 = vmatprep.subr.mxu0 0.0
      %737 = vmatpush2.msra.mxu0 0.0
      %738 = vmatprep.subr.mxu0 0.0
      %739 = vmatpush2.msra.mxu0 0.0
      %740 = vmatprep.subr.mxu0 0.0
      %741 = vmatpush2.msra.mxu0 0.0
      %742 = vmatprep.subr.mxu0 0.0
      %743 = vmatpush2.msra.mxu0 0.0
      %744 = vmatprep.subr.mxu0 0.0
      %745 = vmatpush2.msra.mxu0 0.0
      %746 = vmatprep.subr.mxu0 0.0
      %747 = vmatpush2.msra.mxu0 0.0
      %748 = vmatprep.subr.mxu0 0.0
      %749 = vmatpush2.msra.mxu0 0.0
      %750 = vmatprep.subr.mxu0 0.0
      %751 = vmatpush2.msra.mxu0 0.0
      %752 = vmatprep.subr.mxu0 0.0
      %753 = vmatpush2.msra.mxu0 0.0
      %754 = vmatprep.subr.mxu0 0.0
      %755 = vmatpush2.msra.mxu0 0.0
      %756 = vmatprep.subr.mxu0 0.0
      %757 = vmatpush2.msra.mxu0 0.0
      %758 = vmatprep.subr.mxu0 0.0
      %759 = vmatpush2.msra.mxu0 0.0
      %760 = vmatprep.subr.mxu0 0.0
      %761 = vmatpush2.msra.mxu0 0.0
      %762 = vmatprep.mubr.f32.mxu0 0.0
      %763 = vmatmul.mubr.f32.gmra.mxu0 %v630
      %v764 = vpop.f32.mrf.mxu0
      %v765 = vadd.f32 0.0, %v764
      %v766 = vpop.f32.mrf.mxu0
      %767 = vmatprep.mubr.f32.mxu0 0.0
      %768 = vmatmul.mubr.f32.gmra.mxu0 %v632
      %v769 = vpop.f32.mrf.mxu0
      %v770 = vadd.f32 0.0, %v769
      %v771 = vpop.f32.mrf.mxu0
      %772 = vmatprep.mubr.f32.mxu0 0.0
      %773 = vmatmul.mubr.f32.gmra.mxu0 %v634
      %v774 = vpop.f32.mrf.mxu0
      %v775 = vadd.f32 0.0, %v774
      %v776 = vpop.f32.mrf.mxu0
      %777 = vmatprep.mubr.f32.mxu0 0.0
      %778 = vmatmul.mubr.f32.gmra.mxu0 %v636
      %v779 = vpop.f32.mrf.mxu0
      %v780 = vadd.f32 0.0, %v779
      %v781 = vpop.f32.mrf.mxu0
      %782 = vmatprep.mubr.f32.mxu0 0.0
      %783 = vmatmul.mubr.f32.gmra.mxu0 %v638
      %v784 = vpop.f32.mrf.mxu0
      %v785 = vadd.f32 0.0, %v784
      %v786 = vpop.f32.mrf.mxu0
      %787 = vmatprep.mubr.f32.mxu0 0.0
      %788 = vmatmul.mubr.f32.gmra.mxu0 %v640
      %v789 = vpop.f32.mrf.mxu0
      %v790 = vadd.f32 0.0, %v789
      %v791 = vpop.f32.mrf.mxu0
      %792 = vmatprep.mubr.f32.mxu0 0.0
      %793 = vmatmul.mubr.f32.gmra.mxu0 %v642
      %v794 = vpop.f32.mrf.mxu0
      %v795 = vadd.f32 0.0, %v794
      %v796 = vpop.f32.mrf.mxu0
      %797 = vmatprep.mubr.f32.mxu0 0.0
      %798 = vmatmul.mubr.f32.gmra.mxu0 %v644
      %v799 = vpop.f32.mrf.mxu0
      %v800 = vadd.f32 0.0, %v799
      %v801 = vpop.f32.mrf.mxu0
      %802 = vmatprep.mubr.f32.mxu0 0.0
      %803 = vmatmul.mubr.f32.gmra.mxu0 %v646
      %v804 = vpop.f32.mrf.mxu0
      %v805 = vadd.f32 0.0, %v804
      %v806 = vpop.f32.mrf.mxu0
      %807 = vmatprep.mubr.f32.mxu0 0.0
      %808 = vmatmul.mubr.f32.gmra.mxu0 %v648
      %v809 = vpop.f32.mrf.mxu0
      %v810 = vadd.f32 0.0, %v809
      %v811 = vpop.f32.mrf.mxu0
      %812 = vmatprep.mubr.f32.mxu0 0.0
      %813 = vmatmul.mubr.f32.gmra.mxu0 %v650
      %v814 = vpop.f32.mrf.mxu0
      %v815 = vadd.f32 0.0, %v814
      %v816 = vpop.f32.mrf.mxu0
      %817 = vmatprep.mubr.f32.mxu0 0.0
      %818 = vmatmul.mubr.f32.gmra.mxu0 %v652
      %v819 = vpop.f32.mrf.mxu0
      %v820 = vadd.f32 0.0, %v819
      %v821 = vpop.f32.mrf.mxu0
      %822 = vmatprep.mubr.f32.mxu0 0.0
      %823 = vmatmul.mubr.f32.gmra.mxu0 %v654
      %v824 = vpop.f32.mrf.mxu0
      %v825 = vadd.f32 0.0, %v824
      %v826 = vpop.f32.mrf.mxu0
      %827 = vmatprep.mubr.f32.mxu0 0.0
      %828 = vmatmul.mubr.f32.gmra.mxu0 %v656
      %v829 = vpop.f32.mrf.mxu0
      %v830 = vadd.f32 0.0, %v829
      %v831 = vpop.f32.mrf.mxu0
      %832 = vmatprep.mubr.f32.mxu0 0.0
      %833 = vmatmul.mubr.f32.gmra.mxu0 %v658
      %v834 = vpop.f32.mrf.mxu0
      %v835 = vadd.f32 0.0, %v834
      %v836 = vpop.f32.mrf.mxu0
      %837 = vmatprep.mubr.f32.mxu0 0.0
      %838 = vmatmul.mubr.f32.gmra.mxu0 %v660
      %v839 = vpop.f32.mrf.mxu0
      %v840 = vadd.f32 0.0, %v839
      %v841 = vpop.f32.mrf.mxu0
      %842 = vmatprep.mubr.f32.mxu0 0.0
      %843 = vmatmul.mubr.f32.gmra.mxu0 %v662
      %v844 = vpop.f32.mrf.mxu0
      %v845 = vadd.f32 0.0, %v844
      %v846 = vpop.f32.mrf.mxu0
      %847 = vmatprep.mubr.f32.mxu0 0.0
      %848 = vmatmul.mubr.f32.gmra.mxu0 %v664
      %v849 = vpop.f32.mrf.mxu0
      %v850 = vadd.f32 0.0, %v849
      %v851 = vpop.f32.mrf.mxu0
      %852 = vmatprep.mubr.f32.mxu0 0.0
      %853 = vmatmul.mubr.f32.gmra.mxu0 %v666
      %v854 = vpop.f32.mrf.mxu0
      %v855 = vadd.f32 0.0, %v854
      %v856 = vpop.f32.mrf.mxu0
      %857 = vmatprep.mubr.f32.mxu0 0.0
      %858 = vmatmul.mubr.f32.gmra.mxu0 %v668
      %v859 = vpop.f32.mrf.mxu0
      %v860 = vadd.f32 0.0, %v859
      %v861 = vpop.f32.mrf.mxu0
      %862 = vmatprep.mubr.f32.mxu0 0.0
      %863 = vmatmul.mubr.f32.gmra.mxu0 %v670
      %v864 = vpop.f32.mrf.mxu0
      %v865 = vadd.f32 0.0, %v864
      %v866 = vpop.f32.mrf.mxu0
      %867 = vmatprep.mubr.f32.mxu0 0.0
      %868 = vmatmul.mubr.f32.gmra.mxu0 %v672
      %v869 = vpop.f32.mrf.mxu0
      %v870 = vadd.f32 0.0, %v869
      %v871 = vpop.f32.mrf.mxu0
      %872 = vmatprep.mubr.f32.mxu0 0.0
      %873 = vmatmul.mubr.f32.gmra.mxu0 %v674
      %v874 = vpop.f32.mrf.mxu0
      %v875 = vadd.f32 0.0, %v874
      %v876 = vpop.f32.mrf.mxu0
      %877 = vmatprep.mubr.f32.mxu0 0.0
      %878 = vmatmul.mubr.f32.gmra.mxu0 %v676
      %v879 = vpop.f32.mrf.mxu0
      %v880 = vadd.f32 0.0, %v879
      %v881 = vpop.f32.mrf.mxu0
      %882 = vmatprep.mubr.f32.mxu0 0.0
      %883 = vmatmul.mubr.f32.gmra.mxu0 %v678
      %v884 = vpop.f32.mrf.mxu0
      %v885 = vadd.f32 0.0, %v884
      %v886 = vpop.f32.mrf.mxu0
      %887 = vmatprep.mubr.f32.mxu0 0.0
      %888 = vmatmul.mubr.f32.gmra.mxu0 %v680
      %v889 = vpop.f32.mrf.mxu0
      %v890 = vadd.f32 0.0, %v889
      %v891 = vpop.f32.mrf.mxu0
      %892 = vmatprep.mubr.f32.mxu0 0.0
      %893 = vmatmul.mubr.f32.gmra.mxu0 %v682
      %v894 = vpop.f32.mrf.mxu0
      %v895 = vadd.f32 0.0, %v894
      %v896 = vpop.f32.mrf.mxu0
      %897 = vmatprep.mubr.f32.mxu0 0.0
      %898 = vmatmul.mubr.f32.gmra.mxu0 %v684
      %v899 = vpop.f32.mrf.mxu0
      %v900 = vadd.f32 0.0, %v899
      %v901 = vpop.f32.mrf.mxu0
      %902 = vmatprep.mubr.f32.mxu0 0.0
      %903 = vmatmul.mubr.f32.gmra.mxu0 %v686
      %v904 = vpop.f32.mrf.mxu0
      %v905 = vadd.f32 0.0, %v904
      %v906 = vpop.f32.mrf.mxu0
      %907 = vmatprep.mubr.f32.mxu0 0.0
      %908 = vmatmul.mubr.f32.gmra.mxu0 %v688
      %v909 = vpop.f32.mrf.mxu0
      %v910 = vadd.f32 0.0, %v909
      %v911 = vpop.f32.mrf.mxu0
      %912 = vmatprep.mubr.f32.mxu0 0.0
      %913 = vmatmul.mubr.f32.gmra.mxu0 %v690
      %v914 = vpop.f32.mrf.mxu0
      %v915 = vadd.f32 0.0, %v914
      %v916 = vpop.f32.mrf.mxu0
      %917 = vmatprep.mubr.f32.mxu0 0.0
      %918 = vmatmul.mubr.f32.gmra.mxu0 %v692
      %v919 = vpop.f32.mrf.mxu0
      %v920 = vadd.f32 0.0, %v919
      %v921 = vpop.f32.mrf.mxu0
      %922 = vdwg.mxu0
      %v923 = vadd.f32 %v468, %v765
      %v924 = vadd.f32 %v469, %v770
      %v925 = vadd.f32 %v470, %v775
      %v926 = vadd.f32 %v471, %v780
      %v927 = vadd.f32 %v472, %v785
      %v928 = vadd.f32 %v473, %v790
      %v929 = vadd.f32 %v474, %v795
      %v930 = vadd.f32 %v475, %v800
      %v931 = vadd.f32 %v476, %v805
      %v932 = vadd.f32 %v477, %v810
      %v933 = vadd.f32 %v478, %v815
      %v934 = vadd.f32 %v479, %v820
      %v935 = vadd.f32 %v480, %v825
      %v936 = vadd.f32 %v481, %v830
      %v937 = vadd.f32 %v482, %v835
      %v938 = vadd.f32 %v483, %v840
      %v939 = vadd.f32 %v484, %v845
      %v940 = vadd.f32 %v485, %v850
      %v941 = vadd.f32 %v486, %v855
      %v942 = vadd.f32 %v487, %v860
      %v943 = vadd.f32 %v488, %v865
      %v944 = vadd.f32 %v489, %v870
      %v945 = vadd.f32 %v490, %v875
      %v946 = vadd.f32 %v491, %v880
      %v947 = vadd.f32 %v492, %v885
      %v948 = vadd.f32 %v493, %v890
      %v949 = vadd.f32 %v494, %v895
      %v950 = vadd.f32 %v495, %v900
      %v951 = vadd.f32 %v496, %v905
      %v952 = vadd.f32 %v497, %v910
      %v953 = vadd.f32 %v498, %v915
      %v954 = vadd.f32 %v499, %v920
      %955 = vst.msk [vmem:[#allocation4] sm:$0xff] %vm363, %v923
      %956 = vst.msk [vmem:[#allocation4 + $0x8] sm:$0xff] %vm363, %v924
      %957 = vst.msk [vmem:[#allocation4 + $0x10] sm:$0xff] %vm363, %v925
      %958 = vst.msk [vmem:[#allocation4 + $0x18] sm:$0xff] %vm363, %v926
      %959 = vst.msk [vmem:[#allocation4 + $0x20] sm:$0xff] %vm363, %v927
      %960 = vst.msk [vmem:[#allocation4 + $0x28] sm:$0xff] %vm363, %v928
      %961 = vst.msk [vmem:[#allocation4 + $0x30] sm:$0xff] %vm363, %v929
      %962 = vst.msk [vmem:[#allocation4 + $0x38] sm:$0xff] %vm363, %v930
      %963 = vst.msk [vmem:[#allocation4 + $0x40] sm:$0xff] %vm363, %v931
      %964 = vst.msk [vmem:[#allocation4 + $0x48] sm:$0xff] %vm363, %v932
      %965 = vst.msk [vmem:[#allocation4 + $0x50] sm:$0xff] %vm363, %v933
      %966 = vst.msk [vmem:[#allocation4 + $0x58] sm:$0xff] %vm363, %v934
      %967 = vst.msk [vmem:[#allocation4 + $0x60] sm:$0xff] %vm363, %v935
      %968 = vst.msk [vmem:[#allocation4 + $0x68] sm:$0xff] %vm363, %v936
      %969 = vst.msk [vmem:[#allocation4 + $0x70] sm:$0xff] %vm363, %v937
      %970 = vst.msk [vmem:[#allocation4 + $0x78] sm:$0xff] %vm363, %v938
      %971 = vst.msk [vmem:[#allocation4 + $0x80] sm:$0xff] %vm363, %v939
      %972 = vst.msk [vmem:[#allocation4 + $0x88] sm:$0xff] %vm363, %v940
      %973 = vst.msk [vmem:[#allocation4 + $0x90] sm:$0xff] %vm363, %v941
      %974 = vst.msk [vmem:[#allocation4 + $0x98] sm:$0xff] %vm363, %v942
      %975 = vst.msk [vmem:[#allocation4 + $0xa0] sm:$0xff] %vm363, %v943
      %976 = vst.msk [vmem:[#allocation4 + $0xa8] sm:$0xff] %vm363, %v944
      %977 = vst.msk [vmem:[#allocation4 + $0xb0] sm:$0xff] %vm363, %v945
      %978 = vst.msk [vmem:[#allocation4 + $0xb8] sm:$0xff] %vm363, %v946
      %979 = vst.msk [vmem:[#allocation4 + $0xc0] sm:$0xff] %vm363, %v947
      %980 = vst.msk [vmem:[#allocation4 + $0xc8] sm:$0xff] %vm363, %v948
      %981 = vst.msk [vmem:[#allocation4 + $0xd0] sm:$0xff] %vm363, %v949
      %982 = vst.msk [vmem:[#allocation4 + $0xd8] sm:$0xff] %vm363, %v950
      %983 = vst.msk [vmem:[#allocation4 + $0xe0] sm:$0xff] %vm363, %v951
      %984 = vst.msk [vmem:[#allocation4 + $0xe8] sm:$0xff] %vm363, %v952
      %985 = vst.msk [vmem:[#allocation4 + $0xf0] sm:$0xff] %vm363, %v953
      %986 = vst.msk [vmem:[#allocation4 + $0xf8] sm:$0xff] %vm363, %v954
      %v987 = vld [vmem:[#allocation4] sm:$0xff]
      %v988 = vld [vmem:[#allocation4 + $0x8] sm:$0xff]
      %v989 = vld [vmem:[#allocation4 + $0x10] sm:$0xff]
      %v990 = vld [vmem:[#allocation4 + $0x18] sm:$0xff]
      %v991 = vld [vmem:[#allocation4 + $0x20] sm:$0xff]
      %v992 = vld [vmem:[#allocation4 + $0x28] sm:$0xff]
      %v993 = vld [vmem:[#allocation4 + $0x30] sm:$0xff]
      %v994 = vld [vmem:[#allocation4 + $0x38] sm:$0xff]
      %v995 = vld [vmem:[#allocation4 + $0x40] sm:$0xff]
      %v996 = vld [vmem:[#allocation4 + $0x48] sm:$0xff]
      %v997 = vld [vmem:[#allocation4 + $0x50] sm:$0xff]
      %v998 = vld [vmem:[#allocation4 + $0x58] sm:$0xff]
      %v999 = vld [vmem:[#allocation4 + $0x60] sm:$0xff]
      %v1000 = vld [vmem:[#allocation4 + $0x68] sm:$0xff]
      %v1001 = vld [vmem:[#allocation4 + $0x70] sm:$0xff]
      %v1002 = vld [vmem:[#allocation4 + $0x78] sm:$0xff]
      %v1003 = vld [vmem:[#allocation4 + $0x80] sm:$0xff]
      %v1004 = vld [vmem:[#allocation4 + $0x88] sm:$0xff]
      %v1005 = vld [vmem:[#allocation4 + $0x90] sm:$0xff]
      %v1006 = vld [vmem:[#allocation4 + $0x98] sm:$0xff]
      %v1007 = vld [vmem:[#allocation4 + $0xa0] sm:$0xff]
      %v1008 = vld [vmem:[#allocation4 + $0xa8] sm:$0xff]
      %v1009 = vld [vmem:[#allocation4 + $0xb0] sm:$0xff]
      %v1010 = vld [vmem:[#allocation4 + $0xb8] sm:$0xff]
      %v1011 = vld [vmem:[#allocation4 + $0xc0] sm:$0xff]
      %v1012 = vld [vmem:[#allocation4 + $0xc8] sm:$0xff]
      %v1013 = vld [vmem:[#allocation4 + $0xd0] sm:$0xff]
      %v1014 = vld [vmem:[#allocation4 + $0xd8] sm:$0xff]
      %v1015 = vld [vmem:[#allocation4 + $0xe0] sm:$0xff]
      %v1016 = vld [vmem:[#allocation4 + $0xe8] sm:$0xff]
      %v1017 = vld [vmem:[#allocation4 + $0xf0] sm:$0xff]
      %v1018 = vld [vmem:[#allocation4 + $0xf8] sm:$0xff]
      %s1019 = scalar_lea.vmem %s1, 4
      %v1020 = vld [vmem:[%s1019] sm:$0xf]
      %v1021 = vsel %vm225, %v397, 0
      %v1023 = vsel %vm225, %v398, 0
      %v1025 = vsel %vm225, %v401, 0
      %v1027 = vsel %vm225, %v402, 0
      %v1029 = vsel %vm225, %v405, 0
      %v1031 = vsel %vm225, %v406, 0
      %v1033 = vsel %vm225, %v409, 0
      %v1035 = vsel %vm225, %v410, 0
      %v1037 = vsel %vm225, %v413, 0
      %v1039 = vsel %vm225, %v414, 0
      %v1041 = vsel %vm225, %v417, 0
      %v1043 = vsel %vm225, %v418, 0
      %v1045 = vsel %vm225, %v421, 0
      %v1047 = vsel %vm225, %v422, 0
      %v1049 = vsel %vm225, %v425, 0
      %v1051 = vsel %vm225, %v426, 0
      %v1053 = vsel %vm225, %v429, 0
      %v1055 = vsel %vm225, %v430, 0
      %v1057 = vsel %vm225, %v433, 0
      %v1059 = vsel %vm225, %v434, 0
      %v1061 = vsel %vm225, %v437, 0
      %v1063 = vsel %vm225, %v438, 0
      %v1065 = vsel %vm225, %v441, 0
      %v1067 = vsel %vm225, %v442, 0
      %v1069 = vsel %vm225, %v445, 0
      %v1071 = vsel %vm225, %v446, 0
      %v1073 = vsel %vm225, %v449, 0
      %v1075 = vsel %vm225, %v450, 0
      %v1077 = vsel %vm225, %v453, 0
      %v1079 = vsel %vm225, %v454, 0
      %v1081 = vsel %vm225, %v457, 0
      %v1083 = vsel %vm225, %v458, 0
      %v1086 = vsel %vm694, %v1020, 0
      %1088 = vmatprep.subr.mxu0 0.0
      %1089 = vmatpush1.msra.mxu0 0.0
      %1090 = vmatprep.subr.mxu0 0.0
      %1091 = vmatpush1.msra.mxu0 0.0
      %1092 = vmatprep.subr.mxu0 0.0
      %1093 = vmatpush1.msra.mxu0 0.0
      %1094 = vmatprep.subr.mxu0 0.0
      %1095 = vmatpush1.msra.mxu0 0.0
      %1096 = vmatprep.subr.mxu0 0.0
      %1097 = vmatpush1.msra.mxu0 0.0
      %1098 = vmatprep.subr.mxu0 0.0
      %1099 = vmatpush1.msra.mxu0 0.0
      %1100 = vmatprep.subr.mxu0 0.0
      %1101 = vmatpush1.msra.mxu0 0.0
      %1102 = vmatprep.subr.mxu0 0.0
      %1103 = vmatpush1.msra.mxu0 0.0
      %1104 = vmatprep.subr.mxu0 0.0
      %1105 = vmatpush1.msra.mxu0 0.0
      %1106 = vmatprep.subr.mxu0 0.0
      %1107 = vmatpush1.msra.mxu0 0.0
      %1108 = vmatprep.subr.mxu0 0.0
      %1109 = vmatpush1.msra.mxu0 0.0
      %1110 = vmatprep.subr.mxu0 0.0
      %1111 = vmatpush1.msra.mxu0 0.0
      %1112 = vmatprep.subr.mxu0 0.0
      %1113 = vmatpush1.msra.mxu0 0.0
      %1114 = vmatprep.subr.mxu0 0.0
      %1115 = vmatpush1.msra.mxu0 0.0
      %1116 = vmatprep.subr.mxu0 0.0
      %1117 = vmatpush1.msra.mxu0 0.0
      %1118 = vmatprep.subr.mxu0 0.0
      %1119 = vmatpush1.msra.mxu0 %v1086
      %1120 = vmatprep.subr.mxu0 0.0
      %1121 = vmatpush2.msra.mxu0 0.0
      %1122 = vmatprep.subr.mxu0 0.0
      %1123 = vmatpush2.msra.mxu0 0.0
      %1124 = vmatprep.subr.mxu0 0.0
      %1125 = vmatpush2.msra.mxu0 0.0
      %1126 = vmatprep.subr.mxu0 0.0
      %1127 = vmatpush2.msra.mxu0 0.0
      %1128 = vmatprep.subr.mxu0 0.0
      %1129 = vmatpush2.msra.mxu0 0.0
      %1130 = vmatprep.subr.mxu0 0.0
      %1131 = vmatpush2.msra.mxu0 0.0
      %1132 = vmatprep.subr.mxu0 0.0
      %1133 = vmatpush2.msra.mxu0 0.0
      %1134 = vmatprep.subr.mxu0 0.0
      %1135 = vmatpush2.msra.mxu0 0.0
      %1136 = vmatprep.subr.mxu0 0.0
      %1137 = vmatpush2.msra.mxu0 0.0
      %1138 = vmatprep.subr.mxu0 0.0
      %1139 = vmatpush2.msra.mxu0 0.0
      %1140 = vmatprep.subr.mxu0 0.0
      %1141 = vmatpush2.msra.mxu0 0.0
      %1142 = vmatprep.subr.mxu0 0.0
      %1143 = vmatpush2.msra.mxu0 0.0
      %1144 = vmatprep.subr.mxu0 0.0
      %1145 = vmatpush2.msra.mxu0 0.0
      %1146 = vmatprep.subr.mxu0 0.0
      %1147 = vmatpush2.msra.mxu0 0.0
      %1148 = vmatprep.subr.mxu0 0.0
      %1149 = vmatpush2.msra.mxu0 0.0
      %1150 = vmatprep.subr.mxu0 0.0
      %1151 = vmatpush2.msra.mxu0 0.0
      %1152 = vmatprep.mubr.f32.mxu0 0.0
      %1153 = vmatmul.mubr.f32.gmra.mxu0 %v1021
      %v1154 = vpop.f32.mrf.mxu0
      %v1155 = vadd.f32 0.0, %v1154
      %v1156 = vpop.f32.mrf.mxu0
      %1157 = vmatprep.mubr.f32.mxu0 0.0
      %1158 = vmatmul.mubr.f32.gmra.mxu0 %v1023
      %v1159 = vpop.f32.mrf.mxu0
      %v1160 = vadd.f32 0.0, %v1159
      %v1161 = vpop.f32.mrf.mxu0
      %1162 = vmatprep.mubr.f32.mxu0 0.0
      %1163 = vmatmul.mubr.f32.gmra.mxu0 %v1025
      %v1164 = vpop.f32.mrf.mxu0
      %v1165 = vadd.f32 0.0, %v1164
      %v1166 = vpop.f32.mrf.mxu0
      %1167 = vmatprep.mubr.f32.mxu0 0.0
      %1168 = vmatmul.mubr.f32.gmra.mxu0 %v1027
      %v1169 = vpop.f32.mrf.mxu0
      %v1170 = vadd.f32 0.0, %v1169
      %v1171 = vpop.f32.mrf.mxu0
      %1172 = vmatprep.mubr.f32.mxu0 0.0
      %1173 = vmatmul.mubr.f32.gmra.mxu0 %v1029
      %v1174 = vpop.f32.mrf.mxu0
      %v1175 = vadd.f32 0.0, %v1174
      %v1176 = vpop.f32.mrf.mxu0
      %1177 = vmatprep.mubr.f32.mxu0 0.0
      %1178 = vmatmul.mubr.f32.gmra.mxu0 %v1031
      %v1179 = vpop.f32.mrf.mxu0
      %v1180 = vadd.f32 0.0, %v1179
      %v1181 = vpop.f32.mrf.mxu0
      %1182 = vmatprep.mubr.f32.mxu0 0.0
      %1183 = vmatmul.mubr.f32.gmra.mxu0 %v1033
      %v1184 = vpop.f32.mrf.mxu0
      %v1185 = vadd.f32 0.0, %v1184
      %v1186 = vpop.f32.mrf.mxu0
      %1187 = vmatprep.mubr.f32.mxu0 0.0
      %1188 = vmatmul.mubr.f32.gmra.mxu0 %v1035
      %v1189 = vpop.f32.mrf.mxu0
      %v1190 = vadd.f32 0.0, %v1189
      %v1191 = vpop.f32.mrf.mxu0
      %1192 = vmatprep.mubr.f32.mxu0 0.0
      %1193 = vmatmul.mubr.f32.gmra.mxu0 %v1037
      %v1194 = vpop.f32.mrf.mxu0
      %v1195 = vadd.f32 0.0, %v1194
      %v1196 = vpop.f32.mrf.mxu0
      %1197 = vmatprep.mubr.f32.mxu0 0.0
      %1198 = vmatmul.mubr.f32.gmra.mxu0 %v1039
      %v1199 = vpop.f32.mrf.mxu0
      %v1200 = vadd.f32 0.0, %v1199
      %v1201 = vpop.f32.mrf.mxu0
      %1202 = vmatprep.mubr.f32.mxu0 0.0
      %1203 = vmatmul.mubr.f32.gmra.mxu0 %v1041
      %v1204 = vpop.f32.mrf.mxu0
      %v1205 = vadd.f32 0.0, %v1204
      %v1206 = vpop.f32.mrf.mxu0
      %1207 = vmatprep.mubr.f32.mxu0 0.0
      %1208 = vmatmul.mubr.f32.gmra.mxu0 %v1043
      %v1209 = vpop.f32.mrf.mxu0
      %v1210 = vadd.f32 0.0, %v1209
      %v1211 = vpop.f32.mrf.mxu0
      %1212 = vmatprep.mubr.f32.mxu0 0.0
      %1213 = vmatmul.mubr.f32.gmra.mxu0 %v1045
      %v1214 = vpop.f32.mrf.mxu0
      %v1215 = vadd.f32 0.0, %v1214
      %v1216 = vpop.f32.mrf.mxu0
      %1217 = vmatprep.mubr.f32.mxu0 0.0
      %1218 = vmatmul.mubr.f32.gmra.mxu0 %v1047
      %v1219 = vpop.f32.mrf.mxu0
      %v1220 = vadd.f32 0.0, %v1219
      %v1221 = vpop.f32.mrf.mxu0
      %1222 = vmatprep.mubr.f32.mxu0 0.0
      %1223 = vmatmul.mubr.f32.gmra.mxu0 %v1049
      %v1224 = vpop.f32.mrf.mxu0
      %v1225 = vadd.f32 0.0, %v1224
      %v1226 = vpop.f32.mrf.mxu0
      %1227 = vmatprep.mubr.f32.mxu0 0.0
      %1228 = vmatmul.mubr.f32.gmra.mxu0 %v1051
      %v1229 = vpop.f32.mrf.mxu0
      %v1230 = vadd.f32 0.0, %v1229
      %v1231 = vpop.f32.mrf.mxu0
      %1232 = vmatprep.mubr.f32.mxu0 0.0
      %1233 = vmatmul.mubr.f32.gmra.mxu0 %v1053
      %v1234 = vpop.f32.mrf.mxu0
      %v1235 = vadd.f32 0.0, %v1234
      %v1236 = vpop.f32.mrf.mxu0
      %1237 = vmatprep.mubr.f32.mxu0 0.0
      %1238 = vmatmul.mubr.f32.gmra.mxu0 %v1055
      %v1239 = vpop.f32.mrf.mxu0
      %v1240 = vadd.f32 0.0, %v1239
      %v1241 = vpop.f32.mrf.mxu0
      %1242 = vmatprep.mubr.f32.mxu0 0.0
      %1243 = vmatmul.mubr.f32.gmra.mxu0 %v1057
      %v1244 = vpop.f32.mrf.mxu0
      %v1245 = vadd.f32 0.0, %v1244
      %v1246 = vpop.f32.mrf.mxu0
      %1247 = vmatprep.mubr.f32.mxu0 0.0
      %1248 = vmatmul.mubr.f32.gmra.mxu0 %v1059
      %v1249 = vpop.f32.mrf.mxu0
      %v1250 = vadd.f32 0.0, %v1249
      %v1251 = vpop.f32.mrf.mxu0
      %1252 = vmatprep.mubr.f32.mxu0 0.0
      %1253 = vmatmul.mubr.f32.gmra.mxu0 %v1061
      %v1254 = vpop.f32.mrf.mxu0
      %v1255 = vadd.f32 0.0, %v1254
      %v1256 = vpop.f32.mrf.mxu0
      %1257 = vmatprep.mubr.f32.mxu0 0.0
      %1258 = vmatmul.mubr.f32.gmra.mxu0 %v1063
      %v1259 = vpop.f32.mrf.mxu0
      %v1260 = vadd.f32 0.0, %v1259
      %v1261 = vpop.f32.mrf.mxu0
      %1262 = vmatprep.mubr.f32.mxu0 0.0
      %1263 = vmatmul.mubr.f32.gmra.mxu0 %v1065
      %v1264 = vpop.f32.mrf.mxu0
      %v1265 = vadd.f32 0.0, %v1264
      %v1266 = vpop.f32.mrf.mxu0
      %1267 = vmatprep.mubr.f32.mxu0 0.0
      %1268 = vmatmul.mubr.f32.gmra.mxu0 %v1067
      %v1269 = vpop.f32.mrf.mxu0
      %v1270 = vadd.f32 0.0, %v1269
      %v1271 = vpop.f32.mrf.mxu0
      %1272 = vmatprep.mubr.f32.mxu0 0.0
      %1273 = vmatmul.mubr.f32.gmra.mxu0 %v1069
      %v1274 = vpop.f32.mrf.mxu0
      %v1275 = vadd.f32 0.0, %v1274
      %v1276 = vpop.f32.mrf.mxu0
      %1277 = vmatprep.mubr.f32.mxu0 0.0
      %1278 = vmatmul.mubr.f32.gmra.mxu0 %v1071
      %v1279 = vpop.f32.mrf.mxu0
      %v1280 = vadd.f32 0.0, %v1279
      %v1281 = vpop.f32.mrf.mxu0
      %1282 = vmatprep.mubr.f32.mxu0 0.0
      %1283 = vmatmul.mubr.f32.gmra.mxu0 %v1073
      %v1284 = vpop.f32.mrf.mxu0
      %v1285 = vadd.f32 0.0, %v1284
      %v1286 = vpop.f32.mrf.mxu0
      %1287 = vmatprep.mubr.f32.mxu0 0.0
      %1288 = vmatmul.mubr.f32.gmra.mxu0 %v1075
      %v1289 = vpop.f32.mrf.mxu0
      %v1290 = vadd.f32 0.0, %v1289
      %v1291 = vpop.f32.mrf.mxu0
      %1292 = vmatprep.mubr.f32.mxu0 0.0
      %1293 = vmatmul.mubr.f32.gmra.mxu0 %v1077
      %v1294 = vpop.f32.mrf.mxu0
      %v1295 = vadd.f32 0.0, %v1294
      %v1296 = vpop.f32.mrf.mxu0
      %1297 = vmatprep.mubr.f32.mxu0 0.0
      %1298 = vmatmul.mubr.f32.gmra.mxu0 %v1079
      %v1299 = vpop.f32.mrf.mxu0
      %v1300 = vadd.f32 0.0, %v1299
      %v1301 = vpop.f32.mrf.mxu0
      %1302 = vmatprep.mubr.f32.mxu0 0.0
      %1303 = vmatmul.mubr.f32.gmra.mxu0 %v1081
      %v1304 = vpop.f32.mrf.mxu0
      %v1305 = vadd.f32 0.0, %v1304
      %v1306 = vpop.f32.mrf.mxu0
      %1307 = vmatprep.mubr.f32.mxu0 0.0
      %1308 = vmatmul.mubr.f32.gmra.mxu0 %v1083
      %v1309 = vpop.f32.mrf.mxu0
      %v1310 = vadd.f32 0.0, %v1309
      %v1311 = vpop.f32.mrf.mxu0
      %1312 = vdwg.mxu0
      %v1313 = vadd.f32 %v987, %v1155
      %v1314 = vadd.f32 %v988, %v1160
      %v1315 = vadd.f32 %v989, %v1165
      %v1316 = vadd.f32 %v990, %v1170
      %v1317 = vadd.f32 %v991, %v1175
      %v1318 = vadd.f32 %v992, %v1180
      %v1319 = vadd.f32 %v993, %v1185
      %v1320 = vadd.f32 %v994, %v1190
      %v1321 = vadd.f32 %v995, %v1195
      %v1322 = vadd.f32 %v996, %v1200
      %v1323 = vadd.f32 %v997, %v1205
      %v1324 = vadd.f32 %v998, %v1210
      %v1325 = vadd.f32 %v999, %v1215
      %v1326 = vadd.f32 %v1000, %v1220
      %v1327 = vadd.f32 %v1001, %v1225
      %v1328 = vadd.f32 %v1002, %v1230
      %v1329 = vadd.f32 %v1003, %v1235
      %v1330 = vadd.f32 %v1004, %v1240
      %v1331 = vadd.f32 %v1005, %v1245
      %v1332 = vadd.f32 %v1006, %v1250
      %v1333 = vadd.f32 %v1007, %v1255
      %v1334 = vadd.f32 %v1008, %v1260
      %v1335 = vadd.f32 %v1009, %v1265
      %v1336 = vadd.f32 %v1010, %v1270
      %v1337 = vadd.f32 %v1011, %v1275
      %v1338 = vadd.f32 %v1012, %v1280
      %v1339 = vadd.f32 %v1013, %v1285
      %v1340 = vadd.f32 %v1014, %v1290
      %v1341 = vadd.f32 %v1015, %v1295
      %v1342 = vadd.f32 %v1016, %v1300
      %v1343 = vadd.f32 %v1017, %v1305
      %v1344 = vadd.f32 %v1018, %v1310
      %1345 = vst.msk [vmem:[#allocation4] sm:$0xff] %vm363, %v1313
      %1346 = vst.msk [vmem:[#allocation4 + $0x8] sm:$0xff] %vm363, %v1314
      %1347 = vst.msk [vmem:[#allocation4 + $0x10] sm:$0xff] %vm363, %v1315
      %1348 = vst.msk [vmem:[#allocation4 + $0x18] sm:$0xff] %vm363, %v1316
      %1349 = vst.msk [vmem:[#allocation4 + $0x20] sm:$0xff] %vm363, %v1317
      %1350 = vst.msk [vmem:[#allocation4 + $0x28] sm:$0xff] %vm363, %v1318
      %1351 = vst.msk [vmem:[#allocation4 + $0x30] sm:$0xff] %vm363, %v1319
      %1352 = vst.msk [vmem:[#allocation4 + $0x38] sm:$0xff] %vm363, %v1320
      %1353 = vst.msk [vmem:[#allocation4 + $0x40] sm:$0xff] %vm363, %v1321
      %1354 = vst.msk [vmem:[#allocation4 + $0x48] sm:$0xff] %vm363, %v1322
      %1355 = vst.msk [vmem:[#allocation4 + $0x50] sm:$0xff] %vm363, %v1323
      %1356 = vst.msk [vmem:[#allocation4 + $0x58] sm:$0xff] %vm363, %v1324
      %1357 = vst.msk [vmem:[#allocation4 + $0x60] sm:$0xff] %vm363, %v1325
      %1358 = vst.msk [vmem:[#allocation4 + $0x68] sm:$0xff] %vm363, %v1326
      %1359 = vst.msk [vmem:[#allocation4 + $0x70] sm:$0xff] %vm363, %v1327
      %1360 = vst.msk [vmem:[#allocation4 + $0x78] sm:$0xff] %vm363, %v1328
      %1361 = vst.msk [vmem:[#allocation4 + $0x80] sm:$0xff] %vm363, %v1329
      %1362 = vst.msk [vmem:[#allocation4 + $0x88] sm:$0xff] %vm363, %v1330
      %1363 = vst.msk [vmem:[#allocation4 + $0x90] sm:$0xff] %vm363, %v1331
      %1364 = vst.msk [vmem:[#allocation4 + $0x98] sm:$0xff] %vm363, %v1332
      %1365 = vst.msk [vmem:[#allocation4 + $0xa0] sm:$0xff] %vm363, %v1333
      %1366 = vst.msk [vmem:[#allocation4 + $0xa8] sm:$0xff] %vm363, %v1334
      %1367 = vst.msk [vmem:[#allocation4 + $0xb0] sm:$0xff] %vm363, %v1335
      %1368 = vst.msk [vmem:[#allocation4 + $0xb8] sm:$0xff] %vm363, %v1336
      %1369 = vst.msk [vmem:[#allocation4 + $0xc0] sm:$0xff] %vm363, %v1337
      %1370 = vst.msk [vmem:[#allocation4 + $0xc8] sm:$0xff] %vm363, %v1338
      %1371 = vst.msk [vmem:[#allocation4 + $0xd0] sm:$0xff] %vm363, %v1339
      %1372 = vst.msk [vmem:[#allocation4 + $0xd8] sm:$0xff] %vm363, %v1340
      %1373 = vst.msk [vmem:[#allocation4 + $0xe0] sm:$0xff] %vm363, %v1341
      %1374 = vst.msk [vmem:[#allocation4 + $0xe8] sm:$0xff] %vm363, %v1342
      %1375 = vst.msk [vmem:[#allocation4 + $0xf0] sm:$0xff] %vm363, %v1343
      %1376 = vst.msk [vmem:[#allocation4 + $0xf8] sm:$0xff] %vm363, %v1344
      %v1377 = vld [vmem:[#allocation4] sm:$0xff]
      %v1378 = vld [vmem:[#allocation4 + $0x8] sm:$0xff]
      %v1379 = vld [vmem:[#allocation4 + $0x10] sm:$0xff]
      %v1380 = vld [vmem:[#allocation4 + $0x18] sm:$0xff]
      %v1381 = vld [vmem:[#allocation4 + $0x20] sm:$0xff]
      %v1382 = vld [vmem:[#allocation4 + $0x28] sm:$0xff]
      %v1383 = vld [vmem:[#allocation4 + $0x30] sm:$0xff]
      %v1384 = vld [vmem:[#allocation4 + $0x38] sm:$0xff]
      %v1385 = vld [vmem:[#allocation4 + $0x40] sm:$0xff]
      %v1386 = vld [vmem:[#allocation4 + $0x48] sm:$0xff]
      %v1387 = vld [vmem:[#allocation4 + $0x50] sm:$0xff]
      %v1388 = vld [vmem:[#allocation4 + $0x58] sm:$0xff]
      %v1389 = vld [vmem:[#allocation4 + $0x60] sm:$0xff]
      %v1390 = vld [vmem:[#allocation4 + $0x68] sm:$0xff]
      %v1391 = vld [vmem:[#allocation4 + $0x70] sm:$0xff]
      %v1392 = vld [vmem:[#allocation4 + $0x78] sm:$0xff]
      %v1393 = vld [vmem:[#allocation4 + $0x80] sm:$0xff]
      %v1394 = vld [vmem:[#allocation4 + $0x88] sm:$0xff]
      %v1395 = vld [vmem:[#allocation4 + $0x90] sm:$0xff]
      %v1396 = vld [vmem:[#allocation4 + $0x98] sm:$0xff]
      %v1397 = vld [vmem:[#allocation4 + $0xa0] sm:$0xff]
      %v1398 = vld [vmem:[#allocation4 + $0xa8] sm:$0xff]
      %v1399 = vld [vmem:[#allocation4 + $0xb0] sm:$0xff]
      %v1400 = vld [vmem:[#allocation4 + $0xb8] sm:$0xff]
      %v1401 = vld [vmem:[#allocation4 + $0xc0] sm:$0xff]
      %v1402 = vld [vmem:[#allocation4 + $0xc8] sm:$0xff]
      %v1403 = vld [vmem:[#allocation4 + $0xd0] sm:$0xff]
      %v1404 = vld [vmem:[#allocation4 + $0xd8] sm:$0xff]
      %v1405 = vld [vmem:[#allocation4 + $0xe0] sm:$0xff]
      %v1406 = vld [vmem:[#allocation4 + $0xe8] sm:$0xff]
      %v1407 = vld [vmem:[#allocation4 + $0xf0] sm:$0xff]
      %v1408 = vld [vmem:[#allocation4 + $0xf8] sm:$0xff]
      %vm1425 = vcmask 1046528
      %v1426 = vrot.slane %v397, 1
      %v1427 = vrot.slane %v398, 1
      %v1428 = vsel %vm1425, %v1426, %v1427
      %v1429 = vrot.slane %v399, 1
      %v1430 = vsel %vm1425, %v1427, %v1429
      %v1431 = vrot.slane %v401, 1
      %v1432 = vrot.slane %v402, 1
      %v1433 = vsel %vm1425, %v1431, %v1432
      %v1434 = vrot.slane %v403, 1
      %v1435 = vsel %vm1425, %v1432, %v1434
      %v1436 = vrot.slane %v405, 1
      %v1437 = vrot.slane %v406, 1
      %v1438 = vsel %vm1425, %v1436, %v1437
      %v1439 = vrot.slane %v407, 1
      %v1440 = vsel %vm1425, %v1437, %v1439
      %v1441 = vrot.slane %v409, 1
      %v1442 = vrot.slane %v410, 1
      %v1443 = vsel %vm1425, %v1441, %v1442
      %v1444 = vrot.slane %v411, 1
      %v1445 = vsel %vm1425, %v1442, %v1444
      %v1446 = vrot.slane %v413, 1
      %v1447 = vrot.slane %v414, 1
      %v1448 = vsel %vm1425, %v1446, %v1447
      %v1449 = vrot.slane %v415, 1
      %v1450 = vsel %vm1425, %v1447, %v1449
      %v1451 = vrot.slane %v417, 1
      %v1452 = vrot.slane %v418, 1
      %v1453 = vsel %vm1425, %v1451, %v1452
      %v1454 = vrot.slane %v419, 1
      %v1455 = vsel %vm1425, %v1452, %v1454
      %v1456 = vrot.slane %v421, 1
      %v1457 = vrot.slane %v422, 1
      %v1458 = vsel %vm1425, %v1456, %v1457
      %v1459 = vrot.slane %v423, 1
      %v1460 = vsel %vm1425, %v1457, %v1459
      %v1461 = vrot.slane %v425, 1
      %v1462 = vrot.slane %v426, 1
      %v1463 = vsel %vm1425, %v1461, %v1462
      %v1464 = vrot.slane %v427, 1
      %v1465 = vsel %vm1425, %v1462, %v1464
      %v1466 = vrot.slane %v429, 1
      %v1467 = vrot.slane %v430, 1
      %v1468 = vsel %vm1425, %v1466, %v1467
      %v1469 = vrot.slane %v431, 1
      %v1470 = vsel %vm1425, %v1467, %v1469
      %v1471 = vrot.slane %v433, 1
      %v1472 = vrot.slane %v434, 1
      %v1473 = vsel %vm1425, %v1471, %v1472
      %v1474 = vrot.slane %v435, 1
      %v1475 = vsel %vm1425, %v1472, %v1474
      %v1476 = vrot.slane %v437, 1
      %v1477 = vrot.slane %v438, 1
      %v1478 = vsel %vm1425, %v1476, %v1477
      %v1479 = vrot.slane %v439, 1
      %v1480 = vsel %vm1425, %v1477, %v1479
      %v1481 = vrot.slane %v441, 1
      %v1482 = vrot.slane %v442, 1
      %v1483 = vsel %vm1425, %v1481, %v1482
      %v1484 = vrot.slane %v443, 1
      %v1485 = vsel %vm1425, %v1482, %v1484
      %v1486 = vrot.slane %v445, 1
      %v1487 = vrot.slane %v446, 1
      %v1488 = vsel %vm1425, %v1486, %v1487
      %v1489 = vrot.slane %v447, 1
      %v1490 = vsel %vm1425, %v1487, %v1489
      %v1491 = vrot.slane %v449, 1
      %v1492 = vrot.slane %v450, 1
      %v1493 = vsel %vm1425, %v1491, %v1492
      %v1494 = vrot.slane %v451, 1
      %v1495 = vsel %vm1425, %v1492, %v1494
      %v1496 = vrot.slane %v453, 1
      %v1497 = vrot.slane %v454, 1
      %v1498 = vsel %vm1425, %v1496, %v1497
      %v1499 = vrot.slane %v455, 1
      %v1500 = vsel %vm1425, %v1497, %v1499
      %v1501 = vrot.slane %v457, 1
      %v1502 = vrot.slane %v458, 1
      %v1503 = vsel %vm1425, %v1501, %v1502
      %v1504 = vrot.slane %v459, 1
      %v1505 = vsel %vm1425, %v1502, %v1504
      %s1506 = scalar_lea.vmem %s1, 8
      %v1507 = vld [vmem:[%s1506] sm:$0xf]
      %v1508 = vsel %vm225, %v1428, 0
      %v1510 = vsel %vm225, %v1430, 0
      %v1512 = vsel %vm225, %v1433, 0
      %v1514 = vsel %vm225, %v1435, 0
      %v1516 = vsel %vm225, %v1438, 0
      %v1518 = vsel %vm225, %v1440, 0
      %v1520 = vsel %vm225, %v1443, 0
      %v1522 = vsel %vm225, %v1445, 0
      %v1524 = vsel %vm225, %v1448, 0
      %v1526 = vsel %vm225, %v1450, 0
      %v1528 = vsel %vm225, %v1453, 0
      %v1530 = vsel %vm225, %v1455, 0
      %v1532 = vsel %vm225, %v1458, 0
      %v1534 = vsel %vm225, %v1460, 0
      %v1536 = vsel %vm225, %v1463, 0
      %v1538 = vsel %vm225, %v1465, 0
      %v1540 = vsel %vm225, %v1468, 0
      %v1542 = vsel %vm225, %v1470, 0
      %v1544 = vsel %vm225, %v1473, 0
      %v1546 = vsel %vm225, %v1475, 0
      %v1548 = vsel %vm225, %v1478, 0
      %v1550 = vsel %vm225, %v1480, 0
      %v1552 = vsel %vm225, %v1483, 0
      %v1554 = vsel %vm225, %v1485, 0
      %v1556 = vsel %vm225, %v1488, 0
      %v1558 = vsel %vm225, %v1490, 0
      %v1560 = vsel %vm225, %v1493, 0
      %v1562 = vsel %vm225, %v1495, 0
      %v1564 = vsel %vm225, %v1498, 0
      %v1566 = vsel %vm225, %v1500, 0
      %v1568 = vsel %vm225, %v1503, 0
      %v1570 = vsel %vm225, %v1505, 0
      %v1573 = vsel %vm694, %v1507, 0
      %1575 = vmatprep.subr.mxu0 0.0
      %1576 = vmatpush1.msra.mxu0 0.0
      %1577 = vmatprep.subr.mxu0 0.0
      %1578 = vmatpush1.msra.mxu0 0.0
      %1579 = vmatprep.subr.mxu0 0.0
      %1580 = vmatpush1.msra.mxu0 0.0
      %1581 = vmatprep.subr.mxu0 0.0
      %1582 = vmatpush1.msra.mxu0 0.0
      %1583 = vmatprep.subr.mxu0 0.0
      %1584 = vmatpush1.msra.mxu0 0.0
      %1585 = vmatprep.subr.mxu0 0.0
      %1586 = vmatpush1.msra.mxu0 0.0
      %1587 = vmatprep.subr.mxu0 0.0
      %1588 = vmatpush1.msra.mxu0 0.0
      %1589 = vmatprep.subr.mxu0 0.0
      %1590 = vmatpush1.msra.mxu0 0.0
      %1591 = vmatprep.subr.mxu0 0.0
      %1592 = vmatpush1.msra.mxu0 0.0
      %1593 = vmatprep.subr.mxu0 0.0
      %1594 = vmatpush1.msra.mxu0 0.0
      %1595 = vmatprep.subr.mxu0 0.0
      %1596 = vmatpush1.msra.mxu0 0.0
      %1597 = vmatprep.subr.mxu0 0.0
      %1598 = vmatpush1.msra.mxu0 0.0
      %1599 = vmatprep.subr.mxu0 0.0
      %1600 = vmatpush1.msra.mxu0 0.0
      %1601 = vmatprep.subr.mxu0 0.0
      %1602 = vmatpush1.msra.mxu0 0.0
      %1603 = vmatprep.subr.mxu0 0.0
      %1604 = vmatpush1.msra.mxu0 0.0
      %1605 = vmatprep.subr.mxu0 0.0
      %1606 = vmatpush1.msra.mxu0 %v1573
      %1607 = vmatprep.subr.mxu0 0.0
      %1608 = vmatpush2.msra.mxu0 0.0
      %1609 = vmatprep.subr.mxu0 0.0
      %1610 = vmatpush2.msra.mxu0 0.0
      %1611 = vmatprep.subr.mxu0 0.0
      %1612 = vmatpush2.msra.mxu0 0.0
      %1613 = vmatprep.subr.mxu0 0.0
      %1614 = vmatpush2.msra.mxu0 0.0
      %1615 = vmatprep.subr.mxu0 0.0
      %1616 = vmatpush2.msra.mxu0 0.0
      %1617 = vmatprep.subr.mxu0 0.0
      %1618 = vmatpush2.msra.mxu0 0.0
      %1619 = vmatprep.subr.mxu0 0.0
      %1620 = vmatpush2.msra.mxu0 0.0
      %1621 = vmatprep.subr.mxu0 0.0
      %1622 = vmatpush2.msra.mxu0 0.0
      %1623 = vmatprep.subr.mxu0 0.0
      %1624 = vmatpush2.msra.mxu0 0.0
      %1625 = vmatprep.subr.mxu0 0.0
      %1626 = vmatpush2.msra.mxu0 0.0
      %1627 = vmatprep.subr.mxu0 0.0
      %1628 = vmatpush2.msra.mxu0 0.0
      %1629 = vmatprep.subr.mxu0 0.0
      %1630 = vmatpush2.msra.mxu0 0.0
      %1631 = vmatprep.subr.mxu0 0.0
      %1632 = vmatpush2.msra.mxu0 0.0
      %1633 = vmatprep.subr.mxu0 0.0
      %1634 = vmatpush2.msra.mxu0 0.0
      %1635 = vmatprep.subr.mxu0 0.0
      %1636 = vmatpush2.msra.mxu0 0.0
      %1637 = vmatprep.subr.mxu0 0.0
      %1638 = vmatpush2.msra.mxu0 0.0
      %1639 = vmatprep.mubr.f32.mxu0 0.0
      %1640 = vmatmul.mubr.f32.gmra.mxu0 %v1508
      %v1641 = vpop.f32.mrf.mxu0
      %v1642 = vadd.f32 0.0, %v1641
      %v1643 = vpop.f32.mrf.mxu0
      %1644 = vmatprep.mubr.f32.mxu0 0.0
      %1645 = vmatmul.mubr.f32.gmra.mxu0 %v1510
      %v1646 = vpop.f32.mrf.mxu0
      %v1647 = vadd.f32 0.0, %v1646
      %v1648 = vpop.f32.mrf.mxu0
      %1649 = vmatprep.mubr.f32.mxu0 0.0
      %1650 = vmatmul.mubr.f32.gmra.mxu0 %v1512
      %v1651 = vpop.f32.mrf.mxu0
      %v1652 = vadd.f32 0.0, %v1651
      %v1653 = vpop.f32.mrf.mxu0
      %1654 = vmatprep.mubr.f32.mxu0 0.0
      %1655 = vmatmul.mubr.f32.gmra.mxu0 %v1514
      %v1656 = vpop.f32.mrf.mxu0
      %v1657 = vadd.f32 0.0, %v1656
      %v1658 = vpop.f32.mrf.mxu0
      %1659 = vmatprep.mubr.f32.mxu0 0.0
      %1660 = vmatmul.mubr.f32.gmra.mxu0 %v1516
      %v1661 = vpop.f32.mrf.mxu0
      %v1662 = vadd.f32 0.0, %v1661
      %v1663 = vpop.f32.mrf.mxu0
      %1664 = vmatprep.mubr.f32.mxu0 0.0
      %1665 = vmatmul.mubr.f32.gmra.mxu0 %v1518
      %v1666 = vpop.f32.mrf.mxu0
      %v1667 = vadd.f32 0.0, %v1666
      %v1668 = vpop.f32.mrf.mxu0
      %1669 = vmatprep.mubr.f32.mxu0 0.0
      %1670 = vmatmul.mubr.f32.gmra.mxu0 %v1520
      %v1671 = vpop.f32.mrf.mxu0
      %v1672 = vadd.f32 0.0, %v1671
      %v1673 = vpop.f32.mrf.mxu0
      %1674 = vmatprep.mubr.f32.mxu0 0.0
      %1675 = vmatmul.mubr.f32.gmra.mxu0 %v1522
      %v1676 = vpop.f32.mrf.mxu0
      %v1677 = vadd.f32 0.0, %v1676
      %v1678 = vpop.f32.mrf.mxu0
      %1679 = vmatprep.mubr.f32.mxu0 0.0
      %1680 = vmatmul.mubr.f32.gmra.mxu0 %v1524
      %v1681 = vpop.f32.mrf.mxu0
      %v1682 = vadd.f32 0.0, %v1681
      %v1683 = vpop.f32.mrf.mxu0
      %1684 = vmatprep.mubr.f32.mxu0 0.0
      %1685 = vmatmul.mubr.f32.gmra.mxu0 %v1526
      %v1686 = vpop.f32.mrf.mxu0
      %v1687 = vadd.f32 0.0, %v1686
      %v1688 = vpop.f32.mrf.mxu0
      %1689 = vmatprep.mubr.f32.mxu0 0.0
      %1690 = vmatmul.mubr.f32.gmra.mxu0 %v1528
      %v1691 = vpop.f32.mrf.mxu0
      %v1692 = vadd.f32 0.0, %v1691
      %v1693 = vpop.f32.mrf.mxu0
      %1694 = vmatprep.mubr.f32.mxu0 0.0
      %1695 = vmatmul.mubr.f32.gmra.mxu0 %v1530
      %v1696 = vpop.f32.mrf.mxu0
      %v1697 = vadd.f32 0.0, %v1696
      %v1698 = vpop.f32.mrf.mxu0
      %1699 = vmatprep.mubr.f32.mxu0 0.0
      %1700 = vmatmul.mubr.f32.gmra.mxu0 %v1532
      %v1701 = vpop.f32.mrf.mxu0
      %v1702 = vadd.f32 0.0, %v1701
      %v1703 = vpop.f32.mrf.mxu0
      %1704 = vmatprep.mubr.f32.mxu0 0.0
      %1705 = vmatmul.mubr.f32.gmra.mxu0 %v1534
      %v1706 = vpop.f32.mrf.mxu0
      %v1707 = vadd.f32 0.0, %v1706
      %v1708 = vpop.f32.mrf.mxu0
      %1709 = vmatprep.mubr.f32.mxu0 0.0
      %1710 = vmatmul.mubr.f32.gmra.mxu0 %v1536
      %v1711 = vpop.f32.mrf.mxu0
      %v1712 = vadd.f32 0.0, %v1711
      %v1713 = vpop.f32.mrf.mxu0
      %1714 = vmatprep.mubr.f32.mxu0 0.0
      %1715 = vmatmul.mubr.f32.gmra.mxu0 %v1538
      %v1716 = vpop.f32.mrf.mxu0
      %v1717 = vadd.f32 0.0, %v1716
      %v1718 = vpop.f32.mrf.mxu0
      %1719 = vmatprep.mubr.f32.mxu0 0.0
      %1720 = vmatmul.mubr.f32.gmra.mxu0 %v1540
      %v1721 = vpop.f32.mrf.mxu0
      %v1722 = vadd.f32 0.0, %v1721
      %v1723 = vpop.f32.mrf.mxu0
      %1724 = vmatprep.mubr.f32.mxu0 0.0
      %1725 = vmatmul.mubr.f32.gmra.mxu0 %v1542
      %v1726 = vpop.f32.mrf.mxu0
      %v1727 = vadd.f32 0.0, %v1726
      %v1728 = vpop.f32.mrf.mxu0
      %1729 = vmatprep.mubr.f32.mxu0 0.0
      %1730 = vmatmul.mubr.f32.gmra.mxu0 %v1544
      %v1731 = vpop.f32.mrf.mxu0
      %v1732 = vadd.f32 0.0, %v1731
      %v1733 = vpop.f32.mrf.mxu0
      %1734 = vmatprep.mubr.f32.mxu0 0.0
      %1735 = vmatmul.mubr.f32.gmra.mxu0 %v1546
      %v1736 = vpop.f32.mrf.mxu0
      %v1737 = vadd.f32 0.0, %v1736
      %v1738 = vpop.f32.mrf.mxu0
      %1739 = vmatprep.mubr.f32.mxu0 0.0
      %1740 = vmatmul.mubr.f32.gmra.mxu0 %v1548
      %v1741 = vpop.f32.mrf.mxu0
      %v1742 = vadd.f32 0.0, %v1741
      %v1743 = vpop.f32.mrf.mxu0
      %1744 = vmatprep.mubr.f32.mxu0 0.0
      %1745 = vmatmul.mubr.f32.gmra.mxu0 %v1550
      %v1746 = vpop.f32.mrf.mxu0
      %v1747 = vadd.f32 0.0, %v1746
      %v1748 = vpop.f32.mrf.mxu0
      %1749 = vmatprep.mubr.f32.mxu0 0.0
      %1750 = vmatmul.mubr.f32.gmra.mxu0 %v1552
      %v1751 = vpop.f32.mrf.mxu0
      %v1752 = vadd.f32 0.0, %v1751
      %v1753 = vpop.f32.mrf.mxu0
      %1754 = vmatprep.mubr.f32.mxu0 0.0
      %1755 = vmatmul.mubr.f32.gmra.mxu0 %v1554
      %v1756 = vpop.f32.mrf.mxu0
      %v1757 = vadd.f32 0.0, %v1756
      %v1758 = vpop.f32.mrf.mxu0
      %1759 = vmatprep.mubr.f32.mxu0 0.0
      %1760 = vmatmul.mubr.f32.gmra.mxu0 %v1556
      %v1761 = vpop.f32.mrf.mxu0
      %v1762 = vadd.f32 0.0, %v1761
      %v1763 = vpop.f32.mrf.mxu0
      %1764 = vmatprep.mubr.f32.mxu0 0.0
      %1765 = vmatmul.mubr.f32.gmra.mxu0 %v1558
      %v1766 = vpop.f32.mrf.mxu0
      %v1767 = vadd.f32 0.0, %v1766
      %v1768 = vpop.f32.mrf.mxu0
      %1769 = vmatprep.mubr.f32.mxu0 0.0
      %1770 = vmatmul.mubr.f32.gmra.mxu0 %v1560
      %v1771 = vpop.f32.mrf.mxu0
      %v1772 = vadd.f32 0.0, %v1771
      %v1773 = vpop.f32.mrf.mxu0
      %1774 = vmatprep.mubr.f32.mxu0 0.0
      %1775 = vmatmul.mubr.f32.gmra.mxu0 %v1562
      %v1776 = vpop.f32.mrf.mxu0
      %v1777 = vadd.f32 0.0, %v1776
      %v1778 = vpop.f32.mrf.mxu0
      %1779 = vmatprep.mubr.f32.mxu0 0.0
      %1780 = vmatmul.mubr.f32.gmra.mxu0 %v1564
      %v1781 = vpop.f32.mrf.mxu0
      %v1782 = vadd.f32 0.0, %v1781
      %v1783 = vpop.f32.mrf.mxu0
      %1784 = vmatprep.mubr.f32.mxu0 0.0
      %1785 = vmatmul.mubr.f32.gmra.mxu0 %v1566
      %v1786 = vpop.f32.mrf.mxu0
      %v1787 = vadd.f32 0.0, %v1786
      %v1788 = vpop.f32.mrf.mxu0
      %1789 = vmatprep.mubr.f32.mxu0 0.0
      %1790 = vmatmul.mubr.f32.gmra.mxu0 %v1568
      %v1791 = vpop.f32.mrf.mxu0
      %v1792 = vadd.f32 0.0, %v1791
      %v1793 = vpop.f32.mrf.mxu0
      %1794 = vmatprep.mubr.f32.mxu0 0.0
      %1795 = vmatmul.mubr.f32.gmra.mxu0 %v1570
      %v1796 = vpop.f32.mrf.mxu0
      %v1797 = vadd.f32 0.0, %v1796
      %v1798 = vpop.f32.mrf.mxu0
      %1799 = vdwg.mxu0
      %v1800 = vadd.f32 %v1377, %v1642
      %v1801 = vadd.f32 %v1378, %v1647
      %v1802 = vadd.f32 %v1379, %v1652
      %v1803 = vadd.f32 %v1380, %v1657
      %v1804 = vadd.f32 %v1381, %v1662
      %v1805 = vadd.f32 %v1382, %v1667
      %v1806 = vadd.f32 %v1383, %v1672
      %v1807 = vadd.f32 %v1384, %v1677
      %v1808 = vadd.f32 %v1385, %v1682
      %v1809 = vadd.f32 %v1386, %v1687
      %v1810 = vadd.f32 %v1387, %v1692
      %v1811 = vadd.f32 %v1388, %v1697
      %v1812 = vadd.f32 %v1389, %v1702
      %v1813 = vadd.f32 %v1390, %v1707
      %v1814 = vadd.f32 %v1391, %v1712
      %v1815 = vadd.f32 %v1392, %v1717
      %v1816 = vadd.f32 %v1393, %v1722
      %v1817 = vadd.f32 %v1394, %v1727
      %v1818 = vadd.f32 %v1395, %v1732
      %v1819 = vadd.f32 %v1396, %v1737
      %v1820 = vadd.f32 %v1397, %v1742
      %v1821 = vadd.f32 %v1398, %v1747
      %v1822 = vadd.f32 %v1399, %v1752
      %v1823 = vadd.f32 %v1400, %v1757
      %v1824 = vadd.f32 %v1401, %v1762
      %v1825 = vadd.f32 %v1402, %v1767
      %v1826 = vadd.f32 %v1403, %v1772
      %v1827 = vadd.f32 %v1404, %v1777
      %v1828 = vadd.f32 %v1405, %v1782
      %v1829 = vadd.f32 %v1406, %v1787
      %v1830 = vadd.f32 %v1407, %v1792
      %v1831 = vadd.f32 %v1408, %v1797
      %1832 = vst.msk [vmem:[#allocation4] sm:$0xff] %vm363, %v1800
      %1833 = vst.msk [vmem:[#allocation4 + $0x8] sm:$0xff] %vm363, %v1801
      %1834 = vst.msk [vmem:[#allocation4 + $0x10] sm:$0xff] %vm363, %v1802
      %1835 = vst.msk [vmem:[#allocation4 + $0x18] sm:$0xff] %vm363, %v1803
      %1836 = vst.msk [vmem:[#allocation4 + $0x20] sm:$0xff] %vm363, %v1804
      %1837 = vst.msk [vmem:[#allocation4 + $0x28] sm:$0xff] %vm363, %v1805
      %1838 = vst.msk [vmem:[#allocation4 + $0x30] sm:$0xff] %vm363, %v1806
      %1839 = vst.msk [vmem:[#allocation4 + $0x38] sm:$0xff] %vm363, %v1807
      %1840 = vst.msk [vmem:[#allocation4 + $0x40] sm:$0xff] %vm363, %v1808
      %1841 = vst.msk [vmem:[#allocation4 + $0x48] sm:$0xff] %vm363, %v1809
      %1842 = vst.msk [vmem:[#allocation4 + $0x50] sm:$0xff] %vm363, %v1810
      %1843 = vst.msk [vmem:[#allocation4 + $0x58] sm:$0xff] %vm363, %v1811
      %1844 = vst.msk [vmem:[#allocation4 + $0x60] sm:$0xff] %vm363, %v1812
      %1845 = vst.msk [vmem:[#allocation4 + $0x68] sm:$0xff] %vm363, %v1813
      %1846 = vst.msk [vmem:[#allocation4 + $0x70] sm:$0xff] %vm363, %v1814
      %1847 = vst.msk [vmem:[#allocation4 + $0x78] sm:$0xff] %vm363, %v1815
      %1848 = vst.msk [vmem:[#allocation4 + $0x80] sm:$0xff] %vm363, %v1816
      %1849 = vst.msk [vmem:[#allocation4 + $0x88] sm:$0xff] %vm363, %v1817
      %1850 = vst.msk [vmem:[#allocation4 + $0x90] sm:$0xff] %vm363, %v1818
      %1851 = vst.msk [vmem:[#allocation4 + $0x98] sm:$0xff] %vm363, %v1819
      %1852 = vst.msk [vmem:[#allocation4 + $0xa0] sm:$0xff] %vm363, %v1820
      %1853 = vst.msk [vmem:[#allocation4 + $0xa8] sm:$0xff] %vm363, %v1821
      %1854 = vst.msk [vmem:[#allocation4 + $0xb0] sm:$0xff] %vm363, %v1822
      %1855 = vst.msk [vmem:[#allocation4 + $0xb8] sm:$0xff] %vm363, %v1823
      %1856 = vst.msk [vmem:[#allocation4 + $0xc0] sm:$0xff] %vm363, %v1824
      %1857 = vst.msk [vmem:[#allocation4 + $0xc8] sm:$0xff] %vm363, %v1825
      %1858 = vst.msk [vmem:[#allocation4 + $0xd0] sm:$0xff] %vm363, %v1826
      %1859 = vst.msk [vmem:[#allocation4 + $0xd8] sm:$0xff] %vm363, %v1827
      %1860 = vst.msk [vmem:[#allocation4 + $0xe0] sm:$0xff] %vm363, %v1828
      %1861 = vst.msk [vmem:[#allocation4 + $0xe8] sm:$0xff] %vm363, %v1829
      %1862 = vst.msk [vmem:[#allocation4 + $0xf0] sm:$0xff] %vm363, %v1830
      %1863 = vst.msk [vmem:[#allocation4 + $0xf8] sm:$0xff] %vm363, %v1831
      %v1864 = vld [vmem:[#allocation4] sm:$0xff]
      %v1865 = vld [vmem:[#allocation4 + $0x8] sm:$0xff]
      %v1866 = vld [vmem:[#allocation4 + $0x10] sm:$0xff]
      %v1867 = vld [vmem:[#allocation4 + $0x18] sm:$0xff]
      %v1868 = vld [vmem:[#allocation4 + $0x20] sm:$0xff]
      %v1869 = vld [vmem:[#allocation4 + $0x28] sm:$0xff]
      %v1870 = vld [vmem:[#allocation4 + $0x30] sm:$0xff]
      %v1871 = vld [vmem:[#allocation4 + $0x38] sm:$0xff]
      %v1872 = vld [vmem:[#allocation4 + $0x40] sm:$0xff]
      %v1873 = vld [vmem:[#allocation4 + $0x48] sm:$0xff]
      %v1874 = vld [vmem:[#allocation4 + $0x50] sm:$0xff]
      %v1875 = vld [vmem:[#allocation4 + $0x58] sm:$0xff]
      %v1876 = vld [vmem:[#allocation4 + $0x60] sm:$0xff]
      %v1877 = vld [vmem:[#allocation4 + $0x68] sm:$0xff]
      %v1878 = vld [vmem:[#allocation4 + $0x70] sm:$0xff]
      %v1879 = vld [vmem:[#allocation4 + $0x78] sm:$0xff]
      %v1880 = vld [vmem:[#allocation4 + $0x80] sm:$0xff]
      %v1881 = vld [vmem:[#allocation4 + $0x88] sm:$0xff]
      %v1882 = vld [vmem:[#allocation4 + $0x90] sm:$0xff]
      %v1883 = vld [vmem:[#allocation4 + $0x98] sm:$0xff]
      %v1884 = vld [vmem:[#allocation4 + $0xa0] sm:$0xff]
      %v1885 = vld [vmem:[#allocation4 + $0xa8] sm:$0xff]
      %v1886 = vld [vmem:[#allocation4 + $0xb0] sm:$0xff]
      %v1887 = vld [vmem:[#allocation4 + $0xb8] sm:$0xff]
      %v1888 = vld [vmem:[#allocation4 + $0xc0] sm:$0xff]
      %v1889 = vld [vmem:[#allocation4 + $0xc8] sm:$0xff]
      %v1890 = vld [vmem:[#allocation4 + $0xd0] sm:$0xff]
      %v1891 = vld [vmem:[#allocation4 + $0xd8] sm:$0xff]
      %v1892 = vld [vmem:[#allocation4 + $0xe0] sm:$0xff]
      %v1893 = vld [vmem:[#allocation4 + $0xe8] sm:$0xff]
      %v1894 = vld [vmem:[#allocation4 + $0xf0] sm:$0xff]
      %v1895 = vld [vmem:[#allocation4 + $0xf8] sm:$0xff]
      %v1899 = vrot.slane %v460, 7
      %v1900 = vrot.slane %v461, 7
      %v1901 = vsel %vm548, %v1899, %v1900
      %v1902 = vrot.slane %v462, 7
      %v1903 = vsel %vm548, %v1900, %v1902
      %s1904 = scalar_lea.vmem %s1, 12
      %v1905 = vld [vmem:[%s1904] sm:$0xf]
      %v1906 = vsel %vm225, %v1901, 0
      %v1908 = vsel %vm225, %v1903, 0
      %v1911 = vsel %vm694, %v1905, 0
      %1913 = vmatprep.subr.mxu0 0.0
      %1914 = vmatpush1.msra.mxu0 0.0
      %1915 = vmatprep.subr.mxu0 0.0
      %1916 = vmatpush1.msra.mxu0 0.0
      %1917 = vmatprep.subr.mxu0 0.0
      %1918 = vmatpush1.msra.mxu0 0.0
      %1919 = vmatprep.subr.mxu0 0.0
      %1920 = vmatpush1.msra.mxu0 0.0
      %1921 = vmatprep.subr.mxu0 0.0
      %1922 = vmatpush1.msra.mxu0 0.0
      %1923 = vmatprep.subr.mxu0 0.0
      %1924 = vmatpush1.msra.mxu0 0.0
      %1925 = vmatprep.subr.mxu0 0.0
      %1926 = vmatpush1.msra.mxu0 0.0
      %1927 = vmatprep.subr.mxu0 0.0
      %1928 = vmatpush1.msra.mxu0 0.0
      %1929 = vmatprep.subr.mxu0 0.0
      %1930 = vmatpush1.msra.mxu0 0.0
      %1931 = vmatprep.subr.mxu0 0.0
      %1932 = vmatpush1.msra.mxu0 0.0
      %1933 = vmatprep.subr.mxu0 0.0
      %1934 = vmatpush1.msra.mxu0 0.0
      %1935 = vmatprep.subr.mxu0 0.0
      %1936 = vmatpush1.msra.mxu0 0.0
      %1937 = vmatprep.subr.mxu0 0.0
      %1938 = vmatpush1.msra.mxu0 0.0
      %1939 = vmatprep.subr.mxu0 0.0
      %1940 = vmatpush1.msra.mxu0 0.0
      %1941 = vmatprep.subr.mxu0 0.0
      %1942 = vmatpush1.msra.mxu0 0.0
      %1943 = vmatprep.subr.mxu0 0.0
      %1944 = vmatpush1.msra.mxu0 %v1911
      %1945 = vmatprep.subr.mxu0 0.0
      %1946 = vmatpush2.msra.mxu0 0.0
      %1947 = vmatprep.subr.mxu0 0.0
      %1948 = vmatpush2.msra.mxu0 0.0
      %1949 = vmatprep.subr.mxu0 0.0
      %1950 = vmatpush2.msra.mxu0 0.0
      %1951 = vmatprep.subr.mxu0 0.0
      %1952 = vmatpush2.msra.mxu0 0.0
      %1953 = vmatprep.subr.mxu0 0.0
      %1954 = vmatpush2.msra.mxu0 0.0
      %1955 = vmatprep.subr.mxu0 0.0
      %1956 = vmatpush2.msra.mxu0 0.0
      %1957 = vmatprep.subr.mxu0 0.0
      %1958 = vmatpush2.msra.mxu0 0.0
      %1959 = vmatprep.subr.mxu0 0.0
      %1960 = vmatpush2.msra.mxu0 0.0
      %1961 = vmatprep.subr.mxu0 0.0
      %1962 = vmatpush2.msra.mxu0 0.0
      %1963 = vmatprep.subr.mxu0 0.0
      %1964 = vmatpush2.msra.mxu0 0.0
      %1965 = vmatprep.subr.mxu0 0.0
      %1966 = vmatpush2.msra.mxu0 0.0
      %1967 = vmatprep.subr.mxu0 0.0
      %1968 = vmatpush2.msra.mxu0 0.0
      %1969 = vmatprep.subr.mxu0 0.0
      %1970 = vmatpush2.msra.mxu0 0.0
      %1971 = vmatprep.subr.mxu0 0.0
      %1972 = vmatpush2.msra.mxu0 0.0
      %1973 = vmatprep.subr.mxu0 0.0
      %1974 = vmatpush2.msra.mxu0 0.0
      %1975 = vmatprep.subr.mxu0 0.0
      %1976 = vmatpush2.msra.mxu0 0.0
      %1977 = vmatprep.mubr.f32.mxu0 0.0
      %1978 = vmatmul.mubr.f32.gmra.mxu0 %v634
      %v1979 = vpop.f32.mrf.mxu0
      %v1980 = vadd.f32 0.0, %v1979
      %v1981 = vpop.f32.mrf.mxu0
      %1982 = vmatprep.mubr.f32.mxu0 0.0
      %1983 = vmatmul.mubr.f32.gmra.mxu0 %v636
      %v1984 = vpop.f32.mrf.mxu0
      %v1985 = vadd.f32 0.0, %v1984
      %v1986 = vpop.f32.mrf.mxu0
      %1987 = vmatprep.mubr.f32.mxu0 0.0
      %1988 = vmatmul.mubr.f32.gmra.mxu0 %v638
      %v1989 = vpop.f32.mrf.mxu0
      %v1990 = vadd.f32 0.0, %v1989
      %v1991 = vpop.f32.mrf.mxu0
      %1992 = vmatprep.mubr.f32.mxu0 0.0
      %1993 = vmatmul.mubr.f32.gmra.mxu0 %v640
      %v1994 = vpop.f32.mrf.mxu0
      %v1995 = vadd.f32 0.0, %v1994
      %v1996 = vpop.f32.mrf.mxu0
      %1997 = vmatprep.mubr.f32.mxu0 0.0
      %1998 = vmatmul.mubr.f32.gmra.mxu0 %v642
      %v1999 = vpop.f32.mrf.mxu0
      %v2000 = vadd.f32 0.0, %v1999
      %v2001 = vpop.f32.mrf.mxu0
      %2002 = vmatprep.mubr.f32.mxu0 0.0
      %2003 = vmatmul.mubr.f32.gmra.mxu0 %v644
      %v2004 = vpop.f32.mrf.mxu0
      %v2005 = vadd.f32 0.0, %v2004
      %v2006 = vpop.f32.mrf.mxu0
      %2007 = vmatprep.mubr.f32.mxu0 0.0
      %2008 = vmatmul.mubr.f32.gmra.mxu0 %v646
      %v2009 = vpop.f32.mrf.mxu0
      %v2010 = vadd.f32 0.0, %v2009
      %v2011 = vpop.f32.mrf.mxu0
      %2012 = vmatprep.mubr.f32.mxu0 0.0
      %2013 = vmatmul.mubr.f32.gmra.mxu0 %v648
      %v2014 = vpop.f32.mrf.mxu0
      %v2015 = vadd.f32 0.0, %v2014
      %v2016 = vpop.f32.mrf.mxu0
      %2017 = vmatprep.mubr.f32.mxu0 0.0
      %2018 = vmatmul.mubr.f32.gmra.mxu0 %v650
      %v2019 = vpop.f32.mrf.mxu0
      %v2020 = vadd.f32 0.0, %v2019
      %v2021 = vpop.f32.mrf.mxu0
      %2022 = vmatprep.mubr.f32.mxu0 0.0
      %2023 = vmatmul.mubr.f32.gmra.mxu0 %v652
      %v2024 = vpop.f32.mrf.mxu0
      %v2025 = vadd.f32 0.0, %v2024
      %v2026 = vpop.f32.mrf.mxu0
      %2027 = vmatprep.mubr.f32.mxu0 0.0
      %2028 = vmatmul.mubr.f32.gmra.mxu0 %v654
      %v2029 = vpop.f32.mrf.mxu0
      %v2030 = vadd.f32 0.0, %v2029
      %v2031 = vpop.f32.mrf.mxu0
      %2032 = vmatprep.mubr.f32.mxu0 0.0
      %2033 = vmatmul.mubr.f32.gmra.mxu0 %v656
      %v2034 = vpop.f32.mrf.mxu0
      %v2035 = vadd.f32 0.0, %v2034
      %v2036 = vpop.f32.mrf.mxu0
      %2037 = vmatprep.mubr.f32.mxu0 0.0
      %2038 = vmatmul.mubr.f32.gmra.mxu0 %v658
      %v2039 = vpop.f32.mrf.mxu0
      %v2040 = vadd.f32 0.0, %v2039
      %v2041 = vpop.f32.mrf.mxu0
      %2042 = vmatprep.mubr.f32.mxu0 0.0
      %2043 = vmatmul.mubr.f32.gmra.mxu0 %v660
      %v2044 = vpop.f32.mrf.mxu0
      %v2045 = vadd.f32 0.0, %v2044
      %v2046 = vpop.f32.mrf.mxu0
      %2047 = vmatprep.mubr.f32.mxu0 0.0
      %2048 = vmatmul.mubr.f32.gmra.mxu0 %v662
      %v2049 = vpop.f32.mrf.mxu0
      %v2050 = vadd.f32 0.0, %v2049
      %v2051 = vpop.f32.mrf.mxu0
      %2052 = vmatprep.mubr.f32.mxu0 0.0
      %2053 = vmatmul.mubr.f32.gmra.mxu0 %v664
      %v2054 = vpop.f32.mrf.mxu0
      %v2055 = vadd.f32 0.0, %v2054
      %v2056 = vpop.f32.mrf.mxu0
      %2057 = vmatprep.mubr.f32.mxu0 0.0
      %2058 = vmatmul.mubr.f32.gmra.mxu0 %v666
      %v2059 = vpop.f32.mrf.mxu0
      %v2060 = vadd.f32 0.0, %v2059
      %v2061 = vpop.f32.mrf.mxu0
      %2062 = vmatprep.mubr.f32.mxu0 0.0
      %2063 = vmatmul.mubr.f32.gmra.mxu0 %v668
      %v2064 = vpop.f32.mrf.mxu0
      %v2065 = vadd.f32 0.0, %v2064
      %v2066 = vpop.f32.mrf.mxu0
      %2067 = vmatprep.mubr.f32.mxu0 0.0
      %2068 = vmatmul.mubr.f32.gmra.mxu0 %v670
      %v2069 = vpop.f32.mrf.mxu0
      %v2070 = vadd.f32 0.0, %v2069
      %v2071 = vpop.f32.mrf.mxu0
      %2072 = vmatprep.mubr.f32.mxu0 0.0
      %2073 = vmatmul.mubr.f32.gmra.mxu0 %v672
      %v2074 = vpop.f32.mrf.mxu0
      %v2075 = vadd.f32 0.0, %v2074
      %v2076 = vpop.f32.mrf.mxu0
      %2077 = vmatprep.mubr.f32.mxu0 0.0
      %2078 = vmatmul.mubr.f32.gmra.mxu0 %v674
      %v2079 = vpop.f32.mrf.mxu0
      %v2080 = vadd.f32 0.0, %v2079
      %v2081 = vpop.f32.mrf.mxu0
      %2082 = vmatprep.mubr.f32.mxu0 0.0
      %2083 = vmatmul.mubr.f32.gmra.mxu0 %v676
      %v2084 = vpop.f32.mrf.mxu0
      %v2085 = vadd.f32 0.0, %v2084
      %v2086 = vpop.f32.mrf.mxu0
      %2087 = vmatprep.mubr.f32.mxu0 0.0
      %2088 = vmatmul.mubr.f32.gmra.mxu0 %v678
      %v2089 = vpop.f32.mrf.mxu0
      %v2090 = vadd.f32 0.0, %v2089
      %v2091 = vpop.f32.mrf.mxu0
      %2092 = vmatprep.mubr.f32.mxu0 0.0
      %2093 = vmatmul.mubr.f32.gmra.mxu0 %v680
      %v2094 = vpop.f32.mrf.mxu0
      %v2095 = vadd.f32 0.0, %v2094
      %v2096 = vpop.f32.mrf.mxu0
      %2097 = vmatprep.mubr.f32.mxu0 0.0
      %2098 = vmatmul.mubr.f32.gmra.mxu0 %v682
      %v2099 = vpop.f32.mrf.mxu0
      %v2100 = vadd.f32 0.0, %v2099
      %v2101 = vpop.f32.mrf.mxu0
      %2102 = vmatprep.mubr.f32.mxu0 0.0
      %2103 = vmatmul.mubr.f32.gmra.mxu0 %v684
      %v2104 = vpop.f32.mrf.mxu0
      %v2105 = vadd.f32 0.0, %v2104
      %v2106 = vpop.f32.mrf.mxu0
      %2107 = vmatprep.mubr.f32.mxu0 0.0
      %2108 = vmatmul.mubr.f32.gmra.mxu0 %v686
      %v2109 = vpop.f32.mrf.mxu0
      %v2110 = vadd.f32 0.0, %v2109
      %v2111 = vpop.f32.mrf.mxu0
      %2112 = vmatprep.mubr.f32.mxu0 0.0
      %2113 = vmatmul.mubr.f32.gmra.mxu0 %v688
      %v2114 = vpop.f32.mrf.mxu0
      %v2115 = vadd.f32 0.0, %v2114
      %v2116 = vpop.f32.mrf.mxu0
      %2117 = vmatprep.mubr.f32.mxu0 0.0
      %2118 = vmatmul.mubr.f32.gmra.mxu0 %v690
      %v2119 = vpop.f32.mrf.mxu0
      %v2120 = vadd.f32 0.0, %v2119
      %v2121 = vpop.f32.mrf.mxu0
      %2122 = vmatprep.mubr.f32.mxu0 0.0
      %2123 = vmatmul.mubr.f32.gmra.mxu0 %v692
      %v2124 = vpop.f32.mrf.mxu0
      %v2125 = vadd.f32 0.0, %v2124
      %v2126 = vpop.f32.mrf.mxu0
      %2127 = vmatprep.mubr.f32.mxu0 0.0
      %2128 = vmatmul.mubr.f32.gmra.mxu0 %v1906
      %v2129 = vpop.f32.mrf.mxu0
      %v2130 = vadd.f32 0.0, %v2129
      %v2131 = vpop.f32.mrf.mxu0
      %2132 = vmatprep.mubr.f32.mxu0 0.0
      %2133 = vmatmul.mubr.f32.gmra.mxu0 %v1908
      %v2134 = vpop.f32.mrf.mxu0
      %v2135 = vadd.f32 0.0, %v2134
      %v2136 = vpop.f32.mrf.mxu0
      %2137 = vdwg.mxu0
      %v2138 = vadd.f32 %v1864, %v1980
      %v2139 = vadd.f32 %v1865, %v1985
      %v2140 = vadd.f32 %v1866, %v1990
      %v2141 = vadd.f32 %v1867, %v1995
      %v2142 = vadd.f32 %v1868, %v2000
      %v2143 = vadd.f32 %v1869, %v2005
      %v2144 = vadd.f32 %v1870, %v2010
      %v2145 = vadd.f32 %v1871, %v2015
      %v2146 = vadd.f32 %v1872, %v2020
      %v2147 = vadd.f32 %v1873, %v2025
      %v2148 = vadd.f32 %v1874, %v2030
      %v2149 = vadd.f32 %v1875, %v2035
      %v2150 = vadd.f32 %v1876, %v2040
      %v2151 = vadd.f32 %v1877, %v2045
      %v2152 = vadd.f32 %v1878, %v2050
      %v2153 = vadd.f32 %v1879, %v2055
      %v2154 = vadd.f32 %v1880, %v2060
      %v2155 = vadd.f32 %v1881, %v2065
      %v2156 = vadd.f32 %v1882, %v2070
      %v2157 = vadd.f32 %v1883, %v2075
      %v2158 = vadd.f32 %v1884, %v2080
      %v2159 = vadd.f32 %v1885, %v2085
      %v2160 = vadd.f32 %v1886, %v2090
      %v2161 = vadd.f32 %v1887, %v2095
      %v2162 = vadd.f32 %v1888, %v2100
      %v2163 = vadd.f32 %v1889, %v2105
      %v2164 = vadd.f32 %v1890, %v2110
      %v2165 = vadd.f32 %v1891, %v2115
      %v2166 = vadd.f32 %v1892, %v2120
      %v2167 = vadd.f32 %v1893, %v2125
      %v2168 = vadd.f32 %v1894, %v2130
      %v2169 = vadd.f32 %v1895, %v2135
      %2170 = vst.msk [vmem:[#allocation4] sm:$0xff] %vm363, %v2138
      %2171 = vst.msk [vmem:[#allocation4 + $0x8] sm:$0xff] %vm363, %v2139
      %2172 = vst.msk [vmem:[#allocation4 + $0x10] sm:$0xff] %vm363, %v2140
      %2173 = vst.msk [vmem:[#allocation4 + $0x18] sm:$0xff] %vm363, %v2141
      %2174 = vst.msk [vmem:[#allocation4 + $0x20] sm:$0xff] %vm363, %v2142
      %2175 = vst.msk [vmem:[#allocation4 + $0x28] sm:$0xff] %vm363, %v2143
      %2176 = vst.msk [vmem:[#allocation4 + $0x30] sm:$0xff] %vm363, %v2144
      %2177 = vst.msk [vmem:[#allocation4 + $0x38] sm:$0xff] %vm363, %v2145
      %2178 = vst.msk [vmem:[#allocation4 + $0x40] sm:$0xff] %vm363, %v2146
      %2179 = vst.msk [vmem:[#allocation4 + $0x48] sm:$0xff] %vm363, %v2147
      %2180 = vst.msk [vmem:[#allocation4 + $0x50] sm:$0xff] %vm363, %v2148
      %2181 = vst.msk [vmem:[#allocation4 + $0x58] sm:$0xff] %vm363, %v2149
      %2182 = vst.msk [vmem:[#allocation4 + $0x60] sm:$0xff] %vm363, %v2150
      %2183 = vst.msk [vmem:[#allocation4 + $0x68] sm:$0xff] %vm363, %v2151
      %2184 = vst.msk [vmem:[#allocation4 + $0x70] sm:$0xff] %vm363, %v2152
      %2185 = vst.msk [vmem:[#allocation4 + $0x78] sm:$0xff] %vm363, %v2153
      %2186 = vst.msk [vmem:[#allocation4 + $0x80] sm:$0xff] %vm363, %v2154
      %2187 = vst.msk [vmem:[#allocation4 + $0x88] sm:$0xff] %vm363, %v2155
      %2188 = vst.msk [vmem:[#allocation4 + $0x90] sm:$0xff] %vm363, %v2156
      %2189 = vst.msk [vmem:[#allocation4 + $0x98] sm:$0xff] %vm363, %v2157
      %2190 = vst.msk [vmem:[#allocation4 + $0xa0] sm:$0xff] %vm363, %v2158
      %2191 = vst.msk [vmem:[#allocation4 + $0xa8] sm:$0xff] %vm363, %v2159
      %2192 = vst.msk [vmem:[#allocation4 + $0xb0] sm:$0xff] %vm363, %v2160
      %2193 = vst.msk [vmem:[#allocation4 + $0xb8] sm:$0xff] %vm363, %v2161
      %2194 = vst.msk [vmem:[#allocation4 + $0xc0] sm:$0xff] %vm363, %v2162
      %2195 = vst.msk [vmem:[#allocation4 + $0xc8] sm:$0xff] %vm363, %v2163
      %2196 = vst.msk [vmem:[#allocation4 + $0xd0] sm:$0xff] %vm363, %v2164
      %2197 = vst.msk [vmem:[#allocation4 + $0xd8] sm:$0xff] %vm363, %v2165
      %2198 = vst.msk [vmem:[#allocation4 + $0xe0] sm:$0xff] %vm363, %v2166
      %2199 = vst.msk [vmem:[#allocation4 + $0xe8] sm:$0xff] %vm363, %v2167
      %2200 = vst.msk [vmem:[#allocation4 + $0xf0] sm:$0xff] %vm363, %v2168
      %2201 = vst.msk [vmem:[#allocation4 + $0xf8] sm:$0xff] %vm363, %v2169
      %v2202 = vld [vmem:[#allocation4] sm:$0xff]
      %v2203 = vld [vmem:[#allocation4 + $0x8] sm:$0xff]
      %v2204 = vld [vmem:[#allocation4 + $0x10] sm:$0xff]
      %v2205 = vld [vmem:[#allocation4 + $0x18] sm:$0xff]
      %v2206 = vld [vmem:[#allocation4 + $0x20] sm:$0xff]
      %v2207 = vld [vmem:[#allocation4 + $0x28] sm:$0xff]
      %v2208 = vld [vmem:[#allocation4 + $0x30] sm:$0xff]
      %v2209 = vld [vmem:[#allocation4 + $0x38] sm:$0xff]
      %v2210 = vld [vmem:[#allocation4 + $0x40] sm:$0xff]
      %v2211 = vld [vmem:[#allocation4 + $0x48] sm:$0xff]
      %v2212 = vld [vmem:[#allocation4 + $0x50] sm:$0xff]
      %v2213 = vld [vmem:[#allocation4 + $0x58] sm:$0xff]
      %v2214 = vld [vmem:[#allocation4 + $0x60] sm:$0xff]
      %v2215 = vld [vmem:[#allocation4 + $0x68] sm:$0xff]
      %v2216 = vld [vmem:[#allocation4 + $0x70] sm:$0xff]
      %v2217 = vld [vmem:[#allocation4 + $0x78] sm:$0xff]
      %v2218 = vld [vmem:[#allocation4 + $0x80] sm:$0xff]
      %v2219 = vld [vmem:[#allocation4 + $0x88] sm:$0xff]
      %v2220 = vld [vmem:[#allocation4 + $0x90] sm:$0xff]
      %v2221 = vld [vmem:[#allocation4 + $0x98] sm:$0xff]
      %v2222 = vld [vmem:[#allocation4 + $0xa0] sm:$0xff]
      %v2223 = vld [vmem:[#allocation4 + $0xa8] sm:$0xff]
      %v2224 = vld [vmem:[#allocation4 + $0xb0] sm:$0xff]
      %v2225 = vld [vmem:[#allocation4 + $0xb8] sm:$0xff]
      %v2226 = vld [vmem:[#allocation4 + $0xc0] sm:$0xff]
      %v2227 = vld [vmem:[#allocation4 + $0xc8] sm:$0xff]
      %v2228 = vld [vmem:[#allocation4 + $0xd0] sm:$0xff]
      %v2229 = vld [vmem:[#allocation4 + $0xd8] sm:$0xff]
      %v2230 = vld [vmem:[#allocation4 + $0xe0] sm:$0xff]
      %v2231 = vld [vmem:[#allocation4 + $0xe8] sm:$0xff]
      %v2232 = vld [vmem:[#allocation4 + $0xf0] sm:$0xff]
      %v2233 = vld [vmem:[#allocation4 + $0xf8] sm:$0xff]
      %s2234 = scalar_lea.vmem %s1, 16
      %v2235 = vld [vmem:[%s2234] sm:$0xf]
      %v2236 = vsel %vm225, %v461, 0
      %v2238 = vsel %vm225, %v462, 0
      %v2241 = vsel %vm694, %v2235, 0
      %2243 = vmatprep.subr.mxu0 0.0
      %2244 = vmatpush1.msra.mxu0 0.0
      %2245 = vmatprep.subr.mxu0 0.0
      %2246 = vmatpush1.msra.mxu0 0.0
      %2247 = vmatprep.subr.mxu0 0.0
      %2248 = vmatpush1.msra.mxu0 0.0
      %2249 = vmatprep.subr.mxu0 0.0
      %2250 = vmatpush1.msra.mxu0 0.0
      %2251 = vmatprep.subr.mxu0 0.0
      %2252 = vmatpush1.msra.mxu0 0.0
      %2253 = vmatprep.subr.mxu0 0.0
      %2254 = vmatpush1.msra.mxu0 0.0
      %2255 = vmatprep.subr.mxu0 0.0
      %2256 = vmatpush1.msra.mxu0 0.0
      %2257 = vmatprep.subr.mxu0 0.0
      %2258 = vmatpush1.msra.mxu0 0.0
      %2259 = vmatprep.subr.mxu0 0.0
      %2260 = vmatpush1.msra.mxu0 0.0
      %2261 = vmatprep.subr.mxu0 0.0
      %2262 = vmatpush1.msra.mxu0 0.0
      %2263 = vmatprep.subr.mxu0 0.0
      %2264 = vmatpush1.msra.mxu0 0.0
      %2265 = vmatprep.subr.mxu0 0.0
      %2266 = vmatpush1.msra.mxu0 0.0
      %2267 = vmatprep.subr.mxu0 0.0
      %2268 = vmatpush1.msra.mxu0 0.0
      %2269 = vmatprep.subr.mxu0 0.0
      %2270 = vmatpush1.msra.mxu0 0.0
      %2271 = vmatprep.subr.mxu0 0.0
      %2272 = vmatpush1.msra.mxu0 0.0
      %2273 = vmatprep.subr.mxu0 0.0
      %2274 = vmatpush1.msra.mxu0 %v2241
      %2275 = vmatprep.subr.mxu0 0.0
      %2276 = vmatpush2.msra.mxu0 0.0
      %2277 = vmatprep.subr.mxu0 0.0
      %2278 = vmatpush2.msra.mxu0 0.0
      %2279 = vmatprep.subr.mxu0 0.0
      %2280 = vmatpush2.msra.mxu0 0.0
      %2281 = vmatprep.subr.mxu0 0.0
      %2282 = vmatpush2.msra.mxu0 0.0
      %2283 = vmatprep.subr.mxu0 0.0
      %2284 = vmatpush2.msra.mxu0 0.0
      %2285 = vmatprep.subr.mxu0 0.0
      %2286 = vmatpush2.msra.mxu0 0.0
      %2287 = vmatprep.subr.mxu0 0.0
      %2288 = vmatpush2.msra.mxu0 0.0
      %2289 = vmatprep.subr.mxu0 0.0
      %2290 = vmatpush2.msra.mxu0 0.0
      %2291 = vmatprep.subr.mxu0 0.0
      %2292 = vmatpush2.msra.mxu0 0.0
      %2293 = vmatprep.subr.mxu0 0.0
      %2294 = vmatpush2.msra.mxu0 0.0
      %2295 = vmatprep.subr.mxu0 0.0
      %2296 = vmatpush2.msra.mxu0 0.0
      %2297 = vmatprep.subr.mxu0 0.0
      %2298 = vmatpush2.msra.mxu0 0.0
      %2299 = vmatprep.subr.mxu0 0.0
      %2300 = vmatpush2.msra.mxu0 0.0
      %2301 = vmatprep.subr.mxu0 0.0
      %2302 = vmatpush2.msra.mxu0 0.0
      %2303 = vmatprep.subr.mxu0 0.0
      %2304 = vmatpush2.msra.mxu0 0.0
      %2305 = vmatprep.subr.mxu0 0.0
      %2306 = vmatpush2.msra.mxu0 0.0
      %2307 = vmatprep.mubr.f32.mxu0 0.0
      %2308 = vmatmul.mubr.f32.gmra.mxu0 %v1025
      %v2309 = vpop.f32.mrf.mxu0
      %v2310 = vadd.f32 0.0, %v2309
      %v2311 = vpop.f32.mrf.mxu0
      %2312 = vmatprep.mubr.f32.mxu0 0.0
      %2313 = vmatmul.mubr.f32.gmra.mxu0 %v1027
      %v2314 = vpop.f32.mrf.mxu0
      %v2315 = vadd.f32 0.0, %v2314
      %v2316 = vpop.f32.mrf.mxu0
      %2317 = vmatprep.mubr.f32.mxu0 0.0
      %2318 = vmatmul.mubr.f32.gmra.mxu0 %v1029
      %v2319 = vpop.f32.mrf.mxu0
      %v2320 = vadd.f32 0.0, %v2319
      %v2321 = vpop.f32.mrf.mxu0
      %2322 = vmatprep.mubr.f32.mxu0 0.0
      %2323 = vmatmul.mubr.f32.gmra.mxu0 %v1031
      %v2324 = vpop.f32.mrf.mxu0
      %v2325 = vadd.f32 0.0, %v2324
      %v2326 = vpop.f32.mrf.mxu0
      %2327 = vmatprep.mubr.f32.mxu0 0.0
      %2328 = vmatmul.mubr.f32.gmra.mxu0 %v1033
      %v2329 = vpop.f32.mrf.mxu0
      %v2330 = vadd.f32 0.0, %v2329
      %v2331 = vpop.f32.mrf.mxu0
      %2332 = vmatprep.mubr.f32.mxu0 0.0
      %2333 = vmatmul.mubr.f32.gmra.mxu0 %v1035
      %v2334 = vpop.f32.mrf.mxu0
      %v2335 = vadd.f32 0.0, %v2334
      %v2336 = vpop.f32.mrf.mxu0
      %2337 = vmatprep.mubr.f32.mxu0 0.0
      %2338 = vmatmul.mubr.f32.gmra.mxu0 %v1037
      %v2339 = vpop.f32.mrf.mxu0
      %v2340 = vadd.f32 0.0, %v2339
      %v2341 = vpop.f32.mrf.mxu0
      %2342 = vmatprep.mubr.f32.mxu0 0.0
      %2343 = vmatmul.mubr.f32.gmra.mxu0 %v1039
      %v2344 = vpop.f32.mrf.mxu0
      %v2345 = vadd.f32 0.0, %v2344
      %v2346 = vpop.f32.mrf.mxu0
      %2347 = vmatprep.mubr.f32.mxu0 0.0
      %2348 = vmatmul.mubr.f32.gmra.mxu0 %v1041
      %v2349 = vpop.f32.mrf.mxu0
      %v2350 = vadd.f32 0.0, %v2349
      %v2351 = vpop.f32.mrf.mxu0
      %2352 = vmatprep.mubr.f32.mxu0 0.0
      %2353 = vmatmul.mubr.f32.gmra.mxu0 %v1043
      %v2354 = vpop.f32.mrf.mxu0
      %v2355 = vadd.f32 0.0, %v2354
      %v2356 = vpop.f32.mrf.mxu0
      %2357 = vmatprep.mubr.f32.mxu0 0.0
      %2358 = vmatmul.mubr.f32.gmra.mxu0 %v1045
      %v2359 = vpop.f32.mrf.mxu0
      %v2360 = vadd.f32 0.0, %v2359
      %v2361 = vpop.f32.mrf.mxu0
      %2362 = vmatprep.mubr.f32.mxu0 0.0
      %2363 = vmatmul.mubr.f32.gmra.mxu0 %v1047
      %v2364 = vpop.f32.mrf.mxu0
      %v2365 = vadd.f32 0.0, %v2364
      %v2366 = vpop.f32.mrf.mxu0
      %2367 = vmatprep.mubr.f32.mxu0 0.0
      %2368 = vmatmul.mubr.f32.gmra.mxu0 %v1049
      %v2369 = vpop.f32.mrf.mxu0
      %v2370 = vadd.f32 0.0, %v2369
      %v2371 = vpop.f32.mrf.mxu0
      %2372 = vmatprep.mubr.f32.mxu0 0.0
      %2373 = vmatmul.mubr.f32.gmra.mxu0 %v1051
      %v2374 = vpop.f32.mrf.mxu0
      %v2375 = vadd.f32 0.0, %v2374
      %v2376 = vpop.f32.mrf.mxu0
      %2377 = vmatprep.mubr.f32.mxu0 0.0
      %2378 = vmatmul.mubr.f32.gmra.mxu0 %v1053
      %v2379 = vpop.f32.mrf.mxu0
      %v2380 = vadd.f32 0.0, %v2379
      %v2381 = vpop.f32.mrf.mxu0
      %2382 = vmatprep.mubr.f32.mxu0 0.0
      %2383 = vmatmul.mubr.f32.gmra.mxu0 %v1055
      %v2384 = vpop.f32.mrf.mxu0
      %v2385 = vadd.f32 0.0, %v2384
      %v2386 = vpop.f32.mrf.mxu0
      %2387 = vmatprep.mubr.f32.mxu0 0.0
      %2388 = vmatmul.mubr.f32.gmra.mxu0 %v1057
      %v2389 = vpop.f32.mrf.mxu0
      %v2390 = vadd.f32 0.0, %v2389
      %v2391 = vpop.f32.mrf.mxu0
      %2392 = vmatprep.mubr.f32.mxu0 0.0
      %2393 = vmatmul.mubr.f32.gmra.mxu0 %v1059
      %v2394 = vpop.f32.mrf.mxu0
      %v2395 = vadd.f32 0.0, %v2394
      %v2396 = vpop.f32.mrf.mxu0
      %2397 = vmatprep.mubr.f32.mxu0 0.0
      %2398 = vmatmul.mubr.f32.gmra.mxu0 %v1061
      %v2399 = vpop.f32.mrf.mxu0
      %v2400 = vadd.f32 0.0, %v2399
      %v2401 = vpop.f32.mrf.mxu0
      %2402 = vmatprep.mubr.f32.mxu0 0.0
      %2403 = vmatmul.mubr.f32.gmra.mxu0 %v1063
      %v2404 = vpop.f32.mrf.mxu0
      %v2405 = vadd.f32 0.0, %v2404
      %v2406 = vpop.f32.mrf.mxu0
      %2407 = vmatprep.mubr.f32.mxu0 0.0
      %2408 = vmatmul.mubr.f32.gmra.mxu0 %v1065
      %v2409 = vpop.f32.mrf.mxu0
      %v2410 = vadd.f32 0.0, %v2409
      %v2411 = vpop.f32.mrf.mxu0
      %2412 = vmatprep.mubr.f32.mxu0 0.0
      %2413 = vmatmul.mubr.f32.gmra.mxu0 %v1067
      %v2414 = vpop.f32.mrf.mxu0
      %v2415 = vadd.f32 0.0, %v2414
      %v2416 = vpop.f32.mrf.mxu0
      %2417 = vmatprep.mubr.f32.mxu0 0.0
      %2418 = vmatmul.mubr.f32.gmra.mxu0 %v1069
      %v2419 = vpop.f32.mrf.mxu0
      %v2420 = vadd.f32 0.0, %v2419
      %v2421 = vpop.f32.mrf.mxu0
      %2422 = vmatprep.mubr.f32.mxu0 0.0
      %2423 = vmatmul.mubr.f32.gmra.mxu0 %v1071
      %v2424 = vpop.f32.mrf.mxu0
      %v2425 = vadd.f32 0.0, %v2424
      %v2426 = vpop.f32.mrf.mxu0
      %2427 = vmatprep.mubr.f32.mxu0 0.0
      %2428 = vmatmul.mubr.f32.gmra.mxu0 %v1073
      %v2429 = vpop.f32.mrf.mxu0
      %v2430 = vadd.f32 0.0, %v2429
      %v2431 = vpop.f32.mrf.mxu0
      %2432 = vmatprep.mubr.f32.mxu0 0.0
      %2433 = vmatmul.mubr.f32.gmra.mxu0 %v1075
      %v2434 = vpop.f32.mrf.mxu0
      %v2435 = vadd.f32 0.0, %v2434
      %v2436 = vpop.f32.mrf.mxu0
      %2437 = vmatprep.mubr.f32.mxu0 0.0
      %2438 = vmatmul.mubr.f32.gmra.mxu0 %v1077
      %v2439 = vpop.f32.mrf.mxu0
      %v2440 = vadd.f32 0.0, %v2439
      %v2441 = vpop.f32.mrf.mxu0
      %2442 = vmatprep.mubr.f32.mxu0 0.0
      %2443 = vmatmul.mubr.f32.gmra.mxu0 %v1079
      %v2444 = vpop.f32.mrf.mxu0
      %v2445 = vadd.f32 0.0, %v2444
      %v2446 = vpop.f32.mrf.mxu0
      %2447 = vmatprep.mubr.f32.mxu0 0.0
      %2448 = vmatmul.mubr.f32.gmra.mxu0 %v1081
      %v2449 = vpop.f32.mrf.mxu0
      %v2450 = vadd.f32 0.0, %v2449
      %v2451 = vpop.f32.mrf.mxu0
      %2452 = vmatprep.mubr.f32.mxu0 0.0
      %2453 = vmatmul.mubr.f32.gmra.mxu0 %v1083
      %v2454 = vpop.f32.mrf.mxu0
      %v2455 = vadd.f32 0.0, %v2454
      %v2456 = vpop.f32.mrf.mxu0
      %2457 = vmatprep.mubr.f32.mxu0 0.0
      %2458 = vmatmul.mubr.f32.gmra.mxu0 %v2236
      %v2459 = vpop.f32.mrf.mxu0
      %v2460 = vadd.f32 0.0, %v2459
      %v2461 = vpop.f32.mrf.mxu0
      %2462 = vmatprep.mubr.f32.mxu0 0.0
      %2463 = vmatmul.mubr.f32.gmra.mxu0 %v2238
      %v2464 = vpop.f32.mrf.mxu0
      %v2465 = vadd.f32 0.0, %v2464
      %v2466 = vpop.f32.mrf.mxu0
      %2467 = vdwg.mxu0
      %v2468 = vadd.f32 %v2202, %v2310
      %v2469 = vadd.f32 %v2203, %v2315
      %v2470 = vadd.f32 %v2204, %v2320
      %v2471 = vadd.f32 %v2205, %v2325
      %v2472 = vadd.f32 %v2206, %v2330
      %v2473 = vadd.f32 %v2207, %v2335
      %v2474 = vadd.f32 %v2208, %v2340
      %v2475 = vadd.f32 %v2209, %v2345
      %v2476 = vadd.f32 %v2210, %v2350
      %v2477 = vadd.f32 %v2211, %v2355
      %v2478 = vadd.f32 %v2212, %v2360
      %v2479 = vadd.f32 %v2213, %v2365
      %v2480 = vadd.f32 %v2214, %v2370
      %v2481 = vadd.f32 %v2215, %v2375
      %v2482 = vadd.f32 %v2216, %v2380
      %v2483 = vadd.f32 %v2217, %v2385
      %v2484 = vadd.f32 %v2218, %v2390
      %v2485 = vadd.f32 %v2219, %v2395
      %v2486 = vadd.f32 %v2220, %v2400
      %v2487 = vadd.f32 %v2221, %v2405
      %v2488 = vadd.f32 %v2222, %v2410
      %v2489 = vadd.f32 %v2223, %v2415
      %v2490 = vadd.f32 %v2224, %v2420
      %v2491 = vadd.f32 %v2225, %v2425
      %v2492 = vadd.f32 %v2226, %v2430
      %v2493 = vadd.f32 %v2227, %v2435
      %v2494 = vadd.f32 %v2228, %v2440
      %v2495 = vadd.f32 %v2229, %v2445
      %v2496 = vadd.f32 %v2230, %v2450
      %v2497 = vadd.f32 %v2231, %v2455
      %v2498 = vadd.f32 %v2232, %v2460
      %v2499 = vadd.f32 %v2233, %v2465
      %2500 = vst.msk [vmem:[#allocation4] sm:$0xff] %vm363, %v2468
      %2501 = vst.msk [vmem:[#allocation4 + $0x8] sm:$0xff] %vm363, %v2469
      %2502 = vst.msk [vmem:[#allocation4 + $0x10] sm:$0xff] %vm363, %v2470
      %2503 = vst.msk [vmem:[#allocation4 + $0x18] sm:$0xff] %vm363, %v2471
      %2504 = vst.msk [vmem:[#allocation4 + $0x20] sm:$0xff] %vm363, %v2472
      %2505 = vst.msk [vmem:[#allocation4 + $0x28] sm:$0xff] %vm363, %v2473
      %2506 = vst.msk [vmem:[#allocation4 + $0x30] sm:$0xff] %vm363, %v2474
      %2507 = vst.msk [vmem:[#allocation4 + $0x38] sm:$0xff] %vm363, %v2475
      %2508 = vst.msk [vmem:[#allocation4 + $0x40] sm:$0xff] %vm363, %v2476
      %2509 = vst.msk [vmem:[#allocation4 + $0x48] sm:$0xff] %vm363, %v2477
      %2510 = vst.msk [vmem:[#allocation4 + $0x50] sm:$0xff] %vm363, %v2478
      %2511 = vst.msk [vmem:[#allocation4 + $0x58] sm:$0xff] %vm363, %v2479
      %2512 = vst.msk [vmem:[#allocation4 + $0x60] sm:$0xff] %vm363, %v2480
      %2513 = vst.msk [vmem:[#allocation4 + $0x68] sm:$0xff] %vm363, %v2481
      %2514 = vst.msk [vmem:[#allocation4 + $0x70] sm:$0xff] %vm363, %v2482
      %2515 = vst.msk [vmem:[#allocation4 + $0x78] sm:$0xff] %vm363, %v2483
      %2516 = vst.msk [vmem:[#allocation4 + $0x80] sm:$0xff] %vm363, %v2484
      %2517 = vst.msk [vmem:[#allocation4 + $0x88] sm:$0xff] %vm363, %v2485
      %2518 = vst.msk [vmem:[#allocation4 + $0x90] sm:$0xff] %vm363, %v2486
      %2519 = vst.msk [vmem:[#allocation4 + $0x98] sm:$0xff] %vm363, %v2487
      %2520 = vst.msk [vmem:[#allocation4 + $0xa0] sm:$0xff] %vm363, %v2488
      %2521 = vst.msk [vmem:[#allocation4 + $0xa8] sm:$0xff] %vm363, %v2489
      %2522 = vst.msk [vmem:[#allocation4 + $0xb0] sm:$0xff] %vm363, %v2490
      %2523 = vst.msk [vmem:[#allocation4 + $0xb8] sm:$0xff] %vm363, %v2491
      %2524 = vst.msk [vmem:[#allocation4 + $0xc0] sm:$0xff] %vm363, %v2492
      %2525 = vst.msk [vmem:[#allocation4 + $0xc8] sm:$0xff] %vm363, %v2493
      %2526 = vst.msk [vmem:[#allocation4 + $0xd0] sm:$0xff] %vm363, %v2494
      %2527 = vst.msk [vmem:[#allocation4 + $0xd8] sm:$0xff] %vm363, %v2495
      %2528 = vst.msk [vmem:[#allocation4 + $0xe0] sm:$0xff] %vm363, %v2496
      %2529 = vst.msk [vmem:[#allocation4 + $0xe8] sm:$0xff] %vm363, %v2497
      %2530 = vst.msk [vmem:[#allocation4 + $0xf0] sm:$0xff] %vm363, %v2498
      %2531 = vst.msk [vmem:[#allocation4 + $0xf8] sm:$0xff] %vm363, %v2499
      %v2532 = vld [vmem:[#allocation4] sm:$0xff]
      %v2533 = vld [vmem:[#allocation4 + $0x8] sm:$0xff]
      %v2534 = vld [vmem:[#allocation4 + $0x10] sm:$0xff]
      %v2535 = vld [vmem:[#allocation4 + $0x18] sm:$0xff]
      %v2536 = vld [vmem:[#allocation4 + $0x20] sm:$0xff]
      %v2537 = vld [vmem:[#allocation4 + $0x28] sm:$0xff]
      %v2538 = vld [vmem:[#allocation4 + $0x30] sm:$0xff]
      %v2539 = vld [vmem:[#allocation4 + $0x38] sm:$0xff]
      %v2540 = vld [vmem:[#allocation4 + $0x40] sm:$0xff]
      %v2541 = vld [vmem:[#allocation4 + $0x48] sm:$0xff]
      %v2542 = vld [vmem:[#allocation4 + $0x50] sm:$0xff]
      %v2543 = vld [vmem:[#allocation4 + $0x58] sm:$0xff]
      %v2544 = vld [vmem:[#allocation4 + $0x60] sm:$0xff]
      %v2545 = vld [vmem:[#allocation4 + $0x68] sm:$0xff]
      %v2546 = vld [vmem:[#allocation4 + $0x70] sm:$0xff]
      %v2547 = vld [vmem:[#allocation4 + $0x78] sm:$0xff]
      %v2548 = vld [vmem:[#allocation4 + $0x80] sm:$0xff]
      %v2549 = vld [vmem:[#allocation4 + $0x88] sm:$0xff]
      %v2550 = vld [vmem:[#allocation4 + $0x90] sm:$0xff]
      %v2551 = vld [vmem:[#allocation4 + $0x98] sm:$0xff]
      %v2552 = vld [vmem:[#allocation4 + $0xa0] sm:$0xff]
      %v2553 = vld [vmem:[#allocation4 + $0xa8] sm:$0xff]
      %v2554 = vld [vmem:[#allocation4 + $0xb0] sm:$0xff]
      %v2555 = vld [vmem:[#allocation4 + $0xb8] sm:$0xff]
      %v2556 = vld [vmem:[#allocation4 + $0xc0] sm:$0xff]
      %v2557 = vld [vmem:[#allocation4 + $0xc8] sm:$0xff]
      %v2558 = vld [vmem:[#allocation4 + $0xd0] sm:$0xff]
      %v2559 = vld [vmem:[#allocation4 + $0xd8] sm:$0xff]
      %v2560 = vld [vmem:[#allocation4 + $0xe0] sm:$0xff]
      %v2561 = vld [vmem:[#allocation4 + $0xe8] sm:$0xff]
      %v2562 = vld [vmem:[#allocation4 + $0xf0] sm:$0xff]
      %v2563 = vld [vmem:[#allocation4 + $0xf8] sm:$0xff]
      %v2565 = vrot.slane %v461, 1
      %v2566 = vrot.slane %v462, 1
      %v2567 = vsel %vm1425, %v2565, %v2566
      %v2568 = vrot.slane %v463, 1
      %v2569 = vsel %vm1425, %v2566, %v2568
      %s2570 = scalar_lea.vmem %s1, 20
      %v2571 = vld [vmem:[%s2570] sm:$0xf]
      %v2572 = vsel %vm225, %v2567, 0
      %v2574 = vsel %vm225, %v2569, 0
      %v2577 = vsel %vm694, %v2571, 0
      %2579 = vmatprep.subr.mxu0 0.0
      %2580 = vmatpush1.msra.mxu0 0.0
      %2581 = vmatprep.subr.mxu0 0.0
      %2582 = vmatpush1.msra.mxu0 0.0
      %2583 = vmatprep.subr.mxu0 0.0
      %2584 = vmatpush1.msra.mxu0 0.0
      %2585 = vmatprep.subr.mxu0 0.0
      %2586 = vmatpush1.msra.mxu0 0.0
      %2587 = vmatprep.subr.mxu0 0.0
      %2588 = vmatpush1.msra.mxu0 0.0
      %2589 = vmatprep.subr.mxu0 0.0
      %2590 = vmatpush1.msra.mxu0 0.0
      %2591 = vmatprep.subr.mxu0 0.0
      %2592 = vmatpush1.msra.mxu0 0.0
      %2593 = vmatprep.subr.mxu0 0.0
      %2594 = vmatpush1.msra.mxu0 0.0
      %2595 = vmatprep.subr.mxu0 0.0
      %2596 = vmatpush1.msra.mxu0 0.0
      %2597 = vmatprep.subr.mxu0 0.0
      %2598 = vmatpush1.msra.mxu0 0.0
      %2599 = vmatprep.subr.mxu0 0.0
      %2600 = vmatpush1.msra.mxu0 0.0
      %2601 = vmatprep.subr.mxu0 0.0
      %2602 = vmatpush1.msra.mxu0 0.0
      %2603 = vmatprep.subr.mxu0 0.0
      %2604 = vmatpush1.msra.mxu0 0.0
      %2605 = vmatprep.subr.mxu0 0.0
      %2606 = vmatpush1.msra.mxu0 0.0
      %2607 = vmatprep.subr.mxu0 0.0
      %2608 = vmatpush1.msra.mxu0 0.0
      %2609 = vmatprep.subr.mxu0 0.0
      %2610 = vmatpush1.msra.mxu0 %v2577
      %2611 = vmatprep.subr.mxu0 0.0
      %2612 = vmatpush2.msra.mxu0 0.0
      %2613 = vmatprep.subr.mxu0 0.0
      %2614 = vmatpush2.msra.mxu0 0.0
      %2615 = vmatprep.subr.mxu0 0.0
      %2616 = vmatpush2.msra.mxu0 0.0
      %2617 = vmatprep.subr.mxu0 0.0
      %2618 = vmatpush2.msra.mxu0 0.0
      %2619 = vmatprep.subr.mxu0 0.0
      %2620 = vmatpush2.msra.mxu0 0.0
      %2621 = vmatprep.subr.mxu0 0.0
      %2622 = vmatpush2.msra.mxu0 0.0
      %2623 = vmatprep.subr.mxu0 0.0
      %2624 = vmatpush2.msra.mxu0 0.0
      %2625 = vmatprep.subr.mxu0 0.0
      %2626 = vmatpush2.msra.mxu0 0.0
      %2627 = vmatprep.subr.mxu0 0.0
      %2628 = vmatpush2.msra.mxu0 0.0
      %2629 = vmatprep.subr.mxu0 0.0
      %2630 = vmatpush2.msra.mxu0 0.0
      %2631 = vmatprep.subr.mxu0 0.0
      %2632 = vmatpush2.msra.mxu0 0.0
      %2633 = vmatprep.subr.mxu0 0.0
      %2634 = vmatpush2.msra.mxu0 0.0
      %2635 = vmatprep.subr.mxu0 0.0
      %2636 = vmatpush2.msra.mxu0 0.0
      %2637 = vmatprep.subr.mxu0 0.0
      %2638 = vmatpush2.msra.mxu0 0.0
      %2639 = vmatprep.subr.mxu0 0.0
      %2640 = vmatpush2.msra.mxu0 0.0
      %2641 = vmatprep.subr.mxu0 0.0
      %2642 = vmatpush2.msra.mxu0 0.0
      %2643 = vmatprep.mubr.f32.mxu0 0.0
      %2644 = vmatmul.mubr.f32.gmra.mxu0 %v1512
      %v2645 = vpop.f32.mrf.mxu0
      %v2646 = vadd.f32 0.0, %v2645
      %v2647 = vpop.f32.mrf.mxu0
      %2648 = vmatprep.mubr.f32.mxu0 0.0
      %2649 = vmatmul.mubr.f32.gmra.mxu0 %v1514
      %v2650 = vpop.f32.mrf.mxu0
      %v2651 = vadd.f32 0.0, %v2650
      %v2652 = vpop.f32.mrf.mxu0
      %2653 = vmatprep.mubr.f32.mxu0 0.0
      %2654 = vmatmul.mubr.f32.gmra.mxu0 %v1516
      %v2655 = vpop.f32.mrf.mxu0
      %v2656 = vadd.f32 0.0, %v2655
      %v2657 = vpop.f32.mrf.mxu0
      %2658 = vmatprep.mubr.f32.mxu0 0.0
      %2659 = vmatmul.mubr.f32.gmra.mxu0 %v1518
      %v2660 = vpop.f32.mrf.mxu0
      %v2661 = vadd.f32 0.0, %v2660
      %v2662 = vpop.f32.mrf.mxu0
      %2663 = vmatprep.mubr.f32.mxu0 0.0
      %2664 = vmatmul.mubr.f32.gmra.mxu0 %v1520
      %v2665 = vpop.f32.mrf.mxu0
      %v2666 = vadd.f32 0.0, %v2665
      %v2667 = vpop.f32.mrf.mxu0
      %2668 = vmatprep.mubr.f32.mxu0 0.0
      %2669 = vmatmul.mubr.f32.gmra.mxu0 %v1522
      %v2670 = vpop.f32.mrf.mxu0
      %v2671 = vadd.f32 0.0, %v2670
      %v2672 = vpop.f32.mrf.mxu0
      %2673 = vmatprep.mubr.f32.mxu0 0.0
      %2674 = vmatmul.mubr.f32.gmra.mxu0 %v1524
      %v2675 = vpop.f32.mrf.mxu0
      %v2676 = vadd.f32 0.0, %v2675
      %v2677 = vpop.f32.mrf.mxu0
      %2678 = vmatprep.mubr.f32.mxu0 0.0
      %2679 = vmatmul.mubr.f32.gmra.mxu0 %v1526
      %v2680 = vpop.f32.mrf.mxu0
      %v2681 = vadd.f32 0.0, %v2680
      %v2682 = vpop.f32.mrf.mxu0
      %2683 = vmatprep.mubr.f32.mxu0 0.0
      %2684 = vmatmul.mubr.f32.gmra.mxu0 %v1528
      %v2685 = vpop.f32.mrf.mxu0
      %v2686 = vadd.f32 0.0, %v2685
      %v2687 = vpop.f32.mrf.mxu0
      %2688 = vmatprep.mubr.f32.mxu0 0.0
      %2689 = vmatmul.mubr.f32.gmra.mxu0 %v1530
      %v2690 = vpop.f32.mrf.mxu0
      %v2691 = vadd.f32 0.0, %v2690
      %v2692 = vpop.f32.mrf.mxu0
      %2693 = vmatprep.mubr.f32.mxu0 0.0
      %2694 = vmatmul.mubr.f32.gmra.mxu0 %v1532
      %v2695 = vpop.f32.mrf.mxu0
      %v2696 = vadd.f32 0.0, %v2695
      %v2697 = vpop.f32.mrf.mxu0
      %2698 = vmatprep.mubr.f32.mxu0 0.0
      %2699 = vmatmul.mubr.f32.gmra.mxu0 %v1534
      %v2700 = vpop.f32.mrf.mxu0
      %v2701 = vadd.f32 0.0, %v2700
      %v2702 = vpop.f32.mrf.mxu0
      %2703 = vmatprep.mubr.f32.mxu0 0.0
      %2704 = vmatmul.mubr.f32.gmra.mxu0 %v1536
      %v2705 = vpop.f32.mrf.mxu0
      %v2706 = vadd.f32 0.0, %v2705
      %v2707 = vpop.f32.mrf.mxu0
      %2708 = vmatprep.mubr.f32.mxu0 0.0
      %2709 = vmatmul.mubr.f32.gmra.mxu0 %v1538
      %v2710 = vpop.f32.mrf.mxu0
      %v2711 = vadd.f32 0.0, %v2710
      %v2712 = vpop.f32.mrf.mxu0
      %2713 = vmatprep.mubr.f32.mxu0 0.0
      %2714 = vmatmul.mubr.f32.gmra.mxu0 %v1540
      %v2715 = vpop.f32.mrf.mxu0
      %v2716 = vadd.f32 0.0, %v2715
      %v2717 = vpop.f32.mrf.mxu0
      %2718 = vmatprep.mubr.f32.mxu0 0.0
      %2719 = vmatmul.mubr.f32.gmra.mxu0 %v1542
      %v2720 = vpop.f32.mrf.mxu0
      %v2721 = vadd.f32 0.0, %v2720
      %v2722 = vpop.f32.mrf.mxu0
      %2723 = vmatprep.mubr.f32.mxu0 0.0
      %2724 = vmatmul.mubr.f32.gmra.mxu0 %v1544
      %v2725 = vpop.f32.mrf.mxu0
      %v2726 = vadd.f32 0.0, %v2725
      %v2727 = vpop.f32.mrf.mxu0
      %2728 = vmatprep.mubr.f32.mxu0 0.0
      %2729 = vmatmul.mubr.f32.gmra.mxu0 %v1546
      %v2730 = vpop.f32.mrf.mxu0
      %v2731 = vadd.f32 0.0, %v2730
      %v2732 = vpop.f32.mrf.mxu0
      %2733 = vmatprep.mubr.f32.mxu0 0.0
      %2734 = vmatmul.mubr.f32.gmra.mxu0 %v1548
      %v2735 = vpop.f32.mrf.mxu0
      %v2736 = vadd.f32 0.0, %v2735
      %v2737 = vpop.f32.mrf.mxu0
      %2738 = vmatprep.mubr.f32.mxu0 0.0
      %2739 = vmatmul.mubr.f32.gmra.mxu0 %v1550
      %v2740 = vpop.f32.mrf.mxu0
      %v2741 = vadd.f32 0.0, %v2740
      %v2742 = vpop.f32.mrf.mxu0
      %2743 = vmatprep.mubr.f32.mxu0 0.0
      %2744 = vmatmul.mubr.f32.gmra.mxu0 %v1552
      %v2745 = vpop.f32.mrf.mxu0
      %v2746 = vadd.f32 0.0, %v2745
      %v2747 = vpop.f32.mrf.mxu0
      %2748 = vmatprep.mubr.f32.mxu0 0.0
      %2749 = vmatmul.mubr.f32.gmra.mxu0 %v1554
      %v2750 = vpop.f32.mrf.mxu0
      %v2751 = vadd.f32 0.0, %v2750
      %v2752 = vpop.f32.mrf.mxu0
      %2753 = vmatprep.mubr.f32.mxu0 0.0
      %2754 = vmatmul.mubr.f32.gmra.mxu0 %v1556
      %v2755 = vpop.f32.mrf.mxu0
      %v2756 = vadd.f32 0.0, %v2755
      %v2757 = vpop.f32.mrf.mxu0
      %2758 = vmatprep.mubr.f32.mxu0 0.0
      %2759 = vmatmul.mubr.f32.gmra.mxu0 %v1558
      %v2760 = vpop.f32.mrf.mxu0
      %v2761 = vadd.f32 0.0, %v2760
      %v2762 = vpop.f32.mrf.mxu0
      %2763 = vmatprep.mubr.f32.mxu0 0.0
      %2764 = vmatmul.mubr.f32.gmra.mxu0 %v1560
      %v2765 = vpop.f32.mrf.mxu0
      %v2766 = vadd.f32 0.0, %v2765
      %v2767 = vpop.f32.mrf.mxu0
      %2768 = vmatprep.mubr.f32.mxu0 0.0
      %2769 = vmatmul.mubr.f32.gmra.mxu0 %v1562
      %v2770 = vpop.f32.mrf.mxu0
      %v2771 = vadd.f32 0.0, %v2770
      %v2772 = vpop.f32.mrf.mxu0
      %2773 = vmatprep.mubr.f32.mxu0 0.0
      %2774 = vmatmul.mubr.f32.gmra.mxu0 %v1564
      %v2775 = vpop.f32.mrf.mxu0
      %v2776 = vadd.f32 0.0, %v2775
      %v2777 = vpop.f32.mrf.mxu0
      %2778 = vmatprep.mubr.f32.mxu0 0.0
      %2779 = vmatmul.mubr.f32.gmra.mxu0 %v1566
      %v2780 = vpop.f32.mrf.mxu0
      %v2781 = vadd.f32 0.0, %v2780
      %v2782 = vpop.f32.mrf.mxu0
      %2783 = vmatprep.mubr.f32.mxu0 0.0
      %2784 = vmatmul.mubr.f32.gmra.mxu0 %v1568
      %v2785 = vpop.f32.mrf.mxu0
      %v2786 = vadd.f32 0.0, %v2785
      %v2787 = vpop.f32.mrf.mxu0
      %2788 = vmatprep.mubr.f32.mxu0 0.0
      %2789 = vmatmul.mubr.f32.gmra.mxu0 %v1570
      %v2790 = vpop.f32.mrf.mxu0
      %v2791 = vadd.f32 0.0, %v2790
      %v2792 = vpop.f32.mrf.mxu0
      %2793 = vmatprep.mubr.f32.mxu0 0.0
      %2794 = vmatmul.mubr.f32.gmra.mxu0 %v2572
      %v2795 = vpop.f32.mrf.mxu0
      %v2796 = vadd.f32 0.0, %v2795
      %v2797 = vpop.f32.mrf.mxu0
      %2798 = vmatprep.mubr.f32.mxu0 0.0
      %2799 = vmatmul.mubr.f32.gmra.mxu0 %v2574
      %v2800 = vpop.f32.mrf.mxu0
      %v2801 = vadd.f32 0.0, %v2800
      %v2802 = vpop.f32.mrf.mxu0
      %2803 = vdwg.mxu0
      %v2804 = vadd.f32 %v2532, %v2646
      %v2805 = vadd.f32 %v2533, %v2651
      %v2806 = vadd.f32 %v2534, %v2656
      %v2807 = vadd.f32 %v2535, %v2661
      %v2808 = vadd.f32 %v2536, %v2666
      %v2809 = vadd.f32 %v2537, %v2671
      %v2810 = vadd.f32 %v2538, %v2676
      %v2811 = vadd.f32 %v2539, %v2681
      %v2812 = vadd.f32 %v2540, %v2686
      %v2813 = vadd.f32 %v2541, %v2691
      %v2814 = vadd.f32 %v2542, %v2696
      %v2815 = vadd.f32 %v2543, %v2701
      %v2816 = vadd.f32 %v2544, %v2706
      %v2817 = vadd.f32 %v2545, %v2711
      %v2818 = vadd.f32 %v2546, %v2716
      %v2819 = vadd.f32 %v2547, %v2721
      %v2820 = vadd.f32 %v2548, %v2726
      %v2821 = vadd.f32 %v2549, %v2731
      %v2822 = vadd.f32 %v2550, %v2736
      %v2823 = vadd.f32 %v2551, %v2741
      %v2824 = vadd.f32 %v2552, %v2746
      %v2825 = vadd.f32 %v2553, %v2751
      %v2826 = vadd.f32 %v2554, %v2756
      %v2827 = vadd.f32 %v2555, %v2761
      %v2828 = vadd.f32 %v2556, %v2766
      %v2829 = vadd.f32 %v2557, %v2771
      %v2830 = vadd.f32 %v2558, %v2776
      %v2831 = vadd.f32 %v2559, %v2781
      %v2832 = vadd.f32 %v2560, %v2786
      %v2833 = vadd.f32 %v2561, %v2791
      %v2834 = vadd.f32 %v2562, %v2796
      %v2835 = vadd.f32 %v2563, %v2801
      %2836 = vst.msk [vmem:[#allocation4] sm:$0xff] %vm363, %v2804
      %2837 = vst.msk [vmem:[#allocation4 + $0x8] sm:$0xff] %vm363, %v2805
      %2838 = vst.msk [vmem:[#allocation4 + $0x10] sm:$0xff] %vm363, %v2806
      %2839 = vst.msk [vmem:[#allocation4 + $0x18] sm:$0xff] %vm363, %v2807
      %2840 = vst.msk [vmem:[#allocation4 + $0x20] sm:$0xff] %vm363, %v2808
      %2841 = vst.msk [vmem:[#allocation4 + $0x28] sm:$0xff] %vm363, %v2809
      %2842 = vst.msk [vmem:[#allocation4 + $0x30] sm:$0xff] %vm363, %v2810
      %2843 = vst.msk [vmem:[#allocation4 + $0x38] sm:$0xff] %vm363, %v2811
      %2844 = vst.msk [vmem:[#allocation4 + $0x40] sm:$0xff] %vm363, %v2812
      %2845 = vst.msk [vmem:[#allocation4 + $0x48] sm:$0xff] %vm363, %v2813
      %2846 = vst.msk [vmem:[#allocation4 + $0x50] sm:$0xff] %vm363, %v2814
      %2847 = vst.msk [vmem:[#allocation4 + $0x58] sm:$0xff] %vm363, %v2815
      %2848 = vst.msk [vmem:[#allocation4 + $0x60] sm:$0xff] %vm363, %v2816
      %2849 = vst.msk [vmem:[#allocation4 + $0x68] sm:$0xff] %vm363, %v2817
      %2850 = vst.msk [vmem:[#allocation4 + $0x70] sm:$0xff] %vm363, %v2818
      %2851 = vst.msk [vmem:[#allocation4 + $0x78] sm:$0xff] %vm363, %v2819
      %2852 = vst.msk [vmem:[#allocation4 + $0x80] sm:$0xff] %vm363, %v2820
      %2853 = vst.msk [vmem:[#allocation4 + $0x88] sm:$0xff] %vm363, %v2821
      %2854 = vst.msk [vmem:[#allocation4 + $0x90] sm:$0xff] %vm363, %v2822
      %2855 = vst.msk [vmem:[#allocation4 + $0x98] sm:$0xff] %vm363, %v2823
      %2856 = vst.msk [vmem:[#allocation4 + $0xa0] sm:$0xff] %vm363, %v2824
      %2857 = vst.msk [vmem:[#allocation4 + $0xa8] sm:$0xff] %vm363, %v2825
      %2858 = vst.msk [vmem:[#allocation4 + $0xb0] sm:$0xff] %vm363, %v2826
      %2859 = vst.msk [vmem:[#allocation4 + $0xb8] sm:$0xff] %vm363, %v2827
      %2860 = vst.msk [vmem:[#allocation4 + $0xc0] sm:$0xff] %vm363, %v2828
      %2861 = vst.msk [vmem:[#allocation4 + $0xc8] sm:$0xff] %vm363, %v2829
      %2862 = vst.msk [vmem:[#allocation4 + $0xd0] sm:$0xff] %vm363, %v2830
      %2863 = vst.msk [vmem:[#allocation4 + $0xd8] sm:$0xff] %vm363, %v2831
      %2864 = vst.msk [vmem:[#allocation4 + $0xe0] sm:$0xff] %vm363, %v2832
      %2865 = vst.msk [vmem:[#allocation4 + $0xe8] sm:$0xff] %vm363, %v2833
      %2866 = vst.msk [vmem:[#allocation4 + $0xf0] sm:$0xff] %vm363, %v2834
      %2867 = vst.msk [vmem:[#allocation4 + $0xf8] sm:$0xff] %vm363, %v2835
      %v2868 = vld [vmem:[#allocation4] sm:$0xff]
      %v2869 = vld [vmem:[#allocation4 + $0x8] sm:$0xff]
      %v2870 = vld [vmem:[#allocation4 + $0x10] sm:$0xff]
      %v2871 = vld [vmem:[#allocation4 + $0x18] sm:$0xff]
      %v2872 = vld [vmem:[#allocation4 + $0x20] sm:$0xff]
      %v2873 = vld [vmem:[#allocation4 + $0x28] sm:$0xff]
      %v2874 = vld [vmem:[#allocation4 + $0x30] sm:$0xff]
      %v2875 = vld [vmem:[#allocation4 + $0x38] sm:$0xff]
      %v2876 = vld [vmem:[#allocation4 + $0x40] sm:$0xff]
      %v2877 = vld [vmem:[#allocation4 + $0x48] sm:$0xff]
      %v2878 = vld [vmem:[#allocation4 + $0x50] sm:$0xff]
      %v2879 = vld [vmem:[#allocation4 + $0x58] sm:$0xff]
      %v2880 = vld [vmem:[#allocation4 + $0x60] sm:$0xff]
      %v2881 = vld [vmem:[#allocation4 + $0x68] sm:$0xff]
      %v2882 = vld [vmem:[#allocation4 + $0x70] sm:$0xff]
      %v2883 = vld [vmem:[#allocation4 + $0x78] sm:$0xff]
      %v2884 = vld [vmem:[#allocation4 + $0x80] sm:$0xff]
      %v2885 = vld [vmem:[#allocation4 + $0x88] sm:$0xff]
      %v2886 = vld [vmem:[#allocation4 + $0x90] sm:$0xff]
      %v2887 = vld [vmem:[#allocation4 + $0x98] sm:$0xff]
      %v2888 = vld [vmem:[#allocation4 + $0xa0] sm:$0xff]
      %v2889 = vld [vmem:[#allocation4 + $0xa8] sm:$0xff]
      %v2890 = vld [vmem:[#allocation4 + $0xb0] sm:$0xff]
      %v2891 = vld [vmem:[#allocation4 + $0xb8] sm:$0xff]
      %v2892 = vld [vmem:[#allocation4 + $0xc0] sm:$0xff]
      %v2893 = vld [vmem:[#allocation4 + $0xc8] sm:$0xff]
      %v2894 = vld [vmem:[#allocation4 + $0xd0] sm:$0xff]
      %v2895 = vld [vmem:[#allocation4 + $0xd8] sm:$0xff]
      %v2896 = vld [vmem:[#allocation4 + $0xe0] sm:$0xff]
      %v2897 = vld [vmem:[#allocation4 + $0xe8] sm:$0xff]
      %v2898 = vld [vmem:[#allocation4 + $0xf0] sm:$0xff]
      %v2899 = vld [vmem:[#allocation4 + $0xf8] sm:$0xff]
      %v2903 = vrot.slane %v464, 7
      %v2904 = vrot.slane %v465, 7
      %v2905 = vsel %vm548, %v2903, %v2904
      %v2906 = vrot.slane %v466, 7
      %v2907 = vsel %vm548, %v2904, %v2906
      %s2908 = scalar_lea.vmem %s1, 24
      %v2909 = vld [vmem:[%s2908] sm:$0xf]
      %v2910 = vsel %vm225, %v2905, 0
      %v2912 = vsel %vm225, %v2907, 0
      %v2915 = vsel %vm694, %v2909, 0
      %2917 = vmatprep.subr.mxu0 0.0
      %2918 = vmatpush1.msra.mxu0 0.0
      %2919 = vmatprep.subr.mxu0 0.0
      %2920 = vmatpush1.msra.mxu0 0.0
      %2921 = vmatprep.subr.mxu0 0.0
      %2922 = vmatpush1.msra.mxu0 0.0
      %2923 = vmatprep.subr.mxu0 0.0
      %2924 = vmatpush1.msra.mxu0 0.0
      %2925 = vmatprep.subr.mxu0 0.0
      %2926 = vmatpush1.msra.mxu0 0.0
      %2927 = vmatprep.subr.mxu0 0.0
      %2928 = vmatpush1.msra.mxu0 0.0
      %2929 = vmatprep.subr.mxu0 0.0
      %2930 = vmatpush1.msra.mxu0 0.0
      %2931 = vmatprep.subr.mxu0 0.0
      %2932 = vmatpush1.msra.mxu0 0.0
      %2933 = vmatprep.subr.mxu0 0.0
      %2934 = vmatpush1.msra.mxu0 0.0
      %2935 = vmatprep.subr.mxu0 0.0
      %2936 = vmatpush1.msra.mxu0 0.0
      %2937 = vmatprep.subr.mxu0 0.0
      %2938 = vmatpush1.msra.mxu0 0.0
      %2939 = vmatprep.subr.mxu0 0.0
      %2940 = vmatpush1.msra.mxu0 0.0
      %2941 = vmatprep.subr.mxu0 0.0
      %2942 = vmatpush1.msra.mxu0 0.0
      %2943 = vmatprep.subr.mxu0 0.0
      %2944 = vmatpush1.msra.mxu0 0.0
      %2945 = vmatprep.subr.mxu0 0.0
      %2946 = vmatpush1.msra.mxu0 0.0
      %2947 = vmatprep.subr.mxu0 0.0
      %2948 = vmatpush1.msra.mxu0 %v2915
      %2949 = vmatprep.subr.mxu0 0.0
      %2950 = vmatpush2.msra.mxu0 0.0
      %2951 = vmatprep.subr.mxu0 0.0
      %2952 = vmatpush2.msra.mxu0 0.0
      %2953 = vmatprep.subr.mxu0 0.0
      %2954 = vmatpush2.msra.mxu0 0.0
      %2955 = vmatprep.subr.mxu0 0.0
      %2956 = vmatpush2.msra.mxu0 0.0
      %2957 = vmatprep.subr.mxu0 0.0
      %2958 = vmatpush2.msra.mxu0 0.0
      %2959 = vmatprep.subr.mxu0 0.0
      %2960 = vmatpush2.msra.mxu0 0.0
      %2961 = vmatprep.subr.mxu0 0.0
      %2962 = vmatpush2.msra.mxu0 0.0
      %2963 = vmatprep.subr.mxu0 0.0
      %2964 = vmatpush2.msra.mxu0 0.0
      %2965 = vmatprep.subr.mxu0 0.0
      %2966 = vmatpush2.msra.mxu0 0.0
      %2967 = vmatprep.subr.mxu0 0.0
      %2968 = vmatpush2.msra.mxu0 0.0
      %2969 = vmatprep.subr.mxu0 0.0
      %2970 = vmatpush2.msra.mxu0 0.0
      %2971 = vmatprep.subr.mxu0 0.0
      %2972 = vmatpush2.msra.mxu0 0.0
      %2973 = vmatprep.subr.mxu0 0.0
      %2974 = vmatpush2.msra.mxu0 0.0
      %2975 = vmatprep.subr.mxu0 0.0
      %2976 = vmatpush2.msra.mxu0 0.0
      %2977 = vmatprep.subr.mxu0 0.0
      %2978 = vmatpush2.msra.mxu0 0.0
      %2979 = vmatprep.subr.mxu0 0.0
      %2980 = vmatpush2.msra.mxu0 0.0
      %2981 = vmatprep.mubr.f32.mxu0 0.0
      %2982 = vmatmul.mubr.f32.gmra.mxu0 %v638
      %v2983 = vpop.f32.mrf.mxu0
      %v2984 = vadd.f32 0.0, %v2983
      %v2985 = vpop.f32.mrf.mxu0
      %2986 = vmatprep.mubr.f32.mxu0 0.0
      %2987 = vmatmul.mubr.f32.gmra.mxu0 %v640
      %v2988 = vpop.f32.mrf.mxu0
      %v2989 = vadd.f32 0.0, %v2988
      %v2990 = vpop.f32.mrf.mxu0
      %2991 = vmatprep.mubr.f32.mxu0 0.0
      %2992 = vmatmul.mubr.f32.gmra.mxu0 %v642
      %v2993 = vpop.f32.mrf.mxu0
      %v2994 = vadd.f32 0.0, %v2993
      %v2995 = vpop.f32.mrf.mxu0
      %2996 = vmatprep.mubr.f32.mxu0 0.0
      %2997 = vmatmul.mubr.f32.gmra.mxu0 %v644
      %v2998 = vpop.f32.mrf.mxu0
      %v2999 = vadd.f32 0.0, %v2998
      %v3000 = vpop.f32.mrf.mxu0
      %3001 = vmatprep.mubr.f32.mxu0 0.0
      %3002 = vmatmul.mubr.f32.gmra.mxu0 %v646
      %v3003 = vpop.f32.mrf.mxu0
      %v3004 = vadd.f32 0.0, %v3003
      %v3005 = vpop.f32.mrf.mxu0
      %3006 = vmatprep.mubr.f32.mxu0 0.0
      %3007 = vmatmul.mubr.f32.gmra.mxu0 %v648
      %v3008 = vpop.f32.mrf.mxu0
      %v3009 = vadd.f32 0.0, %v3008
      %v3010 = vpop.f32.mrf.mxu0
      %3011 = vmatprep.mubr.f32.mxu0 0.0
      %3012 = vmatmul.mubr.f32.gmra.mxu0 %v650
      %v3013 = vpop.f32.mrf.mxu0
      %v3014 = vadd.f32 0.0, %v3013
      %v3015 = vpop.f32.mrf.mxu0
      %3016 = vmatprep.mubr.f32.mxu0 0.0
      %3017 = vmatmul.mubr.f32.gmra.mxu0 %v652
      %v3018 = vpop.f32.mrf.mxu0
      %v3019 = vadd.f32 0.0, %v3018
      %v3020 = vpop.f32.mrf.mxu0
      %3021 = vmatprep.mubr.f32.mxu0 0.0
      %3022 = vmatmul.mubr.f32.gmra.mxu0 %v654
      %v3023 = vpop.f32.mrf.mxu0
      %v3024 = vadd.f32 0.0, %v3023
      %v3025 = vpop.f32.mrf.mxu0
      %3026 = vmatprep.mubr.f32.mxu0 0.0
      %3027 = vmatmul.mubr.f32.gmra.mxu0 %v656
      %v3028 = vpop.f32.mrf.mxu0
      %v3029 = vadd.f32 0.0, %v3028
      %v3030 = vpop.f32.mrf.mxu0
      %3031 = vmatprep.mubr.f32.mxu0 0.0
      %3032 = vmatmul.mubr.f32.gmra.mxu0 %v658
      %v3033 = vpop.f32.mrf.mxu0
      %v3034 = vadd.f32 0.0, %v3033
      %v3035 = vpop.f32.mrf.mxu0
      %3036 = vmatprep.mubr.f32.mxu0 0.0
      %3037 = vmatmul.mubr.f32.gmra.mxu0 %v660
      %v3038 = vpop.f32.mrf.mxu0
      %v3039 = vadd.f32 0.0, %v3038
      %v3040 = vpop.f32.mrf.mxu0
      %3041 = vmatprep.mubr.f32.mxu0 0.0
      %3042 = vmatmul.mubr.f32.gmra.mxu0 %v662
      %v3043 = vpop.f32.mrf.mxu0
      %v3044 = vadd.f32 0.0, %v3043
      %v3045 = vpop.f32.mrf.mxu0
      %3046 = vmatprep.mubr.f32.mxu0 0.0
      %3047 = vmatmul.mubr.f32.gmra.mxu0 %v664
      %v3048 = vpop.f32.mrf.mxu0
      %v3049 = vadd.f32 0.0, %v3048
      %v3050 = vpop.f32.mrf.mxu0
      %3051 = vmatprep.mubr.f32.mxu0 0.0
      %3052 = vmatmul.mubr.f32.gmra.mxu0 %v666
      %v3053 = vpop.f32.mrf.mxu0
      %v3054 = vadd.f32 0.0, %v3053
      %v3055 = vpop.f32.mrf.mxu0
      %3056 = vmatprep.mubr.f32.mxu0 0.0
      %3057 = vmatmul.mubr.f32.gmra.mxu0 %v668
      %v3058 = vpop.f32.mrf.mxu0
      %v3059 = vadd.f32 0.0, %v3058
      %v3060 = vpop.f32.mrf.mxu0
      %3061 = vmatprep.mubr.f32.mxu0 0.0
      %3062 = vmatmul.mubr.f32.gmra.mxu0 %v670
      %v3063 = vpop.f32.mrf.mxu0
      %v3064 = vadd.f32 0.0, %v3063
      %v3065 = vpop.f32.mrf.mxu0
      %3066 = vmatprep.mubr.f32.mxu0 0.0
      %3067 = vmatmul.mubr.f32.gmra.mxu0 %v672
      %v3068 = vpop.f32.mrf.mxu0
      %v3069 = vadd.f32 0.0, %v3068
      %v3070 = vpop.f32.mrf.mxu0
      %3071 = vmatprep.mubr.f32.mxu0 0.0
      %3072 = vmatmul.mubr.f32.gmra.mxu0 %v674
      %v3073 = vpop.f32.mrf.mxu0
      %v3074 = vadd.f32 0.0, %v3073
      %v3075 = vpop.f32.mrf.mxu0
      %3076 = vmatprep.mubr.f32.mxu0 0.0
      %3077 = vmatmul.mubr.f32.gmra.mxu0 %v676
      %v3078 = vpop.f32.mrf.mxu0
      %v3079 = vadd.f32 0.0, %v3078
      %v3080 = vpop.f32.mrf.mxu0
      %3081 = vmatprep.mubr.f32.mxu0 0.0
      %3082 = vmatmul.mubr.f32.gmra.mxu0 %v678
      %v3083 = vpop.f32.mrf.mxu0
      %v3084 = vadd.f32 0.0, %v3083
      %v3085 = vpop.f32.mrf.mxu0
      %3086 = vmatprep.mubr.f32.mxu0 0.0
      %3087 = vmatmul.mubr.f32.gmra.mxu0 %v680
      %v3088 = vpop.f32.mrf.mxu0
      %v3089 = vadd.f32 0.0, %v3088
      %v3090 = vpop.f32.mrf.mxu0
      %3091 = vmatprep.mubr.f32.mxu0 0.0
      %3092 = vmatmul.mubr.f32.gmra.mxu0 %v682
      %v3093 = vpop.f32.mrf.mxu0
      %v3094 = vadd.f32 0.0, %v3093
      %v3095 = vpop.f32.mrf.mxu0
      %3096 = vmatprep.mubr.f32.mxu0 0.0
      %3097 = vmatmul.mubr.f32.gmra.mxu0 %v684
      %v3098 = vpop.f32.mrf.mxu0
      %v3099 = vadd.f32 0.0, %v3098
      %v3100 = vpop.f32.mrf.mxu0
      %3101 = vmatprep.mubr.f32.mxu0 0.0
      %3102 = vmatmul.mubr.f32.gmra.mxu0 %v686
      %v3103 = vpop.f32.mrf.mxu0
      %v3104 = vadd.f32 0.0, %v3103
      %v3105 = vpop.f32.mrf.mxu0
      %3106 = vmatprep.mubr.f32.mxu0 0.0
      %3107 = vmatmul.mubr.f32.gmra.mxu0 %v688
      %v3108 = vpop.f32.mrf.mxu0
      %v3109 = vadd.f32 0.0, %v3108
      %v3110 = vpop.f32.mrf.mxu0
      %3111 = vmatprep.mubr.f32.mxu0 0.0
      %3112 = vmatmul.mubr.f32.gmra.mxu0 %v690
      %v3113 = vpop.f32.mrf.mxu0
      %v3114 = vadd.f32 0.0, %v3113
      %v3115 = vpop.f32.mrf.mxu0
      %3116 = vmatprep.mubr.f32.mxu0 0.0
      %3117 = vmatmul.mubr.f32.gmra.mxu0 %v692
      %v3118 = vpop.f32.mrf.mxu0
      %v3119 = vadd.f32 0.0, %v3118
      %v3120 = vpop.f32.mrf.mxu0
      %3121 = vmatprep.mubr.f32.mxu0 0.0
      %3122 = vmatmul.mubr.f32.gmra.mxu0 %v1906
      %v3123 = vpop.f32.mrf.mxu0
      %v3124 = vadd.f32 0.0, %v3123
      %v3125 = vpop.f32.mrf.mxu0
      %3126 = vmatprep.mubr.f32.mxu0 0.0
      %3127 = vmatmul.mubr.f32.gmra.mxu0 %v1908
      %v3128 = vpop.f32.mrf.mxu0
      %v3129 = vadd.f32 0.0, %v3128
      %v3130 = vpop.f32.mrf.mxu0
      %3131 = vmatprep.mubr.f32.mxu0 0.0
      %3132 = vmatmul.mubr.f32.gmra.mxu0 %v2910
      %v3133 = vpop.f32.mrf.mxu0
      %v3134 = vadd.f32 0.0, %v3133
      %v3135 = vpop.f32.mrf.mxu0
      %3136 = vmatprep.mubr.f32.mxu0 0.0
      %3137 = vmatmul.mubr.f32.gmra.mxu0 %v2912
      %v3138 = vpop.f32.mrf.mxu0
      %v3139 = vadd.f32 0.0, %v3138
      %v3140 = vpop.f32.mrf.mxu0
      %3141 = vdwg.mxu0
      %v3142 = vadd.f32 %v2868, %v2984
      %v3143 = vadd.f32 %v2869, %v2989
      %v3144 = vadd.f32 %v2870, %v2994
      %v3145 = vadd.f32 %v2871, %v2999
      %v3146 = vadd.f32 %v2872, %v3004
      %v3147 = vadd.f32 %v2873, %v3009
      %v3148 = vadd.f32 %v2874, %v3014
      %v3149 = vadd.f32 %v2875, %v3019
      %v3150 = vadd.f32 %v2876, %v3024
      %v3151 = vadd.f32 %v2877, %v3029
      %v3152 = vadd.f32 %v2878, %v3034
      %v3153 = vadd.f32 %v2879, %v3039
      %v3154 = vadd.f32 %v2880, %v3044
      %v3155 = vadd.f32 %v2881, %v3049
      %v3156 = vadd.f32 %v2882, %v3054
      %v3157 = vadd.f32 %v2883, %v3059
      %v3158 = vadd.f32 %v2884, %v3064
      %v3159 = vadd.f32 %v2885, %v3069
      %v3160 = vadd.f32 %v2886, %v3074
      %v3161 = vadd.f32 %v2887, %v3079
      %v3162 = vadd.f32 %v2888, %v3084
      %v3163 = vadd.f32 %v2889, %v3089
      %v3164 = vadd.f32 %v2890, %v3094
      %v3165 = vadd.f32 %v2891, %v3099
      %v3166 = vadd.f32 %v2892, %v3104
      %v3167 = vadd.f32 %v2893, %v3109
      %v3168 = vadd.f32 %v2894, %v3114
      %v3169 = vadd.f32 %v2895, %v3119
      %v3170 = vadd.f32 %v2896, %v3124
      %v3171 = vadd.f32 %v2897, %v3129
      %v3172 = vadd.f32 %v2898, %v3134
      %v3173 = vadd.f32 %v2899, %v3139
      %3174 = vst.msk [vmem:[#allocation4] sm:$0xff] %vm363, %v3142
      %3175 = vst.msk [vmem:[#allocation4 + $0x8] sm:$0xff] %vm363, %v3143
      %3176 = vst.msk [vmem:[#allocation4 + $0x10] sm:$0xff] %vm363, %v3144
      %3177 = vst.msk [vmem:[#allocation4 + $0x18] sm:$0xff] %vm363, %v3145
      %3178 = vst.msk [vmem:[#allocation4 + $0x20] sm:$0xff] %vm363, %v3146
      %3179 = vst.msk [vmem:[#allocation4 + $0x28] sm:$0xff] %vm363, %v3147
      %3180 = vst.msk [vmem:[#allocation4 + $0x30] sm:$0xff] %vm363, %v3148
      %3181 = vst.msk [vmem:[#allocation4 + $0x38] sm:$0xff] %vm363, %v3149
      %3182 = vst.msk [vmem:[#allocation4 + $0x40] sm:$0xff] %vm363, %v3150
      %3183 = vst.msk [vmem:[#allocation4 + $0x48] sm:$0xff] %vm363, %v3151
      %3184 = vst.msk [vmem:[#allocation4 + $0x50] sm:$0xff] %vm363, %v3152
      %3185 = vst.msk [vmem:[#allocation4 + $0x58] sm:$0xff] %vm363, %v3153
      %3186 = vst.msk [vmem:[#allocation4 + $0x60] sm:$0xff] %vm363, %v3154
      %3187 = vst.msk [vmem:[#allocation4 + $0x68] sm:$0xff] %vm363, %v3155
      %3188 = vst.msk [vmem:[#allocation4 + $0x70] sm:$0xff] %vm363, %v3156
      %3189 = vst.msk [vmem:[#allocation4 + $0x78] sm:$0xff] %vm363, %v3157
      %3190 = vst.msk [vmem:[#allocation4 + $0x80] sm:$0xff] %vm363, %v3158
      %3191 = vst.msk [vmem:[#allocation4 + $0x88] sm:$0xff] %vm363, %v3159
      %3192 = vst.msk [vmem:[#allocation4 + $0x90] sm:$0xff] %vm363, %v3160
      %3193 = vst.msk [vmem:[#allocation4 + $0x98] sm:$0xff] %vm363, %v3161
      %3194 = vst.msk [vmem:[#allocation4 + $0xa0] sm:$0xff] %vm363, %v3162
      %3195 = vst.msk [vmem:[#allocation4 + $0xa8] sm:$0xff] %vm363, %v3163
      %3196 = vst.msk [vmem:[#allocation4 + $0xb0] sm:$0xff] %vm363, %v3164
      %3197 = vst.msk [vmem:[#allocation4 + $0xb8] sm:$0xff] %vm363, %v3165
      %3198 = vst.msk [vmem:[#allocation4 + $0xc0] sm:$0xff] %vm363, %v3166
      %3199 = vst.msk [vmem:[#allocation4 + $0xc8] sm:$0xff] %vm363, %v3167
      %3200 = vst.msk [vmem:[#allocation4 + $0xd0] sm:$0xff] %vm363, %v3168
      %3201 = vst.msk [vmem:[#allocation4 + $0xd8] sm:$0xff] %vm363, %v3169
      %3202 = vst.msk [vmem:[#allocation4 + $0xe0] sm:$0xff] %vm363, %v3170
      %3203 = vst.msk [vmem:[#allocation4 + $0xe8] sm:$0xff] %vm363, %v3171
      %3204 = vst.msk [vmem:[#allocation4 + $0xf0] sm:$0xff] %vm363, %v3172
      %3205 = vst.msk [vmem:[#allocation4 + $0xf8] sm:$0xff] %vm363, %v3173
      %v3206 = vld [vmem:[#allocation4] sm:$0xff]
      %v3207 = vld [vmem:[#allocation4 + $0x8] sm:$0xff]
      %v3208 = vld [vmem:[#allocation4 + $0x10] sm:$0xff]
      %v3209 = vld [vmem:[#allocation4 + $0x18] sm:$0xff]
      %v3210 = vld [vmem:[#allocation4 + $0x20] sm:$0xff]
      %v3211 = vld [vmem:[#allocation4 + $0x28] sm:$0xff]
      %v3212 = vld [vmem:[#allocation4 + $0x30] sm:$0xff]
      %v3213 = vld [vmem:[#allocation4 + $0x38] sm:$0xff]
      %v3214 = vld [vmem:[#allocation4 + $0x40] sm:$0xff]
      %v3215 = vld [vmem:[#allocation4 + $0x48] sm:$0xff]
      %v3216 = vld [vmem:[#allocation4 + $0x50] sm:$0xff]
      %v3217 = vld [vmem:[#allocation4 + $0x58] sm:$0xff]
      %v3218 = vld [vmem:[#allocation4 + $0x60] sm:$0xff]
      %v3219 = vld [vmem:[#allocation4 + $0x68] sm:$0xff]
      %v3220 = vld [vmem:[#allocation4 + $0x70] sm:$0xff]
      %v3221 = vld [vmem:[#allocation4 + $0x78] sm:$0xff]
      %v3222 = vld [vmem:[#allocation4 + $0x80] sm:$0xff]
      %v3223 = vld [vmem:[#allocation4 + $0x88] sm:$0xff]
      %v3224 = vld [vmem:[#allocation4 + $0x90] sm:$0xff]
      %v3225 = vld [vmem:[#allocation4 + $0x98] sm:$0xff]
      %v3226 = vld [vmem:[#allocation4 + $0xa0] sm:$0xff]
      %v3227 = vld [vmem:[#allocation4 + $0xa8] sm:$0xff]
      %v3228 = vld [vmem:[#allocation4 + $0xb0] sm:$0xff]
      %v3229 = vld [vmem:[#allocation4 + $0xb8] sm:$0xff]
      %v3230 = vld [vmem:[#allocation4 + $0xc0] sm:$0xff]
      %v3231 = vld [vmem:[#allocation4 + $0xc8] sm:$0xff]
      %v3232 = vld [vmem:[#allocation4 + $0xd0] sm:$0xff]
      %v3233 = vld [vmem:[#allocation4 + $0xd8] sm:$0xff]
      %v3234 = vld [vmem:[#allocation4 + $0xe0] sm:$0xff]
      %v3235 = vld [vmem:[#allocation4 + $0xe8] sm:$0xff]
      %v3236 = vld [vmem:[#allocation4 + $0xf0] sm:$0xff]
      %v3237 = vld [vmem:[#allocation4 + $0xf8] sm:$0xff]
      %s3238 = scalar_lea.vmem %s1, 28
      %v3239 = vld [vmem:[%s3238] sm:$0xf]
      %v3240 = vsel %vm225, %v465, 0
      %v3242 = vsel %vm225, %v466, 0
      %v3245 = vsel %vm694, %v3239, 0
      %3247 = vmatprep.subr.mxu0 0.0
      %3248 = vmatpush1.msra.mxu0 0.0
      %3249 = vmatprep.subr.mxu0 0.0
      %3250 = vmatpush1.msra.mxu0 0.0
      %3251 = vmatprep.subr.mxu0 0.0
      %3252 = vmatpush1.msra.mxu0 0.0
      %3253 = vmatprep.subr.mxu0 0.0
      %3254 = vmatpush1.msra.mxu0 0.0
      %3255 = vmatprep.subr.mxu0 0.0
      %3256 = vmatpush1.msra.mxu0 0.0
      %3257 = vmatprep.subr.mxu0 0.0
      %3258 = vmatpush1.msra.mxu0 0.0
      %3259 = vmatprep.subr.mxu0 0.0
      %3260 = vmatpush1.msra.mxu0 0.0
      %3261 = vmatprep.subr.mxu0 0.0
      %3262 = vmatpush1.msra.mxu0 0.0
      %3263 = vmatprep.subr.mxu0 0.0
      %3264 = vmatpush1.msra.mxu0 0.0
      %3265 = vmatprep.subr.mxu0 0.0
      %3266 = vmatpush1.msra.mxu0 0.0
      %3267 = vmatprep.subr.mxu0 0.0
      %3268 = vmatpush1.msra.mxu0 0.0
      %3269 = vmatprep.subr.mxu0 0.0
      %3270 = vmatpush1.msra.mxu0 0.0
      %3271 = vmatprep.subr.mxu0 0.0
      %3272 = vmatpush1.msra.mxu0 0.0
      %3273 = vmatprep.subr.mxu0 0.0
      %3274 = vmatpush1.msra.mxu0 0.0
      %3275 = vmatprep.subr.mxu0 0.0
      %3276 = vmatpush1.msra.mxu0 0.0
      %3277 = vmatprep.subr.mxu0 0.0
      %3278 = vmatpush1.msra.mxu0 %v3245
      %3279 = vmatprep.subr.mxu0 0.0
      %3280 = vmatpush2.msra.mxu0 0.0
      %3281 = vmatprep.subr.mxu0 0.0
      %3282 = vmatpush2.msra.mxu0 0.0
      %3283 = vmatprep.subr.mxu0 0.0
      %3284 = vmatpush2.msra.mxu0 0.0
      %3285 = vmatprep.subr.mxu0 0.0
      %3286 = vmatpush2.msra.mxu0 0.0
      %3287 = vmatprep.subr.mxu0 0.0
      %3288 = vmatpush2.msra.mxu0 0.0
      %3289 = vmatprep.subr.mxu0 0.0
      %3290 = vmatpush2.msra.mxu0 0.0
      %3291 = vmatprep.subr.mxu0 0.0
      %3292 = vmatpush2.msra.mxu0 0.0
      %3293 = vmatprep.subr.mxu0 0.0
      %3294 = vmatpush2.msra.mxu0 0.0
      %3295 = vmatprep.subr.mxu0 0.0
      %3296 = vmatpush2.msra.mxu0 0.0
      %3297 = vmatprep.subr.mxu0 0.0
      %3298 = vmatpush2.msra.mxu0 0.0
      %3299 = vmatprep.subr.mxu0 0.0
      %3300 = vmatpush2.msra.mxu0 0.0
      %3301 = vmatprep.subr.mxu0 0.0
      %3302 = vmatpush2.msra.mxu0 0.0
      %3303 = vmatprep.subr.mxu0 0.0
      %3304 = vmatpush2.msra.mxu0 0.0
      %3305 = vmatprep.subr.mxu0 0.0
      %3306 = vmatpush2.msra.mxu0 0.0
      %3307 = vmatprep.subr.mxu0 0.0
      %3308 = vmatpush2.msra.mxu0 0.0
      %3309 = vmatprep.subr.mxu0 0.0
      %3310 = vmatpush2.msra.mxu0 0.0
      %3311 = vmatprep.mubr.f32.mxu0 0.0
      %3312 = vmatmul.mubr.f32.gmra.mxu0 %v1029
      %v3313 = vpop.f32.mrf.mxu0
      %v3314 = vadd.f32 0.0, %v3313
      %v3315 = vpop.f32.mrf.mxu0
      %3316 = vmatprep.mubr.f32.mxu0 0.0
      %3317 = vmatmul.mubr.f32.gmra.mxu0 %v1031
      %v3318 = vpop.f32.mrf.mxu0
      %v3319 = vadd.f32 0.0, %v3318
      %v3320 = vpop.f32.mrf.mxu0
      %3321 = vmatprep.mubr.f32.mxu0 0.0
      %3322 = vmatmul.mubr.f32.gmra.mxu0 %v1033
      %v3323 = vpop.f32.mrf.mxu0
      %v3324 = vadd.f32 0.0, %v3323
      %v3325 = vpop.f32.mrf.mxu0
      %3326 = vmatprep.mubr.f32.mxu0 0.0
      %3327 = vmatmul.mubr.f32.gmra.mxu0 %v1035
      %v3328 = vpop.f32.mrf.mxu0
      %v3329 = vadd.f32 0.0, %v3328
      %v3330 = vpop.f32.mrf.mxu0
      %3331 = vmatprep.mubr.f32.mxu0 0.0
      %3332 = vmatmul.mubr.f32.gmra.mxu0 %v1037
      %v3333 = vpop.f32.mrf.mxu0
      %v3334 = vadd.f32 0.0, %v3333
      %v3335 = vpop.f32.mrf.mxu0
      %3336 = vmatprep.mubr.f32.mxu0 0.0
      %3337 = vmatmul.mubr.f32.gmra.mxu0 %v1039
      %v3338 = vpop.f32.mrf.mxu0
      %v3339 = vadd.f32 0.0, %v3338
      %v3340 = vpop.f32.mrf.mxu0
      %3341 = vmatprep.mubr.f32.mxu0 0.0
      %3342 = vmatmul.mubr.f32.gmra.mxu0 %v1041
      %v3343 = vpop.f32.mrf.mxu0
      %v3344 = vadd.f32 0.0, %v3343
      %v3345 = vpop.f32.mrf.mxu0
      %3346 = vmatprep.mubr.f32.mxu0 0.0
      %3347 = vmatmul.mubr.f32.gmra.mxu0 %v1043
      %v3348 = vpop.f32.mrf.mxu0
      %v3349 = vadd.f32 0.0, %v3348
      %v3350 = vpop.f32.mrf.mxu0
      %3351 = vmatprep.mubr.f32.mxu0 0.0
      %3352 = vmatmul.mubr.f32.gmra.mxu0 %v1045
      %v3353 = vpop.f32.mrf.mxu0
      %v3354 = vadd.f32 0.0, %v3353
      %v3355 = vpop.f32.mrf.mxu0
      %3356 = vmatprep.mubr.f32.mxu0 0.0
      %3357 = vmatmul.mubr.f32.gmra.mxu0 %v1047
      %v3358 = vpop.f32.mrf.mxu0
      %v3359 = vadd.f32 0.0, %v3358
      %v3360 = vpop.f32.mrf.mxu0
      %3361 = vmatprep.mubr.f32.mxu0 0.0
      %3362 = vmatmul.mubr.f32.gmra.mxu0 %v1049
      %v3363 = vpop.f32.mrf.mxu0
      %v3364 = vadd.f32 0.0, %v3363
      %v3365 = vpop.f32.mrf.mxu0
      %3366 = vmatprep.mubr.f32.mxu0 0.0
      %3367 = vmatmul.mubr.f32.gmra.mxu0 %v1051
      %v3368 = vpop.f32.mrf.mxu0
      %v3369 = vadd.f32 0.0, %v3368
      %v3370 = vpop.f32.mrf.mxu0
      %3371 = vmatprep.mubr.f32.mxu0 0.0
      %3372 = vmatmul.mubr.f32.gmra.mxu0 %v1053
      %v3373 = vpop.f32.mrf.mxu0
      %v3374 = vadd.f32 0.0, %v3373
      %v3375 = vpop.f32.mrf.mxu0
      %3376 = vmatprep.mubr.f32.mxu0 0.0
      %3377 = vmatmul.mubr.f32.gmra.mxu0 %v1055
      %v3378 = vpop.f32.mrf.mxu0
      %v3379 = vadd.f32 0.0, %v3378
      %v3380 = vpop.f32.mrf.mxu0
      %3381 = vmatprep.mubr.f32.mxu0 0.0
      %3382 = vmatmul.mubr.f32.gmra.mxu0 %v1057
      %v3383 = vpop.f32.mrf.mxu0
      %v3384 = vadd.f32 0.0, %v3383
      %v3385 = vpop.f32.mrf.mxu0
      %3386 = vmatprep.mubr.f32.mxu0 0.0
      %3387 = vmatmul.mubr.f32.gmra.mxu0 %v1059
      %v3388 = vpop.f32.mrf.mxu0
      %v3389 = vadd.f32 0.0, %v3388
      %v3390 = vpop.f32.mrf.mxu0
      %3391 = vmatprep.mubr.f32.mxu0 0.0
      %3392 = vmatmul.mubr.f32.gmra.mxu0 %v1061
      %v3393 = vpop.f32.mrf.mxu0
      %v3394 = vadd.f32 0.0, %v3393
      %v3395 = vpop.f32.mrf.mxu0
      %3396 = vmatprep.mubr.f32.mxu0 0.0
      %3397 = vmatmul.mubr.f32.gmra.mxu0 %v1063
      %v3398 = vpop.f32.mrf.mxu0
      %v3399 = vadd.f32 0.0, %v3398
      %v3400 = vpop.f32.mrf.mxu0
      %3401 = vmatprep.mubr.f32.mxu0 0.0
      %3402 = vmatmul.mubr.f32.gmra.mxu0 %v1065
      %v3403 = vpop.f32.mrf.mxu0
      %v3404 = vadd.f32 0.0, %v3403
      %v3405 = vpop.f32.mrf.mxu0
      %3406 = vmatprep.mubr.f32.mxu0 0.0
      %3407 = vmatmul.mubr.f32.gmra.mxu0 %v1067
      %v3408 = vpop.f32.mrf.mxu0
      %v3409 = vadd.f32 0.0, %v3408
      %v3410 = vpop.f32.mrf.mxu0
      %3411 = vmatprep.mubr.f32.mxu0 0.0
      %3412 = vmatmul.mubr.f32.gmra.mxu0 %v1069
      %v3413 = vpop.f32.mrf.mxu0
      %v3414 = vadd.f32 0.0, %v3413
      %v3415 = vpop.f32.mrf.mxu0
      %3416 = vmatprep.mubr.f32.mxu0 0.0
      %3417 = vmatmul.mubr.f32.gmra.mxu0 %v1071
      %v3418 = vpop.f32.mrf.mxu0
      %v3419 = vadd.f32 0.0, %v3418
      %v3420 = vpop.f32.mrf.mxu0
      %3421 = vmatprep.mubr.f32.mxu0 0.0
      %3422 = vmatmul.mubr.f32.gmra.mxu0 %v1073
      %v3423 = vpop.f32.mrf.mxu0
      %v3424 = vadd.f32 0.0, %v3423
      %v3425 = vpop.f32.mrf.mxu0
      %3426 = vmatprep.mubr.f32.mxu0 0.0
      %3427 = vmatmul.mubr.f32.gmra.mxu0 %v1075
      %v3428 = vpop.f32.mrf.mxu0
      %v3429 = vadd.f32 0.0, %v3428
      %v3430 = vpop.f32.mrf.mxu0
      %3431 = vmatprep.mubr.f32.mxu0 0.0
      %3432 = vmatmul.mubr.f32.gmra.mxu0 %v1077
      %v3433 = vpop.f32.mrf.mxu0
      %v3434 = vadd.f32 0.0, %v3433
      %v3435 = vpop.f32.mrf.mxu0
      %3436 = vmatprep.mubr.f32.mxu0 0.0
      %3437 = vmatmul.mubr.f32.gmra.mxu0 %v1079
      %v3438 = vpop.f32.mrf.mxu0
      %v3439 = vadd.f32 0.0, %v3438
      %v3440 = vpop.f32.mrf.mxu0
      %3441 = vmatprep.mubr.f32.mxu0 0.0
      %3442 = vmatmul.mubr.f32.gmra.mxu0 %v1081
      %v3443 = vpop.f32.mrf.mxu0
      %v3444 = vadd.f32 0.0, %v3443
      %v3445 = vpop.f32.mrf.mxu0
      %3446 = vmatprep.mubr.f32.mxu0 0.0
      %3447 = vmatmul.mubr.f32.gmra.mxu0 %v1083
      %v3448 = vpop.f32.mrf.mxu0
      %v3449 = vadd.f32 0.0, %v3448
      %v3450 = vpop.f32.mrf.mxu0
      %3451 = vmatprep.mubr.f32.mxu0 0.0
      %3452 = vmatmul.mubr.f32.gmra.mxu0 %v2236
      %v3453 = vpop.f32.mrf.mxu0
      %v3454 = vadd.f32 0.0, %v3453
      %v3455 = vpop.f32.mrf.mxu0
      %3456 = vmatprep.mubr.f32.mxu0 0.0
      %3457 = vmatmul.mubr.f32.gmra.mxu0 %v2238
      %v3458 = vpop.f32.mrf.mxu0
      %v3459 = vadd.f32 0.0, %v3458
      %v3460 = vpop.f32.mrf.mxu0
      %3461 = vmatprep.mubr.f32.mxu0 0.0
      %3462 = vmatmul.mubr.f32.gmra.mxu0 %v3240
      %v3463 = vpop.f32.mrf.mxu0
      %v3464 = vadd.f32 0.0, %v3463
      %v3465 = vpop.f32.mrf.mxu0
      %3466 = vmatprep.mubr.f32.mxu0 0.0
      %3467 = vmatmul.mubr.f32.gmra.mxu0 %v3242
      %v3468 = vpop.f32.mrf.mxu0
      %v3469 = vadd.f32 0.0, %v3468
      %v3470 = vpop.f32.mrf.mxu0
      %3471 = vdwg.mxu0
      %v3472 = vadd.f32 %v3206, %v3314
      %v3473 = vadd.f32 %v3207, %v3319
      %v3474 = vadd.f32 %v3208, %v3324
      %v3475 = vadd.f32 %v3209, %v3329
      %v3476 = vadd.f32 %v3210, %v3334
      %v3477 = vadd.f32 %v3211, %v3339
      %v3478 = vadd.f32 %v3212, %v3344
      %v3479 = vadd.f32 %v3213, %v3349
      %v3480 = vadd.f32 %v3214, %v3354
      %v3481 = vadd.f32 %v3215, %v3359
      %v3482 = vadd.f32 %v3216, %v3364
      %v3483 = vadd.f32 %v3217, %v3369
      %v3484 = vadd.f32 %v3218, %v3374
      %v3485 = vadd.f32 %v3219, %v3379
      %v3486 = vadd.f32 %v3220, %v3384
      %v3487 = vadd.f32 %v3221, %v3389
      %v3488 = vadd.f32 %v3222, %v3394
      %v3489 = vadd.f32 %v3223, %v3399
      %v3490 = vadd.f32 %v3224, %v3404
      %v3491 = vadd.f32 %v3225, %v3409
      %v3492 = vadd.f32 %v3226, %v3414
      %v3493 = vadd.f32 %v3227, %v3419
      %v3494 = vadd.f32 %v3228, %v3424
      %v3495 = vadd.f32 %v3229, %v3429
      %v3496 = vadd.f32 %v3230, %v3434
      %v3497 = vadd.f32 %v3231, %v3439
      %v3498 = vadd.f32 %v3232, %v3444
      %v3499 = vadd.f32 %v3233, %v3449
      %v3500 = vadd.f32 %v3234, %v3454
      %v3501 = vadd.f32 %v3235, %v3459
      %v3502 = vadd.f32 %v3236, %v3464
      %v3503 = vadd.f32 %v3237, %v3469
      %3504 = vst.msk [vmem:[#allocation4] sm:$0xff] %vm363, %v3472
      %3505 = vst.msk [vmem:[#allocation4 + $0x8] sm:$0xff] %vm363, %v3473
      %3506 = vst.msk [vmem:[#allocation4 + $0x10] sm:$0xff] %vm363, %v3474
      %3507 = vst.msk [vmem:[#allocation4 + $0x18] sm:$0xff] %vm363, %v3475
      %3508 = vst.msk [vmem:[#allocation4 + $0x20] sm:$0xff] %vm363, %v3476
      %3509 = vst.msk [vmem:[#allocation4 + $0x28] sm:$0xff] %vm363, %v3477
      %3510 = vst.msk [vmem:[#allocation4 + $0x30] sm:$0xff] %vm363, %v3478
      %3511 = vst.msk [vmem:[#allocation4 + $0x38] sm:$0xff] %vm363, %v3479
      %3512 = vst.msk [vmem:[#allocation4 + $0x40] sm:$0xff] %vm363, %v3480
      %3513 = vst.msk [vmem:[#allocation4 + $0x48] sm:$0xff] %vm363, %v3481
      %3514 = vst.msk [vmem:[#allocation4 + $0x50] sm:$0xff] %vm363, %v3482
      %3515 = vst.msk [vmem:[#allocation4 + $0x58] sm:$0xff] %vm363, %v3483
      %3516 = vst.msk [vmem:[#allocation4 + $0x60] sm:$0xff] %vm363, %v3484
      %3517 = vst.msk [vmem:[#allocation4 + $0x68] sm:$0xff] %vm363, %v3485
      %3518 = vst.msk [vmem:[#allocation4 + $0x70] sm:$0xff] %vm363, %v3486
      %3519 = vst.msk [vmem:[#allocation4 + $0x78] sm:$0xff] %vm363, %v3487
      %3520 = vst.msk [vmem:[#allocation4 + $0x80] sm:$0xff] %vm363, %v3488
      %3521 = vst.msk [vmem:[#allocation4 + $0x88] sm:$0xff] %vm363, %v3489
      %3522 = vst.msk [vmem:[#allocation4 + $0x90] sm:$0xff] %vm363, %v3490
      %3523 = vst.msk [vmem:[#allocation4 + $0x98] sm:$0xff] %vm363, %v3491
      %3524 = vst.msk [vmem:[#allocation4 + $0xa0] sm:$0xff] %vm363, %v3492
      %3525 = vst.msk [vmem:[#allocation4 + $0xa8] sm:$0xff] %vm363, %v3493
      %3526 = vst.msk [vmem:[#allocation4 + $0xb0] sm:$0xff] %vm363, %v3494
      %3527 = vst.msk [vmem:[#allocation4 + $0xb8] sm:$0xff] %vm363, %v3495
      %3528 = vst.msk [vmem:[#allocation4 + $0xc0] sm:$0xff] %vm363, %v3496
      %3529 = vst.msk [vmem:[#allocation4 + $0xc8] sm:$0xff] %vm363, %v3497
      %3530 = vst.msk [vmem:[#allocation4 + $0xd0] sm:$0xff] %vm363, %v3498
      %3531 = vst.msk [vmem:[#allocation4 + $0xd8] sm:$0xff] %vm363, %v3499
      %3532 = vst.msk [vmem:[#allocation4 + $0xe0] sm:$0xff] %vm363, %v3500
      %3533 = vst.msk [vmem:[#allocation4 + $0xe8] sm:$0xff] %vm363, %v3501
      %3534 = vst.msk [vmem:[#allocation4 + $0xf0] sm:$0xff] %vm363, %v3502
      %3535 = vst.msk [vmem:[#allocation4 + $0xf8] sm:$0xff] %vm363, %v3503
      %v3536 = vld [vmem:[#allocation4] sm:$0xff]
      %v3537 = vld [vmem:[#allocation4 + $0x8] sm:$0xff]
      %v3538 = vld [vmem:[#allocation4 + $0x10] sm:$0xff]
      %v3539 = vld [vmem:[#allocation4 + $0x18] sm:$0xff]
      %v3540 = vld [vmem:[#allocation4 + $0x20] sm:$0xff]
      %v3541 = vld [vmem:[#allocation4 + $0x28] sm:$0xff]
      %v3542 = vld [vmem:[#allocation4 + $0x30] sm:$0xff]
      %v3543 = vld [vmem:[#allocation4 + $0x38] sm:$0xff]
      %v3544 = vld [vmem:[#allocation4 + $0x40] sm:$0xff]
      %v3545 = vld [vmem:[#allocation4 + $0x48] sm:$0xff]
      %v3546 = vld [vmem:[#allocation4 + $0x50] sm:$0xff]
      %v3547 = vld [vmem:[#allocation4 + $0x58] sm:$0xff]
      %v3548 = vld [vmem:[#allocation4 + $0x60] sm:$0xff]
      %v3549 = vld [vmem:[#allocation4 + $0x68] sm:$0xff]
      %v3550 = vld [vmem:[#allocation4 + $0x70] sm:$0xff]
      %v3551 = vld [vmem:[#allocation4 + $0x78] sm:$0xff]
      %v3552 = vld [vmem:[#allocation4 + $0x80] sm:$0xff]
      %v3553 = vld [vmem:[#allocation4 + $0x88] sm:$0xff]
      %v3554 = vld [vmem:[#allocation4 + $0x90] sm:$0xff]
      %v3555 = vld [vmem:[#allocation4 + $0x98] sm:$0xff]
      %v3556 = vld [vmem:[#allocation4 + $0xa0] sm:$0xff]
      %v3557 = vld [vmem:[#allocation4 + $0xa8] sm:$0xff]
      %v3558 = vld [vmem:[#allocation4 + $0xb0] sm:$0xff]
      %v3559 = vld [vmem:[#allocation4 + $0xb8] sm:$0xff]
      %v3560 = vld [vmem:[#allocation4 + $0xc0] sm:$0xff]
      %v3561 = vld [vmem:[#allocation4 + $0xc8] sm:$0xff]
      %v3562 = vld [vmem:[#allocation4 + $0xd0] sm:$0xff]
      %v3563 = vld [vmem:[#allocation4 + $0xd8] sm:$0xff]
      %v3564 = vld [vmem:[#allocation4 + $0xe0] sm:$0xff]
      %v3565 = vld [vmem:[#allocation4 + $0xe8] sm:$0xff]
      %v3566 = vld [vmem:[#allocation4 + $0xf0] sm:$0xff]
      %v3567 = vld [vmem:[#allocation4 + $0xf8] sm:$0xff]
      %v3569 = vrot.slane %v465, 1
      %v3570 = vrot.slane %v466, 1
      %v3571 = vsel %vm1425, %v3569, %v3570
      %v3572 = vrot.slane %v467, 1
      %v3573 = vsel %vm1425, %v3570, %v3572
      %s3574 = scalar_lea.vmem %s1, 32
      %v3575 = vld [vmem:[%s3574] sm:$0xf]
      %v3576 = vsel %vm225, %v3571, 0
      %v3578 = vsel %vm225, %v3573, 0
      %v3581 = vsel %vm694, %v3575, 0
      %3583 = vmatprep.subr.mxu0 0.0
      %3584 = vmatpush1.msra.mxu0 0.0
      %3585 = vmatprep.subr.mxu0 0.0
      %3586 = vmatpush1.msra.mxu0 0.0
      %3587 = vmatprep.subr.mxu0 0.0
      %3588 = vmatpush1.msra.mxu0 0.0
      %3589 = vmatprep.subr.mxu0 0.0
      %3590 = vmatpush1.msra.mxu0 0.0
      %3591 = vmatprep.subr.mxu0 0.0
      %3592 = vmatpush1.msra.mxu0 0.0
      %3593 = vmatprep.subr.mxu0 0.0
      %3594 = vmatpush1.msra.mxu0 0.0
      %3595 = vmatprep.subr.mxu0 0.0
      %3596 = vmatpush1.msra.mxu0 0.0
      %3597 = vmatprep.subr.mxu0 0.0
      %3598 = vmatpush1.msra.mxu0 0.0
      %3599 = vmatprep.subr.mxu0 0.0
      %3600 = vmatpush1.msra.mxu0 0.0
      %3601 = vmatprep.subr.mxu0 0.0
      %3602 = vmatpush1.msra.mxu0 0.0
      %3603 = vmatprep.subr.mxu0 0.0
      %3604 = vmatpush1.msra.mxu0 0.0
      %3605 = vmatprep.subr.mxu0 0.0
      %3606 = vmatpush1.msra.mxu0 0.0
      %3607 = vmatprep.subr.mxu0 0.0
      %3608 = vmatpush1.msra.mxu0 0.0
      %3609 = vmatprep.subr.mxu0 0.0
      %3610 = vmatpush1.msra.mxu0 0.0
      %3611 = vmatprep.subr.mxu0 0.0
      %3612 = vmatpush1.msra.mxu0 0.0
      %3613 = vmatprep.subr.mxu0 0.0
      %3614 = vmatpush1.msra.mxu0 %v3581
      %3615 = vmatprep.subr.mxu0 0.0
      %3616 = vmatpush2.msra.mxu0 0.0
      %3617 = vmatprep.subr.mxu0 0.0
      %3618 = vmatpush2.msra.mxu0 0.0
      %3619 = vmatprep.subr.mxu0 0.0
      %3620 = vmatpush2.msra.mxu0 0.0
      %3621 = vmatprep.subr.mxu0 0.0
      %3622 = vmatpush2.msra.mxu0 0.0
      %3623 = vmatprep.subr.mxu0 0.0
      %3624 = vmatpush2.msra.mxu0 0.0
      %3625 = vmatprep.subr.mxu0 0.0
      %3626 = vmatpush2.msra.mxu0 0.0
      %3627 = vmatprep.subr.mxu0 0.0
      %3628 = vmatpush2.msra.mxu0 0.0
      %3629 = vmatprep.subr.mxu0 0.0
      %3630 = vmatpush2.msra.mxu0 0.0
      %3631 = vmatprep.subr.mxu0 0.0
      %3632 = vmatpush2.msra.mxu0 0.0
      %3633 = vmatprep.subr.mxu0 0.0
      %3634 = vmatpush2.msra.mxu0 0.0
      %3635 = vmatprep.subr.mxu0 0.0
      %3636 = vmatpush2.msra.mxu0 0.0
      %3637 = vmatprep.subr.mxu0 0.0
      %3638 = vmatpush2.msra.mxu0 0.0
      %3639 = vmatprep.subr.mxu0 0.0
      %3640 = vmatpush2.msra.mxu0 0.0
      %3641 = vmatprep.subr.mxu0 0.0
      %3642 = vmatpush2.msra.mxu0 0.0
      %3643 = vmatprep.subr.mxu0 0.0
      %3644 = vmatpush2.msra.mxu0 0.0
      %3645 = vmatprep.subr.mxu0 0.0
      %3646 = vmatpush2.msra.mxu0 0.0
      %3647 = vmatprep.mubr.f32.mxu0 0.0
      %3648 = vmatmul.mubr.f32.gmra.mxu0 %v1516
      %v3649 = vpop.f32.mrf.mxu0
      %v3650 = vadd.f32 0.0, %v3649
      %v3651 = vpop.f32.mrf.mxu0
      %3652 = vmatprep.mubr.f32.mxu0 0.0
      %3653 = vmatmul.mubr.f32.gmra.mxu0 %v1518
      %v3654 = vpop.f32.mrf.mxu0
      %v3655 = vadd.f32 0.0, %v3654
      %v3656 = vpop.f32.mrf.mxu0
      %3657 = vmatprep.mubr.f32.mxu0 0.0
      %3658 = vmatmul.mubr.f32.gmra.mxu0 %v1520
      %v3659 = vpop.f32.mrf.mxu0
      %v3660 = vadd.f32 0.0, %v3659
      %v3661 = vpop.f32.mrf.mxu0
      %3662 = vmatprep.mubr.f32.mxu0 0.0
      %3663 = vmatmul.mubr.f32.gmra.mxu0 %v1522
      %v3664 = vpop.f32.mrf.mxu0
      %v3665 = vadd.f32 0.0, %v3664
      %v3666 = vpop.f32.mrf.mxu0
      %3667 = vmatprep.mubr.f32.mxu0 0.0
      %3668 = vmatmul.mubr.f32.gmra.mxu0 %v1524
      %v3669 = vpop.f32.mrf.mxu0
      %v3670 = vadd.f32 0.0, %v3669
      %v3671 = vpop.f32.mrf.mxu0
      %3672 = vmatprep.mubr.f32.mxu0 0.0
      %3673 = vmatmul.mubr.f32.gmra.mxu0 %v1526
      %v3674 = vpop.f32.mrf.mxu0
      %v3675 = vadd.f32 0.0, %v3674
      %v3676 = vpop.f32.mrf.mxu0
      %3677 = vmatprep.mubr.f32.mxu0 0.0
      %3678 = vmatmul.mubr.f32.gmra.mxu0 %v1528
      %v3679 = vpop.f32.mrf.mxu0
      %v3680 = vadd.f32 0.0, %v3679
      %v3681 = vpop.f32.mrf.mxu0
      %3682 = vmatprep.mubr.f32.mxu0 0.0
      %3683 = vmatmul.mubr.f32.gmra.mxu0 %v1530
      %v3684 = vpop.f32.mrf.mxu0
      %v3685 = vadd.f32 0.0, %v3684
      %v3686 = vpop.f32.mrf.mxu0
      %3687 = vmatprep.mubr.f32.mxu0 0.0
      %3688 = vmatmul.mubr.f32.gmra.mxu0 %v1532
      %v3689 = vpop.f32.mrf.mxu0
      %v3690 = vadd.f32 0.0, %v3689
      %v3691 = vpop.f32.mrf.mxu0
      %3692 = vmatprep.mubr.f32.mxu0 0.0
      %3693 = vmatmul.mubr.f32.gmra.mxu0 %v1534
      %v3694 = vpop.f32.mrf.mxu0
      %v3695 = vadd.f32 0.0, %v3694
      %v3696 = vpop.f32.mrf.mxu0
      %3697 = vmatprep.mubr.f32.mxu0 0.0
      %3698 = vmatmul.mubr.f32.gmra.mxu0 %v1536
      %v3699 = vpop.f32.mrf.mxu0
      %v3700 = vadd.f32 0.0, %v3699
      %v3701 = vpop.f32.mrf.mxu0
      %3702 = vmatprep.mubr.f32.mxu0 0.0
      %3703 = vmatmul.mubr.f32.gmra.mxu0 %v1538
      %v3704 = vpop.f32.mrf.mxu0
      %v3705 = vadd.f32 0.0, %v3704
      %v3706 = vpop.f32.mrf.mxu0
      %3707 = vmatprep.mubr.f32.mxu0 0.0
      %3708 = vmatmul.mubr.f32.gmra.mxu0 %v1540
      %v3709 = vpop.f32.mrf.mxu0
      %v3710 = vadd.f32 0.0, %v3709
      %v3711 = vpop.f32.mrf.mxu0
      %3712 = vmatprep.mubr.f32.mxu0 0.0
      %3713 = vmatmul.mubr.f32.gmra.mxu0 %v1542
      %v3714 = vpop.f32.mrf.mxu0
      %v3715 = vadd.f32 0.0, %v3714
      %v3716 = vpop.f32.mrf.mxu0
      %3717 = vmatprep.mubr.f32.mxu0 0.0
      %3718 = vmatmul.mubr.f32.gmra.mxu0 %v1544
      %v3719 = vpop.f32.mrf.mxu0
      %v3720 = vadd.f32 0.0, %v3719
      %v3721 = vpop.f32.mrf.mxu0
      %3722 = vmatprep.mubr.f32.mxu0 0.0
      %3723 = vmatmul.mubr.f32.gmra.mxu0 %v1546
      %v3724 = vpop.f32.mrf.mxu0
      %v3725 = vadd.f32 0.0, %v3724
      %v3726 = vpop.f32.mrf.mxu0
      %3727 = vmatprep.mubr.f32.mxu0 0.0
      %3728 = vmatmul.mubr.f32.gmra.mxu0 %v1548
      %v3729 = vpop.f32.mrf.mxu0
      %v3730 = vadd.f32 0.0, %v3729
      %v3731 = vpop.f32.mrf.mxu0
      %3732 = vmatprep.mubr.f32.mxu0 0.0
      %3733 = vmatmul.mubr.f32.gmra.mxu0 %v1550
      %v3734 = vpop.f32.mrf.mxu0
      %v3735 = vadd.f32 0.0, %v3734
      %v3736 = vpop.f32.mrf.mxu0
      %3737 = vmatprep.mubr.f32.mxu0 0.0
      %3738 = vmatmul.mubr.f32.gmra.mxu0 %v1552
      %v3739 = vpop.f32.mrf.mxu0
      %v3740 = vadd.f32 0.0, %v3739
      %v3741 = vpop.f32.mrf.mxu0
      %3742 = vmatprep.mubr.f32.mxu0 0.0
      %3743 = vmatmul.mubr.f32.gmra.mxu0 %v1554
      %v3744 = vpop.f32.mrf.mxu0
      %v3745 = vadd.f32 0.0, %v3744
      %v3746 = vpop.f32.mrf.mxu0
      %3747 = vmatprep.mubr.f32.mxu0 0.0
      %3748 = vmatmul.mubr.f32.gmra.mxu0 %v1556
      %v3749 = vpop.f32.mrf.mxu0
      %v3750 = vadd.f32 0.0, %v3749
      %v3751 = vpop.f32.mrf.mxu0
      %3752 = vmatprep.mubr.f32.mxu0 0.0
      %3753 = vmatmul.mubr.f32.gmra.mxu0 %v1558
      %v3754 = vpop.f32.mrf.mxu0
      %v3755 = vadd.f32 0.0, %v3754
      %v3756 = vpop.f32.mrf.mxu0
      %3757 = vmatprep.mubr.f32.mxu0 0.0
      %3758 = vmatmul.mubr.f32.gmra.mxu0 %v1560
      %v3759 = vpop.f32.mrf.mxu0
      %v3760 = vadd.f32 0.0, %v3759
      %v3761 = vpop.f32.mrf.mxu0
      %3762 = vmatprep.mubr.f32.mxu0 0.0
      %3763 = vmatmul.mubr.f32.gmra.mxu0 %v1562
      %v3764 = vpop.f32.mrf.mxu0
      %v3765 = vadd.f32 0.0, %v3764
      %v3766 = vpop.f32.mrf.mxu0
      %3767 = vmatprep.mubr.f32.mxu0 0.0
      %3768 = vmatmul.mubr.f32.gmra.mxu0 %v1564
      %v3769 = vpop.f32.mrf.mxu0
      %v3770 = vadd.f32 0.0, %v3769
      %v3771 = vpop.f32.mrf.mxu0
      %3772 = vmatprep.mubr.f32.mxu0 0.0
      %3773 = vmatmul.mubr.f32.gmra.mxu0 %v1566
      %v3774 = vpop.f32.mrf.mxu0
      %v3775 = vadd.f32 0.0, %v3774
      %v3776 = vpop.f32.mrf.mxu0
      %3777 = vmatprep.mubr.f32.mxu0 0.0
      %3778 = vmatmul.mubr.f32.gmra.mxu0 %v1568
      %v3779 = vpop.f32.mrf.mxu0
      %v3780 = vadd.f32 0.0, %v3779
      %v3781 = vpop.f32.mrf.mxu0
      %3782 = vmatprep.mubr.f32.mxu0 0.0
      %3783 = vmatmul.mubr.f32.gmra.mxu0 %v1570
      %v3784 = vpop.f32.mrf.mxu0
      %v3785 = vadd.f32 0.0, %v3784
      %v3786 = vpop.f32.mrf.mxu0
      %3787 = vmatprep.mubr.f32.mxu0 0.0
      %3788 = vmatmul.mubr.f32.gmra.mxu0 %v2572
      %v3789 = vpop.f32.mrf.mxu0
      %v3790 = vadd.f32 0.0, %v3789
      %v3791 = vpop.f32.mrf.mxu0
      %3792 = vmatprep.mubr.f32.mxu0 0.0
      %3793 = vmatmul.mubr.f32.gmra.mxu0 %v2574
      %v3794 = vpop.f32.mrf.mxu0
      %v3795 = vadd.f32 0.0, %v3794
      %v3796 = vpop.f32.mrf.mxu0
      %3797 = vmatprep.mubr.f32.mxu0 0.0
      %3798 = vmatmul.mubr.f32.gmra.mxu0 %v3576
      %v3799 = vpop.f32.mrf.mxu0
      %v3800 = vadd.f32 0.0, %v3799
      %v3801 = vpop.f32.mrf.mxu0
      %3802 = vmatprep.mubr.f32.mxu0 0.0
      %3803 = vmatmul.mubr.f32.gmra.mxu0 %v3578
      %v3804 = vpop.f32.mrf.mxu0
      %v3805 = vadd.f32 0.0, %v3804
      %v3806 = vpop.f32.mrf.mxu0
      %3807 = vdwg.mxu0
      %v3808 = vadd.f32 %v3536, %v3650
      %v3809 = vadd.f32 %v3537, %v3655
      %v3810 = vadd.f32 %v3538, %v3660
      %v3811 = vadd.f32 %v3539, %v3665
      %v3812 = vadd.f32 %v3540, %v3670
      %v3813 = vadd.f32 %v3541, %v3675
      %v3814 = vadd.f32 %v3542, %v3680
      %v3815 = vadd.f32 %v3543, %v3685
      %v3816 = vadd.f32 %v3544, %v3690
      %v3817 = vadd.f32 %v3545, %v3695
      %v3818 = vadd.f32 %v3546, %v3700
      %v3819 = vadd.f32 %v3547, %v3705
      %v3820 = vadd.f32 %v3548, %v3710
      %v3821 = vadd.f32 %v3549, %v3715
      %v3822 = vadd.f32 %v3550, %v3720
      %v3823 = vadd.f32 %v3551, %v3725
      %v3824 = vadd.f32 %v3552, %v3730
      %v3825 = vadd.f32 %v3553, %v3735
      %v3826 = vadd.f32 %v3554, %v3740
      %v3827 = vadd.f32 %v3555, %v3745
      %v3828 = vadd.f32 %v3556, %v3750
      %v3829 = vadd.f32 %v3557, %v3755
      %v3830 = vadd.f32 %v3558, %v3760
      %v3831 = vadd.f32 %v3559, %v3765
      %v3832 = vadd.f32 %v3560, %v3770
      %v3833 = vadd.f32 %v3561, %v3775
      %v3834 = vadd.f32 %v3562, %v3780
      %v3835 = vadd.f32 %v3563, %v3785
      %v3836 = vadd.f32 %v3564, %v3790
      %v3837 = vadd.f32 %v3565, %v3795
      %v3838 = vadd.f32 %v3566, %v3800
      %v3839 = vadd.f32 %v3567, %v3805
      %3840 = vst.msk [vmem:[#allocation4] sm:$0xff] %vm363, %v3808
      %3841 = vst.msk [vmem:[#allocation4 + $0x8] sm:$0xff] %vm363, %v3809
      %3842 = vst.msk [vmem:[#allocation4 + $0x10] sm:$0xff] %vm363, %v3810
      %3843 = vst.msk [vmem:[#allocation4 + $0x18] sm:$0xff] %vm363, %v3811
      %3844 = vst.msk [vmem:[#allocation4 + $0x20] sm:$0xff] %vm363, %v3812
      %3845 = vst.msk [vmem:[#allocation4 + $0x28] sm:$0xff] %vm363, %v3813
      %3846 = vst.msk [vmem:[#allocation4 + $0x30] sm:$0xff] %vm363, %v3814
      %3847 = vst.msk [vmem:[#allocation4 + $0x38] sm:$0xff] %vm363, %v3815
      %3848 = vst.msk [vmem:[#allocation4 + $0x40] sm:$0xff] %vm363, %v3816
      %3849 = vst.msk [vmem:[#allocation4 + $0x48] sm:$0xff] %vm363, %v3817
      %3850 = vst.msk [vmem:[#allocation4 + $0x50] sm:$0xff] %vm363, %v3818
      %3851 = vst.msk [vmem:[#allocation4 + $0x58] sm:$0xff] %vm363, %v3819
      %3852 = vst.msk [vmem:[#allocation4 + $0x60] sm:$0xff] %vm363, %v3820
      %3853 = vst.msk [vmem:[#allocation4 + $0x68] sm:$0xff] %vm363, %v3821
      %3854 = vst.msk [vmem:[#allocation4 + $0x70] sm:$0xff] %vm363, %v3822
      %3855 = vst.msk [vmem:[#allocation4 + $0x78] sm:$0xff] %vm363, %v3823
      %3856 = vst.msk [vmem:[#allocation4 + $0x80] sm:$0xff] %vm363, %v3824
      %3857 = vst.msk [vmem:[#allocation4 + $0x88] sm:$0xff] %vm363, %v3825
      %3858 = vst.msk [vmem:[#allocation4 + $0x90] sm:$0xff] %vm363, %v3826
      %3859 = vst.msk [vmem:[#allocation4 + $0x98] sm:$0xff] %vm363, %v3827
      %3860 = vst.msk [vmem:[#allocation4 + $0xa0] sm:$0xff] %vm363, %v3828
      %3861 = vst.msk [vmem:[#allocation4 + $0xa8] sm:$0xff] %vm363, %v3829
      %3862 = vst.msk [vmem:[#allocation4 + $0xb0] sm:$0xff] %vm363, %v3830
      %3863 = vst.msk [vmem:[#allocation4 + $0xb8] sm:$0xff] %vm363, %v3831
      %3864 = vst.msk [vmem:[#allocation4 + $0xc0] sm:$0xff] %vm363, %v3832
      %3865 = vst.msk [vmem:[#allocation4 + $0xc8] sm:$0xff] %vm363, %v3833
      %3866 = vst.msk [vmem:[#allocation4 + $0xd0] sm:$0xff] %vm363, %v3834
      %3867 = vst.msk [vmem:[#allocation4 + $0xd8] sm:$0xff] %vm363, %v3835
      %3868 = vst.msk [vmem:[#allocation4 + $0xe0] sm:$0xff] %vm363, %v3836
      %3869 = vst.msk [vmem:[#allocation4 + $0xe8] sm:$0xff] %vm363, %v3837
      %3870 = vst.msk [vmem:[#allocation4 + $0xf0] sm:$0xff] %vm363, %v3838
      %3871 = vst.msk [vmem:[#allocation4 + $0xf8] sm:$0xff] %vm363, %v3839
      %v3872 = vld [vmem:[#allocation4] sm:$0xff]
      %v3873 = vld [vmem:[#allocation4 + $0x8] sm:$0xff]
      %v3874 = vld [vmem:[#allocation4 + $0x10] sm:$0xff]
      %v3875 = vld [vmem:[#allocation4 + $0x18] sm:$0xff]
      %v3876 = vld [vmem:[#allocation4 + $0x20] sm:$0xff]
      %v3877 = vld [vmem:[#allocation4 + $0x28] sm:$0xff]
      %v3878 = vld [vmem:[#allocation4 + $0x30] sm:$0xff]
      %v3879 = vld [vmem:[#allocation4 + $0x38] sm:$0xff]
      %v3880 = vld [vmem:[#allocation4 + $0x40] sm:$0xff]
      %v3881 = vld [vmem:[#allocation4 + $0x48] sm:$0xff]
      %v3882 = vld [vmem:[#allocation4 + $0x50] sm:$0xff]
      %v3883 = vld [vmem:[#allocation4 + $0x58] sm:$0xff]
      %v3884 = vld [vmem:[#allocation4 + $0x60] sm:$0xff]
      %v3885 = vld [vmem:[#allocation4 + $0x68] sm:$0xff]
      %v3886 = vld [vmem:[#allocation4 + $0x70] sm:$0xff]
      %v3887 = vld [vmem:[#allocation4 + $0x78] sm:$0xff]
      %v3888 = vld [vmem:[#allocation4 + $0x80] sm:$0xff]
      %v3889 = vld [vmem:[#allocation4 + $0x88] sm:$0xff]
      %v3890 = vld [vmem:[#allocation4 + $0x90] sm:$0xff]
      %v3891 = vld [vmem:[#allocation4 + $0x98] sm:$0xff]
      %v3892 = vld [vmem:[#allocation4 + $0xa0] sm:$0xff]
      %v3893 = vld [vmem:[#allocation4 + $0xa8] sm:$0xff]
      %v3894 = vld [vmem:[#allocation4 + $0xb0] sm:$0xff]
      %v3895 = vld [vmem:[#allocation4 + $0xb8] sm:$0xff]
      %v3896 = vld [vmem:[#allocation4 + $0xc0] sm:$0xff]
      %v3897 = vld [vmem:[#allocation4 + $0xc8] sm:$0xff]
      %v3898 = vld [vmem:[#allocation4 + $0xd0] sm:$0xff]
      %v3899 = vld [vmem:[#allocation4 + $0xd8] sm:$0xff]
      %v3900 = vld [vmem:[#allocation4 + $0xe0] sm:$0xff]
      %v3901 = vld [vmem:[#allocation4 + $0xe8] sm:$0xff]
      %v3902 = vld [vmem:[#allocation4 + $0xf0] sm:$0xff]
      %v3903 = vld [vmem:[#allocation4 + $0xf8] sm:$0xff]
      %v3904 = vld [vmem:[%s2] sm:$0x1]
      %v3906 = vlaneseq
      %v3907 = vshrl.u32 %v3906, 7
      %v3908 = vsub.s32 0, %v3907
      %v3909 = vrot.slane %v3904, %v3908
      %v3911 = vadd.f32 %v3872, %v3909
      %v3912 = vadd.f32 %v3873, %v3909
      %v3913 = vadd.f32 %v3874, %v3909
      %v3914 = vadd.f32 %v3875, %v3909
      %v3915 = vadd.f32 %v3876, %v3909
      %v3916 = vadd.f32 %v3877, %v3909
      %v3917 = vadd.f32 %v3878, %v3909
      %v3918 = vadd.f32 %v3879, %v3909
      %v3919 = vadd.f32 %v3880, %v3909
      %v3920 = vadd.f32 %v3881, %v3909
      %v3921 = vadd.f32 %v3882, %v3909
      %v3922 = vadd.f32 %v3883, %v3909
      %v3923 = vadd.f32 %v3884, %v3909
      %v3924 = vadd.f32 %v3885, %v3909
      %v3925 = vadd.f32 %v3886, %v3909
      %v3926 = vadd.f32 %v3887, %v3909
      %v3927 = vadd.f32 %v3888, %v3909
      %v3928 = vadd.f32 %v3889, %v3909
      %v3929 = vadd.f32 %v3890, %v3909
      %v3930 = vadd.f32 %v3891, %v3909
      %v3931 = vadd.f32 %v3892, %v3909
      %v3932 = vadd.f32 %v3893, %v3909
      %v3933 = vadd.f32 %v3894, %v3909
      %v3934 = vadd.f32 %v3895, %v3909
      %v3935 = vadd.f32 %v3896, %v3909
      %v3936 = vadd.f32 %v3897, %v3909
      %v3937 = vadd.f32 %v3898, %v3909
      %v3938 = vadd.f32 %v3899, %v3909
      %v3939 = vadd.f32 %v3900, %v3909
      %v3940 = vadd.f32 %v3901, %v3909
      %v3941 = vadd.f32 %v3902, %v3909
      %v3942 = vadd.f32 %v3903, %v3909
      %vm3943 = vcmp.gt.f32.partialorder %v3911, 0.0
      %vm3944 = vcmp.gt.f32.partialorder %v3912, 0.0
      %vm3945 = vcmp.gt.f32.partialorder %v3913, 0.0
      %vm3946 = vcmp.gt.f32.partialorder %v3914, 0.0
      %vm3947 = vcmp.gt.f32.partialorder %v3915, 0.0
      %vm3948 = vcmp.gt.f32.partialorder %v3916, 0.0
      %vm3949 = vcmp.gt.f32.partialorder %v3917, 0.0
      %vm3950 = vcmp.gt.f32.partialorder %v3918, 0.0
      %vm3951 = vcmp.gt.f32.partialorder %v3919, 0.0
      %vm3952 = vcmp.gt.f32.partialorder %v3920, 0.0
      %vm3953 = vcmp.gt.f32.partialorder %v3921, 0.0
      %vm3954 = vcmp.gt.f32.partialorder %v3922, 0.0
      %vm3955 = vcmp.gt.f32.partialorder %v3923, 0.0
      %vm3956 = vcmp.gt.f32.partialorder %v3924, 0.0
      %vm3957 = vcmp.gt.f32.partialorder %v3925, 0.0
      %vm3958 = vcmp.gt.f32.partialorder %v3926, 0.0
      %vm3959 = vcmp.gt.f32.partialorder %v3927, 0.0
      %vm3960 = vcmp.gt.f32.partialorder %v3928, 0.0
      %vm3961 = vcmp.gt.f32.partialorder %v3929, 0.0
      %vm3962 = vcmp.gt.f32.partialorder %v3930, 0.0
      %vm3963 = vcmp.gt.f32.partialorder %v3931, 0.0
      %vm3964 = vcmp.gt.f32.partialorder %v3932, 0.0
      %vm3965 = vcmp.gt.f32.partialorder %v3933, 0.0
      %vm3966 = vcmp.gt.f32.partialorder %v3934, 0.0
      %vm3967 = vcmp.gt.f32.partialorder %v3935, 0.0
      %vm3968 = vcmp.gt.f32.partialorder %v3936, 0.0
      %vm3969 = vcmp.gt.f32.partialorder %v3937, 0.0
      %vm3970 = vcmp.gt.f32.partialorder %v3938, 0.0
      %vm3971 = vcmp.gt.f32.partialorder %v3939, 0.0
      %vm3972 = vcmp.gt.f32.partialorder %v3940, 0.0
      %vm3973 = vcmp.gt.f32.partialorder %v3941, 0.0
      %vm3974 = vcmp.gt.f32.partialorder %v3942, 0.0
      %v3975 = vmul.f32 %v3911, 0.01
      %v3976 = vmul.f32 %v3912, 0.01
      %v3977 = vmul.f32 %v3913, 0.01
      %v3978 = vmul.f32 %v3914, 0.01
      %v3979 = vmul.f32 %v3915, 0.01
      %v3980 = vmul.f32 %v3916, 0.01
      %v3981 = vmul.f32 %v3917, 0.01
      %v3982 = vmul.f32 %v3918, 0.01
      %v3983 = vmul.f32 %v3919, 0.01
      %v3984 = vmul.f32 %v3920, 0.01
      %v3985 = vmul.f32 %v3921, 0.01
      %v3986 = vmul.f32 %v3922, 0.01
      %v3987 = vmul.f32 %v3923, 0.01
      %v3988 = vmul.f32 %v3924, 0.01
      %v3989 = vmul.f32 %v3925, 0.01
      %v3990 = vmul.f32 %v3926, 0.01
      %v3991 = vmul.f32 %v3927, 0.01
      %v3992 = vmul.f32 %v3928, 0.01
      %v3993 = vmul.f32 %v3929, 0.01
      %v3994 = vmul.f32 %v3930, 0.01
      %v3995 = vmul.f32 %v3931, 0.01
      %v3996 = vmul.f32 %v3932, 0.01
      %v3997 = vmul.f32 %v3933, 0.01
      %v3998 = vmul.f32 %v3934, 0.01
      %v3999 = vmul.f32 %v3935, 0.01
      %v4000 = vmul.f32 %v3936, 0.01
      %v4001 = vmul.f32 %v3937, 0.01
      %v4002 = vmul.f32 %v3938, 0.01
      %v4003 = vmul.f32 %v3939, 0.01
      %v4004 = vmul.f32 %v3940, 0.01
      %v4005 = vmul.f32 %v3941, 0.01
      %v4006 = vmul.f32 %v3942, 0.01
      %v4007 = vsel %vm3943, %v3911, %v3975
      %v4008 = vsel %vm3944, %v3912, %v3976
      %v4009 = vsel %vm3945, %v3913, %v3977
      %v4010 = vsel %vm3946, %v3914, %v3978
      %v4011 = vsel %vm3947, %v3915, %v3979
      %v4012 = vsel %vm3948, %v3916, %v3980
      %v4013 = vsel %vm3949, %v3917, %v3981
      %v4014 = vsel %vm3950, %v3918, %v3982
      %v4015 = vsel %vm3951, %v3919, %v3983
      %v4016 = vsel %vm3952, %v3920, %v3984
      %v4017 = vsel %vm3953, %v3921, %v3985
      %v4018 = vsel %vm3954, %v3922, %v3986
      %v4019 = vsel %vm3955, %v3923, %v3987
      %v4020 = vsel %vm3956, %v3924, %v3988
      %v4021 = vsel %vm3957, %v3925, %v3989
      %v4022 = vsel %vm3958, %v3926, %v3990
      %v4023 = vsel %vm3959, %v3927, %v3991
      %v4024 = vsel %vm3960, %v3928, %v3992
      %v4025 = vsel %vm3961, %v3929, %v3993
      %v4026 = vsel %vm3962, %v3930, %v3994
      %v4027 = vsel %vm3963, %v3931, %v3995
      %v4028 = vsel %vm3964, %v3932, %v3996
      %v4029 = vsel %vm3965, %v3933, %v3997
      %v4030 = vsel %vm3966, %v3934, %v3998
      %v4031 = vsel %vm3967, %v3935, %v3999
      %v4032 = vsel %vm3968, %v3936, %v4000
      %v4033 = vsel %vm3969, %v3937, %v4001
      %v4034 = vsel %vm3970, %v3938, %v4002
      %v4035 = vsel %vm3971, %v3939, %v4003
      %v4036 = vsel %vm3972, %v3940, %v4004
      %v4037 = vsel %vm3973, %v3941, %v4005
      %v4038 = vsel %vm3974, %v3942, %v4006
      %4039 = vst.msk [vmem:[#allocation3] sm:$0xff] %vm363, 0.0
      %4040 = vst.msk [vmem:[#allocation3 + $0x8] sm:$0xff] %vm363, 0.0
      %4041 = vst.msk [vmem:[#allocation3 + $0x10] sm:$0xff] %vm363, 0.0
      %4042 = vst.msk [vmem:[#allocation3 + $0x18] sm:$0xff] %vm363, 0.0
      %4043 = vst.msk [vmem:[#allocation3 + $0x20] sm:$0xff] %vm363, 0.0
      %4044 = vst.msk [vmem:[#allocation3 + $0x28] sm:$0xff] %vm363, 0.0
      %4045 = vst.msk [vmem:[#allocation3 + $0x30] sm:$0xff] %vm363, 0.0
      %4046 = vst.msk [vmem:[#allocation3 + $0x38] sm:$0xff] %vm363, 0.0
      %4047 = vst.msk [vmem:[#allocation3 + $0x40] sm:$0xff] %vm363, 0.0
      %4048 = vst.msk [vmem:[#allocation3 + $0x48] sm:$0xff] %vm363, 0.0
      %4049 = vst.msk [vmem:[#allocation3 + $0x50] sm:$0xff] %vm363, 0.0
      %4050 = vst.msk [vmem:[#allocation3 + $0x58] sm:$0xff] %vm363, 0.0
      %4051 = vst.msk [vmem:[#allocation3 + $0x60] sm:$0xff] %vm363, 0.0
      %4052 = vst.msk [vmem:[#allocation3 + $0x68] sm:$0xff] %vm363, 0.0
      %4053 = vst.msk [vmem:[#allocation3 + $0x70] sm:$0xff] %vm363, 0.0
      %4054 = vst.msk [vmem:[#allocation3 + $0x78] sm:$0xff] %vm363, 0.0
      %4055 = vst.msk [vmem:[#allocation3 + $0x80] sm:$0xff] %vm363, 0.0
      %4056 = vst.msk [vmem:[#allocation3 + $0x88] sm:$0xff] %vm363, 0.0
      %4057 = vst.msk [vmem:[#allocation3 + $0x90] sm:$0xff] %vm363, 0.0
      %4058 = vst.msk [vmem:[#allocation3 + $0x98] sm:$0xff] %vm363, 0.0
      %4059 = vst.msk [vmem:[#allocation3 + $0xa0] sm:$0xff] %vm363, 0.0
      %4060 = vst.msk [vmem:[#allocation3 + $0xa8] sm:$0xff] %vm363, 0.0
      %4061 = vst.msk [vmem:[#allocation3 + $0xb0] sm:$0xff] %vm363, 0.0
      %4062 = vst.msk [vmem:[#allocation3 + $0xb8] sm:$0xff] %vm363, 0.0
      %4063 = vst.msk [vmem:[#allocation3 + $0xc0] sm:$0xff] %vm363, 0.0
      %4064 = vst.msk [vmem:[#allocation3 + $0xc8] sm:$0xff] %vm363, 0.0
      %4065 = vst.msk [vmem:[#allocation3 + $0xd0] sm:$0xff] %vm363, 0.0
      %4066 = vst.msk [vmem:[#allocation3 + $0xd8] sm:$0xff] %vm363, 0.0
      %4067 = vst.msk [vmem:[#allocation3 + $0xe0] sm:$0xff] %vm363, 0.0
      %4068 = vst.msk [vmem:[#allocation3 + $0xe8] sm:$0xff] %vm363, 0.0
      %4069 = vst.msk [vmem:[#allocation3 + $0xf0] sm:$0xff] %vm363, 0.0
      %4070 = vst.msk [vmem:[#allocation3 + $0xf8] sm:$0xff] %vm363, 0.0
      %4071 = vst.msk [vmem:[#allocation3 + $0x100] sm:$0xff] %vm363, 0.0
      %4072 = vst.msk [vmem:[#allocation3 + $0x108] sm:$0xff] %vm363, 0.0
      %4073 = vst.msk [vmem:[#allocation3 + $0x110] sm:$0xff] %vm363, 0.0
      %4074 = vst.msk [vmem:[#allocation3 + $0x118] sm:$0xff] %vm363, 0.0
      %4075 = vst.msk [vmem:[#allocation3 + $0x120] sm:$0xff] %vm363, 0.0
      %4076 = vst.msk [vmem:[#allocation3 + $0x128] sm:$0xff] %vm363, 0.0
      %4077 = vst.msk [vmem:[#allocation3 + $0x130] sm:$0xff] %vm363, 0.0
      %4078 = vst.msk [vmem:[#allocation3 + $0x138] sm:$0xff] %vm363, 0.0
      %4079 = vst.msk [vmem:[#allocation3 + $0x140] sm:$0xff] %vm363, 0.0
      %4080 = vst.msk [vmem:[#allocation3 + $0x148] sm:$0xff] %vm363, 0.0
      %4081 = vst.msk [vmem:[#allocation3 + $0x150] sm:$0xff] %vm363, 0.0
      %4082 = vst.msk [vmem:[#allocation3 + $0x158] sm:$0xff] %vm363, 0.0
      %4083 = vst.msk [vmem:[#allocation3 + $0x160] sm:$0xff] %vm363, 0.0
      %4084 = vst.msk [vmem:[#allocation3 + $0x168] sm:$0xff] %vm363, 0.0
      %4085 = vst.msk [vmem:[#allocation3 + $0x170] sm:$0xff] %vm363, 0.0
      %4086 = vst.msk [vmem:[#allocation3 + $0x178] sm:$0xff] %vm363, 0.0
      %4087 = vst.msk [vmem:[#allocation3 + $0x180] sm:$0xff] %vm363, 0.0
      %4088 = vst.msk [vmem:[#allocation3 + $0x188] sm:$0xff] %vm363, 0.0
      %4089 = vst.msk [vmem:[#allocation3 + $0x190] sm:$0xff] %vm363, 0.0
      %4090 = vst.msk [vmem:[#allocation3 + $0x198] sm:$0xff] %vm363, 0.0
      %4091 = vst.msk [vmem:[#allocation3 + $0x1a0] sm:$0xff] %vm363, 0.0
      %4092 = vst.msk [vmem:[#allocation3 + $0x1a8] sm:$0xff] %vm363, 0.0
      %4093 = vst.msk [vmem:[#allocation3 + $0x1b0] sm:$0xff] %vm363, 0.0
      %4094 = vst.msk [vmem:[#allocation3 + $0x1b8] sm:$0xff] %vm363, 0.0
      %4095 = vst.msk [vmem:[#allocation3 + $0x1c0] sm:$0xff] %vm363, 0.0
      %4096 = vst.msk [vmem:[#allocation3 + $0x1c8] sm:$0xff] %vm363, 0.0
      %4097 = vst.msk [vmem:[#allocation3 + $0x1d0] sm:$0xff] %vm363, 0.0
      %4098 = vst.msk [vmem:[#allocation3 + $0x1d8] sm:$0xff] %vm363, 0.0
      %4099 = vst.msk [vmem:[#allocation3 + $0x1e0] sm:$0xff] %vm363, 0.0
      %4100 = vst.msk [vmem:[#allocation3 + $0x1e8] sm:$0xff] %vm363, 0.0
      %4101 = vst.msk [vmem:[#allocation3 + $0x1f0] sm:$0xff] %vm363, 0.0
      %4102 = vst.msk [vmem:[#allocation3 + $0x1f8] sm:$0xff] %vm363, 0.0
      %4103 = vst.msk [vmem:[#allocation3 + $0x200] sm:$0xff] %vm363, 0.0
      %4104 = vst.msk [vmem:[#allocation3 + $0x208] sm:$0xff] %vm363, 0.0
      %4105 = vst.msk [vmem:[#allocation3 + $0x210] sm:$0xff] %vm363, 0.0
      %4106 = vst.msk [vmem:[#allocation3 + $0x218] sm:$0xff] %vm363, 0.0
      %4107 = vst.msk [vmem:[#allocation3 + $0x220] sm:$0xff] %vm363, 0.0
      %4108 = vst.msk [vmem:[#allocation3 + $0x228] sm:$0xff] %vm363, 0.0
      %4109 = vst.msk [vmem:[#allocation3 + $0x230] sm:$0xff] %vm363, 0.0
      %4110 = vst.msk [vmem:[#allocation3 + $0x238] sm:$0xff] %vm363, 0.0
      %s4111 = scalar_lea.vmem [#allocation3], 32
      %4112 = vst.msk [vmem:[%s4111 + $0x8] sm:$0xff] %vm363, %v4007
      %4113 = vst.msk [vmem:[%s4111 + $0x10] sm:$0xff] %vm363, %v4008
      %4114 = vst.msk [vmem:[%s4111 + $0x28] sm:$0xff] %vm363, %v4009
      %4115 = vst.msk [vmem:[%s4111 + $0x30] sm:$0xff] %vm363, %v4010
      %4116 = vst.msk [vmem:[%s4111 + $0x48] sm:$0xff] %vm363, %v4011
      %4117 = vst.msk [vmem:[%s4111 + $0x50] sm:$0xff] %vm363, %v4012
      %4118 = vst.msk [vmem:[%s4111 + $0x68] sm:$0xff] %vm363, %v4013
      %4119 = vst.msk [vmem:[%s4111 + $0x70] sm:$0xff] %vm363, %v4014
      %4120 = vst.msk [vmem:[%s4111 + $0x88] sm:$0xff] %vm363, %v4015
      %4121 = vst.msk [vmem:[%s4111 + $0x90] sm:$0xff] %vm363, %v4016
      %4122 = vst.msk [vmem:[%s4111 + $0xa8] sm:$0xff] %vm363, %v4017
      %4123 = vst.msk [vmem:[%s4111 + $0xb0] sm:$0xff] %vm363, %v4018
      %4124 = vst.msk [vmem:[%s4111 + $0xc8] sm:$0xff] %vm363, %v4019
      %4125 = vst.msk [vmem:[%s4111 + $0xd0] sm:$0xff] %vm363, %v4020
      %4126 = vst.msk [vmem:[%s4111 + $0xe8] sm:$0xff] %vm363, %v4021
      %4127 = vst.msk [vmem:[%s4111 + $0xf0] sm:$0xff] %vm363, %v4022
      %4128 = vst.msk [vmem:[%s4111 + $0x108] sm:$0xff] %vm363, %v4023
      %4129 = vst.msk [vmem:[%s4111 + $0x110] sm:$0xff] %vm363, %v4024
      %4130 = vst.msk [vmem:[%s4111 + $0x128] sm:$0xff] %vm363, %v4025
      %4131 = vst.msk [vmem:[%s4111 + $0x130] sm:$0xff] %vm363, %v4026
      %4132 = vst.msk [vmem:[%s4111 + $0x148] sm:$0xff] %vm363, %v4027
      %4133 = vst.msk [vmem:[%s4111 + $0x150] sm:$0xff] %vm363, %v4028
      %4134 = vst.msk [vmem:[%s4111 + $0x168] sm:$0xff] %vm363, %v4029
      %4135 = vst.msk [vmem:[%s4111 + $0x170] sm:$0xff] %vm363, %v4030
      %4136 = vst.msk [vmem:[%s4111 + $0x188] sm:$0xff] %vm363, %v4031
      %4137 = vst.msk [vmem:[%s4111 + $0x190] sm:$0xff] %vm363, %v4032
      %4138 = vst.msk [vmem:[%s4111 + $0x1a8] sm:$0xff] %vm363, %v4033
      %4139 = vst.msk [vmem:[%s4111 + $0x1b0] sm:$0xff] %vm363, %v4034
      %4140 = vst.msk [vmem:[%s4111 + $0x1c8] sm:$0xff] %vm363, %v4035
      %4141 = vst.msk [vmem:[%s4111 + $0x1d0] sm:$0xff] %vm363, %v4036
      %4142 = vst.msk [vmem:[%s4111 + $0x1e8] sm:$0xff] %vm363, %v4037
      %4143 = vst.msk [vmem:[%s4111 + $0x1f0] sm:$0xff] %vm363, %v4038
      %4144 = vst.msk [vmem:[#allocation4] sm:$0xff] %vm363, 0.0
      %4145 = vst.msk [vmem:[#allocation4 + $0x8] sm:$0xff] %vm363, 0.0
      %4146 = vst.msk [vmem:[#allocation4 + $0x10] sm:$0xff] %vm363, 0.0
      %4147 = vst.msk [vmem:[#allocation4 + $0x18] sm:$0xff] %vm363, 0.0
      %4148 = vst.msk [vmem:[#allocation4 + $0x20] sm:$0xff] %vm363, 0.0
      %4149 = vst.msk [vmem:[#allocation4 + $0x28] sm:$0xff] %vm363, 0.0
      %4150 = vst.msk [vmem:[#allocation4 + $0x30] sm:$0xff] %vm363, 0.0
      %4151 = vst.msk [vmem:[#allocation4 + $0x38] sm:$0xff] %vm363, 0.0
      %4152 = vst.msk [vmem:[#allocation4 + $0x40] sm:$0xff] %vm363, 0.0
      %4153 = vst.msk [vmem:[#allocation4 + $0x48] sm:$0xff] %vm363, 0.0
      %4154 = vst.msk [vmem:[#allocation4 + $0x50] sm:$0xff] %vm363, 0.0
      %4155 = vst.msk [vmem:[#allocation4 + $0x58] sm:$0xff] %vm363, 0.0
      %4156 = vst.msk [vmem:[#allocation4 + $0x60] sm:$0xff] %vm363, 0.0
      %4157 = vst.msk [vmem:[#allocation4 + $0x68] sm:$0xff] %vm363, 0.0
      %4158 = vst.msk [vmem:[#allocation4 + $0x70] sm:$0xff] %vm363, 0.0
      %4159 = vst.msk [vmem:[#allocation4 + $0x78] sm:$0xff] %vm363, 0.0
      %4160 = vst.msk [vmem:[#allocation4 + $0x80] sm:$0xff] %vm363, 0.0
      %4161 = vst.msk [vmem:[#allocation4 + $0x88] sm:$0xff] %vm363, 0.0
      %4162 = vst.msk [vmem:[#allocation4 + $0x90] sm:$0xff] %vm363, 0.0
      %4163 = vst.msk [vmem:[#allocation4 + $0x98] sm:$0xff] %vm363, 0.0
      %4164 = vst.msk [vmem:[#allocation4 + $0xa0] sm:$0xff] %vm363, 0.0
      %4165 = vst.msk [vmem:[#allocation4 + $0xa8] sm:$0xff] %vm363, 0.0
      %4166 = vst.msk [vmem:[#allocation4 + $0xb0] sm:$0xff] %vm363, 0.0
      %4167 = vst.msk [vmem:[#allocation4 + $0xb8] sm:$0xff] %vm363, 0.0
      %4168 = vst.msk [vmem:[#allocation4 + $0xc0] sm:$0xff] %vm363, 0.0
      %4169 = vst.msk [vmem:[#allocation4 + $0xc8] sm:$0xff] %vm363, 0.0
      %4170 = vst.msk [vmem:[#allocation4 + $0xd0] sm:$0xff] %vm363, 0.0
      %4171 = vst.msk [vmem:[#allocation4 + $0xd8] sm:$0xff] %vm363, 0.0
      %4172 = vst.msk [vmem:[#allocation4 + $0xe0] sm:$0xff] %vm363, 0.0
      %4173 = vst.msk [vmem:[#allocation4 + $0xe8] sm:$0xff] %vm363, 0.0
      %4174 = vst.msk [vmem:[#allocation4 + $0xf0] sm:$0xff] %vm363, 0.0
      %4175 = vst.msk [vmem:[#allocation4 + $0xf8] sm:$0xff] %vm363, 0.0
      %v4176 = vld [vmem:[#allocation3] sm:$0xff]
      %v4177 = vld [vmem:[#allocation3 + $0x8] sm:$0xff]
      %v4178 = vld [vmem:[#allocation3 + $0x10] sm:$0xff]
      %v4179 = vld [vmem:[#allocation3 + $0x18] sm:$0xff]
      %v4180 = vld [vmem:[#allocation3 + $0x20] sm:$0xff]
      %v4181 = vld [vmem:[#allocation3 + $0x28] sm:$0xff]
      %v4182 = vld [vmem:[#allocation3 + $0x30] sm:$0xff]
      %v4183 = vld [vmem:[#allocation3 + $0x38] sm:$0xff]
      %v4184 = vld [vmem:[#allocation3 + $0x40] sm:$0xff]
      %v4185 = vld [vmem:[#allocation3 + $0x48] sm:$0xff]
      %v4186 = vld [vmem:[#allocation3 + $0x50] sm:$0xff]
      %v4187 = vld [vmem:[#allocation3 + $0x58] sm:$0xff]
      %v4188 = vld [vmem:[#allocation3 + $0x60] sm:$0xff]
      %v4189 = vld [vmem:[#allocation3 + $0x68] sm:$0xff]
      %v4190 = vld [vmem:[#allocation3 + $0x70] sm:$0xff]
      %v4191 = vld [vmem:[#allocation3 + $0x78] sm:$0xff]
      %v4192 = vld [vmem:[#allocation3 + $0x80] sm:$0xff]
      %v4193 = vld [vmem:[#allocation3 + $0x88] sm:$0xff]
      %v4194 = vld [vmem:[#allocation3 + $0x90] sm:$0xff]
      %v4195 = vld [vmem:[#allocation3 + $0x98] sm:$0xff]
      %v4196 = vld [vmem:[#allocation3 + $0xa0] sm:$0xff]
      %v4197 = vld [vmem:[#allocation3 + $0xa8] sm:$0xff]
      %v4198 = vld [vmem:[#allocation3 + $0xb0] sm:$0xff]
      %v4199 = vld [vmem:[#allocation3 + $0xb8] sm:$0xff]
      %v4200 = vld [vmem:[#allocation3 + $0xc0] sm:$0xff]
      %v4201 = vld [vmem:[#allocation3 + $0xc8] sm:$0xff]
      %v4202 = vld [vmem:[#allocation3 + $0xd0] sm:$0xff]
      %v4203 = vld [vmem:[#allocation3 + $0xd8] sm:$0xff]
      %v4204 = vld [vmem:[#allocation3 + $0xe0] sm:$0xff]
      %v4205 = vld [vmem:[#allocation3 + $0xe8] sm:$0xff]
      %v4206 = vld [vmem:[#allocation3 + $0xf0] sm:$0xff]
      %v4207 = vld [vmem:[#allocation3 + $0xf8] sm:$0xff]
      %v4208 = vld [vmem:[#allocation3 + $0x100] sm:$0xff]
      %v4209 = vld [vmem:[#allocation3 + $0x108] sm:$0xff]
      %v4210 = vld [vmem:[#allocation3 + $0x110] sm:$0xff]
      %v4211 = vld [vmem:[#allocation3 + $0x118] sm:$0xff]
      %v4212 = vld [vmem:[#allocation3 + $0x120] sm:$0xff]
      %v4213 = vld [vmem:[#allocation3 + $0x128] sm:$0xff]
      %v4214 = vld [vmem:[#allocation3 + $0x130] sm:$0xff]
      %v4215 = vld [vmem:[#allocation3 + $0x138] sm:$0xff]
      %v4216 = vld [vmem:[#allocation3 + $0x140] sm:$0xff]
      %v4217 = vld [vmem:[#allocation3 + $0x148] sm:$0xff]
      %v4218 = vld [vmem:[#allocation3 + $0x150] sm:$0xff]
      %v4219 = vld [vmem:[#allocation3 + $0x158] sm:$0xff]
      %v4220 = vld [vmem:[#allocation3 + $0x160] sm:$0xff]
      %v4221 = vld [vmem:[#allocation3 + $0x168] sm:$0xff]
      %v4222 = vld [vmem:[#allocation3 + $0x170] sm:$0xff]
      %v4223 = vld [vmem:[#allocation3 + $0x178] sm:$0xff]
      %v4224 = vld [vmem:[#allocation3 + $0x180] sm:$0xff]
      %v4225 = vld [vmem:[#allocation3 + $0x188] sm:$0xff]
      %v4226 = vld [vmem:[#allocation3 + $0x190] sm:$0xff]
      %v4227 = vld [vmem:[#allocation3 + $0x198] sm:$0xff]
      %v4228 = vld [vmem:[#allocation3 + $0x1a0] sm:$0xff]
      %v4229 = vld [vmem:[#allocation3 + $0x1a8] sm:$0xff]
      %v4230 = vld [vmem:[#allocation3 + $0x1b0] sm:$0xff]
      %v4231 = vld [vmem:[#allocation3 + $0x1b8] sm:$0xff]
      %v4232 = vld [vmem:[#allocation3 + $0x1c0] sm:$0xff]
      %v4233 = vld [vmem:[#allocation3 + $0x1c8] sm:$0xff]
      %v4234 = vld [vmem:[#allocation3 + $0x1d0] sm:$0xff]
      %v4235 = vld [vmem:[#allocation3 + $0x1d8] sm:$0xff]
      %v4236 = vld [vmem:[#allocation3 + $0x1e0] sm:$0xff]
      %v4237 = vld [vmem:[#allocation3 + $0x1e8] sm:$0xff]
      %v4238 = vld [vmem:[#allocation3 + $0x1f0] sm:$0xff]
      %v4239 = vld [vmem:[#allocation3 + $0x1f8] sm:$0xff]
      %v4240 = vld [vmem:[#allocation3 + $0x200] sm:$0xff]
      %v4241 = vld [vmem:[#allocation3 + $0x208] sm:$0xff]
      %v4242 = vld [vmem:[#allocation3 + $0x210] sm:$0xff]
      %v4243 = vld [vmem:[#allocation3 + $0x218] sm:$0xff]
      %v4244 = vld [vmem:[#allocation3 + $0x220] sm:$0xff]
      %v4245 = vld [vmem:[#allocation3 + $0x228] sm:$0xff]
      %v4246 = vld [vmem:[#allocation3 + $0x230] sm:$0xff]
      %v4247 = vld [vmem:[#allocation3 + $0x238] sm:$0xff]
      %v4248 = vld [vmem:[#allocation4] sm:$0xff]
      %v4249 = vld [vmem:[#allocation4 + $0x8] sm:$0xff]
      %v4250 = vld [vmem:[#allocation4 + $0x10] sm:$0xff]
      %v4251 = vld [vmem:[#allocation4 + $0x18] sm:$0xff]
      %v4252 = vld [vmem:[#allocation4 + $0x20] sm:$0xff]
      %v4253 = vld [vmem:[#allocation4 + $0x28] sm:$0xff]
      %v4254 = vld [vmem:[#allocation4 + $0x30] sm:$0xff]
      %v4255 = vld [vmem:[#allocation4 + $0x38] sm:$0xff]
      %v4256 = vld [vmem:[#allocation4 + $0x40] sm:$0xff]
      %v4257 = vld [vmem:[#allocation4 + $0x48] sm:$0xff]
      %v4258 = vld [vmem:[#allocation4 + $0x50] sm:$0xff]
      %v4259 = vld [vmem:[#allocation4 + $0x58] sm:$0xff]
      %v4260 = vld [vmem:[#allocation4 + $0x60] sm:$0xff]
      %v4261 = vld [vmem:[#allocation4 + $0x68] sm:$0xff]
      %v4262 = vld [vmem:[#allocation4 + $0x70] sm:$0xff]
      %v4263 = vld [vmem:[#allocation4 + $0x78] sm:$0xff]
      %v4264 = vld [vmem:[#allocation4 + $0x80] sm:$0xff]
      %v4265 = vld [vmem:[#allocation4 + $0x88] sm:$0xff]
      %v4266 = vld [vmem:[#allocation4 + $0x90] sm:$0xff]
      %v4267 = vld [vmem:[#allocation4 + $0x98] sm:$0xff]
      %v4268 = vld [vmem:[#allocation4 + $0xa0] sm:$0xff]
      %v4269 = vld [vmem:[#allocation4 + $0xa8] sm:$0xff]
      %v4270 = vld [vmem:[#allocation4 + $0xb0] sm:$0xff]
      %v4271 = vld [vmem:[#allocation4 + $0xb8] sm:$0xff]
      %v4272 = vld [vmem:[#allocation4 + $0xc0] sm:$0xff]
      %v4273 = vld [vmem:[#allocation4 + $0xc8] sm:$0xff]
      %v4274 = vld [vmem:[#allocation4 + $0xd0] sm:$0xff]
      %v4275 = vld [vmem:[#allocation4 + $0xd8] sm:$0xff]
      %v4276 = vld [vmem:[#allocation4 + $0xe0] sm:$0xff]
      %v4277 = vld [vmem:[#allocation4 + $0xe8] sm:$0xff]
      %v4278 = vld [vmem:[#allocation4 + $0xf0] sm:$0xff]
      %v4279 = vld [vmem:[#allocation4 + $0xf8] sm:$0xff]
      %v4328 = vrot.slane %v4176, 7
      %v4329 = vrot.slane %v4177, 7
      %v4330 = vsel %vm548, %v4328, %v4329
      %v4331 = vrot.slane %v4178, 7
      %v4332 = vsel %vm548, %v4329, %v4331
      %v4333 = vrot.slane %v4180, 7
      %v4334 = vrot.slane %v4181, 7
      %v4335 = vsel %vm548, %v4333, %v4334
      %v4336 = vrot.slane %v4182, 7
      %v4337 = vsel %vm548, %v4334, %v4336
      %v4338 = vrot.slane %v4184, 7
      %v4339 = vrot.slane %v4185, 7
      %v4340 = vsel %vm548, %v4338, %v4339
      %v4341 = vrot.slane %v4186, 7
      %v4342 = vsel %vm548, %v4339, %v4341
      %v4343 = vrot.slane %v4188, 7
      %v4344 = vrot.slane %v4189, 7
      %v4345 = vsel %vm548, %v4343, %v4344
      %v4346 = vrot.slane %v4190, 7
      %v4347 = vsel %vm548, %v4344, %v4346
      %v4348 = vrot.slane %v4192, 7
      %v4349 = vrot.slane %v4193, 7
      %v4350 = vsel %vm548, %v4348, %v4349
      %v4351 = vrot.slane %v4194, 7
      %v4352 = vsel %vm548, %v4349, %v4351
      %v4353 = vrot.slane %v4196, 7
      %v4354 = vrot.slane %v4197, 7
      %v4355 = vsel %vm548, %v4353, %v4354
      %v4356 = vrot.slane %v4198, 7
      %v4357 = vsel %vm548, %v4354, %v4356
      %v4358 = vrot.slane %v4200, 7
      %v4359 = vrot.slane %v4201, 7
      %v4360 = vsel %vm548, %v4358, %v4359
      %v4361 = vrot.slane %v4202, 7
      %v4362 = vsel %vm548, %v4359, %v4361
      %v4363 = vrot.slane %v4204, 7
      %v4364 = vrot.slane %v4205, 7
      %v4365 = vsel %vm548, %v4363, %v4364
      %v4366 = vrot.slane %v4206, 7
      %v4367 = vsel %vm548, %v4364, %v4366
      %v4368 = vrot.slane %v4208, 7
      %v4369 = vrot.slane %v4209, 7
      %v4370 = vsel %vm548, %v4368, %v4369
      %v4371 = vrot.slane %v4210, 7
      %v4372 = vsel %vm548, %v4369, %v4371
      %v4373 = vrot.slane %v4212, 7
      %v4374 = vrot.slane %v4213, 7
      %v4375 = vsel %vm548, %v4373, %v4374
      %v4376 = vrot.slane %v4214, 7
      %v4377 = vsel %vm548, %v4374, %v4376
      %v4378 = vrot.slane %v4216, 7
      %v4379 = vrot.slane %v4217, 7
      %v4380 = vsel %vm548, %v4378, %v4379
      %v4381 = vrot.slane %v4218, 7
      %v4382 = vsel %vm548, %v4379, %v4381
      %v4383 = vrot.slane %v4220, 7
      %v4384 = vrot.slane %v4221, 7
      %v4385 = vsel %vm548, %v4383, %v4384
      %v4386 = vrot.slane %v4222, 7
      %v4387 = vsel %vm548, %v4384, %v4386
      %v4388 = vrot.slane %v4224, 7
      %v4389 = vrot.slane %v4225, 7
      %v4390 = vsel %vm548, %v4388, %v4389
      %v4391 = vrot.slane %v4226, 7
      %v4392 = vsel %vm548, %v4389, %v4391
      %v4393 = vrot.slane %v4228, 7
      %v4394 = vrot.slane %v4229, 7
      %v4395 = vsel %vm548, %v4393, %v4394
      %v4396 = vrot.slane %v4230, 7
      %v4397 = vsel %vm548, %v4394, %v4396
      %v4398 = vrot.slane %v4232, 7
      %v4399 = vrot.slane %v4233, 7
      %v4400 = vsel %vm548, %v4398, %v4399
      %v4401 = vrot.slane %v4234, 7
      %v4402 = vsel %vm548, %v4399, %v4401
      %v4403 = vrot.slane %v4236, 7
      %v4404 = vrot.slane %v4237, 7
      %v4405 = vsel %vm548, %v4403, %v4404
      %v4406 = vrot.slane %v4238, 7
      %v4407 = vsel %vm548, %v4404, %v4406
      %v4408 = vld [vmem:[%s3] sm:$0xff]
      %v4409 = vsel %vm363, %v4330, 0
      %v4411 = vsel %vm363, %v4332, 0
      %v4413 = vsel %vm363, %v4335, 0
      %v4415 = vsel %vm363, %v4337, 0
      %v4417 = vsel %vm363, %v4340, 0
      %v4419 = vsel %vm363, %v4342, 0
      %v4421 = vsel %vm363, %v4345, 0
      %v4423 = vsel %vm363, %v4347, 0
      %v4425 = vsel %vm363, %v4350, 0
      %v4427 = vsel %vm363, %v4352, 0
      %v4429 = vsel %vm363, %v4355, 0
      %v4431 = vsel %vm363, %v4357, 0
      %v4433 = vsel %vm363, %v4360, 0
      %v4435 = vsel %vm363, %v4362, 0
      %v4437 = vsel %vm363, %v4365, 0
      %v4439 = vsel %vm363, %v4367, 0
      %v4441 = vsel %vm363, %v4370, 0
      %v4443 = vsel %vm363, %v4372, 0
      %v4445 = vsel %vm363, %v4375, 0
      %v4447 = vsel %vm363, %v4377, 0
      %v4449 = vsel %vm363, %v4380, 0
      %v4451 = vsel %vm363, %v4382, 0
      %v4453 = vsel %vm363, %v4385, 0
      %v4455 = vsel %vm363, %v4387, 0
      %v4457 = vsel %vm363, %v4390, 0
      %v4459 = vsel %vm363, %v4392, 0
      %v4461 = vsel %vm363, %v4395, 0
      %v4463 = vsel %vm363, %v4397, 0
      %v4465 = vsel %vm363, %v4400, 0
      %v4467 = vsel %vm363, %v4402, 0
      %v4469 = vsel %vm363, %v4405, 0
      %v4471 = vsel %vm363, %v4407, 0
      %4473 = vmatprep.subr.mxu0 0.0
      %4474 = vmatpush1.msra.mxu0 0.0
      %4475 = vmatprep.subr.mxu0 0.0
      %4476 = vmatpush1.msra.mxu0 0.0
      %4477 = vmatprep.subr.mxu0 0.0
      %4478 = vmatpush1.msra.mxu0 0.0
      %4479 = vmatprep.subr.mxu0 0.0
      %4480 = vmatpush1.msra.mxu0 0.0
      %4481 = vmatprep.subr.mxu0 0.0
      %4482 = vmatpush1.msra.mxu0 0.0
      %4483 = vmatprep.subr.mxu0 0.0
      %4484 = vmatpush1.msra.mxu0 0.0
      %4485 = vmatprep.subr.mxu0 0.0
      %4486 = vmatpush1.msra.mxu0 0.0
      %4487 = vmatprep.subr.mxu0 0.0
      %4488 = vmatpush1.msra.mxu0 0.0
      %4489 = vmatprep.subr.mxu0 0.0
      %4490 = vmatpush1.msra.mxu0 0.0
      %4491 = vmatprep.subr.mxu0 0.0
      %4492 = vmatpush1.msra.mxu0 0.0
      %4493 = vmatprep.subr.mxu0 0.0
      %4494 = vmatpush1.msra.mxu0 0.0
      %4495 = vmatprep.subr.mxu0 0.0
      %4496 = vmatpush1.msra.mxu0 0.0
      %4497 = vmatprep.subr.mxu0 0.0
      %4498 = vmatpush1.msra.mxu0 0.0
      %4499 = vmatprep.subr.mxu0 0.0
      %4500 = vmatpush1.msra.mxu0 0.0
      %4501 = vmatprep.subr.mxu0 0.0
      %4502 = vmatpush1.msra.mxu0 0.0
      %4503 = vmatprep.subr.mxu0 0.0
      %4504 = vmatpush1.msra.mxu0 %v4408
      %4505 = vmatprep.subr.mxu0 0.0
      %4506 = vmatpush2.msra.mxu0 0.0
      %4507 = vmatprep.subr.mxu0 0.0
      %4508 = vmatpush2.msra.mxu0 0.0
      %4509 = vmatprep.subr.mxu0 0.0
      %4510 = vmatpush2.msra.mxu0 0.0
      %4511 = vmatprep.subr.mxu0 0.0
      %4512 = vmatpush2.msra.mxu0 0.0
      %4513 = vmatprep.subr.mxu0 0.0
      %4514 = vmatpush2.msra.mxu0 0.0
      %4515 = vmatprep.subr.mxu0 0.0
      %4516 = vmatpush2.msra.mxu0 0.0
      %4517 = vmatprep.subr.mxu0 0.0
      %4518 = vmatpush2.msra.mxu0 0.0
      %4519 = vmatprep.subr.mxu0 0.0
      %4520 = vmatpush2.msra.mxu0 0.0
      %4521 = vmatprep.subr.mxu0 0.0
      %4522 = vmatpush2.msra.mxu0 0.0
      %4523 = vmatprep.subr.mxu0 0.0
      %4524 = vmatpush2.msra.mxu0 0.0
      %4525 = vmatprep.subr.mxu0 0.0
      %4526 = vmatpush2.msra.mxu0 0.0
      %4527 = vmatprep.subr.mxu0 0.0
      %4528 = vmatpush2.msra.mxu0 0.0
      %4529 = vmatprep.subr.mxu0 0.0
      %4530 = vmatpush2.msra.mxu0 0.0
      %4531 = vmatprep.subr.mxu0 0.0
      %4532 = vmatpush2.msra.mxu0 0.0
      %4533 = vmatprep.subr.mxu0 0.0
      %4534 = vmatpush2.msra.mxu0 0.0
      %4535 = vmatprep.subr.mxu0 0.0
      %4536 = vmatpush2.msra.mxu0 0.0
      %4537 = vmatprep.mubr.f32.mxu0 0.0
      %4538 = vmatmul.mubr.f32.gmra.mxu0 %v4409
      %v4539 = vpop.f32.mrf.mxu0
      %v4540 = vadd.f32 0.0, %v4539
      %v4541 = vpop.f32.mrf.mxu0
      %4542 = vmatprep.mubr.f32.mxu0 0.0
      %4543 = vmatmul.mubr.f32.gmra.mxu0 %v4411
      %v4544 = vpop.f32.mrf.mxu0
      %v4545 = vadd.f32 0.0, %v4544
      %v4546 = vpop.f32.mrf.mxu0
      %4547 = vmatprep.mubr.f32.mxu0 0.0
      %4548 = vmatmul.mubr.f32.gmra.mxu0 %v4413
      %v4549 = vpop.f32.mrf.mxu0
      %v4550 = vadd.f32 0.0, %v4549
      %v4551 = vpop.f32.mrf.mxu0
      %4552 = vmatprep.mubr.f32.mxu0 0.0
      %4553 = vmatmul.mubr.f32.gmra.mxu0 %v4415
      %v4554 = vpop.f32.mrf.mxu0
      %v4555 = vadd.f32 0.0, %v4554
      %v4556 = vpop.f32.mrf.mxu0
      %4557 = vmatprep.mubr.f32.mxu0 0.0
      %4558 = vmatmul.mubr.f32.gmra.mxu0 %v4417
      %v4559 = vpop.f32.mrf.mxu0
      %v4560 = vadd.f32 0.0, %v4559
      %v4561 = vpop.f32.mrf.mxu0
      %4562 = vmatprep.mubr.f32.mxu0 0.0
      %4563 = vmatmul.mubr.f32.gmra.mxu0 %v4419
      %v4564 = vpop.f32.mrf.mxu0
      %v4565 = vadd.f32 0.0, %v4564
      %v4566 = vpop.f32.mrf.mxu0
      %4567 = vmatprep.mubr.f32.mxu0 0.0
      %4568 = vmatmul.mubr.f32.gmra.mxu0 %v4421
      %v4569 = vpop.f32.mrf.mxu0
      %v4570 = vadd.f32 0.0, %v4569
      %v4571 = vpop.f32.mrf.mxu0
      %4572 = vmatprep.mubr.f32.mxu0 0.0
      %4573 = vmatmul.mubr.f32.gmra.mxu0 %v4423
      %v4574 = vpop.f32.mrf.mxu0
      %v4575 = vadd.f32 0.0, %v4574
      %v4576 = vpop.f32.mrf.mxu0
      %4577 = vmatprep.mubr.f32.mxu0 0.0
      %4578 = vmatmul.mubr.f32.gmra.mxu0 %v4425
      %v4579 = vpop.f32.mrf.mxu0
      %v4580 = vadd.f32 0.0, %v4579
      %v4581 = vpop.f32.mrf.mxu0
      %4582 = vmatprep.mubr.f32.mxu0 0.0
      %4583 = vmatmul.mubr.f32.gmra.mxu0 %v4427
      %v4584 = vpop.f32.mrf.mxu0
      %v4585 = vadd.f32 0.0, %v4584
      %v4586 = vpop.f32.mrf.mxu0
      %4587 = vmatprep.mubr.f32.mxu0 0.0
      %4588 = vmatmul.mubr.f32.gmra.mxu0 %v4429
      %v4589 = vpop.f32.mrf.mxu0
      %v4590 = vadd.f32 0.0, %v4589
      %v4591 = vpop.f32.mrf.mxu0
      %4592 = vmatprep.mubr.f32.mxu0 0.0
      %4593 = vmatmul.mubr.f32.gmra.mxu0 %v4431
      %v4594 = vpop.f32.mrf.mxu0
      %v4595 = vadd.f32 0.0, %v4594
      %v4596 = vpop.f32.mrf.mxu0
      %4597 = vmatprep.mubr.f32.mxu0 0.0
      %4598 = vmatmul.mubr.f32.gmra.mxu0 %v4433
      %v4599 = vpop.f32.mrf.mxu0
      %v4600 = vadd.f32 0.0, %v4599
      %v4601 = vpop.f32.mrf.mxu0
      %4602 = vmatprep.mubr.f32.mxu0 0.0
      %4603 = vmatmul.mubr.f32.gmra.mxu0 %v4435
      %v4604 = vpop.f32.mrf.mxu0
      %v4605 = vadd.f32 0.0, %v4604
      %v4606 = vpop.f32.mrf.mxu0
      %4607 = vmatprep.mubr.f32.mxu0 0.0
      %4608 = vmatmul.mubr.f32.gmra.mxu0 %v4437
      %v4609 = vpop.f32.mrf.mxu0
      %v4610 = vadd.f32 0.0, %v4609
      %v4611 = vpop.f32.mrf.mxu0
      %4612 = vmatprep.mubr.f32.mxu0 0.0
      %4613 = vmatmul.mubr.f32.gmra.mxu0 %v4439
      %v4614 = vpop.f32.mrf.mxu0
      %v4615 = vadd.f32 0.0, %v4614
      %v4616 = vpop.f32.mrf.mxu0
      %4617 = vmatprep.mubr.f32.mxu0 0.0
      %4618 = vmatmul.mubr.f32.gmra.mxu0 %v4441
      %v4619 = vpop.f32.mrf.mxu0
      %v4620 = vadd.f32 0.0, %v4619
      %v4621 = vpop.f32.mrf.mxu0
      %4622 = vmatprep.mubr.f32.mxu0 0.0
      %4623 = vmatmul.mubr.f32.gmra.mxu0 %v4443
      %v4624 = vpop.f32.mrf.mxu0
      %v4625 = vadd.f32 0.0, %v4624
      %v4626 = vpop.f32.mrf.mxu0
      %4627 = vmatprep.mubr.f32.mxu0 0.0
      %4628 = vmatmul.mubr.f32.gmra.mxu0 %v4445
      %v4629 = vpop.f32.mrf.mxu0
      %v4630 = vadd.f32 0.0, %v4629
      %v4631 = vpop.f32.mrf.mxu0
      %4632 = vmatprep.mubr.f32.mxu0 0.0
      %4633 = vmatmul.mubr.f32.gmra.mxu0 %v4447
      %v4634 = vpop.f32.mrf.mxu0
      %v4635 = vadd.f32 0.0, %v4634
      %v4636 = vpop.f32.mrf.mxu0
      %4637 = vmatprep.mubr.f32.mxu0 0.0
      %4638 = vmatmul.mubr.f32.gmra.mxu0 %v4449
      %v4639 = vpop.f32.mrf.mxu0
      %v4640 = vadd.f32 0.0, %v4639
      %v4641 = vpop.f32.mrf.mxu0
      %4642 = vmatprep.mubr.f32.mxu0 0.0
      %4643 = vmatmul.mubr.f32.gmra.mxu0 %v4451
      %v4644 = vpop.f32.mrf.mxu0
      %v4645 = vadd.f32 0.0, %v4644
      %v4646 = vpop.f32.mrf.mxu0
      %4647 = vmatprep.mubr.f32.mxu0 0.0
      %4648 = vmatmul.mubr.f32.gmra.mxu0 %v4453
      %v4649 = vpop.f32.mrf.mxu0
      %v4650 = vadd.f32 0.0, %v4649
      %v4651 = vpop.f32.mrf.mxu0
      %4652 = vmatprep.mubr.f32.mxu0 0.0
      %4653 = vmatmul.mubr.f32.gmra.mxu0 %v4455
      %v4654 = vpop.f32.mrf.mxu0
      %v4655 = vadd.f32 0.0, %v4654
      %v4656 = vpop.f32.mrf.mxu0
      %4657 = vmatprep.mubr.f32.mxu0 0.0
      %4658 = vmatmul.mubr.f32.gmra.mxu0 %v4457
      %v4659 = vpop.f32.mrf.mxu0
      %v4660 = vadd.f32 0.0, %v4659
      %v4661 = vpop.f32.mrf.mxu0
      %4662 = vmatprep.mubr.f32.mxu0 0.0
      %4663 = vmatmul.mubr.f32.gmra.mxu0 %v4459
      %v4664 = vpop.f32.mrf.mxu0
      %v4665 = vadd.f32 0.0, %v4664
      %v4666 = vpop.f32.mrf.mxu0
      %4667 = vmatprep.mubr.f32.mxu0 0.0
      %4668 = vmatmul.mubr.f32.gmra.mxu0 %v4461
      %v4669 = vpop.f32.mrf.mxu0
      %v4670 = vadd.f32 0.0, %v4669
      %v4671 = vpop.f32.mrf.mxu0
      %4672 = vmatprep.mubr.f32.mxu0 0.0
      %4673 = vmatmul.mubr.f32.gmra.mxu0 %v4463
      %v4674 = vpop.f32.mrf.mxu0
      %v4675 = vadd.f32 0.0, %v4674
      %v4676 = vpop.f32.mrf.mxu0
      %4677 = vmatprep.mubr.f32.mxu0 0.0
      %4678 = vmatmul.mubr.f32.gmra.mxu0 %v4465
      %v4679 = vpop.f32.mrf.mxu0
      %v4680 = vadd.f32 0.0, %v4679
      %v4681 = vpop.f32.mrf.mxu0
      %4682 = vmatprep.mubr.f32.mxu0 0.0
      %4683 = vmatmul.mubr.f32.gmra.mxu0 %v4467
      %v4684 = vpop.f32.mrf.mxu0
      %v4685 = vadd.f32 0.0, %v4684
      %v4686 = vpop.f32.mrf.mxu0
      %4687 = vmatprep.mubr.f32.mxu0 0.0
      %4688 = vmatmul.mubr.f32.gmra.mxu0 %v4469
      %v4689 = vpop.f32.mrf.mxu0
      %v4690 = vadd.f32 0.0, %v4689
      %v4691 = vpop.f32.mrf.mxu0
      %4692 = vmatprep.mubr.f32.mxu0 0.0
      %4693 = vmatmul.mubr.f32.gmra.mxu0 %v4471
      %v4694 = vpop.f32.mrf.mxu0
      %v4695 = vadd.f32 0.0, %v4694
      %v4696 = vpop.f32.mrf.mxu0
      %4697 = vdwg.mxu0
      %v4698 = vadd.f32 %v4248, %v4540
      %v4699 = vadd.f32 %v4249, %v4545
      %v4700 = vadd.f32 %v4250, %v4550
      %v4701 = vadd.f32 %v4251, %v4555
      %v4702 = vadd.f32 %v4252, %v4560
      %v4703 = vadd.f32 %v4253, %v4565
      %v4704 = vadd.f32 %v4254, %v4570
      %v4705 = vadd.f32 %v4255, %v4575
      %v4706 = vadd.f32 %v4256, %v4580
      %v4707 = vadd.f32 %v4257, %v4585
      %v4708 = vadd.f32 %v4258, %v4590
      %v4709 = vadd.f32 %v4259, %v4595
      %v4710 = vadd.f32 %v4260, %v4600
      %v4711 = vadd.f32 %v4261, %v4605
      %v4712 = vadd.f32 %v4262, %v4610
      %v4713 = vadd.f32 %v4263, %v4615
      %v4714 = vadd.f32 %v4264, %v4620
      %v4715 = vadd.f32 %v4265, %v4625
      %v4716 = vadd.f32 %v4266, %v4630
      %v4717 = vadd.f32 %v4267, %v4635
      %v4718 = vadd.f32 %v4268, %v4640
      %v4719 = vadd.f32 %v4269, %v4645
      %v4720 = vadd.f32 %v4270, %v4650
      %v4721 = vadd.f32 %v4271, %v4655
      %v4722 = vadd.f32 %v4272, %v4660
      %v4723 = vadd.f32 %v4273, %v4665
      %v4724 = vadd.f32 %v4274, %v4670
      %v4725 = vadd.f32 %v4275, %v4675
      %v4726 = vadd.f32 %v4276, %v4680
      %v4727 = vadd.f32 %v4277, %v4685
      %v4728 = vadd.f32 %v4278, %v4690
      %v4729 = vadd.f32 %v4279, %v4695
      %4730 = vst.msk [vmem:[#allocation4] sm:$0xff] %vm363, %v4698
      %4731 = vst.msk [vmem:[#allocation4 + $0x8] sm:$0xff] %vm363, %v4699
      %4732 = vst.msk [vmem:[#allocation4 + $0x10] sm:$0xff] %vm363, %v4700
      %4733 = vst.msk [vmem:[#allocation4 + $0x18] sm:$0xff] %vm363, %v4701
      %4734 = vst.msk [vmem:[#allocation4 + $0x20] sm:$0xff] %vm363, %v4702
      %4735 = vst.msk [vmem:[#allocation4 + $0x28] sm:$0xff] %vm363, %v4703
      %4736 = vst.msk [vmem:[#allocation4 + $0x30] sm:$0xff] %vm363, %v4704
      %4737 = vst.msk [vmem:[#allocation4 + $0x38] sm:$0xff] %vm363, %v4705
      %4738 = vst.msk [vmem:[#allocation4 + $0x40] sm:$0xff] %vm363, %v4706
      %4739 = vst.msk [vmem:[#allocation4 + $0x48] sm:$0xff] %vm363, %v4707
      %4740 = vst.msk [vmem:[#allocation4 + $0x50] sm:$0xff] %vm363, %v4708
      %4741 = vst.msk [vmem:[#allocation4 + $0x58] sm:$0xff] %vm363, %v4709
      %4742 = vst.msk [vmem:[#allocation4 + $0x60] sm:$0xff] %vm363, %v4710
      %4743 = vst.msk [vmem:[#allocation4 + $0x68] sm:$0xff] %vm363, %v4711
      %4744 = vst.msk [vmem:[#allocation4 + $0x70] sm:$0xff] %vm363, %v4712
      %4745 = vst.msk [vmem:[#allocation4 + $0x78] sm:$0xff] %vm363, %v4713
      %4746 = vst.msk [vmem:[#allocation4 + $0x80] sm:$0xff] %vm363, %v4714
      %4747 = vst.msk [vmem:[#allocation4 + $0x88] sm:$0xff] %vm363, %v4715
      %4748 = vst.msk [vmem:[#allocation4 + $0x90] sm:$0xff] %vm363, %v4716
      %4749 = vst.msk [vmem:[#allocation4 + $0x98] sm:$0xff] %vm363, %v4717
      %4750 = vst.msk [vmem:[#allocation4 + $0xa0] sm:$0xff] %vm363, %v4718
      %4751 = vst.msk [vmem:[#allocation4 + $0xa8] sm:$0xff] %vm363, %v4719
      %4752 = vst.msk [vmem:[#allocation4 + $0xb0] sm:$0xff] %vm363, %v4720
      %4753 = vst.msk [vmem:[#allocation4 + $0xb8] sm:$0xff] %vm363, %v4721
      %4754 = vst.msk [vmem:[#allocation4 + $0xc0] sm:$0xff] %vm363, %v4722
      %4755 = vst.msk [vmem:[#allocation4 + $0xc8] sm:$0xff] %vm363, %v4723
      %4756 = vst.msk [vmem:[#allocation4 + $0xd0] sm:$0xff] %vm363, %v4724
      %4757 = vst.msk [vmem:[#allocation4 + $0xd8] sm:$0xff] %vm363, %v4725
      %4758 = vst.msk [vmem:[#allocation4 + $0xe0] sm:$0xff] %vm363, %v4726
      %4759 = vst.msk [vmem:[#allocation4 + $0xe8] sm:$0xff] %vm363, %v4727
      %4760 = vst.msk [vmem:[#allocation4 + $0xf0] sm:$0xff] %vm363, %v4728
      %4761 = vst.msk [vmem:[#allocation4 + $0xf8] sm:$0xff] %vm363, %v4729
      %v4762 = vld [vmem:[#allocation4] sm:$0xff]
      %v4763 = vld [vmem:[#allocation4 + $0x8] sm:$0xff]
      %v4764 = vld [vmem:[#allocation4 + $0x10] sm:$0xff]
      %v4765 = vld [vmem:[#allocation4 + $0x18] sm:$0xff]
      %v4766 = vld [vmem:[#allocation4 + $0x20] sm:$0xff]
      %v4767 = vld [vmem:[#allocation4 + $0x28] sm:$0xff]
      %v4768 = vld [vmem:[#allocation4 + $0x30] sm:$0xff]
      %v4769 = vld [vmem:[#allocation4 + $0x38] sm:$0xff]
      %v4770 = vld [vmem:[#allocation4 + $0x40] sm:$0xff]
      %v4771 = vld [vmem:[#allocation4 + $0x48] sm:$0xff]
      %v4772 = vld [vmem:[#allocation4 + $0x50] sm:$0xff]
      %v4773 = vld [vmem:[#allocation4 + $0x58] sm:$0xff]
      %v4774 = vld [vmem:[#allocation4 + $0x60] sm:$0xff]
      %v4775 = vld [vmem:[#allocation4 + $0x68] sm:$0xff]
      %v4776 = vld [vmem:[#allocation4 + $0x70] sm:$0xff]
      %v4777 = vld [vmem:[#allocation4 + $0x78] sm:$0xff]
      %v4778 = vld [vmem:[#allocation4 + $0x80] sm:$0xff]
      %v4779 = vld [vmem:[#allocation4 + $0x88] sm:$0xff]
      %v4780 = vld [vmem:[#allocation4 + $0x90] sm:$0xff]
      %v4781 = vld [vmem:[#allocation4 + $0x98] sm:$0xff]
      %v4782 = vld [vmem:[#allocation4 + $0xa0] sm:$0xff]
      %v4783 = vld [vmem:[#allocation4 + $0xa8] sm:$0xff]
      %v4784 = vld [vmem:[#allocation4 + $0xb0] sm:$0xff]
      %v4785 = vld [vmem:[#allocation4 + $0xb8] sm:$0xff]
      %v4786 = vld [vmem:[#allocation4 + $0xc0] sm:$0xff]
      %v4787 = vld [vmem:[#allocation4 + $0xc8] sm:$0xff]
      %v4788 = vld [vmem:[#allocation4 + $0xd0] sm:$0xff]
      %v4789 = vld [vmem:[#allocation4 + $0xd8] sm:$0xff]
      %v4790 = vld [vmem:[#allocation4 + $0xe0] sm:$0xff]
      %v4791 = vld [vmem:[#allocation4 + $0xe8] sm:$0xff]
      %v4792 = vld [vmem:[#allocation4 + $0xf0] sm:$0xff]
      %v4793 = vld [vmem:[#allocation4 + $0xf8] sm:$0xff]
      %s4794 = scalar_lea.vmem %s3, 8
      %v4795 = vld [vmem:[%s4794] sm:$0xff]
      %v4796 = vsel %vm363, %v4177, 0
      %v4798 = vsel %vm363, %v4178, 0
      %v4800 = vsel %vm363, %v4181, 0
      %v4802 = vsel %vm363, %v4182, 0
      %v4804 = vsel %vm363, %v4185, 0
      %v4806 = vsel %vm363, %v4186, 0
      %v4808 = vsel %vm363, %v4189, 0
      %v4810 = vsel %vm363, %v4190, 0
      %v4812 = vsel %vm363, %v4193, 0
      %v4814 = vsel %vm363, %v4194, 0
      %v4816 = vsel %vm363, %v4197, 0
      %v4818 = vsel %vm363, %v4198, 0
      %v4820 = vsel %vm363, %v4201, 0
      %v4822 = vsel %vm363, %v4202, 0
      %v4824 = vsel %vm363, %v4205, 0
      %v4826 = vsel %vm363, %v4206, 0
      %v4828 = vsel %vm363, %v4209, 0
      %v4830 = vsel %vm363, %v4210, 0
      %v4832 = vsel %vm363, %v4213, 0
      %v4834 = vsel %vm363, %v4214, 0
      %v4836 = vsel %vm363, %v4217, 0
      %v4838 = vsel %vm363, %v4218, 0
      %v4840 = vsel %vm363, %v4221, 0
      %v4842 = vsel %vm363, %v4222, 0
      %v4844 = vsel %vm363, %v4225, 0
      %v4846 = vsel %vm363, %v4226, 0
      %v4848 = vsel %vm363, %v4229, 0
      %v4850 = vsel %vm363, %v4230, 0
      %v4852 = vsel %vm363, %v4233, 0
      %v4854 = vsel %vm363, %v4234, 0
      %v4856 = vsel %vm363, %v4237, 0
      %v4858 = vsel %vm363, %v4238, 0
      %4860 = vmatprep.subr.mxu0 0.0
      %4861 = vmatpush1.msra.mxu0 0.0
      %4862 = vmatprep.subr.mxu0 0.0
      %4863 = vmatpush1.msra.mxu0 0.0
      %4864 = vmatprep.subr.mxu0 0.0
      %4865 = vmatpush1.msra.mxu0 0.0
      %4866 = vmatprep.subr.mxu0 0.0
      %4867 = vmatpush1.msra.mxu0 0.0
      %4868 = vmatprep.subr.mxu0 0.0
      %4869 = vmatpush1.msra.mxu0 0.0
      %4870 = vmatprep.subr.mxu0 0.0
      %4871 = vmatpush1.msra.mxu0 0.0
      %4872 = vmatprep.subr.mxu0 0.0
      %4873 = vmatpush1.msra.mxu0 0.0
      %4874 = vmatprep.subr.mxu0 0.0
      %4875 = vmatpush1.msra.mxu0 0.0
      %4876 = vmatprep.subr.mxu0 0.0
      %4877 = vmatpush1.msra.mxu0 0.0
      %4878 = vmatprep.subr.mxu0 0.0
      %4879 = vmatpush1.msra.mxu0 0.0
      %4880 = vmatprep.subr.mxu0 0.0
      %4881 = vmatpush1.msra.mxu0 0.0
      %4882 = vmatprep.subr.mxu0 0.0
      %4883 = vmatpush1.msra.mxu0 0.0
      %4884 = vmatprep.subr.mxu0 0.0
      %4885 = vmatpush1.msra.mxu0 0.0
      %4886 = vmatprep.subr.mxu0 0.0
      %4887 = vmatpush1.msra.mxu0 0.0
      %4888 = vmatprep.subr.mxu0 0.0
      %4889 = vmatpush1.msra.mxu0 0.0
      %4890 = vmatprep.subr.mxu0 0.0
      %4891 = vmatpush1.msra.mxu0 %v4795
      %4892 = vmatprep.subr.mxu0 0.0
      %4893 = vmatpush2.msra.mxu0 0.0
      %4894 = vmatprep.subr.mxu0 0.0
      %4895 = vmatpush2.msra.mxu0 0.0
      %4896 = vmatprep.subr.mxu0 0.0
      %4897 = vmatpush2.msra.mxu0 0.0
      %4898 = vmatprep.subr.mxu0 0.0
      %4899 = vmatpush2.msra.mxu0 0.0
      %4900 = vmatprep.subr.mxu0 0.0
      %4901 = vmatpush2.msra.mxu0 0.0
      %4902 = vmatprep.subr.mxu0 0.0
      %4903 = vmatpush2.msra.mxu0 0.0
      %4904 = vmatprep.subr.mxu0 0.0
      %4905 = vmatpush2.msra.mxu0 0.0
      %4906 = vmatprep.subr.mxu0 0.0
      %4907 = vmatpush2.msra.mxu0 0.0
      %4908 = vmatprep.subr.mxu0 0.0
      %4909 = vmatpush2.msra.mxu0 0.0
      %4910 = vmatprep.subr.mxu0 0.0
      %4911 = vmatpush2.msra.mxu0 0.0
      %4912 = vmatprep.subr.mxu0 0.0
      %4913 = vmatpush2.msra.mxu0 0.0
      %4914 = vmatprep.subr.mxu0 0.0
      %4915 = vmatpush2.msra.mxu0 0.0
      %4916 = vmatprep.subr.mxu0 0.0
      %4917 = vmatpush2.msra.mxu0 0.0
      %4918 = vmatprep.subr.mxu0 0.0
      %4919 = vmatpush2.msra.mxu0 0.0
      %4920 = vmatprep.subr.mxu0 0.0
      %4921 = vmatpush2.msra.mxu0 0.0
      %4922 = vmatprep.subr.mxu0 0.0
      %4923 = vmatpush2.msra.mxu0 0.0
      %4924 = vmatprep.mubr.f32.mxu0 0.0
      %4925 = vmatmul.mubr.f32.gmra.mxu0 %v4796
      %v4926 = vpop.f32.mrf.mxu0
      %v4927 = vadd.f32 0.0, %v4926
      %v4928 = vpop.f32.mrf.mxu0
      %4929 = vmatprep.mubr.f32.mxu0 0.0
      %4930 = vmatmul.mubr.f32.gmra.mxu0 %v4798
      %v4931 = vpop.f32.mrf.mxu0
      %v4932 = vadd.f32 0.0, %v4931
      %v4933 = vpop.f32.mrf.mxu0
      %4934 = vmatprep.mubr.f32.mxu0 0.0
      %4935 = vmatmul.mubr.f32.gmra.mxu0 %v4800
      %v4936 = vpop.f32.mrf.mxu0
      %v4937 = vadd.f32 0.0, %v4936
      %v4938 = vpop.f32.mrf.mxu0
      %4939 = vmatprep.mubr.f32.mxu0 0.0
      %4940 = vmatmul.mubr.f32.gmra.mxu0 %v4802
      %v4941 = vpop.f32.mrf.mxu0
      %v4942 = vadd.f32 0.0, %v4941
      %v4943 = vpop.f32.mrf.mxu0
      %4944 = vmatprep.mubr.f32.mxu0 0.0
      %4945 = vmatmul.mubr.f32.gmra.mxu0 %v4804
      %v4946 = vpop.f32.mrf.mxu0
      %v4947 = vadd.f32 0.0, %v4946
      %v4948 = vpop.f32.mrf.mxu0
      %4949 = vmatprep.mubr.f32.mxu0 0.0
      %4950 = vmatmul.mubr.f32.gmra.mxu0 %v4806
      %v4951 = vpop.f32.mrf.mxu0
      %v4952 = vadd.f32 0.0, %v4951
      %v4953 = vpop.f32.mrf.mxu0
      %4954 = vmatprep.mubr.f32.mxu0 0.0
      %4955 = vmatmul.mubr.f32.gmra.mxu0 %v4808
      %v4956 = vpop.f32.mrf.mxu0
      %v4957 = vadd.f32 0.0, %v4956
      %v4958 = vpop.f32.mrf.mxu0
      %4959 = vmatprep.mubr.f32.mxu0 0.0
      %4960 = vmatmul.mubr.f32.gmra.mxu0 %v4810
      %v4961 = vpop.f32.mrf.mxu0
      %v4962 = vadd.f32 0.0, %v4961
      %v4963 = vpop.f32.mrf.mxu0
      %4964 = vmatprep.mubr.f32.mxu0 0.0
      %4965 = vmatmul.mubr.f32.gmra.mxu0 %v4812
      %v4966 = vpop.f32.mrf.mxu0
      %v4967 = vadd.f32 0.0, %v4966
      %v4968 = vpop.f32.mrf.mxu0
      %4969 = vmatprep.mubr.f32.mxu0 0.0
      %4970 = vmatmul.mubr.f32.gmra.mxu0 %v4814
      %v4971 = vpop.f32.mrf.mxu0
      %v4972 = vadd.f32 0.0, %v4971
      %v4973 = vpop.f32.mrf.mxu0
      %4974 = vmatprep.mubr.f32.mxu0 0.0
      %4975 = vmatmul.mubr.f32.gmra.mxu0 %v4816
      %v4976 = vpop.f32.mrf.mxu0
      %v4977 = vadd.f32 0.0, %v4976
      %v4978 = vpop.f32.mrf.mxu0
      %4979 = vmatprep.mubr.f32.mxu0 0.0
      %4980 = vmatmul.mubr.f32.gmra.mxu0 %v4818
      %v4981 = vpop.f32.mrf.mxu0
      %v4982 = vadd.f32 0.0, %v4981
      %v4983 = vpop.f32.mrf.mxu0
      %4984 = vmatprep.mubr.f32.mxu0 0.0
      %4985 = vmatmul.mubr.f32.gmra.mxu0 %v4820
      %v4986 = vpop.f32.mrf.mxu0
      %v4987 = vadd.f32 0.0, %v4986
      %v4988 = vpop.f32.mrf.mxu0
      %4989 = vmatprep.mubr.f32.mxu0 0.0
      %4990 = vmatmul.mubr.f32.gmra.mxu0 %v4822
      %v4991 = vpop.f32.mrf.mxu0
      %v4992 = vadd.f32 0.0, %v4991
      %v4993 = vpop.f32.mrf.mxu0
      %4994 = vmatprep.mubr.f32.mxu0 0.0
      %4995 = vmatmul.mubr.f32.gmra.mxu0 %v4824
      %v4996 = vpop.f32.mrf.mxu0
      %v4997 = vadd.f32 0.0, %v4996
      %v4998 = vpop.f32.mrf.mxu0
      %4999 = vmatprep.mubr.f32.mxu0 0.0
      %5000 = vmatmul.mubr.f32.gmra.mxu0 %v4826
      %v5001 = vpop.f32.mrf.mxu0
      %v5002 = vadd.f32 0.0, %v5001
      %v5003 = vpop.f32.mrf.mxu0
      %5004 = vmatprep.mubr.f32.mxu0 0.0
      %5005 = vmatmul.mubr.f32.gmra.mxu0 %v4828
      %v5006 = vpop.f32.mrf.mxu0
      %v5007 = vadd.f32 0.0, %v5006
      %v5008 = vpop.f32.mrf.mxu0
      %5009 = vmatprep.mubr.f32.mxu0 0.0
      %5010 = vmatmul.mubr.f32.gmra.mxu0 %v4830
      %v5011 = vpop.f32.mrf.mxu0
      %v5012 = vadd.f32 0.0, %v5011
      %v5013 = vpop.f32.mrf.mxu0
      %5014 = vmatprep.mubr.f32.mxu0 0.0
      %5015 = vmatmul.mubr.f32.gmra.mxu0 %v4832
      %v5016 = vpop.f32.mrf.mxu0
      %v5017 = vadd.f32 0.0, %v5016
      %v5018 = vpop.f32.mrf.mxu0
      %5019 = vmatprep.mubr.f32.mxu0 0.0
      %5020 = vmatmul.mubr.f32.gmra.mxu0 %v4834
      %v5021 = vpop.f32.mrf.mxu0
      %v5022 = vadd.f32 0.0, %v5021
      %v5023 = vpop.f32.mrf.mxu0
      %5024 = vmatprep.mubr.f32.mxu0 0.0
      %5025 = vmatmul.mubr.f32.gmra.mxu0 %v4836
      %v5026 = vpop.f32.mrf.mxu0
      %v5027 = vadd.f32 0.0, %v5026
      %v5028 = vpop.f32.mrf.mxu0
      %5029 = vmatprep.mubr.f32.mxu0 0.0
      %5030 = vmatmul.mubr.f32.gmra.mxu0 %v4838
      %v5031 = vpop.f32.mrf.mxu0
      %v5032 = vadd.f32 0.0, %v5031
      %v5033 = vpop.f32.mrf.mxu0
      %5034 = vmatprep.mubr.f32.mxu0 0.0
      %5035 = vmatmul.mubr.f32.gmra.mxu0 %v4840
      %v5036 = vpop.f32.mrf.mxu0
      %v5037 = vadd.f32 0.0, %v5036
      %v5038 = vpop.f32.mrf.mxu0
      %5039 = vmatprep.mubr.f32.mxu0 0.0
      %5040 = vmatmul.mubr.f32.gmra.mxu0 %v4842
      %v5041 = vpop.f32.mrf.mxu0
      %v5042 = vadd.f32 0.0, %v5041
      %v5043 = vpop.f32.mrf.mxu0
      %5044 = vmatprep.mubr.f32.mxu0 0.0
      %5045 = vmatmul.mubr.f32.gmra.mxu0 %v4844
      %v5046 = vpop.f32.mrf.mxu0
      %v5047 = vadd.f32 0.0, %v5046
      %v5048 = vpop.f32.mrf.mxu0
      %5049 = vmatprep.mubr.f32.mxu0 0.0
      %5050 = vmatmul.mubr.f32.gmra.mxu0 %v4846
      %v5051 = vpop.f32.mrf.mxu0
      %v5052 = vadd.f32 0.0, %v5051
      %v5053 = vpop.f32.mrf.mxu0
      %5054 = vmatprep.mubr.f32.mxu0 0.0
      %5055 = vmatmul.mubr.f32.gmra.mxu0 %v4848
      %v5056 = vpop.f32.mrf.mxu0
      %v5057 = vadd.f32 0.0, %v5056
      %v5058 = vpop.f32.mrf.mxu0
      %5059 = vmatprep.mubr.f32.mxu0 0.0
      %5060 = vmatmul.mubr.f32.gmra.mxu0 %v4850
      %v5061 = vpop.f32.mrf.mxu0
      %v5062 = vadd.f32 0.0, %v5061
      %v5063 = vpop.f32.mrf.mxu0
      %5064 = vmatprep.mubr.f32.mxu0 0.0
      %5065 = vmatmul.mubr.f32.gmra.mxu0 %v4852
      %v5066 = vpop.f32.mrf.mxu0
      %v5067 = vadd.f32 0.0, %v5066
      %v5068 = vpop.f32.mrf.mxu0
      %5069 = vmatprep.mubr.f32.mxu0 0.0
      %5070 = vmatmul.mubr.f32.gmra.mxu0 %v4854
      %v5071 = vpop.f32.mrf.mxu0
      %v5072 = vadd.f32 0.0, %v5071
      %v5073 = vpop.f32.mrf.mxu0
      %5074 = vmatprep.mubr.f32.mxu0 0.0
      %5075 = vmatmul.mubr.f32.gmra.mxu0 %v4856
      %v5076 = vpop.f32.mrf.mxu0
      %v5077 = vadd.f32 0.0, %v5076
      %v5078 = vpop.f32.mrf.mxu0
      %5079 = vmatprep.mubr.f32.mxu0 0.0
      %5080 = vmatmul.mubr.f32.gmra.mxu0 %v4858
      %v5081 = vpop.f32.mrf.mxu0
      %v5082 = vadd.f32 0.0, %v5081
      %v5083 = vpop.f32.mrf.mxu0
      %5084 = vdwg.mxu0
      %v5085 = vadd.f32 %v4762, %v4927
      %v5086 = vadd.f32 %v4763, %v4932
      %v5087 = vadd.f32 %v4764, %v4937
      %v5088 = vadd.f32 %v4765, %v4942
      %v5089 = vadd.f32 %v4766, %v4947
      %v5090 = vadd.f32 %v4767, %v4952
      %v5091 = vadd.f32 %v4768, %v4957
      %v5092 = vadd.f32 %v4769, %v4962
      %v5093 = vadd.f32 %v4770, %v4967
      %v5094 = vadd.f32 %v4771, %v4972
      %v5095 = vadd.f32 %v4772, %v4977
      %v5096 = vadd.f32 %v4773, %v4982
      %v5097 = vadd.f32 %v4774, %v4987
      %v5098 = vadd.f32 %v4775, %v4992
      %v5099 = vadd.f32 %v4776, %v4997
      %v5100 = vadd.f32 %v4777, %v5002
      %v5101 = vadd.f32 %v4778, %v5007
      %v5102 = vadd.f32 %v4779, %v5012
      %v5103 = vadd.f32 %v4780, %v5017
      %v5104 = vadd.f32 %v4781, %v5022
      %v5105 = vadd.f32 %v4782, %v5027
      %v5106 = vadd.f32 %v4783, %v5032
      %v5107 = vadd.f32 %v4784, %v5037
      %v5108 = vadd.f32 %v4785, %v5042
      %v5109 = vadd.f32 %v4786, %v5047
      %v5110 = vadd.f32 %v4787, %v5052
      %v5111 = vadd.f32 %v4788, %v5057
      %v5112 = vadd.f32 %v4789, %v5062
      %v5113 = vadd.f32 %v4790, %v5067
      %v5114 = vadd.f32 %v4791, %v5072
      %v5115 = vadd.f32 %v4792, %v5077
      %v5116 = vadd.f32 %v4793, %v5082
      %5117 = vst.msk [vmem:[#allocation4] sm:$0xff] %vm363, %v5085
      %5118 = vst.msk [vmem:[#allocation4 + $0x8] sm:$0xff] %vm363, %v5086
      %5119 = vst.msk [vmem:[#allocation4 + $0x10] sm:$0xff] %vm363, %v5087
      %5120 = vst.msk [vmem:[#allocation4 + $0x18] sm:$0xff] %vm363, %v5088
      %5121 = vst.msk [vmem:[#allocation4 + $0x20] sm:$0xff] %vm363, %v5089
      %5122 = vst.msk [vmem:[#allocation4 + $0x28] sm:$0xff] %vm363, %v5090
      %5123 = vst.msk [vmem:[#allocation4 + $0x30] sm:$0xff] %vm363, %v5091
      %5124 = vst.msk [vmem:[#allocation4 + $0x38] sm:$0xff] %vm363, %v5092
      %5125 = vst.msk [vmem:[#allocation4 + $0x40] sm:$0xff] %vm363, %v5093
      %5126 = vst.msk [vmem:[#allocation4 + $0x48] sm:$0xff] %vm363, %v5094
      %5127 = vst.msk [vmem:[#allocation4 + $0x50] sm:$0xff] %vm363, %v5095
      %5128 = vst.msk [vmem:[#allocation4 + $0x58] sm:$0xff] %vm363, %v5096
      %5129 = vst.msk [vmem:[#allocation4 + $0x60] sm:$0xff] %vm363, %v5097
      %5130 = vst.msk [vmem:[#allocation4 + $0x68] sm:$0xff] %vm363, %v5098
      %5131 = vst.msk [vmem:[#allocation4 + $0x70] sm:$0xff] %vm363, %v5099
      %5132 = vst.msk [vmem:[#allocation4 + $0x78] sm:$0xff] %vm363, %v5100
      %5133 = vst.msk [vmem:[#allocation4 + $0x80] sm:$0xff] %vm363, %v5101
      %5134 = vst.msk [vmem:[#allocation4 + $0x88] sm:$0xff] %vm363, %v5102
      %5135 = vst.msk [vmem:[#allocation4 + $0x90] sm:$0xff] %vm363, %v5103
      %5136 = vst.msk [vmem:[#allocation4 + $0x98] sm:$0xff] %vm363, %v5104
      %5137 = vst.msk [vmem:[#allocation4 + $0xa0] sm:$0xff] %vm363, %v5105
      %5138 = vst.msk [vmem:[#allocation4 + $0xa8] sm:$0xff] %vm363, %v5106
      %5139 = vst.msk [vmem:[#allocation4 + $0xb0] sm:$0xff] %vm363, %v5107
      %5140 = vst.msk [vmem:[#allocation4 + $0xb8] sm:$0xff] %vm363, %v5108
      %5141 = vst.msk [vmem:[#allocation4 + $0xc0] sm:$0xff] %vm363, %v5109
      %5142 = vst.msk [vmem:[#allocation4 + $0xc8] sm:$0xff] %vm363, %v5110
      %5143 = vst.msk [vmem:[#allocation4 + $0xd0] sm:$0xff] %vm363, %v5111
      %5144 = vst.msk [vmem:[#allocation4 + $0xd8] sm:$0xff] %vm363, %v5112
      %5145 = vst.msk [vmem:[#allocation4 + $0xe0] sm:$0xff] %vm363, %v5113
      %5146 = vst.msk [vmem:[#allocation4 + $0xe8] sm:$0xff] %vm363, %v5114
      %5147 = vst.msk [vmem:[#allocation4 + $0xf0] sm:$0xff] %vm363, %v5115
      %5148 = vst.msk [vmem:[#allocation4 + $0xf8] sm:$0xff] %vm363, %v5116
      %v5149 = vld [vmem:[#allocation4] sm:$0xff]
      %v5150 = vld [vmem:[#allocation4 + $0x8] sm:$0xff]
      %v5151 = vld [vmem:[#allocation4 + $0x10] sm:$0xff]
      %v5152 = vld [vmem:[#allocation4 + $0x18] sm:$0xff]
      %v5153 = vld [vmem:[#allocation4 + $0x20] sm:$0xff]
      %v5154 = vld [vmem:[#allocation4 + $0x28] sm:$0xff]
      %v5155 = vld [vmem:[#allocation4 + $0x30] sm:$0xff]
      %v5156 = vld [vmem:[#allocation4 + $0x38] sm:$0xff]
      %v5157 = vld [vmem:[#allocation4 + $0x40] sm:$0xff]
      %v5158 = vld [vmem:[#allocation4 + $0x48] sm:$0xff]
      %v5159 = vld [vmem:[#allocation4 + $0x50] sm:$0xff]
      %v5160 = vld [vmem:[#allocation4 + $0x58] sm:$0xff]
      %v5161 = vld [vmem:[#allocation4 + $0x60] sm:$0xff]
      %v5162 = vld [vmem:[#allocation4 + $0x68] sm:$0xff]
      %v5163 = vld [vmem:[#allocation4 + $0x70] sm:$0xff]
      %v5164 = vld [vmem:[#allocation4 + $0x78] sm:$0xff]
      %v5165 = vld [vmem:[#allocation4 + $0x80] sm:$0xff]
      %v5166 = vld [vmem:[#allocation4 + $0x88] sm:$0xff]
      %v5167 = vld [vmem:[#allocation4 + $0x90] sm:$0xff]
      %v5168 = vld [vmem:[#allocation4 + $0x98] sm:$0xff]
      %v5169 = vld [vmem:[#allocation4 + $0xa0] sm:$0xff]
      %v5170 = vld [vmem:[#allocation4 + $0xa8] sm:$0xff]
      %v5171 = vld [vmem:[#allocation4 + $0xb0] sm:$0xff]
      %v5172 = vld [vmem:[#allocation4 + $0xb8] sm:$0xff]
      %v5173 = vld [vmem:[#allocation4 + $0xc0] sm:$0xff]
      %v5174 = vld [vmem:[#allocation4 + $0xc8] sm:$0xff]
      %v5175 = vld [vmem:[#allocation4 + $0xd0] sm:$0xff]
      %v5176 = vld [vmem:[#allocation4 + $0xd8] sm:$0xff]
      %v5177 = vld [vmem:[#allocation4 + $0xe0] sm:$0xff]
      %v5178 = vld [vmem:[#allocation4 + $0xe8] sm:$0xff]
      %v5179 = vld [vmem:[#allocation4 + $0xf0] sm:$0xff]
      %v5180 = vld [vmem:[#allocation4 + $0xf8] sm:$0xff]
      %v5197 = vrot.slane %v4177, 1
      %v5198 = vrot.slane %v4178, 1
      %v5199 = vsel %vm1425, %v5197, %v5198
      %v5200 = vrot.slane %v4179, 1
      %v5201 = vsel %vm1425, %v5198, %v5200
      %v5202 = vrot.slane %v4181, 1
      %v5203 = vrot.slane %v4182, 1
      %v5204 = vsel %vm1425, %v5202, %v5203
      %v5205 = vrot.slane %v4183, 1
      %v5206 = vsel %vm1425, %v5203, %v5205
      %v5207 = vrot.slane %v4185, 1
      %v5208 = vrot.slane %v4186, 1
      %v5209 = vsel %vm1425, %v5207, %v5208
      %v5210 = vrot.slane %v4187, 1
      %v5211 = vsel %vm1425, %v5208, %v5210
      %v5212 = vrot.slane %v4189, 1
      %v5213 = vrot.slane %v4190, 1
      %v5214 = vsel %vm1425, %v5212, %v5213
      %v5215 = vrot.slane %v4191, 1
      %v5216 = vsel %vm1425, %v5213, %v5215
      %v5217 = vrot.slane %v4193, 1
      %v5218 = vrot.slane %v4194, 1
      %v5219 = vsel %vm1425, %v5217, %v5218
      %v5220 = vrot.slane %v4195, 1
      %v5221 = vsel %vm1425, %v5218, %v5220
      %v5222 = vrot.slane %v4197, 1
      %v5223 = vrot.slane %v4198, 1
      %v5224 = vsel %vm1425, %v5222, %v5223
      %v5225 = vrot.slane %v4199, 1
      %v5226 = vsel %vm1425, %v5223, %v5225
      %v5227 = vrot.slane %v4201, 1
      %v5228 = vrot.slane %v4202, 1
      %v5229 = vsel %vm1425, %v5227, %v5228
      %v5230 = vrot.slane %v4203, 1
      %v5231 = vsel %vm1425, %v5228, %v5230
      %v5232 = vrot.slane %v4205, 1
      %v5233 = vrot.slane %v4206, 1
      %v5234 = vsel %vm1425, %v5232, %v5233
      %v5235 = vrot.slane %v4207, 1
      %v5236 = vsel %vm1425, %v5233, %v5235
      %v5237 = vrot.slane %v4209, 1
      %v5238 = vrot.slane %v4210, 1
      %v5239 = vsel %vm1425, %v5237, %v5238
      %v5240 = vrot.slane %v4211, 1
      %v5241 = vsel %vm1425, %v5238, %v5240
      %v5242 = vrot.slane %v4213, 1
      %v5243 = vrot.slane %v4214, 1
      %v5244 = vsel %vm1425, %v5242, %v5243
      %v5245 = vrot.slane %v4215, 1
      %v5246 = vsel %vm1425, %v5243, %v5245
      %v5247 = vrot.slane %v4217, 1
      %v5248 = vrot.slane %v4218, 1
      %v5249 = vsel %vm1425, %v5247, %v5248
      %v5250 = vrot.slane %v4219, 1
      %v5251 = vsel %vm1425, %v5248, %v5250
      %v5252 = vrot.slane %v4221, 1
      %v5253 = vrot.slane %v4222, 1
      %v5254 = vsel %vm1425, %v5252, %v5253
      %v5255 = vrot.slane %v4223, 1
      %v5256 = vsel %vm1425, %v5253, %v5255
      %v5257 = vrot.slane %v4225, 1
      %v5258 = vrot.slane %v4226, 1
      %v5259 = vsel %vm1425, %v5257, %v5258
      %v5260 = vrot.slane %v4227, 1
      %v5261 = vsel %vm1425, %v5258, %v5260
      %v5262 = vrot.slane %v4229, 1
      %v5263 = vrot.slane %v4230, 1
      %v5264 = vsel %vm1425, %v5262, %v5263
      %v5265 = vrot.slane %v4231, 1
      %v5266 = vsel %vm1425, %v5263, %v5265
      %v5267 = vrot.slane %v4233, 1
      %v5268 = vrot.slane %v4234, 1
      %v5269 = vsel %vm1425, %v5267, %v5268
      %v5270 = vrot.slane %v4235, 1
      %v5271 = vsel %vm1425, %v5268, %v5270
      %v5272 = vrot.slane %v4237, 1
      %v5273 = vrot.slane %v4238, 1
      %v5274 = vsel %vm1425, %v5272, %v5273
      %v5275 = vrot.slane %v4239, 1
      %v5276 = vsel %vm1425, %v5273, %v5275
      %s5277 = scalar_lea.vmem %s3, 16
      %v5278 = vld [vmem:[%s5277] sm:$0xff]
      %v5279 = vsel %vm363, %v5199, 0
      %v5281 = vsel %vm363, %v5201, 0
      %v5283 = vsel %vm363, %v5204, 0
      %v5285 = vsel %vm363, %v5206, 0
      %v5287 = vsel %vm363, %v5209, 0
      %v5289 = vsel %vm363, %v5211, 0
      %v5291 = vsel %vm363, %v5214, 0
      %v5293 = vsel %vm363, %v5216, 0
      %v5295 = vsel %vm363, %v5219, 0
      %v5297 = vsel %vm363, %v5221, 0
      %v5299 = vsel %vm363, %v5224, 0
      %v5301 = vsel %vm363, %v5226, 0
      %v5303 = vsel %vm363, %v5229, 0
      %v5305 = vsel %vm363, %v5231, 0
      %v5307 = vsel %vm363, %v5234, 0
      %v5309 = vsel %vm363, %v5236, 0
      %v5311 = vsel %vm363, %v5239, 0
      %v5313 = vsel %vm363, %v5241, 0
      %v5315 = vsel %vm363, %v5244, 0
      %v5317 = vsel %vm363, %v5246, 0
      %v5319 = vsel %vm363, %v5249, 0
      %v5321 = vsel %vm363, %v5251, 0
      %v5323 = vsel %vm363, %v5254, 0
      %v5325 = vsel %vm363, %v5256, 0
      %v5327 = vsel %vm363, %v5259, 0
      %v5329 = vsel %vm363, %v5261, 0
      %v5331 = vsel %vm363, %v5264, 0
      %v5333 = vsel %vm363, %v5266, 0
      %v5335 = vsel %vm363, %v5269, 0
      %v5337 = vsel %vm363, %v5271, 0
      %v5339 = vsel %vm363, %v5274, 0
      %v5341 = vsel %vm363, %v5276, 0
      %5343 = vmatprep.subr.mxu0 0.0
      %5344 = vmatpush1.msra.mxu0 0.0
      %5345 = vmatprep.subr.mxu0 0.0
      %5346 = vmatpush1.msra.mxu0 0.0
      %5347 = vmatprep.subr.mxu0 0.0
      %5348 = vmatpush1.msra.mxu0 0.0
      %5349 = vmatprep.subr.mxu0 0.0
      %5350 = vmatpush1.msra.mxu0 0.0
      %5351 = vmatprep.subr.mxu0 0.0
      %5352 = vmatpush1.msra.mxu0 0.0
      %5353 = vmatprep.subr.mxu0 0.0
      %5354 = vmatpush1.msra.mxu0 0.0
      %5355 = vmatprep.subr.mxu0 0.0
      %5356 = vmatpush1.msra.mxu0 0.0
      %5357 = vmatprep.subr.mxu0 0.0
      %5358 = vmatpush1.msra.mxu0 0.0
      %5359 = vmatprep.subr.mxu0 0.0
      %5360 = vmatpush1.msra.mxu0 0.0
      %5361 = vmatprep.subr.mxu0 0.0
      %5362 = vmatpush1.msra.mxu0 0.0
      %5363 = vmatprep.subr.mxu0 0.0
      %5364 = vmatpush1.msra.mxu0 0.0
      %5365 = vmatprep.subr.mxu0 0.0
      %5366 = vmatpush1.msra.mxu0 0.0
      %5367 = vmatprep.subr.mxu0 0.0
      %5368 = vmatpush1.msra.mxu0 0.0
      %5369 = vmatprep.subr.mxu0 0.0
      %5370 = vmatpush1.msra.mxu0 0.0
      %5371 = vmatprep.subr.mxu0 0.0
      %5372 = vmatpush1.msra.mxu0 0.0
      %5373 = vmatprep.subr.mxu0 0.0
      %5374 = vmatpush1.msra.mxu0 %v5278
      %5375 = vmatprep.subr.mxu0 0.0
      %5376 = vmatpush2.msra.mxu0 0.0
      %5377 = vmatprep.subr.mxu0 0.0
      %5378 = vmatpush2.msra.mxu0 0.0
      %5379 = vmatprep.subr.mxu0 0.0
      %5380 = vmatpush2.msra.mxu0 0.0
      %5381 = vmatprep.subr.mxu0 0.0
      %5382 = vmatpush2.msra.mxu0 0.0
      %5383 = vmatprep.subr.mxu0 0.0
      %5384 = vmatpush2.msra.mxu0 0.0
      %5385 = vmatprep.subr.mxu0 0.0
      %5386 = vmatpush2.msra.mxu0 0.0
      %5387 = vmatprep.subr.mxu0 0.0
      %5388 = vmatpush2.msra.mxu0 0.0
      %5389 = vmatprep.subr.mxu0 0.0
      %5390 = vmatpush2.msra.mxu0 0.0
      %5391 = vmatprep.subr.mxu0 0.0
      %5392 = vmatpush2.msra.mxu0 0.0
      %5393 = vmatprep.subr.mxu0 0.0
      %5394 = vmatpush2.msra.mxu0 0.0
      %5395 = vmatprep.subr.mxu0 0.0
      %5396 = vmatpush2.msra.mxu0 0.0
      %5397 = vmatprep.subr.mxu0 0.0
      %5398 = vmatpush2.msra.mxu0 0.0
      %5399 = vmatprep.subr.mxu0 0.0
      %5400 = vmatpush2.msra.mxu0 0.0
      %5401 = vmatprep.subr.mxu0 0.0
      %5402 = vmatpush2.msra.mxu0 0.0
      %5403 = vmatprep.subr.mxu0 0.0
      %5404 = vmatpush2.msra.mxu0 0.0
      %5405 = vmatprep.subr.mxu0 0.0
      %5406 = vmatpush2.msra.mxu0 0.0
      %5407 = vmatprep.mubr.f32.mxu0 0.0
      %5408 = vmatmul.mubr.f32.gmra.mxu0 %v5279
      %v5409 = vpop.f32.mrf.mxu0
      %v5410 = vadd.f32 0.0, %v5409
      %v5411 = vpop.f32.mrf.mxu0
      %5412 = vmatprep.mubr.f32.mxu0 0.0
      %5413 = vmatmul.mubr.f32.gmra.mxu0 %v5281
      %v5414 = vpop.f32.mrf.mxu0
      %v5415 = vadd.f32 0.0, %v5414
      %v5416 = vpop.f32.mrf.mxu0
      %5417 = vmatprep.mubr.f32.mxu0 0.0
      %5418 = vmatmul.mubr.f32.gmra.mxu0 %v5283
      %v5419 = vpop.f32.mrf.mxu0
      %v5420 = vadd.f32 0.0, %v5419
      %v5421 = vpop.f32.mrf.mxu0
      %5422 = vmatprep.mubr.f32.mxu0 0.0
      %5423 = vmatmul.mubr.f32.gmra.mxu0 %v5285
      %v5424 = vpop.f32.mrf.mxu0
      %v5425 = vadd.f32 0.0, %v5424
      %v5426 = vpop.f32.mrf.mxu0
      %5427 = vmatprep.mubr.f32.mxu0 0.0
      %5428 = vmatmul.mubr.f32.gmra.mxu0 %v5287
      %v5429 = vpop.f32.mrf.mxu0
      %v5430 = vadd.f32 0.0, %v5429
      %v5431 = vpop.f32.mrf.mxu0
      %5432 = vmatprep.mubr.f32.mxu0 0.0
      %5433 = vmatmul.mubr.f32.gmra.mxu0 %v5289
      %v5434 = vpop.f32.mrf.mxu0
      %v5435 = vadd.f32 0.0, %v5434
      %v5436 = vpop.f32.mrf.mxu0
      %5437 = vmatprep.mubr.f32.mxu0 0.0
      %5438 = vmatmul.mubr.f32.gmra.mxu0 %v5291
      %v5439 = vpop.f32.mrf.mxu0
      %v5440 = vadd.f32 0.0, %v5439
      %v5441 = vpop.f32.mrf.mxu0
      %5442 = vmatprep.mubr.f32.mxu0 0.0
      %5443 = vmatmul.mubr.f32.gmra.mxu0 %v5293
      %v5444 = vpop.f32.mrf.mxu0
      %v5445 = vadd.f32 0.0, %v5444
      %v5446 = vpop.f32.mrf.mxu0
      %5447 = vmatprep.mubr.f32.mxu0 0.0
      %5448 = vmatmul.mubr.f32.gmra.mxu0 %v5295
      %v5449 = vpop.f32.mrf.mxu0
      %v5450 = vadd.f32 0.0, %v5449
      %v5451 = vpop.f32.mrf.mxu0
      %5452 = vmatprep.mubr.f32.mxu0 0.0
      %5453 = vmatmul.mubr.f32.gmra.mxu0 %v5297
      %v5454 = vpop.f32.mrf.mxu0
      %v5455 = vadd.f32 0.0, %v5454
      %v5456 = vpop.f32.mrf.mxu0
      %5457 = vmatprep.mubr.f32.mxu0 0.0
      %5458 = vmatmul.mubr.f32.gmra.mxu0 %v5299
      %v5459 = vpop.f32.mrf.mxu0
      %v5460 = vadd.f32 0.0, %v5459
      %v5461 = vpop.f32.mrf.mxu0
      %5462 = vmatprep.mubr.f32.mxu0 0.0
      %5463 = vmatmul.mubr.f32.gmra.mxu0 %v5301
      %v5464 = vpop.f32.mrf.mxu0
      %v5465 = vadd.f32 0.0, %v5464
      %v5466 = vpop.f32.mrf.mxu0
      %5467 = vmatprep.mubr.f32.mxu0 0.0
      %5468 = vmatmul.mubr.f32.gmra.mxu0 %v5303
      %v5469 = vpop.f32.mrf.mxu0
      %v5470 = vadd.f32 0.0, %v5469
      %v5471 = vpop.f32.mrf.mxu0
      %5472 = vmatprep.mubr.f32.mxu0 0.0
      %5473 = vmatmul.mubr.f32.gmra.mxu0 %v5305
      %v5474 = vpop.f32.mrf.mxu0
      %v5475 = vadd.f32 0.0, %v5474
      %v5476 = vpop.f32.mrf.mxu0
      %5477 = vmatprep.mubr.f32.mxu0 0.0
      %5478 = vmatmul.mubr.f32.gmra.mxu0 %v5307
      %v5479 = vpop.f32.mrf.mxu0
      %v5480 = vadd.f32 0.0, %v5479
      %v5481 = vpop.f32.mrf.mxu0
      %5482 = vmatprep.mubr.f32.mxu0 0.0
      %5483 = vmatmul.mubr.f32.gmra.mxu0 %v5309
      %v5484 = vpop.f32.mrf.mxu0
      %v5485 = vadd.f32 0.0, %v5484
      %v5486 = vpop.f32.mrf.mxu0
      %5487 = vmatprep.mubr.f32.mxu0 0.0
      %5488 = vmatmul.mubr.f32.gmra.mxu0 %v5311
      %v5489 = vpop.f32.mrf.mxu0
      %v5490 = vadd.f32 0.0, %v5489
      %v5491 = vpop.f32.mrf.mxu0
      %5492 = vmatprep.mubr.f32.mxu0 0.0
      %5493 = vmatmul.mubr.f32.gmra.mxu0 %v5313
      %v5494 = vpop.f32.mrf.mxu0
      %v5495 = vadd.f32 0.0, %v5494
      %v5496 = vpop.f32.mrf.mxu0
      %5497 = vmatprep.mubr.f32.mxu0 0.0
      %5498 = vmatmul.mubr.f32.gmra.mxu0 %v5315
      %v5499 = vpop.f32.mrf.mxu0
      %v5500 = vadd.f32 0.0, %v5499
      %v5501 = vpop.f32.mrf.mxu0
      %5502 = vmatprep.mubr.f32.mxu0 0.0
      %5503 = vmatmul.mubr.f32.gmra.mxu0 %v5317
      %v5504 = vpop.f32.mrf.mxu0
      %v5505 = vadd.f32 0.0, %v5504
      %v5506 = vpop.f32.mrf.mxu0
      %5507 = vmatprep.mubr.f32.mxu0 0.0
      %5508 = vmatmul.mubr.f32.gmra.mxu0 %v5319
      %v5509 = vpop.f32.mrf.mxu0
      %v5510 = vadd.f32 0.0, %v5509
      %v5511 = vpop.f32.mrf.mxu0
      %5512 = vmatprep.mubr.f32.mxu0 0.0
      %5513 = vmatmul.mubr.f32.gmra.mxu0 %v5321
      %v5514 = vpop.f32.mrf.mxu0
      %v5515 = vadd.f32 0.0, %v5514
      %v5516 = vpop.f32.mrf.mxu0
      %5517 = vmatprep.mubr.f32.mxu0 0.0
      %5518 = vmatmul.mubr.f32.gmra.mxu0 %v5323
      %v5519 = vpop.f32.mrf.mxu0
      %v5520 = vadd.f32 0.0, %v5519
      %v5521 = vpop.f32.mrf.mxu0
      %5522 = vmatprep.mubr.f32.mxu0 0.0
      %5523 = vmatmul.mubr.f32.gmra.mxu0 %v5325
      %v5524 = vpop.f32.mrf.mxu0
      %v5525 = vadd.f32 0.0, %v5524
      %v5526 = vpop.f32.mrf.mxu0
      %5527 = vmatprep.mubr.f32.mxu0 0.0
      %5528 = vmatmul.mubr.f32.gmra.mxu0 %v5327
      %v5529 = vpop.f32.mrf.mxu0
      %v5530 = vadd.f32 0.0, %v5529
      %v5531 = vpop.f32.mrf.mxu0
      %5532 = vmatprep.mubr.f32.mxu0 0.0
      %5533 = vmatmul.mubr.f32.gmra.mxu0 %v5329
      %v5534 = vpop.f32.mrf.mxu0
      %v5535 = vadd.f32 0.0, %v5534
      %v5536 = vpop.f32.mrf.mxu0
      %5537 = vmatprep.mubr.f32.mxu0 0.0
      %5538 = vmatmul.mubr.f32.gmra.mxu0 %v5331
      %v5539 = vpop.f32.mrf.mxu0
      %v5540 = vadd.f32 0.0, %v5539
      %v5541 = vpop.f32.mrf.mxu0
      %5542 = vmatprep.mubr.f32.mxu0 0.0
      %5543 = vmatmul.mubr.f32.gmra.mxu0 %v5333
      %v5544 = vpop.f32.mrf.mxu0
      %v5545 = vadd.f32 0.0, %v5544
      %v5546 = vpop.f32.mrf.mxu0
      %5547 = vmatprep.mubr.f32.mxu0 0.0
      %5548 = vmatmul.mubr.f32.gmra.mxu0 %v5335
      %v5549 = vpop.f32.mrf.mxu0
      %v5550 = vadd.f32 0.0, %v5549
      %v5551 = vpop.f32.mrf.mxu0
      %5552 = vmatprep.mubr.f32.mxu0 0.0
      %5553 = vmatmul.mubr.f32.gmra.mxu0 %v5337
      %v5554 = vpop.f32.mrf.mxu0
      %v5555 = vadd.f32 0.0, %v5554
      %v5556 = vpop.f32.mrf.mxu0
      %5557 = vmatprep.mubr.f32.mxu0 0.0
      %5558 = vmatmul.mubr.f32.gmra.mxu0 %v5339
      %v5559 = vpop.f32.mrf.mxu0
      %v5560 = vadd.f32 0.0, %v5559
      %v5561 = vpop.f32.mrf.mxu0
      %5562 = vmatprep.mubr.f32.mxu0 0.0
      %5563 = vmatmul.mubr.f32.gmra.mxu0 %v5341
      %v5564 = vpop.f32.mrf.mxu0
      %v5565 = vadd.f32 0.0, %v5564
      %v5566 = vpop.f32.mrf.mxu0
      %5567 = vdwg.mxu0
      %v5568 = vadd.f32 %v5149, %v5410
      %v5569 = vadd.f32 %v5150, %v5415
      %v5570 = vadd.f32 %v5151, %v5420
      %v5571 = vadd.f32 %v5152, %v5425
      %v5572 = vadd.f32 %v5153, %v5430
      %v5573 = vadd.f32 %v5154, %v5435
      %v5574 = vadd.f32 %v5155, %v5440
      %v5575 = vadd.f32 %v5156, %v5445
      %v5576 = vadd.f32 %v5157, %v5450
      %v5577 = vadd.f32 %v5158, %v5455
      %v5578 = vadd.f32 %v5159, %v5460
      %v5579 = vadd.f32 %v5160, %v5465
      %v5580 = vadd.f32 %v5161, %v5470
      %v5581 = vadd.f32 %v5162, %v5475
      %v5582 = vadd.f32 %v5163, %v5480
      %v5583 = vadd.f32 %v5164, %v5485
      %v5584 = vadd.f32 %v5165, %v5490
      %v5585 = vadd.f32 %v5166, %v5495
      %v5586 = vadd.f32 %v5167, %v5500
      %v5587 = vadd.f32 %v5168, %v5505
      %v5588 = vadd.f32 %v5169, %v5510
      %v5589 = vadd.f32 %v5170, %v5515
      %v5590 = vadd.f32 %v5171, %v5520
      %v5591 = vadd.f32 %v5172, %v5525
      %v5592 = vadd.f32 %v5173, %v5530
      %v5593 = vadd.f32 %v5174, %v5535
      %v5594 = vadd.f32 %v5175, %v5540
      %v5595 = vadd.f32 %v5176, %v5545
      %v5596 = vadd.f32 %v5177, %v5550
      %v5597 = vadd.f32 %v5178, %v5555
      %v5598 = vadd.f32 %v5179, %v5560
      %v5599 = vadd.f32 %v5180, %v5565
      %5600 = vst.msk [vmem:[#allocation4] sm:$0xff] %vm363, %v5568
      %5601 = vst.msk [vmem:[#allocation4 + $0x8] sm:$0xff] %vm363, %v5569
      %5602 = vst.msk [vmem:[#allocation4 + $0x10] sm:$0xff] %vm363, %v5570
      %5603 = vst.msk [vmem:[#allocation4 + $0x18] sm:$0xff] %vm363, %v5571
      %5604 = vst.msk [vmem:[#allocation4 + $0x20] sm:$0xff] %vm363, %v5572
      %5605 = vst.msk [vmem:[#allocation4 + $0x28] sm:$0xff] %vm363, %v5573
      %5606 = vst.msk [vmem:[#allocation4 + $0x30] sm:$0xff] %vm363, %v5574
      %5607 = vst.msk [vmem:[#allocation4 + $0x38] sm:$0xff] %vm363, %v5575
      %5608 = vst.msk [vmem:[#allocation4 + $0x40] sm:$0xff] %vm363, %v5576
      %5609 = vst.msk [vmem:[#allocation4 + $0x48] sm:$0xff] %vm363, %v5577
      %5610 = vst.msk [vmem:[#allocation4 + $0x50] sm:$0xff] %vm363, %v5578
      %5611 = vst.msk [vmem:[#allocation4 + $0x58] sm:$0xff] %vm363, %v5579
      %5612 = vst.msk [vmem:[#allocation4 + $0x60] sm:$0xff] %vm363, %v5580
      %5613 = vst.msk [vmem:[#allocation4 + $0x68] sm:$0xff] %vm363, %v5581
      %5614 = vst.msk [vmem:[#allocation4 + $0x70] sm:$0xff] %vm363, %v5582
      %5615 = vst.msk [vmem:[#allocation4 + $0x78] sm:$0xff] %vm363, %v5583
      %5616 = vst.msk [vmem:[#allocation4 + $0x80] sm:$0xff] %vm363, %v5584
      %5617 = vst.msk [vmem:[#allocation4 + $0x88] sm:$0xff] %vm363, %v5585
      %5618 = vst.msk [vmem:[#allocation4 + $0x90] sm:$0xff] %vm363, %v5586
      %5619 = vst.msk [vmem:[#allocation4 + $0x98] sm:$0xff] %vm363, %v5587
      %5620 = vst.msk [vmem:[#allocation4 + $0xa0] sm:$0xff] %vm363, %v5588
      %5621 = vst.msk [vmem:[#allocation4 + $0xa8] sm:$0xff] %vm363, %v5589
      %5622 = vst.msk [vmem:[#allocation4 + $0xb0] sm:$0xff] %vm363, %v5590
      %5623 = vst.msk [vmem:[#allocation4 + $0xb8] sm:$0xff] %vm363, %v5591
      %5624 = vst.msk [vmem:[#allocation4 + $0xc0] sm:$0xff] %vm363, %v5592
      %5625 = vst.msk [vmem:[#allocation4 + $0xc8] sm:$0xff] %vm363, %v5593
      %5626 = vst.msk [vmem:[#allocation4 + $0xd0] sm:$0xff] %vm363, %v5594
      %5627 = vst.msk [vmem:[#allocation4 + $0xd8] sm:$0xff] %vm363, %v5595
      %5628 = vst.msk [vmem:[#allocation4 + $0xe0] sm:$0xff] %vm363, %v5596
      %5629 = vst.msk [vmem:[#allocation4 + $0xe8] sm:$0xff] %vm363, %v5597
      %5630 = vst.msk [vmem:[#allocation4 + $0xf0] sm:$0xff] %vm363, %v5598
      %5631 = vst.msk [vmem:[#allocation4 + $0xf8] sm:$0xff] %vm363, %v5599
      %v5632 = vld [vmem:[#allocation4] sm:$0xff]
      %v5633 = vld [vmem:[#allocation4 + $0x8] sm:$0xff]
      %v5634 = vld [vmem:[#allocation4 + $0x10] sm:$0xff]
      %v5635 = vld [vmem:[#allocation4 + $0x18] sm:$0xff]
      %v5636 = vld [vmem:[#allocation4 + $0x20] sm:$0xff]
      %v5637 = vld [vmem:[#allocation4 + $0x28] sm:$0xff]
      %v5638 = vld [vmem:[#allocation4 + $0x30] sm:$0xff]
      %v5639 = vld [vmem:[#allocation4 + $0x38] sm:$0xff]
      %v5640 = vld [vmem:[#allocation4 + $0x40] sm:$0xff]
      %v5641 = vld [vmem:[#allocation4 + $0x48] sm:$0xff]
      %v5642 = vld [vmem:[#allocation4 + $0x50] sm:$0xff]
      %v5643 = vld [vmem:[#allocation4 + $0x58] sm:$0xff]
      %v5644 = vld [vmem:[#allocation4 + $0x60] sm:$0xff]
      %v5645 = vld [vmem:[#allocation4 + $0x68] sm:$0xff]
      %v5646 = vld [vmem:[#allocation4 + $0x70] sm:$0xff]
      %v5647 = vld [vmem:[#allocation4 + $0x78] sm:$0xff]
      %v5648 = vld [vmem:[#allocation4 + $0x80] sm:$0xff]
      %v5649 = vld [vmem:[#allocation4 + $0x88] sm:$0xff]
      %v5650 = vld [vmem:[#allocation4 + $0x90] sm:$0xff]
      %v5651 = vld [vmem:[#allocation4 + $0x98] sm:$0xff]
      %v5652 = vld [vmem:[#allocation4 + $0xa0] sm:$0xff]
      %v5653 = vld [vmem:[#allocation4 + $0xa8] sm:$0xff]
      %v5654 = vld [vmem:[#allocation4 + $0xb0] sm:$0xff]
      %v5655 = vld [vmem:[#allocation4 + $0xb8] sm:$0xff]
      %v5656 = vld [vmem:[#allocation4 + $0xc0] sm:$0xff]
      %v5657 = vld [vmem:[#allocation4 + $0xc8] sm:$0xff]
      %v5658 = vld [vmem:[#allocation4 + $0xd0] sm:$0xff]
      %v5659 = vld [vmem:[#allocation4 + $0xd8] sm:$0xff]
      %v5660 = vld [vmem:[#allocation4 + $0xe0] sm:$0xff]
      %v5661 = vld [vmem:[#allocation4 + $0xe8] sm:$0xff]
      %v5662 = vld [vmem:[#allocation4 + $0xf0] sm:$0xff]
      %v5663 = vld [vmem:[#allocation4 + $0xf8] sm:$0xff]
      %v5667 = vrot.slane %v4240, 7
      %v5668 = vrot.slane %v4241, 7
      %v5669 = vsel %vm548, %v5667, %v5668
      %v5670 = vrot.slane %v4242, 7
      %v5671 = vsel %vm548, %v5668, %v5670
      %s5672 = scalar_lea.vmem %s3, 24
      %v5673 = vld [vmem:[%s5672] sm:$0xff]
      %v5674 = vsel %vm363, %v5669, 0
      %v5676 = vsel %vm363, %v5671, 0
      %5678 = vmatprep.subr.mxu0 0.0
      %5679 = vmatpush1.msra.mxu0 0.0
      %5680 = vmatprep.subr.mxu0 0.0
      %5681 = vmatpush1.msra.mxu0 0.0
      %5682 = vmatprep.subr.mxu0 0.0
      %5683 = vmatpush1.msra.mxu0 0.0
      %5684 = vmatprep.subr.mxu0 0.0
      %5685 = vmatpush1.msra.mxu0 0.0
      %5686 = vmatprep.subr.mxu0 0.0
      %5687 = vmatpush1.msra.mxu0 0.0
      %5688 = vmatprep.subr.mxu0 0.0
      %5689 = vmatpush1.msra.mxu0 0.0
      %5690 = vmatprep.subr.mxu0 0.0
      %5691 = vmatpush1.msra.mxu0 0.0
      %5692 = vmatprep.subr.mxu0 0.0
      %5693 = vmatpush1.msra.mxu0 0.0
      %5694 = vmatprep.subr.mxu0 0.0
      %5695 = vmatpush1.msra.mxu0 0.0
      %5696 = vmatprep.subr.mxu0 0.0
      %5697 = vmatpush1.msra.mxu0 0.0
      %5698 = vmatprep.subr.mxu0 0.0
      %5699 = vmatpush1.msra.mxu0 0.0
      %5700 = vmatprep.subr.mxu0 0.0
      %5701 = vmatpush1.msra.mxu0 0.0
      %5702 = vmatprep.subr.mxu0 0.0
      %5703 = vmatpush1.msra.mxu0 0.0
      %5704 = vmatprep.subr.mxu0 0.0
      %5705 = vmatpush1.msra.mxu0 0.0
      %5706 = vmatprep.subr.mxu0 0.0
      %5707 = vmatpush1.msra.mxu0 0.0
      %5708 = vmatprep.subr.mxu0 0.0
      %5709 = vmatpush1.msra.mxu0 %v5673
      %5710 = vmatprep.subr.mxu0 0.0
      %5711 = vmatpush2.msra.mxu0 0.0
      %5712 = vmatprep.subr.mxu0 0.0
      %5713 = vmatpush2.msra.mxu0 0.0
      %5714 = vmatprep.subr.mxu0 0.0
      %5715 = vmatpush2.msra.mxu0 0.0
      %5716 = vmatprep.subr.mxu0 0.0
      %5717 = vmatpush2.msra.mxu0 0.0
      %5718 = vmatprep.subr.mxu0 0.0
      %5719 = vmatpush2.msra.mxu0 0.0
      %5720 = vmatprep.subr.mxu0 0.0
      %5721 = vmatpush2.msra.mxu0 0.0
      %5722 = vmatprep.subr.mxu0 0.0
      %5723 = vmatpush2.msra.mxu0 0.0
      %5724 = vmatprep.subr.mxu0 0.0
      %5725 = vmatpush2.msra.mxu0 0.0
      %5726 = vmatprep.subr.mxu0 0.0
      %5727 = vmatpush2.msra.mxu0 0.0
      %5728 = vmatprep.subr.mxu0 0.0
      %5729 = vmatpush2.msra.mxu0 0.0
      %5730 = vmatprep.subr.mxu0 0.0
      %5731 = vmatpush2.msra.mxu0 0.0
      %5732 = vmatprep.subr.mxu0 0.0
      %5733 = vmatpush2.msra.mxu0 0.0
      %5734 = vmatprep.subr.mxu0 0.0
      %5735 = vmatpush2.msra.mxu0 0.0
      %5736 = vmatprep.subr.mxu0 0.0
      %5737 = vmatpush2.msra.mxu0 0.0
      %5738 = vmatprep.subr.mxu0 0.0
      %5739 = vmatpush2.msra.mxu0 0.0
      %5740 = vmatprep.subr.mxu0 0.0
      %5741 = vmatpush2.msra.mxu0 0.0
      %5742 = vmatprep.mubr.f32.mxu0 0.0
      %5743 = vmatmul.mubr.f32.gmra.mxu0 %v4413
      %v5744 = vpop.f32.mrf.mxu0
      %v5745 = vadd.f32 0.0, %v5744
      %v5746 = vpop.f32.mrf.mxu0
      %5747 = vmatprep.mubr.f32.mxu0 0.0
      %5748 = vmatmul.mubr.f32.gmra.mxu0 %v4415
      %v5749 = vpop.f32.mrf.mxu0
      %v5750 = vadd.f32 0.0, %v5749
      %v5751 = vpop.f32.mrf.mxu0
      %5752 = vmatprep.mubr.f32.mxu0 0.0
      %5753 = vmatmul.mubr.f32.gmra.mxu0 %v4417
      %v5754 = vpop.f32.mrf.mxu0
      %v5755 = vadd.f32 0.0, %v5754
      %v5756 = vpop.f32.mrf.mxu0
      %5757 = vmatprep.mubr.f32.mxu0 0.0
      %5758 = vmatmul.mubr.f32.gmra.mxu0 %v4419
      %v5759 = vpop.f32.mrf.mxu0
      %v5760 = vadd.f32 0.0, %v5759
      %v5761 = vpop.f32.mrf.mxu0
      %5762 = vmatprep.mubr.f32.mxu0 0.0
      %5763 = vmatmul.mubr.f32.gmra.mxu0 %v4421
      %v5764 = vpop.f32.mrf.mxu0
      %v5765 = vadd.f32 0.0, %v5764
      %v5766 = vpop.f32.mrf.mxu0
      %5767 = vmatprep.mubr.f32.mxu0 0.0
      %5768 = vmatmul.mubr.f32.gmra.mxu0 %v4423
      %v5769 = vpop.f32.mrf.mxu0
      %v5770 = vadd.f32 0.0, %v5769
      %v5771 = vpop.f32.mrf.mxu0
      %5772 = vmatprep.mubr.f32.mxu0 0.0
      %5773 = vmatmul.mubr.f32.gmra.mxu0 %v4425
      %v5774 = vpop.f32.mrf.mxu0
      %v5775 = vadd.f32 0.0, %v5774
      %v5776 = vpop.f32.mrf.mxu0
      %5777 = vmatprep.mubr.f32.mxu0 0.0
      %5778 = vmatmul.mubr.f32.gmra.mxu0 %v4427
      %v5779 = vpop.f32.mrf.mxu0
      %v5780 = vadd.f32 0.0, %v5779
      %v5781 = vpop.f32.mrf.mxu0
      %5782 = vmatprep.mubr.f32.mxu0 0.0
      %5783 = vmatmul.mubr.f32.gmra.mxu0 %v4429
      %v5784 = vpop.f32.mrf.mxu0
      %v5785 = vadd.f32 0.0, %v5784
      %v5786 = vpop.f32.mrf.mxu0
      %5787 = vmatprep.mubr.f32.mxu0 0.0
      %5788 = vmatmul.mubr.f32.gmra.mxu0 %v4431
      %v5789 = vpop.f32.mrf.mxu0
      %v5790 = vadd.f32 0.0, %v5789
      %v5791 = vpop.f32.mrf.mxu0
      %5792 = vmatprep.mubr.f32.mxu0 0.0
      %5793 = vmatmul.mubr.f32.gmra.mxu0 %v4433
      %v5794 = vpop.f32.mrf.mxu0
      %v5795 = vadd.f32 0.0, %v5794
      %v5796 = vpop.f32.mrf.mxu0
      %5797 = vmatprep.mubr.f32.mxu0 0.0
      %5798 = vmatmul.mubr.f32.gmra.mxu0 %v4435
      %v5799 = vpop.f32.mrf.mxu0
      %v5800 = vadd.f32 0.0, %v5799
      %v5801 = vpop.f32.mrf.mxu0
      %5802 = vmatprep.mubr.f32.mxu0 0.0
      %5803 = vmatmul.mubr.f32.gmra.mxu0 %v4437
      %v5804 = vpop.f32.mrf.mxu0
      %v5805 = vadd.f32 0.0, %v5804
      %v5806 = vpop.f32.mrf.mxu0
      %5807 = vmatprep.mubr.f32.mxu0 0.0
      %5808 = vmatmul.mubr.f32.gmra.mxu0 %v4439
      %v5809 = vpop.f32.mrf.mxu0
      %v5810 = vadd.f32 0.0, %v5809
      %v5811 = vpop.f32.mrf.mxu0
      %5812 = vmatprep.mubr.f32.mxu0 0.0
      %5813 = vmatmul.mubr.f32.gmra.mxu0 %v4441
      %v5814 = vpop.f32.mrf.mxu0
      %v5815 = vadd.f32 0.0, %v5814
      %v5816 = vpop.f32.mrf.mxu0
      %5817 = vmatprep.mubr.f32.mxu0 0.0
      %5818 = vmatmul.mubr.f32.gmra.mxu0 %v4443
      %v5819 = vpop.f32.mrf.mxu0
      %v5820 = vadd.f32 0.0, %v5819
      %v5821 = vpop.f32.mrf.mxu0
      %5822 = vmatprep.mubr.f32.mxu0 0.0
      %5823 = vmatmul.mubr.f32.gmra.mxu0 %v4445
      %v5824 = vpop.f32.mrf.mxu0
      %v5825 = vadd.f32 0.0, %v5824
      %v5826 = vpop.f32.mrf.mxu0
      %5827 = vmatprep.mubr.f32.mxu0 0.0
      %5828 = vmatmul.mubr.f32.gmra.mxu0 %v4447
      %v5829 = vpop.f32.mrf.mxu0
      %v5830 = vadd.f32 0.0, %v5829
      %v5831 = vpop.f32.mrf.mxu0
      %5832 = vmatprep.mubr.f32.mxu0 0.0
      %5833 = vmatmul.mubr.f32.gmra.mxu0 %v4449
      %v5834 = vpop.f32.mrf.mxu0
      %v5835 = vadd.f32 0.0, %v5834
      %v5836 = vpop.f32.mrf.mxu0
      %5837 = vmatprep.mubr.f32.mxu0 0.0
      %5838 = vmatmul.mubr.f32.gmra.mxu0 %v4451
      %v5839 = vpop.f32.mrf.mxu0
      %v5840 = vadd.f32 0.0, %v5839
      %v5841 = vpop.f32.mrf.mxu0
      %5842 = vmatprep.mubr.f32.mxu0 0.0
      %5843 = vmatmul.mubr.f32.gmra.mxu0 %v4453
      %v5844 = vpop.f32.mrf.mxu0
      %v5845 = vadd.f32 0.0, %v5844
      %v5846 = vpop.f32.mrf.mxu0
      %5847 = vmatprep.mubr.f32.mxu0 0.0
      %5848 = vmatmul.mubr.f32.gmra.mxu0 %v4455
      %v5849 = vpop.f32.mrf.mxu0
      %v5850 = vadd.f32 0.0, %v5849
      %v5851 = vpop.f32.mrf.mxu0
      %5852 = vmatprep.mubr.f32.mxu0 0.0
      %5853 = vmatmul.mubr.f32.gmra.mxu0 %v4457
      %v5854 = vpop.f32.mrf.mxu0
      %v5855 = vadd.f32 0.0, %v5854
      %v5856 = vpop.f32.mrf.mxu0
      %5857 = vmatprep.mubr.f32.mxu0 0.0
      %5858 = vmatmul.mubr.f32.gmra.mxu0 %v4459
      %v5859 = vpop.f32.mrf.mxu0
      %v5860 = vadd.f32 0.0, %v5859
      %v5861 = vpop.f32.mrf.mxu0
      %5862 = vmatprep.mubr.f32.mxu0 0.0
      %5863 = vmatmul.mubr.f32.gmra.mxu0 %v4461
      %v5864 = vpop.f32.mrf.mxu0
      %v5865 = vadd.f32 0.0, %v5864
      %v5866 = vpop.f32.mrf.mxu0
      %5867 = vmatprep.mubr.f32.mxu0 0.0
      %5868 = vmatmul.mubr.f32.gmra.mxu0 %v4463
      %v5869 = vpop.f32.mrf.mxu0
      %v5870 = vadd.f32 0.0, %v5869
      %v5871 = vpop.f32.mrf.mxu0
      %5872 = vmatprep.mubr.f32.mxu0 0.0
      %5873 = vmatmul.mubr.f32.gmra.mxu0 %v4465
      %v5874 = vpop.f32.mrf.mxu0
      %v5875 = vadd.f32 0.0, %v5874
      %v5876 = vpop.f32.mrf.mxu0
      %5877 = vmatprep.mubr.f32.mxu0 0.0
      %5878 = vmatmul.mubr.f32.gmra.mxu0 %v4467
      %v5879 = vpop.f32.mrf.mxu0
      %v5880 = vadd.f32 0.0, %v5879
      %v5881 = vpop.f32.mrf.mxu0
      %5882 = vmatprep.mubr.f32.mxu0 0.0
      %5883 = vmatmul.mubr.f32.gmra.mxu0 %v4469
      %v5884 = vpop.f32.mrf.mxu0
      %v5885 = vadd.f32 0.0, %v5884
      %v5886 = vpop.f32.mrf.mxu0
      %5887 = vmatprep.mubr.f32.mxu0 0.0
      %5888 = vmatmul.mubr.f32.gmra.mxu0 %v4471
      %v5889 = vpop.f32.mrf.mxu0
      %v5890 = vadd.f32 0.0, %v5889
      %v5891 = vpop.f32.mrf.mxu0
      %5892 = vmatprep.mubr.f32.mxu0 0.0
      %5893 = vmatmul.mubr.f32.gmra.mxu0 %v5674
      %v5894 = vpop.f32.mrf.mxu0
      %v5895 = vadd.f32 0.0, %v5894
      %v5896 = vpop.f32.mrf.mxu0
      %5897 = vmatprep.mubr.f32.mxu0 0.0
      %5898 = vmatmul.mubr.f32.gmra.mxu0 %v5676
      %v5899 = vpop.f32.mrf.mxu0
      %v5900 = vadd.f32 0.0, %v5899
      %v5901 = vpop.f32.mrf.mxu0
      %5902 = vdwg.mxu0
      %v5903 = vadd.f32 %v5632, %v5745
      %v5904 = vadd.f32 %v5633, %v5750
      %v5905 = vadd.f32 %v5634, %v5755
      %v5906 = vadd.f32 %v5635, %v5760
      %v5907 = vadd.f32 %v5636, %v5765
      %v5908 = vadd.f32 %v5637, %v5770
      %v5909 = vadd.f32 %v5638, %v5775
      %v5910 = vadd.f32 %v5639, %v5780
      %v5911 = vadd.f32 %v5640, %v5785
      %v5912 = vadd.f32 %v5641, %v5790
      %v5913 = vadd.f32 %v5642, %v5795
      %v5914 = vadd.f32 %v5643, %v5800
      %v5915 = vadd.f32 %v5644, %v5805
      %v5916 = vadd.f32 %v5645, %v5810
      %v5917 = vadd.f32 %v5646, %v5815
      %v5918 = vadd.f32 %v5647, %v5820
      %v5919 = vadd.f32 %v5648, %v5825
      %v5920 = vadd.f32 %v5649, %v5830
      %v5921 = vadd.f32 %v5650, %v5835
      %v5922 = vadd.f32 %v5651, %v5840
      %v5923 = vadd.f32 %v5652, %v5845
      %v5924 = vadd.f32 %v5653, %v5850
      %v5925 = vadd.f32 %v5654, %v5855
      %v5926 = vadd.f32 %v5655, %v5860
      %v5927 = vadd.f32 %v5656, %v5865
      %v5928 = vadd.f32 %v5657, %v5870
      %v5929 = vadd.f32 %v5658, %v5875
      %v5930 = vadd.f32 %v5659, %v5880
      %v5931 = vadd.f32 %v5660, %v5885
      %v5932 = vadd.f32 %v5661, %v5890
      %v5933 = vadd.f32 %v5662, %v5895
      %v5934 = vadd.f32 %v5663, %v5900
      %5935 = vst.msk [vmem:[#allocation4] sm:$0xff] %vm363, %v5903
      %5936 = vst.msk [vmem:[#allocation4 + $0x8] sm:$0xff] %vm363, %v5904
      %5937 = vst.msk [vmem:[#allocation4 + $0x10] sm:$0xff] %vm363, %v5905
      %5938 = vst.msk [vmem:[#allocation4 + $0x18] sm:$0xff] %vm363, %v5906
      %5939 = vst.msk [vmem:[#allocation4 + $0x20] sm:$0xff] %vm363, %v5907
      %5940 = vst.msk [vmem:[#allocation4 + $0x28] sm:$0xff] %vm363, %v5908
      %5941 = vst.msk [vmem:[#allocation4 + $0x30] sm:$0xff] %vm363, %v5909
      %5942 = vst.msk [vmem:[#allocation4 + $0x38] sm:$0xff] %vm363, %v5910
      %5943 = vst.msk [vmem:[#allocation4 + $0x40] sm:$0xff] %vm363, %v5911
      %5944 = vst.msk [vmem:[#allocation4 + $0x48] sm:$0xff] %vm363, %v5912
      %5945 = vst.msk [vmem:[#allocation4 + $0x50] sm:$0xff] %vm363, %v5913
      %5946 = vst.msk [vmem:[#allocation4 + $0x58] sm:$0xff] %vm363, %v5914
      %5947 = vst.msk [vmem:[#allocation4 + $0x60] sm:$0xff] %vm363, %v5915
      %5948 = vst.msk [vmem:[#allocation4 + $0x68] sm:$0xff] %vm363, %v5916
      %5949 = vst.msk [vmem:[#allocation4 + $0x70] sm:$0xff] %vm363, %v5917
      %5950 = vst.msk [vmem:[#allocation4 + $0x78] sm:$0xff] %vm363, %v5918
      %5951 = vst.msk [vmem:[#allocation4 + $0x80] sm:$0xff] %vm363, %v5919
      %5952 = vst.msk [vmem:[#allocation4 + $0x88] sm:$0xff] %vm363, %v5920
      %5953 = vst.msk [vmem:[#allocation4 + $0x90] sm:$0xff] %vm363, %v5921
      %5954 = vst.msk [vmem:[#allocation4 + $0x98] sm:$0xff] %vm363, %v5922
      %5955 = vst.msk [vmem:[#allocation4 + $0xa0] sm:$0xff] %vm363, %v5923
      %5956 = vst.msk [vmem:[#allocation4 + $0xa8] sm:$0xff] %vm363, %v5924
      %5957 = vst.msk [vmem:[#allocation4 + $0xb0] sm:$0xff] %vm363, %v5925
      %5958 = vst.msk [vmem:[#allocation4 + $0xb8] sm:$0xff] %vm363, %v5926
      %5959 = vst.msk [vmem:[#allocation4 + $0xc0] sm:$0xff] %vm363, %v5927
      %5960 = vst.msk [vmem:[#allocation4 + $0xc8] sm:$0xff] %vm363, %v5928
      %5961 = vst.msk [vmem:[#allocation4 + $0xd0] sm:$0xff] %vm363, %v5929
      %5962 = vst.msk [vmem:[#allocation4 + $0xd8] sm:$0xff] %vm363, %v5930
      %5963 = vst.msk [vmem:[#allocation4 + $0xe0] sm:$0xff] %vm363, %v5931
      %5964 = vst.msk [vmem:[#allocation4 + $0xe8] sm:$0xff] %vm363, %v5932
      %5965 = vst.msk [vmem:[#allocation4 + $0xf0] sm:$0xff] %vm363, %v5933
      %5966 = vst.msk [vmem:[#allocation4 + $0xf8] sm:$0xff] %vm363, %v5934
      %v5967 = vld [vmem:[#allocation4] sm:$0xff]
      %v5968 = vld [vmem:[#allocation4 + $0x8] sm:$0xff]
      %v5969 = vld [vmem:[#allocation4 + $0x10] sm:$0xff]
      %v5970 = vld [vmem:[#allocation4 + $0x18] sm:$0xff]
      %v5971 = vld [vmem:[#allocation4 + $0x20] sm:$0xff]
      %v5972 = vld [vmem:[#allocation4 + $0x28] sm:$0xff]
      %v5973 = vld [vmem:[#allocation4 + $0x30] sm:$0xff]
      %v5974 = vld [vmem:[#allocation4 + $0x38] sm:$0xff]
      %v5975 = vld [vmem:[#allocation4 + $0x40] sm:$0xff]
      %v5976 = vld [vmem:[#allocation4 + $0x48] sm:$0xff]
      %v5977 = vld [vmem:[#allocation4 + $0x50] sm:$0xff]
      %v5978 = vld [vmem:[#allocation4 + $0x58] sm:$0xff]
      %v5979 = vld [vmem:[#allocation4 + $0x60] sm:$0xff]
      %v5980 = vld [vmem:[#allocation4 + $0x68] sm:$0xff]
      %v5981 = vld [vmem:[#allocation4 + $0x70] sm:$0xff]
      %v5982 = vld [vmem:[#allocation4 + $0x78] sm:$0xff]
      %v5983 = vld [vmem:[#allocation4 + $0x80] sm:$0xff]
      %v5984 = vld [vmem:[#allocation4 + $0x88] sm:$0xff]
      %v5985 = vld [vmem:[#allocation4 + $0x90] sm:$0xff]
      %v5986 = vld [vmem:[#allocation4 + $0x98] sm:$0xff]
      %v5987 = vld [vmem:[#allocation4 + $0xa0] sm:$0xff]
      %v5988 = vld [vmem:[#allocation4 + $0xa8] sm:$0xff]
      %v5989 = vld [vmem:[#allocation4 + $0xb0] sm:$0xff]
      %v5990 = vld [vmem:[#allocation4 + $0xb8] sm:$0xff]
      %v5991 = vld [vmem:[#allocation4 + $0xc0] sm:$0xff]
      %v5992 = vld [vmem:[#allocation4 + $0xc8] sm:$0xff]
      %v5993 = vld [vmem:[#allocation4 + $0xd0] sm:$0xff]
      %v5994 = vld [vmem:[#allocation4 + $0xd8] sm:$0xff]
      %v5995 = vld [vmem:[#allocation4 + $0xe0] sm:$0xff]
      %v5996 = vld [vmem:[#allocation4 + $0xe8] sm:$0xff]
      %v5997 = vld [vmem:[#allocation4 + $0xf0] sm:$0xff]
      %v5998 = vld [vmem:[#allocation4 + $0xf8] sm:$0xff]
      %s5999 = scalar_lea.vmem %s3, 32
      %v6000 = vld [vmem:[%s5999] sm:$0xff]
      %v6001 = vsel %vm363, %v4241, 0
      %v6003 = vsel %vm363, %v4242, 0
      %6005 = vmatprep.subr.mxu0 0.0
      %6006 = vmatpush1.msra.mxu0 0.0
      %6007 = vmatprep.subr.mxu0 0.0
      %6008 = vmatpush1.msra.mxu0 0.0
      %6009 = vmatprep.subr.mxu0 0.0
      %6010 = vmatpush1.msra.mxu0 0.0
      %6011 = vmatprep.subr.mxu0 0.0
      %6012 = vmatpush1.msra.mxu0 0.0
      %6013 = vmatprep.subr.mxu0 0.0
      %6014 = vmatpush1.msra.mxu0 0.0
      %6015 = vmatprep.subr.mxu0 0.0
      %6016 = vmatpush1.msra.mxu0 0.0
      %6017 = vmatprep.subr.mxu0 0.0
      %6018 = vmatpush1.msra.mxu0 0.0
      %6019 = vmatprep.subr.mxu0 0.0
      %6020 = vmatpush1.msra.mxu0 0.0
      %6021 = vmatprep.subr.mxu0 0.0
      %6022 = vmatpush1.msra.mxu0 0.0
      %6023 = vmatprep.subr.mxu0 0.0
      %6024 = vmatpush1.msra.mxu0 0.0
      %6025 = vmatprep.subr.mxu0 0.0
      %6026 = vmatpush1.msra.mxu0 0.0
      %6027 = vmatprep.subr.mxu0 0.0
      %6028 = vmatpush1.msra.mxu0 0.0
      %6029 = vmatprep.subr.mxu0 0.0
      %6030 = vmatpush1.msra.mxu0 0.0
      %6031 = vmatprep.subr.mxu0 0.0
      %6032 = vmatpush1.msra.mxu0 0.0
      %6033 = vmatprep.subr.mxu0 0.0
      %6034 = vmatpush1.msra.mxu0 0.0
      %6035 = vmatprep.subr.mxu0 0.0
      %6036 = vmatpush1.msra.mxu0 %v6000
      %6037 = vmatprep.subr.mxu0 0.0
      %6038 = vmatpush2.msra.mxu0 0.0
      %6039 = vmatprep.subr.mxu0 0.0
      %6040 = vmatpush2.msra.mxu0 0.0
      %6041 = vmatprep.subr.mxu0 0.0
      %6042 = vmatpush2.msra.mxu0 0.0
      %6043 = vmatprep.subr.mxu0 0.0
      %6044 = vmatpush2.msra.mxu0 0.0
      %6045 = vmatprep.subr.mxu0 0.0
      %6046 = vmatpush2.msra.mxu0 0.0
      %6047 = vmatprep.subr.mxu0 0.0
      %6048 = vmatpush2.msra.mxu0 0.0
      %6049 = vmatprep.subr.mxu0 0.0
      %6050 = vmatpush2.msra.mxu0 0.0
      %6051 = vmatprep.subr.mxu0 0.0
      %6052 = vmatpush2.msra.mxu0 0.0
      %6053 = vmatprep.subr.mxu0 0.0
      %6054 = vmatpush2.msra.mxu0 0.0
      %6055 = vmatprep.subr.mxu0 0.0
      %6056 = vmatpush2.msra.mxu0 0.0
      %6057 = vmatprep.subr.mxu0 0.0
      %6058 = vmatpush2.msra.mxu0 0.0
      %6059 = vmatprep.subr.mxu0 0.0
      %6060 = vmatpush2.msra.mxu0 0.0
      %6061 = vmatprep.subr.mxu0 0.0
      %6062 = vmatpush2.msra.mxu0 0.0
      %6063 = vmatprep.subr.mxu0 0.0
      %6064 = vmatpush2.msra.mxu0 0.0
      %6065 = vmatprep.subr.mxu0 0.0
      %6066 = vmatpush2.msra.mxu0 0.0
      %6067 = vmatprep.subr.mxu0 0.0
      %6068 = vmatpush2.msra.mxu0 0.0
      %6069 = vmatprep.mubr.f32.mxu0 0.0
      %6070 = vmatmul.mubr.f32.gmra.mxu0 %v4800
      %v6071 = vpop.f32.mrf.mxu0
      %v6072 = vadd.f32 0.0, %v6071
      %v6073 = vpop.f32.mrf.mxu0
      %6074 = vmatprep.mubr.f32.mxu0 0.0
      %6075 = vmatmul.mubr.f32.gmra.mxu0 %v4802
      %v6076 = vpop.f32.mrf.mxu0
      %v6077 = vadd.f32 0.0, %v6076
      %v6078 = vpop.f32.mrf.mxu0
      %6079 = vmatprep.mubr.f32.mxu0 0.0
      %6080 = vmatmul.mubr.f32.gmra.mxu0 %v4804
      %v6081 = vpop.f32.mrf.mxu0
      %v6082 = vadd.f32 0.0, %v6081
      %v6083 = vpop.f32.mrf.mxu0
      %6084 = vmatprep.mubr.f32.mxu0 0.0
      %6085 = vmatmul.mubr.f32.gmra.mxu0 %v4806
      %v6086 = vpop.f32.mrf.mxu0
      %v6087 = vadd.f32 0.0, %v6086
      %v6088 = vpop.f32.mrf.mxu0
      %6089 = vmatprep.mubr.f32.mxu0 0.0
      %6090 = vmatmul.mubr.f32.gmra.mxu0 %v4808
      %v6091 = vpop.f32.mrf.mxu0
      %v6092 = vadd.f32 0.0, %v6091
      %v6093 = vpop.f32.mrf.mxu0
      %6094 = vmatprep.mubr.f32.mxu0 0.0
      %6095 = vmatmul.mubr.f32.gmra.mxu0 %v4810
      %v6096 = vpop.f32.mrf.mxu0
      %v6097 = vadd.f32 0.0, %v6096
      %v6098 = vpop.f32.mrf.mxu0
      %6099 = vmatprep.mubr.f32.mxu0 0.0
      %6100 = vmatmul.mubr.f32.gmra.mxu0 %v4812
      %v6101 = vpop.f32.mrf.mxu0
      %v6102 = vadd.f32 0.0, %v6101
      %v6103 = vpop.f32.mrf.mxu0
      %6104 = vmatprep.mubr.f32.mxu0 0.0
      %6105 = vmatmul.mubr.f32.gmra.mxu0 %v4814
      %v6106 = vpop.f32.mrf.mxu0
      %v6107 = vadd.f32 0.0, %v6106
      %v6108 = vpop.f32.mrf.mxu0
      %6109 = vmatprep.mubr.f32.mxu0 0.0
      %6110 = vmatmul.mubr.f32.gmra.mxu0 %v4816
      %v6111 = vpop.f32.mrf.mxu0
      %v6112 = vadd.f32 0.0, %v6111
      %v6113 = vpop.f32.mrf.mxu0
      %6114 = vmatprep.mubr.f32.mxu0 0.0
      %6115 = vmatmul.mubr.f32.gmra.mxu0 %v4818
      %v6116 = vpop.f32.mrf.mxu0
      %v6117 = vadd.f32 0.0, %v6116
      %v6118 = vpop.f32.mrf.mxu0
      %6119 = vmatprep.mubr.f32.mxu0 0.0
      %6120 = vmatmul.mubr.f32.gmra.mxu0 %v4820
      %v6121 = vpop.f32.mrf.mxu0
      %v6122 = vadd.f32 0.0, %v6121
      %v6123 = vpop.f32.mrf.mxu0
      %6124 = vmatprep.mubr.f32.mxu0 0.0
      %6125 = vmatmul.mubr.f32.gmra.mxu0 %v4822
      %v6126 = vpop.f32.mrf.mxu0
      %v6127 = vadd.f32 0.0, %v6126
      %v6128 = vpop.f32.mrf.mxu0
      %6129 = vmatprep.mubr.f32.mxu0 0.0
      %6130 = vmatmul.mubr.f32.gmra.mxu0 %v4824
      %v6131 = vpop.f32.mrf.mxu0
      %v6132 = vadd.f32 0.0, %v6131
      %v6133 = vpop.f32.mrf.mxu0
      %6134 = vmatprep.mubr.f32.mxu0 0.0
      %6135 = vmatmul.mubr.f32.gmra.mxu0 %v4826
      %v6136 = vpop.f32.mrf.mxu0
      %v6137 = vadd.f32 0.0, %v6136
      %v6138 = vpop.f32.mrf.mxu0
      %6139 = vmatprep.mubr.f32.mxu0 0.0
      %6140 = vmatmul.mubr.f32.gmra.mxu0 %v4828
      %v6141 = vpop.f32.mrf.mxu0
      %v6142 = vadd.f32 0.0, %v6141
      %v6143 = vpop.f32.mrf.mxu0
      %6144 = vmatprep.mubr.f32.mxu0 0.0
      %6145 = vmatmul.mubr.f32.gmra.mxu0 %v4830
      %v6146 = vpop.f32.mrf.mxu0
      %v6147 = vadd.f32 0.0, %v6146
      %v6148 = vpop.f32.mrf.mxu0
      %6149 = vmatprep.mubr.f32.mxu0 0.0
      %6150 = vmatmul.mubr.f32.gmra.mxu0 %v4832
      %v6151 = vpop.f32.mrf.mxu0
      %v6152 = vadd.f32 0.0, %v6151
      %v6153 = vpop.f32.mrf.mxu0
      %6154 = vmatprep.mubr.f32.mxu0 0.0
      %6155 = vmatmul.mubr.f32.gmra.mxu0 %v4834
      %v6156 = vpop.f32.mrf.mxu0
      %v6157 = vadd.f32 0.0, %v6156
      %v6158 = vpop.f32.mrf.mxu0
      %6159 = vmatprep.mubr.f32.mxu0 0.0
      %6160 = vmatmul.mubr.f32.gmra.mxu0 %v4836
      %v6161 = vpop.f32.mrf.mxu0
      %v6162 = vadd.f32 0.0, %v6161
      %v6163 = vpop.f32.mrf.mxu0
      %6164 = vmatprep.mubr.f32.mxu0 0.0
      %6165 = vmatmul.mubr.f32.gmra.mxu0 %v4838
      %v6166 = vpop.f32.mrf.mxu0
      %v6167 = vadd.f32 0.0, %v6166
      %v6168 = vpop.f32.mrf.mxu0
      %6169 = vmatprep.mubr.f32.mxu0 0.0
      %6170 = vmatmul.mubr.f32.gmra.mxu0 %v4840
      %v6171 = vpop.f32.mrf.mxu0
      %v6172 = vadd.f32 0.0, %v6171
      %v6173 = vpop.f32.mrf.mxu0
      %6174 = vmatprep.mubr.f32.mxu0 0.0
      %6175 = vmatmul.mubr.f32.gmra.mxu0 %v4842
      %v6176 = vpop.f32.mrf.mxu0
      %v6177 = vadd.f32 0.0, %v6176
      %v6178 = vpop.f32.mrf.mxu0
      %6179 = vmatprep.mubr.f32.mxu0 0.0
      %6180 = vmatmul.mubr.f32.gmra.mxu0 %v4844
      %v6181 = vpop.f32.mrf.mxu0
      %v6182 = vadd.f32 0.0, %v6181
      %v6183 = vpop.f32.mrf.mxu0
      %6184 = vmatprep.mubr.f32.mxu0 0.0
      %6185 = vmatmul.mubr.f32.gmra.mxu0 %v4846
      %v6186 = vpop.f32.mrf.mxu0
      %v6187 = vadd.f32 0.0, %v6186
      %v6188 = vpop.f32.mrf.mxu0
      %6189 = vmatprep.mubr.f32.mxu0 0.0
      %6190 = vmatmul.mubr.f32.gmra.mxu0 %v4848
      %v6191 = vpop.f32.mrf.mxu0
      %v6192 = vadd.f32 0.0, %v6191
      %v6193 = vpop.f32.mrf.mxu0
      %6194 = vmatprep.mubr.f32.mxu0 0.0
      %6195 = vmatmul.mubr.f32.gmra.mxu0 %v4850
      %v6196 = vpop.f32.mrf.mxu0
      %v6197 = vadd.f32 0.0, %v6196
      %v6198 = vpop.f32.mrf.mxu0
      %6199 = vmatprep.mubr.f32.mxu0 0.0
      %6200 = vmatmul.mubr.f32.gmra.mxu0 %v4852
      %v6201 = vpop.f32.mrf.mxu0
      %v6202 = vadd.f32 0.0, %v6201
      %v6203 = vpop.f32.mrf.mxu0
      %6204 = vmatprep.mubr.f32.mxu0 0.0
      %6205 = vmatmul.mubr.f32.gmra.mxu0 %v4854
      %v6206 = vpop.f32.mrf.mxu0
      %v6207 = vadd.f32 0.0, %v6206
      %v6208 = vpop.f32.mrf.mxu0
      %6209 = vmatprep.mubr.f32.mxu0 0.0
      %6210 = vmatmul.mubr.f32.gmra.mxu0 %v4856
      %v6211 = vpop.f32.mrf.mxu0
      %v6212 = vadd.f32 0.0, %v6211
      %v6213 = vpop.f32.mrf.mxu0
      %6214 = vmatprep.mubr.f32.mxu0 0.0
      %6215 = vmatmul.mubr.f32.gmra.mxu0 %v4858
      %v6216 = vpop.f32.mrf.mxu0
      %v6217 = vadd.f32 0.0, %v6216
      %v6218 = vpop.f32.mrf.mxu0
      %6219 = vmatprep.mubr.f32.mxu0 0.0
      %6220 = vmatmul.mubr.f32.gmra.mxu0 %v6001
      %v6221 = vpop.f32.mrf.mxu0
      %v6222 = vadd.f32 0.0, %v6221
      %v6223 = vpop.f32.mrf.mxu0
      %6224 = vmatprep.mubr.f32.mxu0 0.0
      %6225 = vmatmul.mubr.f32.gmra.mxu0 %v6003
      %v6226 = vpop.f32.mrf.mxu0
      %v6227 = vadd.f32 0.0, %v6226
      %v6228 = vpop.f32.mrf.mxu0
      %6229 = vdwg.mxu0
      %v6230 = vadd.f32 %v5967, %v6072
      %v6231 = vadd.f32 %v5968, %v6077
      %v6232 = vadd.f32 %v5969, %v6082
      %v6233 = vadd.f32 %v5970, %v6087
      %v6234 = vadd.f32 %v5971, %v6092
      %v6235 = vadd.f32 %v5972, %v6097
      %v6236 = vadd.f32 %v5973, %v6102
      %v6237 = vadd.f32 %v5974, %v6107
      %v6238 = vadd.f32 %v5975, %v6112
      %v6239 = vadd.f32 %v5976, %v6117
      %v6240 = vadd.f32 %v5977, %v6122
      %v6241 = vadd.f32 %v5978, %v6127
      %v6242 = vadd.f32 %v5979, %v6132
      %v6243 = vadd.f32 %v5980, %v6137
      %v6244 = vadd.f32 %v5981, %v6142
      %v6245 = vadd.f32 %v5982, %v6147
      %v6246 = vadd.f32 %v5983, %v6152
      %v6247 = vadd.f32 %v5984, %v6157
      %v6248 = vadd.f32 %v5985, %v6162
      %v6249 = vadd.f32 %v5986, %v6167
      %v6250 = vadd.f32 %v5987, %v6172
      %v6251 = vadd.f32 %v5988, %v6177
      %v6252 = vadd.f32 %v5989, %v6182
      %v6253 = vadd.f32 %v5990, %v6187
      %v6254 = vadd.f32 %v5991, %v6192
      %v6255 = vadd.f32 %v5992, %v6197
      %v6256 = vadd.f32 %v5993, %v6202
      %v6257 = vadd.f32 %v5994, %v6207
      %v6258 = vadd.f32 %v5995, %v6212
      %v6259 = vadd.f32 %v5996, %v6217
      %v6260 = vadd.f32 %v5997, %v6222
      %v6261 = vadd.f32 %v5998, %v6227
      %6262 = vst.msk [vmem:[#allocation4] sm:$0xff] %vm363, %v6230
      %6263 = vst.msk [vmem:[#allocation4 + $0x8] sm:$0xff] %vm363, %v6231
      %6264 = vst.msk [vmem:[#allocation4 + $0x10] sm:$0xff] %vm363, %v6232
      %6265 = vst.msk [vmem:[#allocation4 + $0x18] sm:$0xff] %vm363, %v6233
      %6266 = vst.msk [vmem:[#allocation4 + $0x20] sm:$0xff] %vm363, %v6234
      %6267 = vst.msk [vmem:[#allocation4 + $0x28] sm:$0xff] %vm363, %v6235
      %6268 = vst.msk [vmem:[#allocation4 + $0x30] sm:$0xff] %vm363, %v6236
      %6269 = vst.msk [vmem:[#allocation4 + $0x38] sm:$0xff] %vm363, %v6237
      %6270 = vst.msk [vmem:[#allocation4 + $0x40] sm:$0xff] %vm363, %v6238
      %6271 = vst.msk [vmem:[#allocation4 + $0x48] sm:$0xff] %vm363, %v6239
      %6272 = vst.msk [vmem:[#allocation4 + $0x50] sm:$0xff] %vm363, %v6240
      %6273 = vst.msk [vmem:[#allocation4 + $0x58] sm:$0xff] %vm363, %v6241
      %6274 = vst.msk [vmem:[#allocation4 + $0x60] sm:$0xff] %vm363, %v6242
      %6275 = vst.msk [vmem:[#allocation4 + $0x68] sm:$0xff] %vm363, %v6243
      %6276 = vst.msk [vmem:[#allocation4 + $0x70] sm:$0xff] %vm363, %v6244
      %6277 = vst.msk [vmem:[#allocation4 + $0x78] sm:$0xff] %vm363, %v6245
      %6278 = vst.msk [vmem:[#allocation4 + $0x80] sm:$0xff] %vm363, %v6246
      %6279 = vst.msk [vmem:[#allocation4 + $0x88] sm:$0xff] %vm363, %v6247
      %6280 = vst.msk [vmem:[#allocation4 + $0x90] sm:$0xff] %vm363, %v6248
      %6281 = vst.msk [vmem:[#allocation4 + $0x98] sm:$0xff] %vm363, %v6249
      %6282 = vst.msk [vmem:[#allocation4 + $0xa0] sm:$0xff] %vm363, %v6250
      %6283 = vst.msk [vmem:[#allocation4 + $0xa8] sm:$0xff] %vm363, %v6251
      %6284 = vst.msk [vmem:[#allocation4 + $0xb0] sm:$0xff] %vm363, %v6252
      %6285 = vst.msk [vmem:[#allocation4 + $0xb8] sm:$0xff] %vm363, %v6253
      %6286 = vst.msk [vmem:[#allocation4 + $0xc0] sm:$0xff] %vm363, %v6254
      %6287 = vst.msk [vmem:[#allocation4 + $0xc8] sm:$0xff] %vm363, %v6255
      %6288 = vst.msk [vmem:[#allocation4 + $0xd0] sm:$0xff] %vm363, %v6256
      %6289 = vst.msk [vmem:[#allocation4 + $0xd8] sm:$0xff] %vm363, %v6257
      %6290 = vst.msk [vmem:[#allocation4 + $0xe0] sm:$0xff] %vm363, %v6258
      %6291 = vst.msk [vmem:[#allocation4 + $0xe8] sm:$0xff] %vm363, %v6259
      %6292 = vst.msk [vmem:[#allocation4 + $0xf0] sm:$0xff] %vm363, %v6260
      %6293 = vst.msk [vmem:[#allocation4 + $0xf8] sm:$0xff] %vm363, %v6261
      %v6294 = vld [vmem:[#allocation4] sm:$0xff]
      %v6295 = vld [vmem:[#allocation4 + $0x8] sm:$0xff]
      %v6296 = vld [vmem:[#allocation4 + $0x10] sm:$0xff]
      %v6297 = vld [vmem:[#allocation4 + $0x18] sm:$0xff]
      %v6298 = vld [vmem:[#allocation4 + $0x20] sm:$0xff]
      %v6299 = vld [vmem:[#allocation4 + $0x28] sm:$0xff]
      %v6300 = vld [vmem:[#allocation4 + $0x30] sm:$0xff]
      %v6301 = vld [vmem:[#allocation4 + $0x38] sm:$0xff]
      %v6302 = vld [vmem:[#allocation4 + $0x40] sm:$0xff]
      %v6303 = vld [vmem:[#allocation4 + $0x48] sm:$0xff]
      %v6304 = vld [vmem:[#allocation4 + $0x50] sm:$0xff]
      %v6305 = vld [vmem:[#allocation4 + $0x58] sm:$0xff]
      %v6306 = vld [vmem:[#allocation4 + $0x60] sm:$0xff]
      %v6307 = vld [vmem:[#allocation4 + $0x68] sm:$0xff]
      %v6308 = vld [vmem:[#allocation4 + $0x70] sm:$0xff]
      %v6309 = vld [vmem:[#allocation4 + $0x78] sm:$0xff]
      %v6310 = vld [vmem:[#allocation4 + $0x80] sm:$0xff]
      %v6311 = vld [vmem:[#allocation4 + $0x88] sm:$0xff]
      %v6312 = vld [vmem:[#allocation4 + $0x90] sm:$0xff]
      %v6313 = vld [vmem:[#allocation4 + $0x98] sm:$0xff]
      %v6314 = vld [vmem:[#allocation4 + $0xa0] sm:$0xff]
      %v6315 = vld [vmem:[#allocation4 + $0xa8] sm:$0xff]
      %v6316 = vld [vmem:[#allocation4 + $0xb0] sm:$0xff]
      %v6317 = vld [vmem:[#allocation4 + $0xb8] sm:$0xff]
      %v6318 = vld [vmem:[#allocation4 + $0xc0] sm:$0xff]
      %v6319 = vld [vmem:[#allocation4 + $0xc8] sm:$0xff]
      %v6320 = vld [vmem:[#allocation4 + $0xd0] sm:$0xff]
      %v6321 = vld [vmem:[#allocation4 + $0xd8] sm:$0xff]
      %v6322 = vld [vmem:[#allocation4 + $0xe0] sm:$0xff]
      %v6323 = vld [vmem:[#allocation4 + $0xe8] sm:$0xff]
      %v6324 = vld [vmem:[#allocation4 + $0xf0] sm:$0xff]
      %v6325 = vld [vmem:[#allocation4 + $0xf8] sm:$0xff]
      %v6327 = vrot.slane %v4241, 1
      %v6328 = vrot.slane %v4242, 1
      %v6329 = vsel %vm1425, %v6327, %v6328
      %v6330 = vrot.slane %v4243, 1
      %v6331 = vsel %vm1425, %v6328, %v6330
      %s6332 = scalar_lea.vmem %s3, 40
      %v6333 = vld [vmem:[%s6332] sm:$0xff]
      %v6334 = vsel %vm363, %v6329, 0
      %v6336 = vsel %vm363, %v6331, 0
      %6338 = vmatprep.subr.mxu0 0.0
      %6339 = vmatpush1.msra.mxu0 0.0
      %6340 = vmatprep.subr.mxu0 0.0
      %6341 = vmatpush1.msra.mxu0 0.0
      %6342 = vmatprep.subr.mxu0 0.0
      %6343 = vmatpush1.msra.mxu0 0.0
      %6344 = vmatprep.subr.mxu0 0.0
      %6345 = vmatpush1.msra.mxu0 0.0
      %6346 = vmatprep.subr.mxu0 0.0
      %6347 = vmatpush1.msra.mxu0 0.0
      %6348 = vmatprep.subr.mxu0 0.0
      %6349 = vmatpush1.msra.mxu0 0.0
      %6350 = vmatprep.subr.mxu0 0.0
      %6351 = vmatpush1.msra.mxu0 0.0
      %6352 = vmatprep.subr.mxu0 0.0
      %6353 = vmatpush1.msra.mxu0 0.0
      %6354 = vmatprep.subr.mxu0 0.0
      %6355 = vmatpush1.msra.mxu0 0.0
      %6356 = vmatprep.subr.mxu0 0.0
      %6357 = vmatpush1.msra.mxu0 0.0
      %6358 = vmatprep.subr.mxu0 0.0
      %6359 = vmatpush1.msra.mxu0 0.0
      %6360 = vmatprep.subr.mxu0 0.0
      %6361 = vmatpush1.msra.mxu0 0.0
      %6362 = vmatprep.subr.mxu0 0.0
      %6363 = vmatpush1.msra.mxu0 0.0
      %6364 = vmatprep.subr.mxu0 0.0
      %6365 = vmatpush1.msra.mxu0 0.0
      %6366 = vmatprep.subr.mxu0 0.0
      %6367 = vmatpush1.msra.mxu0 0.0
      %6368 = vmatprep.subr.mxu0 0.0
      %6369 = vmatpush1.msra.mxu0 %v6333
      %6370 = vmatprep.subr.mxu0 0.0
      %6371 = vmatpush2.msra.mxu0 0.0
      %6372 = vmatprep.subr.mxu0 0.0
      %6373 = vmatpush2.msra.mxu0 0.0
      %6374 = vmatprep.subr.mxu0 0.0
      %6375 = vmatpush2.msra.mxu0 0.0
      %6376 = vmatprep.subr.mxu0 0.0
      %6377 = vmatpush2.msra.mxu0 0.0
      %6378 = vmatprep.subr.mxu0 0.0
      %6379 = vmatpush2.msra.mxu0 0.0
      %6380 = vmatprep.subr.mxu0 0.0
      %6381 = vmatpush2.msra.mxu0 0.0
      %6382 = vmatprep.subr.mxu0 0.0
      %6383 = vmatpush2.msra.mxu0 0.0
      %6384 = vmatprep.subr.mxu0 0.0
      %6385 = vmatpush2.msra.mxu0 0.0
      %6386 = vmatprep.subr.mxu0 0.0
      %6387 = vmatpush2.msra.mxu0 0.0
      %6388 = vmatprep.subr.mxu0 0.0
      %6389 = vmatpush2.msra.mxu0 0.0
      %6390 = vmatprep.subr.mxu0 0.0
      %6391 = vmatpush2.msra.mxu0 0.0
      %6392 = vmatprep.subr.mxu0 0.0
      %6393 = vmatpush2.msra.mxu0 0.0
      %6394 = vmatprep.subr.mxu0 0.0
      %6395 = vmatpush2.msra.mxu0 0.0
      %6396 = vmatprep.subr.mxu0 0.0
      %6397 = vmatpush2.msra.mxu0 0.0
      %6398 = vmatprep.subr.mxu0 0.0
      %6399 = vmatpush2.msra.mxu0 0.0
      %6400 = vmatprep.subr.mxu0 0.0
      %6401 = vmatpush2.msra.mxu0 0.0
      %6402 = vmatprep.mubr.f32.mxu0 0.0
      %6403 = vmatmul.mubr.f32.gmra.mxu0 %v5283
      %v6404 = vpop.f32.mrf.mxu0
      %v6405 = vadd.f32 0.0, %v6404
      %v6406 = vpop.f32.mrf.mxu0
      %6407 = vmatprep.mubr.f32.mxu0 0.0
      %6408 = vmatmul.mubr.f32.gmra.mxu0 %v5285
      %v6409 = vpop.f32.mrf.mxu0
      %v6410 = vadd.f32 0.0, %v6409
      %v6411 = vpop.f32.mrf.mxu0
      %6412 = vmatprep.mubr.f32.mxu0 0.0
      %6413 = vmatmul.mubr.f32.gmra.mxu0 %v5287
      %v6414 = vpop.f32.mrf.mxu0
      %v6415 = vadd.f32 0.0, %v6414
      %v6416 = vpop.f32.mrf.mxu0
      %6417 = vmatprep.mubr.f32.mxu0 0.0
      %6418 = vmatmul.mubr.f32.gmra.mxu0 %v5289
      %v6419 = vpop.f32.mrf.mxu0
      %v6420 = vadd.f32 0.0, %v6419
      %v6421 = vpop.f32.mrf.mxu0
      %6422 = vmatprep.mubr.f32.mxu0 0.0
      %6423 = vmatmul.mubr.f32.gmra.mxu0 %v5291
      %v6424 = vpop.f32.mrf.mxu0
      %v6425 = vadd.f32 0.0, %v6424
      %v6426 = vpop.f32.mrf.mxu0
      %6427 = vmatprep.mubr.f32.mxu0 0.0
      %6428 = vmatmul.mubr.f32.gmra.mxu0 %v5293
      %v6429 = vpop.f32.mrf.mxu0
      %v6430 = vadd.f32 0.0, %v6429
      %v6431 = vpop.f32.mrf.mxu0
      %6432 = vmatprep.mubr.f32.mxu0 0.0
      %6433 = vmatmul.mubr.f32.gmra.mxu0 %v5295
      %v6434 = vpop.f32.mrf.mxu0
      %v6435 = vadd.f32 0.0, %v6434
      %v6436 = vpop.f32.mrf.mxu0
      %6437 = vmatprep.mubr.f32.mxu0 0.0
      %6438 = vmatmul.mubr.f32.gmra.mxu0 %v5297
      %v6439 = vpop.f32.mrf.mxu0
      %v6440 = vadd.f32 0.0, %v6439
      %v6441 = vpop.f32.mrf.mxu0
      %6442 = vmatprep.mubr.f32.mxu0 0.0
      %6443 = vmatmul.mubr.f32.gmra.mxu0 %v5299
      %v6444 = vpop.f32.mrf.mxu0
      %v6445 = vadd.f32 0.0, %v6444
      %v6446 = vpop.f32.mrf.mxu0
      %6447 = vmatprep.mubr.f32.mxu0 0.0
      %6448 = vmatmul.mubr.f32.gmra.mxu0 %v5301
      %v6449 = vpop.f32.mrf.mxu0
      %v6450 = vadd.f32 0.0, %v6449
      %v6451 = vpop.f32.mrf.mxu0
      %6452 = vmatprep.mubr.f32.mxu0 0.0
      %6453 = vmatmul.mubr.f32.gmra.mxu0 %v5303
      %v6454 = vpop.f32.mrf.mxu0
      %v6455 = vadd.f32 0.0, %v6454
      %v6456 = vpop.f32.mrf.mxu0
      %6457 = vmatprep.mubr.f32.mxu0 0.0
      %6458 = vmatmul.mubr.f32.gmra.mxu0 %v5305
      %v6459 = vpop.f32.mrf.mxu0
      %v6460 = vadd.f32 0.0, %v6459
      %v6461 = vpop.f32.mrf.mxu0
      %6462 = vmatprep.mubr.f32.mxu0 0.0
      %6463 = vmatmul.mubr.f32.gmra.mxu0 %v5307
      %v6464 = vpop.f32.mrf.mxu0
      %v6465 = vadd.f32 0.0, %v6464
      %v6466 = vpop.f32.mrf.mxu0
      %6467 = vmatprep.mubr.f32.mxu0 0.0
      %6468 = vmatmul.mubr.f32.gmra.mxu0 %v5309
      %v6469 = vpop.f32.mrf.mxu0
      %v6470 = vadd.f32 0.0, %v6469
      %v6471 = vpop.f32.mrf.mxu0
      %6472 = vmatprep.mubr.f32.mxu0 0.0
      %6473 = vmatmul.mubr.f32.gmra.mxu0 %v5311
      %v6474 = vpop.f32.mrf.mxu0
      %v6475 = vadd.f32 0.0, %v6474
      %v6476 = vpop.f32.mrf.mxu0
      %6477 = vmatprep.mubr.f32.mxu0 0.0
      %6478 = vmatmul.mubr.f32.gmra.mxu0 %v5313
      %v6479 = vpop.f32.mrf.mxu0
      %v6480 = vadd.f32 0.0, %v6479
      %v6481 = vpop.f32.mrf.mxu0
      %6482 = vmatprep.mubr.f32.mxu0 0.0
      %6483 = vmatmul.mubr.f32.gmra.mxu0 %v5315
      %v6484 = vpop.f32.mrf.mxu0
      %v6485 = vadd.f32 0.0, %v6484
      %v6486 = vpop.f32.mrf.mxu0
      %6487 = vmatprep.mubr.f32.mxu0 0.0
      %6488 = vmatmul.mubr.f32.gmra.mxu0 %v5317
      %v6489 = vpop.f32.mrf.mxu0
      %v6490 = vadd.f32 0.0, %v6489
      %v6491 = vpop.f32.mrf.mxu0
      %6492 = vmatprep.mubr.f32.mxu0 0.0
      %6493 = vmatmul.mubr.f32.gmra.mxu0 %v5319
      %v6494 = vpop.f32.mrf.mxu0
      %v6495 = vadd.f32 0.0, %v6494
      %v6496 = vpop.f32.mrf.mxu0
      %6497 = vmatprep.mubr.f32.mxu0 0.0
      %6498 = vmatmul.mubr.f32.gmra.mxu0 %v5321
      %v6499 = vpop.f32.mrf.mxu0
      %v6500 = vadd.f32 0.0, %v6499
      %v6501 = vpop.f32.mrf.mxu0
      %6502 = vmatprep.mubr.f32.mxu0 0.0
      %6503 = vmatmul.mubr.f32.gmra.mxu0 %v5323
      %v6504 = vpop.f32.mrf.mxu0
      %v6505 = vadd.f32 0.0, %v6504
      %v6506 = vpop.f32.mrf.mxu0
      %6507 = vmatprep.mubr.f32.mxu0 0.0
      %6508 = vmatmul.mubr.f32.gmra.mxu0 %v5325
      %v6509 = vpop.f32.mrf.mxu0
      %v6510 = vadd.f32 0.0, %v6509
      %v6511 = vpop.f32.mrf.mxu0
      %6512 = vmatprep.mubr.f32.mxu0 0.0
      %6513 = vmatmul.mubr.f32.gmra.mxu0 %v5327
      %v6514 = vpop.f32.mrf.mxu0
      %v6515 = vadd.f32 0.0, %v6514
      %v6516 = vpop.f32.mrf.mxu0
      %6517 = vmatprep.mubr.f32.mxu0 0.0
      %6518 = vmatmul.mubr.f32.gmra.mxu0 %v5329
      %v6519 = vpop.f32.mrf.mxu0
      %v6520 = vadd.f32 0.0, %v6519
      %v6521 = vpop.f32.mrf.mxu0
      %6522 = vmatprep.mubr.f32.mxu0 0.0
      %6523 = vmatmul.mubr.f32.gmra.mxu0 %v5331
      %v6524 = vpop.f32.mrf.mxu0
      %v6525 = vadd.f32 0.0, %v6524
      %v6526 = vpop.f32.mrf.mxu0
      %6527 = vmatprep.mubr.f32.mxu0 0.0
      %6528 = vmatmul.mubr.f32.gmra.mxu0 %v5333
      %v6529 = vpop.f32.mrf.mxu0
      %v6530 = vadd.f32 0.0, %v6529
      %v6531 = vpop.f32.mrf.mxu0
      %6532 = vmatprep.mubr.f32.mxu0 0.0
      %6533 = vmatmul.mubr.f32.gmra.mxu0 %v5335
      %v6534 = vpop.f32.mrf.mxu0
      %v6535 = vadd.f32 0.0, %v6534
      %v6536 = vpop.f32.mrf.mxu0
      %6537 = vmatprep.mubr.f32.mxu0 0.0
      %6538 = vmatmul.mubr.f32.gmra.mxu0 %v5337
      %v6539 = vpop.f32.mrf.mxu0
      %v6540 = vadd.f32 0.0, %v6539
      %v6541 = vpop.f32.mrf.mxu0
      %6542 = vmatprep.mubr.f32.mxu0 0.0
      %6543 = vmatmul.mubr.f32.gmra.mxu0 %v5339
      %v6544 = vpop.f32.mrf.mxu0
      %v6545 = vadd.f32 0.0, %v6544
      %v6546 = vpop.f32.mrf.mxu0
      %6547 = vmatprep.mubr.f32.mxu0 0.0
      %6548 = vmatmul.mubr.f32.gmra.mxu0 %v5341
      %v6549 = vpop.f32.mrf.mxu0
      %v6550 = vadd.f32 0.0, %v6549
      %v6551 = vpop.f32.mrf.mxu0
      %6552 = vmatprep.mubr.f32.mxu0 0.0
      %6553 = vmatmul.mubr.f32.gmra.mxu0 %v6334
      %v6554 = vpop.f32.mrf.mxu0
      %v6555 = vadd.f32 0.0, %v6554
      %v6556 = vpop.f32.mrf.mxu0
      %6557 = vmatprep.mubr.f32.mxu0 0.0
      %6558 = vmatmul.mubr.f32.gmra.mxu0 %v6336
      %v6559 = vpop.f32.mrf.mxu0
      %v6560 = vadd.f32 0.0, %v6559
      %v6561 = vpop.f32.mrf.mxu0
      %6562 = vdwg.mxu0
      %v6563 = vadd.f32 %v6294, %v6405
      %v6564 = vadd.f32 %v6295, %v6410
      %v6565 = vadd.f32 %v6296, %v6415
      %v6566 = vadd.f32 %v6297, %v6420
      %v6567 = vadd.f32 %v6298, %v6425
      %v6568 = vadd.f32 %v6299, %v6430
      %v6569 = vadd.f32 %v6300, %v6435
      %v6570 = vadd.f32 %v6301, %v6440
      %v6571 = vadd.f32 %v6302, %v6445
      %v6572 = vadd.f32 %v6303, %v6450
      %v6573 = vadd.f32 %v6304, %v6455
      %v6574 = vadd.f32 %v6305, %v6460
      %v6575 = vadd.f32 %v6306, %v6465
      %v6576 = vadd.f32 %v6307, %v6470
      %v6577 = vadd.f32 %v6308, %v6475
      %v6578 = vadd.f32 %v6309, %v6480
      %v6579 = vadd.f32 %v6310, %v6485
      %v6580 = vadd.f32 %v6311, %v6490
      %v6581 = vadd.f32 %v6312, %v6495
      %v6582 = vadd.f32 %v6313, %v6500
      %v6583 = vadd.f32 %v6314, %v6505
      %v6584 = vadd.f32 %v6315, %v6510
      %v6585 = vadd.f32 %v6316, %v6515
      %v6586 = vadd.f32 %v6317, %v6520
      %v6587 = vadd.f32 %v6318, %v6525
      %v6588 = vadd.f32 %v6319, %v6530
      %v6589 = vadd.f32 %v6320, %v6535
      %v6590 = vadd.f32 %v6321, %v6540
      %v6591 = vadd.f32 %v6322, %v6545
      %v6592 = vadd.f32 %v6323, %v6550
      %v6593 = vadd.f32 %v6324, %v6555
      %v6594 = vadd.f32 %v6325, %v6560
      %6595 = vst.msk [vmem:[#allocation4] sm:$0xff] %vm363, %v6563
      %6596 = vst.msk [vmem:[#allocation4 + $0x8] sm:$0xff] %vm363, %v6564
      %6597 = vst.msk [vmem:[#allocation4 + $0x10] sm:$0xff] %vm363, %v6565
      %6598 = vst.msk [vmem:[#allocation4 + $0x18] sm:$0xff] %vm363, %v6566
      %6599 = vst.msk [vmem:[#allocation4 + $0x20] sm:$0xff] %vm363, %v6567
      %6600 = vst.msk [vmem:[#allocation4 + $0x28] sm:$0xff] %vm363, %v6568
      %6601 = vst.msk [vmem:[#allocation4 + $0x30] sm:$0xff] %vm363, %v6569
      %6602 = vst.msk [vmem:[#allocation4 + $0x38] sm:$0xff] %vm363, %v6570
      %6603 = vst.msk [vmem:[#allocation4 + $0x40] sm:$0xff] %vm363, %v6571
      %6604 = vst.msk [vmem:[#allocation4 + $0x48] sm:$0xff] %vm363, %v6572
      %6605 = vst.msk [vmem:[#allocation4 + $0x50] sm:$0xff] %vm363, %v6573
      %6606 = vst.msk [vmem:[#allocation4 + $0x58] sm:$0xff] %vm363, %v6574
      %6607 = vst.msk [vmem:[#allocation4 + $0x60] sm:$0xff] %vm363, %v6575
      %6608 = vst.msk [vmem:[#allocation4 + $0x68] sm:$0xff] %vm363, %v6576
      %6609 = vst.msk [vmem:[#allocation4 + $0x70] sm:$0xff] %vm363, %v6577
      %6610 = vst.msk [vmem:[#allocation4 + $0x78] sm:$0xff] %vm363, %v6578
      %6611 = vst.msk [vmem:[#allocation4 + $0x80] sm:$0xff] %vm363, %v6579
      %6612 = vst.msk [vmem:[#allocation4 + $0x88] sm:$0xff] %vm363, %v6580
      %6613 = vst.msk [vmem:[#allocation4 + $0x90] sm:$0xff] %vm363, %v6581
      %6614 = vst.msk [vmem:[#allocation4 + $0x98] sm:$0xff] %vm363, %v6582
      %6615 = vst.msk [vmem:[#allocation4 + $0xa0] sm:$0xff] %vm363, %v6583
      %6616 = vst.msk [vmem:[#allocation4 + $0xa8] sm:$0xff] %vm363, %v6584
      %6617 = vst.msk [vmem:[#allocation4 + $0xb0] sm:$0xff] %vm363, %v6585
      %6618 = vst.msk [vmem:[#allocation4 + $0xb8] sm:$0xff] %vm363, %v6586
      %6619 = vst.msk [vmem:[#allocation4 + $0xc0] sm:$0xff] %vm363, %v6587
      %6620 = vst.msk [vmem:[#allocation4 + $0xc8] sm:$0xff] %vm363, %v6588
      %6621 = vst.msk [vmem:[#allocation4 + $0xd0] sm:$0xff] %vm363, %v6589
      %6622 = vst.msk [vmem:[#allocation4 + $0xd8] sm:$0xff] %vm363, %v6590
      %6623 = vst.msk [vmem:[#allocation4 + $0xe0] sm:$0xff] %vm363, %v6591
      %6624 = vst.msk [vmem:[#allocation4 + $0xe8] sm:$0xff] %vm363, %v6592
      %6625 = vst.msk [vmem:[#allocation4 + $0xf0] sm:$0xff] %vm363, %v6593
      %6626 = vst.msk [vmem:[#allocation4 + $0xf8] sm:$0xff] %vm363, %v6594
      %v6627 = vld [vmem:[#allocation4] sm:$0xff]
      %v6628 = vld [vmem:[#allocation4 + $0x8] sm:$0xff]
      %v6629 = vld [vmem:[#allocation4 + $0x10] sm:$0xff]
      %v6630 = vld [vmem:[#allocation4 + $0x18] sm:$0xff]
      %v6631 = vld [vmem:[#allocation4 + $0x20] sm:$0xff]
      %v6632 = vld [vmem:[#allocation4 + $0x28] sm:$0xff]
      %v6633 = vld [vmem:[#allocation4 + $0x30] sm:$0xff]
      %v6634 = vld [vmem:[#allocation4 + $0x38] sm:$0xff]
      %v6635 = vld [vmem:[#allocation4 + $0x40] sm:$0xff]
      %v6636 = vld [vmem:[#allocation4 + $0x48] sm:$0xff]
      %v6637 = vld [vmem:[#allocation4 + $0x50] sm:$0xff]
      %v6638 = vld [vmem:[#allocation4 + $0x58] sm:$0xff]
      %v6639 = vld [vmem:[#allocation4 + $0x60] sm:$0xff]
      %v6640 = vld [vmem:[#allocation4 + $0x68] sm:$0xff]
      %v6641 = vld [vmem:[#allocation4 + $0x70] sm:$0xff]
      %v6642 = vld [vmem:[#allocation4 + $0x78] sm:$0xff]
      %v6643 = vld [vmem:[#allocation4 + $0x80] sm:$0xff]
      %v6644 = vld [vmem:[#allocation4 + $0x88] sm:$0xff]
      %v6645 = vld [vmem:[#allocation4 + $0x90] sm:$0xff]
      %v6646 = vld [vmem:[#allocation4 + $0x98] sm:$0xff]
      %v6647 = vld [vmem:[#allocation4 + $0xa0] sm:$0xff]
      %v6648 = vld [vmem:[#allocation4 + $0xa8] sm:$0xff]
      %v6649 = vld [vmem:[#allocation4 + $0xb0] sm:$0xff]
      %v6650 = vld [vmem:[#allocation4 + $0xb8] sm:$0xff]
      %v6651 = vld [vmem:[#allocation4 + $0xc0] sm:$0xff]
      %v6652 = vld [vmem:[#allocation4 + $0xc8] sm:$0xff]
      %v6653 = vld [vmem:[#allocation4 + $0xd0] sm:$0xff]
      %v6654 = vld [vmem:[#allocation4 + $0xd8] sm:$0xff]
      %v6655 = vld [vmem:[#allocation4 + $0xe0] sm:$0xff]
      %v6656 = vld [vmem:[#allocation4 + $0xe8] sm:$0xff]
      %v6657 = vld [vmem:[#allocation4 + $0xf0] sm:$0xff]
      %v6658 = vld [vmem:[#allocation4 + $0xf8] sm:$0xff]
      %v6662 = vrot.slane %v4244, 7
      %v6663 = vrot.slane %v4245, 7
      %v6664 = vsel %vm548, %v6662, %v6663
      %v6665 = vrot.slane %v4246, 7
      %v6666 = vsel %vm548, %v6663, %v6665
      %s6667 = scalar_lea.vmem %s3, 48
      %v6668 = vld [vmem:[%s6667] sm:$0xff]
      %v6669 = vsel %vm363, %v6664, 0
      %v6671 = vsel %vm363, %v6666, 0
      %6673 = vmatprep.subr.mxu0 0.0
      %6674 = vmatpush1.msra.mxu0 0.0
      %6675 = vmatprep.subr.mxu0 0.0
      %6676 = vmatpush1.msra.mxu0 0.0
      %6677 = vmatprep.subr.mxu0 0.0
      %6678 = vmatpush1.msra.mxu0 0.0
      %6679 = vmatprep.subr.mxu0 0.0
      %6680 = vmatpush1.msra.mxu0 0.0
      %6681 = vmatprep.subr.mxu0 0.0
      %6682 = vmatpush1.msra.mxu0 0.0
      %6683 = vmatprep.subr.mxu0 0.0
      %6684 = vmatpush1.msra.mxu0 0.0
      %6685 = vmatprep.subr.mxu0 0.0
      %6686 = vmatpush1.msra.mxu0 0.0
      %6687 = vmatprep.subr.mxu0 0.0
      %6688 = vmatpush1.msra.mxu0 0.0
      %6689 = vmatprep.subr.mxu0 0.0
      %6690 = vmatpush1.msra.mxu0 0.0
      %6691 = vmatprep.subr.mxu0 0.0
      %6692 = vmatpush1.msra.mxu0 0.0
      %6693 = vmatprep.subr.mxu0 0.0
      %6694 = vmatpush1.msra.mxu0 0.0
      %6695 = vmatprep.subr.mxu0 0.0
      %6696 = vmatpush1.msra.mxu0 0.0
      %6697 = vmatprep.subr.mxu0 0.0
      %6698 = vmatpush1.msra.mxu0 0.0
      %6699 = vmatprep.subr.mxu0 0.0
      %6700 = vmatpush1.msra.mxu0 0.0
      %6701 = vmatprep.subr.mxu0 0.0
      %6702 = vmatpush1.msra.mxu0 0.0
      %6703 = vmatprep.subr.mxu0 0.0
      %6704 = vmatpush1.msra.mxu0 %v6668
      %6705 = vmatprep.subr.mxu0 0.0
      %6706 = vmatpush2.msra.mxu0 0.0
      %6707 = vmatprep.subr.mxu0 0.0
      %6708 = vmatpush2.msra.mxu0 0.0
      %6709 = vmatprep.subr.mxu0 0.0
      %6710 = vmatpush2.msra.mxu0 0.0
      %6711 = vmatprep.subr.mxu0 0.0
      %6712 = vmatpush2.msra.mxu0 0.0
      %6713 = vmatprep.subr.mxu0 0.0
      %6714 = vmatpush2.msra.mxu0 0.0
      %6715 = vmatprep.subr.mxu0 0.0
      %6716 = vmatpush2.msra.mxu0 0.0
      %6717 = vmatprep.subr.mxu0 0.0
      %6718 = vmatpush2.msra.mxu0 0.0
      %6719 = vmatprep.subr.mxu0 0.0
      %6720 = vmatpush2.msra.mxu0 0.0
      %6721 = vmatprep.subr.mxu0 0.0
      %6722 = vmatpush2.msra.mxu0 0.0
      %6723 = vmatprep.subr.mxu0 0.0
      %6724 = vmatpush2.msra.mxu0 0.0
      %6725 = vmatprep.subr.mxu0 0.0
      %6726 = vmatpush2.msra.mxu0 0.0
      %6727 = vmatprep.subr.mxu0 0.0
      %6728 = vmatpush2.msra.mxu0 0.0
      %6729 = vmatprep.subr.mxu0 0.0
      %6730 = vmatpush2.msra.mxu0 0.0
      %6731 = vmatprep.subr.mxu0 0.0
      %6732 = vmatpush2.msra.mxu0 0.0
      %6733 = vmatprep.subr.mxu0 0.0
      %6734 = vmatpush2.msra.mxu0 0.0
      %6735 = vmatprep.subr.mxu0 0.0
      %6736 = vmatpush2.msra.mxu0 0.0
      %6737 = vmatprep.mubr.f32.mxu0 0.0
      %6738 = vmatmul.mubr.f32.gmra.mxu0 %v4417
      %v6739 = vpop.f32.mrf.mxu0
      %v6740 = vadd.f32 0.0, %v6739
      %v6741 = vpop.f32.mrf.mxu0
      %6742 = vmatprep.mubr.f32.mxu0 0.0
      %6743 = vmatmul.mubr.f32.gmra.mxu0 %v4419
      %v6744 = vpop.f32.mrf.mxu0
      %v6745 = vadd.f32 0.0, %v6744
      %v6746 = vpop.f32.mrf.mxu0
      %6747 = vmatprep.mubr.f32.mxu0 0.0
      %6748 = vmatmul.mubr.f32.gmra.mxu0 %v4421
      %v6749 = vpop.f32.mrf.mxu0
      %v6750 = vadd.f32 0.0, %v6749
      %v6751 = vpop.f32.mrf.mxu0
      %6752 = vmatprep.mubr.f32.mxu0 0.0
      %6753 = vmatmul.mubr.f32.gmra.mxu0 %v4423
      %v6754 = vpop.f32.mrf.mxu0
      %v6755 = vadd.f32 0.0, %v6754
      %v6756 = vpop.f32.mrf.mxu0
      %6757 = vmatprep.mubr.f32.mxu0 0.0
      %6758 = vmatmul.mubr.f32.gmra.mxu0 %v4425
      %v6759 = vpop.f32.mrf.mxu0
      %v6760 = vadd.f32 0.0, %v6759
      %v6761 = vpop.f32.mrf.mxu0
      %6762 = vmatprep.mubr.f32.mxu0 0.0
      %6763 = vmatmul.mubr.f32.gmra.mxu0 %v4427
      %v6764 = vpop.f32.mrf.mxu0
      %v6765 = vadd.f32 0.0, %v6764
      %v6766 = vpop.f32.mrf.mxu0
      %6767 = vmatprep.mubr.f32.mxu0 0.0
      %6768 = vmatmul.mubr.f32.gmra.mxu0 %v4429
      %v6769 = vpop.f32.mrf.mxu0
      %v6770 = vadd.f32 0.0, %v6769
      %v6771 = vpop.f32.mrf.mxu0
      %6772 = vmatprep.mubr.f32.mxu0 0.0
      %6773 = vmatmul.mubr.f32.gmra.mxu0 %v4431
      %v6774 = vpop.f32.mrf.mxu0
      %v6775 = vadd.f32 0.0, %v6774
      %v6776 = vpop.f32.mrf.mxu0
      %6777 = vmatprep.mubr.f32.mxu0 0.0
      %6778 = vmatmul.mubr.f32.gmra.mxu0 %v4433
      %v6779 = vpop.f32.mrf.mxu0
      %v6780 = vadd.f32 0.0, %v6779
      %v6781 = vpop.f32.mrf.mxu0
      %6782 = vmatprep.mubr.f32.mxu0 0.0
      %6783 = vmatmul.mubr.f32.gmra.mxu0 %v4435
      %v6784 = vpop.f32.mrf.mxu0
      %v6785 = vadd.f32 0.0, %v6784
      %v6786 = vpop.f32.mrf.mxu0
      %6787 = vmatprep.mubr.f32.mxu0 0.0
      %6788 = vmatmul.mubr.f32.gmra.mxu0 %v4437
      %v6789 = vpop.f32.mrf.mxu0
      %v6790 = vadd.f32 0.0, %v6789
      %v6791 = vpop.f32.mrf.mxu0
      %6792 = vmatprep.mubr.f32.mxu0 0.0
      %6793 = vmatmul.mubr.f32.gmra.mxu0 %v4439
      %v6794 = vpop.f32.mrf.mxu0
      %v6795 = vadd.f32 0.0, %v6794
      %v6796 = vpop.f32.mrf.mxu0
      %6797 = vmatprep.mubr.f32.mxu0 0.0
      %6798 = vmatmul.mubr.f32.gmra.mxu0 %v4441
      %v6799 = vpop.f32.mrf.mxu0
      %v6800 = vadd.f32 0.0, %v6799
      %v6801 = vpop.f32.mrf.mxu0
      %6802 = vmatprep.mubr.f32.mxu0 0.0
      %6803 = vmatmul.mubr.f32.gmra.mxu0 %v4443
      %v6804 = vpop.f32.mrf.mxu0
      %v6805 = vadd.f32 0.0, %v6804
      %v6806 = vpop.f32.mrf.mxu0
      %6807 = vmatprep.mubr.f32.mxu0 0.0
      %6808 = vmatmul.mubr.f32.gmra.mxu0 %v4445
      %v6809 = vpop.f32.mrf.mxu0
      %v6810 = vadd.f32 0.0, %v6809
      %v6811 = vpop.f32.mrf.mxu0
      %6812 = vmatprep.mubr.f32.mxu0 0.0
      %6813 = vmatmul.mubr.f32.gmra.mxu0 %v4447
      %v6814 = vpop.f32.mrf.mxu0
      %v6815 = vadd.f32 0.0, %v6814
      %v6816 = vpop.f32.mrf.mxu0
      %6817 = vmatprep.mubr.f32.mxu0 0.0
      %6818 = vmatmul.mubr.f32.gmra.mxu0 %v4449
      %v6819 = vpop.f32.mrf.mxu0
      %v6820 = vadd.f32 0.0, %v6819
      %v6821 = vpop.f32.mrf.mxu0
      %6822 = vmatprep.mubr.f32.mxu0 0.0
      %6823 = vmatmul.mubr.f32.gmra.mxu0 %v4451
      %v6824 = vpop.f32.mrf.mxu0
      %v6825 = vadd.f32 0.0, %v6824
      %v6826 = vpop.f32.mrf.mxu0
      %6827 = vmatprep.mubr.f32.mxu0 0.0
      %6828 = vmatmul.mubr.f32.gmra.mxu0 %v4453
      %v6829 = vpop.f32.mrf.mxu0
      %v6830 = vadd.f32 0.0, %v6829
      %v6831 = vpop.f32.mrf.mxu0
      %6832 = vmatprep.mubr.f32.mxu0 0.0
      %6833 = vmatmul.mubr.f32.gmra.mxu0 %v4455
      %v6834 = vpop.f32.mrf.mxu0
      %v6835 = vadd.f32 0.0, %v6834
      %v6836 = vpop.f32.mrf.mxu0
      %6837 = vmatprep.mubr.f32.mxu0 0.0
      %6838 = vmatmul.mubr.f32.gmra.mxu0 %v4457
      %v6839 = vpop.f32.mrf.mxu0
      %v6840 = vadd.f32 0.0, %v6839
      %v6841 = vpop.f32.mrf.mxu0
      %6842 = vmatprep.mubr.f32.mxu0 0.0
      %6843 = vmatmul.mubr.f32.gmra.mxu0 %v4459
      %v6844 = vpop.f32.mrf.mxu0
      %v6845 = vadd.f32 0.0, %v6844
      %v6846 = vpop.f32.mrf.mxu0
      %6847 = vmatprep.mubr.f32.mxu0 0.0
      %6848 = vmatmul.mubr.f32.gmra.mxu0 %v4461
      %v6849 = vpop.f32.mrf.mxu0
      %v6850 = vadd.f32 0.0, %v6849
      %v6851 = vpop.f32.mrf.mxu0
      %6852 = vmatprep.mubr.f32.mxu0 0.0
      %6853 = vmatmul.mubr.f32.gmra.mxu0 %v4463
      %v6854 = vpop.f32.mrf.mxu0
      %v6855 = vadd.f32 0.0, %v6854
      %v6856 = vpop.f32.mrf.mxu0
      %6857 = vmatprep.mubr.f32.mxu0 0.0
      %6858 = vmatmul.mubr.f32.gmra.mxu0 %v4465
      %v6859 = vpop.f32.mrf.mxu0
      %v6860 = vadd.f32 0.0, %v6859
      %v6861 = vpop.f32.mrf.mxu0
      %6862 = vmatprep.mubr.f32.mxu0 0.0
      %6863 = vmatmul.mubr.f32.gmra.mxu0 %v4467
      %v6864 = vpop.f32.mrf.mxu0
      %v6865 = vadd.f32 0.0, %v6864
      %v6866 = vpop.f32.mrf.mxu0
      %6867 = vmatprep.mubr.f32.mxu0 0.0
      %6868 = vmatmul.mubr.f32.gmra.mxu0 %v4469
      %v6869 = vpop.f32.mrf.mxu0
      %v6870 = vadd.f32 0.0, %v6869
      %v6871 = vpop.f32.mrf.mxu0
      %6872 = vmatprep.mubr.f32.mxu0 0.0
      %6873 = vmatmul.mubr.f32.gmra.mxu0 %v4471
      %v6874 = vpop.f32.mrf.mxu0
      %v6875 = vadd.f32 0.0, %v6874
      %v6876 = vpop.f32.mrf.mxu0
      %6877 = vmatprep.mubr.f32.mxu0 0.0
      %6878 = vmatmul.mubr.f32.gmra.mxu0 %v5674
      %v6879 = vpop.f32.mrf.mxu0
      %v6880 = vadd.f32 0.0, %v6879
      %v6881 = vpop.f32.mrf.mxu0
      %6882 = vmatprep.mubr.f32.mxu0 0.0
      %6883 = vmatmul.mubr.f32.gmra.mxu0 %v5676
      %v6884 = vpop.f32.mrf.mxu0
      %v6885 = vadd.f32 0.0, %v6884
      %v6886 = vpop.f32.mrf.mxu0
      %6887 = vmatprep.mubr.f32.mxu0 0.0
      %6888 = vmatmul.mubr.f32.gmra.mxu0 %v6669
      %v6889 = vpop.f32.mrf.mxu0
      %v6890 = vadd.f32 0.0, %v6889
      %v6891 = vpop.f32.mrf.mxu0
      %6892 = vmatprep.mubr.f32.mxu0 0.0
      %6893 = vmatmul.mubr.f32.gmra.mxu0 %v6671
      %v6894 = vpop.f32.mrf.mxu0
      %v6895 = vadd.f32 0.0, %v6894
      %v6896 = vpop.f32.mrf.mxu0
      %6897 = vdwg.mxu0
      %v6898 = vadd.f32 %v6627, %v6740
      %v6899 = vadd.f32 %v6628, %v6745
      %v6900 = vadd.f32 %v6629, %v6750
      %v6901 = vadd.f32 %v6630, %v6755
      %v6902 = vadd.f32 %v6631, %v6760
      %v6903 = vadd.f32 %v6632, %v6765
      %v6904 = vadd.f32 %v6633, %v6770
      %v6905 = vadd.f32 %v6634, %v6775
      %v6906 = vadd.f32 %v6635, %v6780
      %v6907 = vadd.f32 %v6636, %v6785
      %v6908 = vadd.f32 %v6637, %v6790
      %v6909 = vadd.f32 %v6638, %v6795
      %v6910 = vadd.f32 %v6639, %v6800
      %v6911 = vadd.f32 %v6640, %v6805
      %v6912 = vadd.f32 %v6641, %v6810
      %v6913 = vadd.f32 %v6642, %v6815
      %v6914 = vadd.f32 %v6643, %v6820
      %v6915 = vadd.f32 %v6644, %v6825
      %v6916 = vadd.f32 %v6645, %v6830
      %v6917 = vadd.f32 %v6646, %v6835
      %v6918 = vadd.f32 %v6647, %v6840
      %v6919 = vadd.f32 %v6648, %v6845
      %v6920 = vadd.f32 %v6649, %v6850
      %v6921 = vadd.f32 %v6650, %v6855
      %v6922 = vadd.f32 %v6651, %v6860
      %v6923 = vadd.f32 %v6652, %v6865
      %v6924 = vadd.f32 %v6653, %v6870
      %v6925 = vadd.f32 %v6654, %v6875
      %v6926 = vadd.f32 %v6655, %v6880
      %v6927 = vadd.f32 %v6656, %v6885
      %v6928 = vadd.f32 %v6657, %v6890
      %v6929 = vadd.f32 %v6658, %v6895
      %6930 = vst.msk [vmem:[#allocation4] sm:$0xff] %vm363, %v6898
      %6931 = vst.msk [vmem:[#allocation4 + $0x8] sm:$0xff] %vm363, %v6899
      %6932 = vst.msk [vmem:[#allocation4 + $0x10] sm:$0xff] %vm363, %v6900
      %6933 = vst.msk [vmem:[#allocation4 + $0x18] sm:$0xff] %vm363, %v6901
      %6934 = vst.msk [vmem:[#allocation4 + $0x20] sm:$0xff] %vm363, %v6902
      %6935 = vst.msk [vmem:[#allocation4 + $0x28] sm:$0xff] %vm363, %v6903
      %6936 = vst.msk [vmem:[#allocation4 + $0x30] sm:$0xff] %vm363, %v6904
      %6937 = vst.msk [vmem:[#allocation4 + $0x38] sm:$0xff] %vm363, %v6905
      %6938 = vst.msk [vmem:[#allocation4 + $0x40] sm:$0xff] %vm363, %v6906
      %6939 = vst.msk [vmem:[#allocation4 + $0x48] sm:$0xff] %vm363, %v6907
      %6940 = vst.msk [vmem:[#allocation4 + $0x50] sm:$0xff] %vm363, %v6908
      %6941 = vst.msk [vmem:[#allocation4 + $0x58] sm:$0xff] %vm363, %v6909
      %6942 = vst.msk [vmem:[#allocation4 + $0x60] sm:$0xff] %vm363, %v6910
      %6943 = vst.msk [vmem:[#allocation4 + $0x68] sm:$0xff] %vm363, %v6911
      %6944 = vst.msk [vmem:[#allocation4 + $0x70] sm:$0xff] %vm363, %v6912
      %6945 = vst.msk [vmem:[#allocation4 + $0x78] sm:$0xff] %vm363, %v6913
      %6946 = vst.msk [vmem:[#allocation4 + $0x80] sm:$0xff] %vm363, %v6914
      %6947 = vst.msk [vmem:[#allocation4 + $0x88] sm:$0xff] %vm363, %v6915
      %6948 = vst.msk [vmem:[#allocation4 + $0x90] sm:$0xff] %vm363, %v6916
      %6949 = vst.msk [vmem:[#allocation4 + $0x98] sm:$0xff] %vm363, %v6917
      %6950 = vst.msk [vmem:[#allocation4 + $0xa0] sm:$0xff] %vm363, %v6918
      %6951 = vst.msk [vmem:[#allocation4 + $0xa8] sm:$0xff] %vm363, %v6919
      %6952 = vst.msk [vmem:[#allocation4 + $0xb0] sm:$0xff] %vm363, %v6920
      %6953 = vst.msk [vmem:[#allocation4 + $0xb8] sm:$0xff] %vm363, %v6921
      %6954 = vst.msk [vmem:[#allocation4 + $0xc0] sm:$0xff] %vm363, %v6922
      %6955 = vst.msk [vmem:[#allocation4 + $0xc8] sm:$0xff] %vm363, %v6923
      %6956 = vst.msk [vmem:[#allocation4 + $0xd0] sm:$0xff] %vm363, %v6924
      %6957 = vst.msk [vmem:[#allocation4 + $0xd8] sm:$0xff] %vm363, %v6925
      %6958 = vst.msk [vmem:[#allocation4 + $0xe0] sm:$0xff] %vm363, %v6926
      %6959 = vst.msk [vmem:[#allocation4 + $0xe8] sm:$0xff] %vm363, %v6927
      %6960 = vst.msk [vmem:[#allocation4 + $0xf0] sm:$0xff] %vm363, %v6928
      %6961 = vst.msk [vmem:[#allocation4 + $0xf8] sm:$0xff] %vm363, %v6929
      %v6962 = vld [vmem:[#allocation4] sm:$0xff]
      %v6963 = vld [vmem:[#allocation4 + $0x8] sm:$0xff]
      %v6964 = vld [vmem:[#allocation4 + $0x10] sm:$0xff]
      %v6965 = vld [vmem:[#allocation4 + $0x18] sm:$0xff]
      %v6966 = vld [vmem:[#allocation4 + $0x20] sm:$0xff]
      %v6967 = vld [vmem:[#allocation4 + $0x28] sm:$0xff]
      %v6968 = vld [vmem:[#allocation4 + $0x30] sm:$0xff]
      %v6969 = vld [vmem:[#allocation4 + $0x38] sm:$0xff]
      %v6970 = vld [vmem:[#allocation4 + $0x40] sm:$0xff]
      %v6971 = vld [vmem:[#allocation4 + $0x48] sm:$0xff]
      %v6972 = vld [vmem:[#allocation4 + $0x50] sm:$0xff]
      %v6973 = vld [vmem:[#allocation4 + $0x58] sm:$0xff]
      %v6974 = vld [vmem:[#allocation4 + $0x60] sm:$0xff]
      %v6975 = vld [vmem:[#allocation4 + $0x68] sm:$0xff]
      %v6976 = vld [vmem:[#allocation4 + $0x70] sm:$0xff]
      %v6977 = vld [vmem:[#allocation4 + $0x78] sm:$0xff]
      %v6978 = vld [vmem:[#allocation4 + $0x80] sm:$0xff]
      %v6979 = vld [vmem:[#allocation4 + $0x88] sm:$0xff]
      %v6980 = vld [vmem:[#allocation4 + $0x90] sm:$0xff]
      %v6981 = vld [vmem:[#allocation4 + $0x98] sm:$0xff]
      %v6982 = vld [vmem:[#allocation4 + $0xa0] sm:$0xff]
      %v6983 = vld [vmem:[#allocation4 + $0xa8] sm:$0xff]
      %v6984 = vld [vmem:[#allocation4 + $0xb0] sm:$0xff]
      %v6985 = vld [vmem:[#allocation4 + $0xb8] sm:$0xff]
      %v6986 = vld [vmem:[#allocation4 + $0xc0] sm:$0xff]
      %v6987 = vld [vmem:[#allocation4 + $0xc8] sm:$0xff]
      %v6988 = vld [vmem:[#allocation4 + $0xd0] sm:$0xff]
      %v6989 = vld [vmem:[#allocation4 + $0xd8] sm:$0xff]
      %v6990 = vld [vmem:[#allocation4 + $0xe0] sm:$0xff]
      %v6991 = vld [vmem:[#allocation4 + $0xe8] sm:$0xff]
      %v6992 = vld [vmem:[#allocation4 + $0xf0] sm:$0xff]
      %v6993 = vld [vmem:[#allocation4 + $0xf8] sm:$0xff]
      %s6994 = scalar_lea.vmem %s3, 56
      %v6995 = vld [vmem:[%s6994] sm:$0xff]
      %v6996 = vsel %vm363, %v4245, 0
      %v6998 = vsel %vm363, %v4246, 0
      %7000 = vmatprep.subr.mxu0 0.0
      %7001 = vmatpush1.msra.mxu0 0.0
      %7002 = vmatprep.subr.mxu0 0.0
      %7003 = vmatpush1.msra.mxu0 0.0
      %7004 = vmatprep.subr.mxu0 0.0
      %7005 = vmatpush1.msra.mxu0 0.0
      %7006 = vmatprep.subr.mxu0 0.0
      %7007 = vmatpush1.msra.mxu0 0.0
      %7008 = vmatprep.subr.mxu0 0.0
      %7009 = vmatpush1.msra.mxu0 0.0
      %7010 = vmatprep.subr.mxu0 0.0
      %7011 = vmatpush1.msra.mxu0 0.0
      %7012 = vmatprep.subr.mxu0 0.0
      %7013 = vmatpush1.msra.mxu0 0.0
      %7014 = vmatprep.subr.mxu0 0.0
      %7015 = vmatpush1.msra.mxu0 0.0
      %7016 = vmatprep.subr.mxu0 0.0
      %7017 = vmatpush1.msra.mxu0 0.0
      %7018 = vmatprep.subr.mxu0 0.0
      %7019 = vmatpush1.msra.mxu0 0.0
      %7020 = vmatprep.subr.mxu0 0.0
      %7021 = vmatpush1.msra.mxu0 0.0
      %7022 = vmatprep.subr.mxu0 0.0
      %7023 = vmatpush1.msra.mxu0 0.0
      %7024 = vmatprep.subr.mxu0 0.0
      %7025 = vmatpush1.msra.mxu0 0.0
      %7026 = vmatprep.subr.mxu0 0.0
      %7027 = vmatpush1.msra.mxu0 0.0
      %7028 = vmatprep.subr.mxu0 0.0
      %7029 = vmatpush1.msra.mxu0 0.0
      %7030 = vmatprep.subr.mxu0 0.0
      %7031 = vmatpush1.msra.mxu0 %v6995
      %7032 = vmatprep.subr.mxu0 0.0
      %7033 = vmatpush2.msra.mxu0 0.0
      %7034 = vmatprep.subr.mxu0 0.0
      %7035 = vmatpush2.msra.mxu0 0.0
      %7036 = vmatprep.subr.mxu0 0.0
      %7037 = vmatpush2.msra.mxu0 0.0
      %7038 = vmatprep.subr.mxu0 0.0
      %7039 = vmatpush2.msra.mxu0 0.0
      %7040 = vmatprep.subr.mxu0 0.0
      %7041 = vmatpush2.msra.mxu0 0.0
      %7042 = vmatprep.subr.mxu0 0.0
      %7043 = vmatpush2.msra.mxu0 0.0
      %7044 = vmatprep.subr.mxu0 0.0
      %7045 = vmatpush2.msra.mxu0 0.0
      %7046 = vmatprep.subr.mxu0 0.0
      %7047 = vmatpush2.msra.mxu0 0.0
      %7048 = vmatprep.subr.mxu0 0.0
      %7049 = vmatpush2.msra.mxu0 0.0
      %7050 = vmatprep.subr.mxu0 0.0
      %7051 = vmatpush2.msra.mxu0 0.0
      %7052 = vmatprep.subr.mxu0 0.0
      %7053 = vmatpush2.msra.mxu0 0.0
      %7054 = vmatprep.subr.mxu0 0.0
      %7055 = vmatpush2.msra.mxu0 0.0
      %7056 = vmatprep.subr.mxu0 0.0
      %7057 = vmatpush2.msra.mxu0 0.0
      %7058 = vmatprep.subr.mxu0 0.0
      %7059 = vmatpush2.msra.mxu0 0.0
      %7060 = vmatprep.subr.mxu0 0.0
      %7061 = vmatpush2.msra.mxu0 0.0
      %7062 = vmatprep.subr.mxu0 0.0
      %7063 = vmatpush2.msra.mxu0 0.0
      %7064 = vmatprep.mubr.f32.mxu0 0.0
      %7065 = vmatmul.mubr.f32.gmra.mxu0 %v4804
      %v7066 = vpop.f32.mrf.mxu0
      %v7067 = vadd.f32 0.0, %v7066
      %v7068 = vpop.f32.mrf.mxu0
      %7069 = vmatprep.mubr.f32.mxu0 0.0
      %7070 = vmatmul.mubr.f32.gmra.mxu0 %v4806
      %v7071 = vpop.f32.mrf.mxu0
      %v7072 = vadd.f32 0.0, %v7071
      %v7073 = vpop.f32.mrf.mxu0
      %7074 = vmatprep.mubr.f32.mxu0 0.0
      %7075 = vmatmul.mubr.f32.gmra.mxu0 %v4808
      %v7076 = vpop.f32.mrf.mxu0
      %v7077 = vadd.f32 0.0, %v7076
      %v7078 = vpop.f32.mrf.mxu0
      %7079 = vmatprep.mubr.f32.mxu0 0.0
      %7080 = vmatmul.mubr.f32.gmra.mxu0 %v4810
      %v7081 = vpop.f32.mrf.mxu0
      %v7082 = vadd.f32 0.0, %v7081
      %v7083 = vpop.f32.mrf.mxu0
      %7084 = vmatprep.mubr.f32.mxu0 0.0
      %7085 = vmatmul.mubr.f32.gmra.mxu0 %v4812
      %v7086 = vpop.f32.mrf.mxu0
      %v7087 = vadd.f32 0.0, %v7086
      %v7088 = vpop.f32.mrf.mxu0
      %7089 = vmatprep.mubr.f32.mxu0 0.0
      %7090 = vmatmul.mubr.f32.gmra.mxu0 %v4814
      %v7091 = vpop.f32.mrf.mxu0
      %v7092 = vadd.f32 0.0, %v7091
      %v7093 = vpop.f32.mrf.mxu0
      %7094 = vmatprep.mubr.f32.mxu0 0.0
      %7095 = vmatmul.mubr.f32.gmra.mxu0 %v4816
      %v7096 = vpop.f32.mrf.mxu0
      %v7097 = vadd.f32 0.0, %v7096
      %v7098 = vpop.f32.mrf.mxu0
      %7099 = vmatprep.mubr.f32.mxu0 0.0
      %7100 = vmatmul.mubr.f32.gmra.mxu0 %v4818
      %v7101 = vpop.f32.mrf.mxu0
      %v7102 = vadd.f32 0.0, %v7101
      %v7103 = vpop.f32.mrf.mxu0
      %7104 = vmatprep.mubr.f32.mxu0 0.0
      %7105 = vmatmul.mubr.f32.gmra.mxu0 %v4820
      %v7106 = vpop.f32.mrf.mxu0
      %v7107 = vadd.f32 0.0, %v7106
      %v7108 = vpop.f32.mrf.mxu0
      %7109 = vmatprep.mubr.f32.mxu0 0.0
      %7110 = vmatmul.mubr.f32.gmra.mxu0 %v4822
      %v7111 = vpop.f32.mrf.mxu0
      %v7112 = vadd.f32 0.0, %v7111
      %v7113 = vpop.f32.mrf.mxu0
      %7114 = vmatprep.mubr.f32.mxu0 0.0
      %7115 = vmatmul.mubr.f32.gmra.mxu0 %v4824
      %v7116 = vpop.f32.mrf.mxu0
      %v7117 = vadd.f32 0.0, %v7116
      %v7118 = vpop.f32.mrf.mxu0
      %7119 = vmatprep.mubr.f32.mxu0 0.0
      %7120 = vmatmul.mubr.f32.gmra.mxu0 %v4826
      %v7121 = vpop.f32.mrf.mxu0
      %v7122 = vadd.f32 0.0, %v7121
      %v7123 = vpop.f32.mrf.mxu0
      %7124 = vmatprep.mubr.f32.mxu0 0.0
      %7125 = vmatmul.mubr.f32.gmra.mxu0 %v4828
      %v7126 = vpop.f32.mrf.mxu0
      %v7127 = vadd.f32 0.0, %v7126
      %v7128 = vpop.f32.mrf.mxu0
      %7129 = vmatprep.mubr.f32.mxu0 0.0
      %7130 = vmatmul.mubr.f32.gmra.mxu0 %v4830
      %v7131 = vpop.f32.mrf.mxu0
      %v7132 = vadd.f32 0.0, %v7131
      %v7133 = vpop.f32.mrf.mxu0
      %7134 = vmatprep.mubr.f32.mxu0 0.0
      %7135 = vmatmul.mubr.f32.gmra.mxu0 %v4832
      %v7136 = vpop.f32.mrf.mxu0
      %v7137 = vadd.f32 0.0, %v7136
      %v7138 = vpop.f32.mrf.mxu0
      %7139 = vmatprep.mubr.f32.mxu0 0.0
      %7140 = vmatmul.mubr.f32.gmra.mxu0 %v4834
      %v7141 = vpop.f32.mrf.mxu0
      %v7142 = vadd.f32 0.0, %v7141
      %v7143 = vpop.f32.mrf.mxu0
      %7144 = vmatprep.mubr.f32.mxu0 0.0
      %7145 = vmatmul.mubr.f32.gmra.mxu0 %v4836
      %v7146 = vpop.f32.mrf.mxu0
      %v7147 = vadd.f32 0.0, %v7146
      %v7148 = vpop.f32.mrf.mxu0
      %7149 = vmatprep.mubr.f32.mxu0 0.0
      %7150 = vmatmul.mubr.f32.gmra.mxu0 %v4838
      %v7151 = vpop.f32.mrf.mxu0
      %v7152 = vadd.f32 0.0, %v7151
      %v7153 = vpop.f32.mrf.mxu0
      %7154 = vmatprep.mubr.f32.mxu0 0.0
      %7155 = vmatmul.mubr.f32.gmra.mxu0 %v4840
      %v7156 = vpop.f32.mrf.mxu0
      %v7157 = vadd.f32 0.0, %v7156
      %v7158 = vpop.f32.mrf.mxu0
      %7159 = vmatprep.mubr.f32.mxu0 0.0
      %7160 = vmatmul.mubr.f32.gmra.mxu0 %v4842
      %v7161 = vpop.f32.mrf.mxu0
      %v7162 = vadd.f32 0.0, %v7161
      %v7163 = vpop.f32.mrf.mxu0
      %7164 = vmatprep.mubr.f32.mxu0 0.0
      %7165 = vmatmul.mubr.f32.gmra.mxu0 %v4844
      %v7166 = vpop.f32.mrf.mxu0
      %v7167 = vadd.f32 0.0, %v7166
      %v7168 = vpop.f32.mrf.mxu0
      %7169 = vmatprep.mubr.f32.mxu0 0.0
      %7170 = vmatmul.mubr.f32.gmra.mxu0 %v4846
      %v7171 = vpop.f32.mrf.mxu0
      %v7172 = vadd.f32 0.0, %v7171
      %v7173 = vpop.f32.mrf.mxu0
      %7174 = vmatprep.mubr.f32.mxu0 0.0
      %7175 = vmatmul.mubr.f32.gmra.mxu0 %v4848
      %v7176 = vpop.f32.mrf.mxu0
      %v7177 = vadd.f32 0.0, %v7176
      %v7178 = vpop.f32.mrf.mxu0
      %7179 = vmatprep.mubr.f32.mxu0 0.0
      %7180 = vmatmul.mubr.f32.gmra.mxu0 %v4850
      %v7181 = vpop.f32.mrf.mxu0
      %v7182 = vadd.f32 0.0, %v7181
      %v7183 = vpop.f32.mrf.mxu0
      %7184 = vmatprep.mubr.f32.mxu0 0.0
      %7185 = vmatmul.mubr.f32.gmra.mxu0 %v4852
      %v7186 = vpop.f32.mrf.mxu0
      %v7187 = vadd.f32 0.0, %v7186
      %v7188 = vpop.f32.mrf.mxu0
      %7189 = vmatprep.mubr.f32.mxu0 0.0
      %7190 = vmatmul.mubr.f32.gmra.mxu0 %v4854
      %v7191 = vpop.f32.mrf.mxu0
      %v7192 = vadd.f32 0.0, %v7191
      %v7193 = vpop.f32.mrf.mxu0
      %7194 = vmatprep.mubr.f32.mxu0 0.0
      %7195 = vmatmul.mubr.f32.gmra.mxu0 %v4856
      %v7196 = vpop.f32.mrf.mxu0
      %v7197 = vadd.f32 0.0, %v7196
      %v7198 = vpop.f32.mrf.mxu0
      %7199 = vmatprep.mubr.f32.mxu0 0.0
      %7200 = vmatmul.mubr.f32.gmra.mxu0 %v4858
      %v7201 = vpop.f32.mrf.mxu0
      %v7202 = vadd.f32 0.0, %v7201
      %v7203 = vpop.f32.mrf.mxu0
      %7204 = vmatprep.mubr.f32.mxu0 0.0
      %7205 = vmatmul.mubr.f32.gmra.mxu0 %v6001
      %v7206 = vpop.f32.mrf.mxu0
      %v7207 = vadd.f32 0.0, %v7206
      %v7208 = vpop.f32.mrf.mxu0
      %7209 = vmatprep.mubr.f32.mxu0 0.0
      %7210 = vmatmul.mubr.f32.gmra.mxu0 %v6003
      %v7211 = vpop.f32.mrf.mxu0
      %v7212 = vadd.f32 0.0, %v7211
      %v7213 = vpop.f32.mrf.mxu0
      %7214 = vmatprep.mubr.f32.mxu0 0.0
      %7215 = vmatmul.mubr.f32.gmra.mxu0 %v6996
      %v7216 = vpop.f32.mrf.mxu0
      %v7217 = vadd.f32 0.0, %v7216
      %v7218 = vpop.f32.mrf.mxu0
      %7219 = vmatprep.mubr.f32.mxu0 0.0
      %7220 = vmatmul.mubr.f32.gmra.mxu0 %v6998
      %v7221 = vpop.f32.mrf.mxu0
      %v7222 = vadd.f32 0.0, %v7221
      %v7223 = vpop.f32.mrf.mxu0
      %7224 = vdwg.mxu0
      %v7225 = vadd.f32 %v6962, %v7067
      %v7226 = vadd.f32 %v6963, %v7072
      %v7227 = vadd.f32 %v6964, %v7077
      %v7228 = vadd.f32 %v6965, %v7082
      %v7229 = vadd.f32 %v6966, %v7087
      %v7230 = vadd.f32 %v6967, %v7092
      %v7231 = vadd.f32 %v6968, %v7097
      %v7232 = vadd.f32 %v6969, %v7102
      %v7233 = vadd.f32 %v6970, %v7107
      %v7234 = vadd.f32 %v6971, %v7112
      %v7235 = vadd.f32 %v6972, %v7117
      %v7236 = vadd.f32 %v6973, %v7122
      %v7237 = vadd.f32 %v6974, %v7127
      %v7238 = vadd.f32 %v6975, %v7132
      %v7239 = vadd.f32 %v6976, %v7137
      %v7240 = vadd.f32 %v6977, %v7142
      %v7241 = vadd.f32 %v6978, %v7147
      %v7242 = vadd.f32 %v6979, %v7152
      %v7243 = vadd.f32 %v6980, %v7157
      %v7244 = vadd.f32 %v6981, %v7162
      %v7245 = vadd.f32 %v6982, %v7167
      %v7246 = vadd.f32 %v6983, %v7172
      %v7247 = vadd.f32 %v6984, %v7177
      %v7248 = vadd.f32 %v6985, %v7182
      %v7249 = vadd.f32 %v6986, %v7187
      %v7250 = vadd.f32 %v6987, %v7192
      %v7251 = vadd.f32 %v6988, %v7197
      %v7252 = vadd.f32 %v6989, %v7202
      %v7253 = vadd.f32 %v6990, %v7207
      %v7254 = vadd.f32 %v6991, %v7212
      %v7255 = vadd.f32 %v6992, %v7217
      %v7256 = vadd.f32 %v6993, %v7222
      %7257 = vst.msk [vmem:[#allocation4] sm:$0xff] %vm363, %v7225
      %7258 = vst.msk [vmem:[#allocation4 + $0x8] sm:$0xff] %vm363, %v7226
      %7259 = vst.msk [vmem:[#allocation4 + $0x10] sm:$0xff] %vm363, %v7227
      %7260 = vst.msk [vmem:[#allocation4 + $0x18] sm:$0xff] %vm363, %v7228
      %7261 = vst.msk [vmem:[#allocation4 + $0x20] sm:$0xff] %vm363, %v7229
      %7262 = vst.msk [vmem:[#allocation4 + $0x28] sm:$0xff] %vm363, %v7230
      %7263 = vst.msk [vmem:[#allocation4 + $0x30] sm:$0xff] %vm363, %v7231
      %7264 = vst.msk [vmem:[#allocation4 + $0x38] sm:$0xff] %vm363, %v7232
      %7265 = vst.msk [vmem:[#allocation4 + $0x40] sm:$0xff] %vm363, %v7233
      %7266 = vst.msk [vmem:[#allocation4 + $0x48] sm:$0xff] %vm363, %v7234
      %7267 = vst.msk [vmem:[#allocation4 + $0x50] sm:$0xff] %vm363, %v7235
      %7268 = vst.msk [vmem:[#allocation4 + $0x58] sm:$0xff] %vm363, %v7236
      %7269 = vst.msk [vmem:[#allocation4 + $0x60] sm:$0xff] %vm363, %v7237
      %7270 = vst.msk [vmem:[#allocation4 + $0x68] sm:$0xff] %vm363, %v7238
      %7271 = vst.msk [vmem:[#allocation4 + $0x70] sm:$0xff] %vm363, %v7239
      %7272 = vst.msk [vmem:[#allocation4 + $0x78] sm:$0xff] %vm363, %v7240
      %7273 = vst.msk [vmem:[#allocation4 + $0x80] sm:$0xff] %vm363, %v7241
      %7274 = vst.msk [vmem:[#allocation4 + $0x88] sm:$0xff] %vm363, %v7242
      %7275 = vst.msk [vmem:[#allocation4 + $0x90] sm:$0xff] %vm363, %v7243
      %7276 = vst.msk [vmem:[#allocation4 + $0x98] sm:$0xff] %vm363, %v7244
      %7277 = vst.msk [vmem:[#allocation4 + $0xa0] sm:$0xff] %vm363, %v7245
      %7278 = vst.msk [vmem:[#allocation4 + $0xa8] sm:$0xff] %vm363, %v7246
      %7279 = vst.msk [vmem:[#allocation4 + $0xb0] sm:$0xff] %vm363, %v7247
      %7280 = vst.msk [vmem:[#allocation4 + $0xb8] sm:$0xff] %vm363, %v7248
      %7281 = vst.msk [vmem:[#allocation4 + $0xc0] sm:$0xff] %vm363, %v7249
      %7282 = vst.msk [vmem:[#allocation4 + $0xc8] sm:$0xff] %vm363, %v7250
      %7283 = vst.msk [vmem:[#allocation4 + $0xd0] sm:$0xff] %vm363, %v7251
      %7284 = vst.msk [vmem:[#allocation4 + $0xd8] sm:$0xff] %vm363, %v7252
      %7285 = vst.msk [vmem:[#allocation4 + $0xe0] sm:$0xff] %vm363, %v7253
      %7286 = vst.msk [vmem:[#allocation4 + $0xe8] sm:$0xff] %vm363, %v7254
      %7287 = vst.msk [vmem:[#allocation4 + $0xf0] sm:$0xff] %vm363, %v7255
      %7288 = vst.msk [vmem:[#allocation4 + $0xf8] sm:$0xff] %vm363, %v7256
      %v7289 = vld [vmem:[#allocation4] sm:$0xff]
      %v7290 = vld [vmem:[#allocation4 + $0x8] sm:$0xff]
      %v7291 = vld [vmem:[#allocation4 + $0x10] sm:$0xff]
      %v7292 = vld [vmem:[#allocation4 + $0x18] sm:$0xff]
      %v7293 = vld [vmem:[#allocation4 + $0x20] sm:$0xff]
      %v7294 = vld [vmem:[#allocation4 + $0x28] sm:$0xff]
      %v7295 = vld [vmem:[#allocation4 + $0x30] sm:$0xff]
      %v7296 = vld [vmem:[#allocation4 + $0x38] sm:$0xff]
      %v7297 = vld [vmem:[#allocation4 + $0x40] sm:$0xff]
      %v7298 = vld [vmem:[#allocation4 + $0x48] sm:$0xff]
      %v7299 = vld [vmem:[#allocation4 + $0x50] sm:$0xff]
      %v7300 = vld [vmem:[#allocation4 + $0x58] sm:$0xff]
      %v7301 = vld [vmem:[#allocation4 + $0x60] sm:$0xff]
      %v7302 = vld [vmem:[#allocation4 + $0x68] sm:$0xff]
      %v7303 = vld [vmem:[#allocation4 + $0x70] sm:$0xff]
      %v7304 = vld [vmem:[#allocation4 + $0x78] sm:$0xff]
      %v7305 = vld [vmem:[#allocation4 + $0x80] sm:$0xff]
      %v7306 = vld [vmem:[#allocation4 + $0x88] sm:$0xff]
      %v7307 = vld [vmem:[#allocation4 + $0x90] sm:$0xff]
      %v7308 = vld [vmem:[#allocation4 + $0x98] sm:$0xff]
      %v7309 = vld [vmem:[#allocation4 + $0xa0] sm:$0xff]
      %v7310 = vld [vmem:[#allocation4 + $0xa8] sm:$0xff]
      %v7311 = vld [vmem:[#allocation4 + $0xb0] sm:$0xff]
      %v7312 = vld [vmem:[#allocation4 + $0xb8] sm:$0xff]
      %v7313 = vld [vmem:[#allocation4 + $0xc0] sm:$0xff]
      %v7314 = vld [vmem:[#allocation4 + $0xc8] sm:$0xff]
      %v7315 = vld [vmem:[#allocation4 + $0xd0] sm:$0xff]
      %v7316 = vld [vmem:[#allocation4 + $0xd8] sm:$0xff]
      %v7317 = vld [vmem:[#allocation4 + $0xe0] sm:$0xff]
      %v7318 = vld [vmem:[#allocation4 + $0xe8] sm:$0xff]
      %v7319 = vld [vmem:[#allocation4 + $0xf0] sm:$0xff]
      %v7320 = vld [vmem:[#allocation4 + $0xf8] sm:$0xff]
      %v7322 = vrot.slane %v4245, 1
      %v7323 = vrot.slane %v4246, 1
      %v7324 = vsel %vm1425, %v7322, %v7323
      %v7325 = vrot.slane %v4247, 1
      %v7326 = vsel %vm1425, %v7323, %v7325
      %s7327 = scalar_lea.vmem %s3, 64
      %v7328 = vld [vmem:[%s7327] sm:$0xff]
      %v7329 = vsel %vm363, %v7324, 0
      %v7331 = vsel %vm363, %v7326, 0
      %7333 = vmatprep.subr.mxu0 0.0
      %7334 = vmatpush1.msra.mxu0 0.0
      %7335 = vmatprep.subr.mxu0 0.0
      %7336 = vmatpush1.msra.mxu0 0.0
      %7337 = vmatprep.subr.mxu0 0.0
      %7338 = vmatpush1.msra.mxu0 0.0
      %7339 = vmatprep.subr.mxu0 0.0
      %7340 = vmatpush1.msra.mxu0 0.0
      %7341 = vmatprep.subr.mxu0 0.0
      %7342 = vmatpush1.msra.mxu0 0.0
      %7343 = vmatprep.subr.mxu0 0.0
      %7344 = vmatpush1.msra.mxu0 0.0
      %7345 = vmatprep.subr.mxu0 0.0
      %7346 = vmatpush1.msra.mxu0 0.0
      %7347 = vmatprep.subr.mxu0 0.0
      %7348 = vmatpush1.msra.mxu0 0.0
      %7349 = vmatprep.subr.mxu0 0.0
      %7350 = vmatpush1.msra.mxu0 0.0
      %7351 = vmatprep.subr.mxu0 0.0
      %7352 = vmatpush1.msra.mxu0 0.0
      %7353 = vmatprep.subr.mxu0 0.0
      %7354 = vmatpush1.msra.mxu0 0.0
      %7355 = vmatprep.subr.mxu0 0.0
      %7356 = vmatpush1.msra.mxu0 0.0
      %7357 = vmatprep.subr.mxu0 0.0
      %7358 = vmatpush1.msra.mxu0 0.0
      %7359 = vmatprep.subr.mxu0 0.0
      %7360 = vmatpush1.msra.mxu0 0.0
      %7361 = vmatprep.subr.mxu0 0.0
      %7362 = vmatpush1.msra.mxu0 0.0
      %7363 = vmatprep.subr.mxu0 0.0
      %7364 = vmatpush1.msra.mxu0 %v7328
      %7365 = vmatprep.subr.mxu0 0.0
      %7366 = vmatpush2.msra.mxu0 0.0
      %7367 = vmatprep.subr.mxu0 0.0
      %7368 = vmatpush2.msra.mxu0 0.0
      %7369 = vmatprep.subr.mxu0 0.0
      %7370 = vmatpush2.msra.mxu0 0.0
      %7371 = vmatprep.subr.mxu0 0.0
      %7372 = vmatpush2.msra.mxu0 0.0
      %7373 = vmatprep.subr.mxu0 0.0
      %7374 = vmatpush2.msra.mxu0 0.0
      %7375 = vmatprep.subr.mxu0 0.0
      %7376 = vmatpush2.msra.mxu0 0.0
      %7377 = vmatprep.subr.mxu0 0.0
      %7378 = vmatpush2.msra.mxu0 0.0
      %7379 = vmatprep.subr.mxu0 0.0
      %7380 = vmatpush2.msra.mxu0 0.0
      %7381 = vmatprep.subr.mxu0 0.0
      %7382 = vmatpush2.msra.mxu0 0.0
      %7383 = vmatprep.subr.mxu0 0.0
      %7384 = vmatpush2.msra.mxu0 0.0
      %7385 = vmatprep.subr.mxu0 0.0
      %7386 = vmatpush2.msra.mxu0 0.0
      %7387 = vmatprep.subr.mxu0 0.0
      %7388 = vmatpush2.msra.mxu0 0.0
      %7389 = vmatprep.subr.mxu0 0.0
      %7390 = vmatpush2.msra.mxu0 0.0
      %7391 = vmatprep.subr.mxu0 0.0
      %7392 = vmatpush2.msra.mxu0 0.0
      %7393 = vmatprep.subr.mxu0 0.0
      %7394 = vmatpush2.msra.mxu0 0.0
      %7395 = vmatprep.subr.mxu0 0.0
      %7396 = vmatpush2.msra.mxu0 0.0
      %7397 = vmatprep.mubr.f32.mxu0 0.0
      %7398 = vmatmul.mubr.f32.gmra.mxu0 %v5287
      %v7399 = vpop.f32.mrf.mxu0
      %v7400 = vadd.f32 0.0, %v7399
      %v7401 = vpop.f32.mrf.mxu0
      %7402 = vmatprep.mubr.f32.mxu0 0.0
      %7403 = vmatmul.mubr.f32.gmra.mxu0 %v5289
      %v7404 = vpop.f32.mrf.mxu0
      %v7405 = vadd.f32 0.0, %v7404
      %v7406 = vpop.f32.mrf.mxu0
      %7407 = vmatprep.mubr.f32.mxu0 0.0
      %7408 = vmatmul.mubr.f32.gmra.mxu0 %v5291
      %v7409 = vpop.f32.mrf.mxu0
      %v7410 = vadd.f32 0.0, %v7409
      %v7411 = vpop.f32.mrf.mxu0
      %7412 = vmatprep.mubr.f32.mxu0 0.0
      %7413 = vmatmul.mubr.f32.gmra.mxu0 %v5293
      %v7414 = vpop.f32.mrf.mxu0
      %v7415 = vadd.f32 0.0, %v7414
      %v7416 = vpop.f32.mrf.mxu0
      %7417 = vmatprep.mubr.f32.mxu0 0.0
      %7418 = vmatmul.mubr.f32.gmra.mxu0 %v5295
      %v7419 = vpop.f32.mrf.mxu0
      %v7420 = vadd.f32 0.0, %v7419
      %v7421 = vpop.f32.mrf.mxu0
      %7422 = vmatprep.mubr.f32.mxu0 0.0
      %7423 = vmatmul.mubr.f32.gmra.mxu0 %v5297
      %v7424 = vpop.f32.mrf.mxu0
      %v7425 = vadd.f32 0.0, %v7424
      %v7426 = vpop.f32.mrf.mxu0
      %7427 = vmatprep.mubr.f32.mxu0 0.0
      %7428 = vmatmul.mubr.f32.gmra.mxu0 %v5299
      %v7429 = vpop.f32.mrf.mxu0
      %v7430 = vadd.f32 0.0, %v7429
      %v7431 = vpop.f32.mrf.mxu0
      %7432 = vmatprep.mubr.f32.mxu0 0.0
      %7433 = vmatmul.mubr.f32.gmra.mxu0 %v5301
      %v7434 = vpop.f32.mrf.mxu0
      %v7435 = vadd.f32 0.0, %v7434
      %v7436 = vpop.f32.mrf.mxu0
      %7437 = vmatprep.mubr.f32.mxu0 0.0
      %7438 = vmatmul.mubr.f32.gmra.mxu0 %v5303
      %v7439 = vpop.f32.mrf.mxu0
      %v7440 = vadd.f32 0.0, %v7439
      %v7441 = vpop.f32.mrf.mxu0
      %7442 = vmatprep.mubr.f32.mxu0 0.0
      %7443 = vmatmul.mubr.f32.gmra.mxu0 %v5305
      %v7444 = vpop.f32.mrf.mxu0
      %v7445 = vadd.f32 0.0, %v7444
      %v7446 = vpop.f32.mrf.mxu0
      %7447 = vmatprep.mubr.f32.mxu0 0.0
      %7448 = vmatmul.mubr.f32.gmra.mxu0 %v5307
      %v7449 = vpop.f32.mrf.mxu0
      %v7450 = vadd.f32 0.0, %v7449
      %v7451 = vpop.f32.mrf.mxu0
      %7452 = vmatprep.mubr.f32.mxu0 0.0
      %7453 = vmatmul.mubr.f32.gmra.mxu0 %v5309
      %v7454 = vpop.f32.mrf.mxu0
      %v7455 = vadd.f32 0.0, %v7454
      %v7456 = vpop.f32.mrf.mxu0
      %7457 = vmatprep.mubr.f32.mxu0 0.0
      %7458 = vmatmul.mubr.f32.gmra.mxu0 %v5311
      %v7459 = vpop.f32.mrf.mxu0
      %v7460 = vadd.f32 0.0, %v7459
      %v7461 = vpop.f32.mrf.mxu0
      %7462 = vmatprep.mubr.f32.mxu0 0.0
      %7463 = vmatmul.mubr.f32.gmra.mxu0 %v5313
      %v7464 = vpop.f32.mrf.mxu0
      %v7465 = vadd.f32 0.0, %v7464
      %v7466 = vpop.f32.mrf.mxu0
      %7467 = vmatprep.mubr.f32.mxu0 0.0
      %7468 = vmatmul.mubr.f32.gmra.mxu0 %v5315
      %v7469 = vpop.f32.mrf.mxu0
      %v7470 = vadd.f32 0.0, %v7469
      %v7471 = vpop.f32.mrf.mxu0
      %7472 = vmatprep.mubr.f32.mxu0 0.0
      %7473 = vmatmul.mubr.f32.gmra.mxu0 %v5317
      %v7474 = vpop.f32.mrf.mxu0
      %v7475 = vadd.f32 0.0, %v7474
      %v7476 = vpop.f32.mrf.mxu0
      %7477 = vmatprep.mubr.f32.mxu0 0.0
      %7478 = vmatmul.mubr.f32.gmra.mxu0 %v5319
      %v7479 = vpop.f32.mrf.mxu0
      %v7480 = vadd.f32 0.0, %v7479
      %v7481 = vpop.f32.mrf.mxu0
      %7482 = vmatprep.mubr.f32.mxu0 0.0
      %7483 = vmatmul.mubr.f32.gmra.mxu0 %v5321
      %v7484 = vpop.f32.mrf.mxu0
      %v7485 = vadd.f32 0.0, %v7484
      %v7486 = vpop.f32.mrf.mxu0
      %7487 = vmatprep.mubr.f32.mxu0 0.0
      %7488 = vmatmul.mubr.f32.gmra.mxu0 %v5323
      %v7489 = vpop.f32.mrf.mxu0
      %v7490 = vadd.f32 0.0, %v7489
      %v7491 = vpop.f32.mrf.mxu0
      %7492 = vmatprep.mubr.f32.mxu0 0.0
      %7493 = vmatmul.mubr.f32.gmra.mxu0 %v5325
      %v7494 = vpop.f32.mrf.mxu0
      %v7495 = vadd.f32 0.0, %v7494
      %v7496 = vpop.f32.mrf.mxu0
      %7497 = vmatprep.mubr.f32.mxu0 0.0
      %7498 = vmatmul.mubr.f32.gmra.mxu0 %v5327
      %v7499 = vpop.f32.mrf.mxu0
      %v7500 = vadd.f32 0.0, %v7499
      %v7501 = vpop.f32.mrf.mxu0
      %7502 = vmatprep.mubr.f32.mxu0 0.0
      %7503 = vmatmul.mubr.f32.gmra.mxu0 %v5329
      %v7504 = vpop.f32.mrf.mxu0
      %v7505 = vadd.f32 0.0, %v7504
      %v7506 = vpop.f32.mrf.mxu0
      %7507 = vmatprep.mubr.f32.mxu0 0.0
      %7508 = vmatmul.mubr.f32.gmra.mxu0 %v5331
      %v7509 = vpop.f32.mrf.mxu0
      %v7510 = vadd.f32 0.0, %v7509
      %v7511 = vpop.f32.mrf.mxu0
      %7512 = vmatprep.mubr.f32.mxu0 0.0
      %7513 = vmatmul.mubr.f32.gmra.mxu0 %v5333
      %v7514 = vpop.f32.mrf.mxu0
      %v7515 = vadd.f32 0.0, %v7514
      %v7516 = vpop.f32.mrf.mxu0
      %7517 = vmatprep.mubr.f32.mxu0 0.0
      %7518 = vmatmul.mubr.f32.gmra.mxu0 %v5335
      %v7519 = vpop.f32.mrf.mxu0
      %v7520 = vadd.f32 0.0, %v7519
      %v7521 = vpop.f32.mrf.mxu0
      %7522 = vmatprep.mubr.f32.mxu0 0.0
      %7523 = vmatmul.mubr.f32.gmra.mxu0 %v5337
      %v7524 = vpop.f32.mrf.mxu0
      %v7525 = vadd.f32 0.0, %v7524
      %v7526 = vpop.f32.mrf.mxu0
      %7527 = vmatprep.mubr.f32.mxu0 0.0
      %7528 = vmatmul.mubr.f32.gmra.mxu0 %v5339
      %v7529 = vpop.f32.mrf.mxu0
      %v7530 = vadd.f32 0.0, %v7529
      %v7531 = vpop.f32.mrf.mxu0
      %7532 = vmatprep.mubr.f32.mxu0 0.0
      %7533 = vmatmul.mubr.f32.gmra.mxu0 %v5341
      %v7534 = vpop.f32.mrf.mxu0
      %v7535 = vadd.f32 0.0, %v7534
      %v7536 = vpop.f32.mrf.mxu0
      %7537 = vmatprep.mubr.f32.mxu0 0.0
      %7538 = vmatmul.mubr.f32.gmra.mxu0 %v6334
      %v7539 = vpop.f32.mrf.mxu0
      %v7540 = vadd.f32 0.0, %v7539
      %v7541 = vpop.f32.mrf.mxu0
      %7542 = vmatprep.mubr.f32.mxu0 0.0
      %7543 = vmatmul.mubr.f32.gmra.mxu0 %v6336
      %v7544 = vpop.f32.mrf.mxu0
      %v7545 = vadd.f32 0.0, %v7544
      %v7546 = vpop.f32.mrf.mxu0
      %7547 = vmatprep.mubr.f32.mxu0 0.0
      %7548 = vmatmul.mubr.f32.gmra.mxu0 %v7329
      %v7549 = vpop.f32.mrf.mxu0
      %v7550 = vadd.f32 0.0, %v7549
      %v7551 = vpop.f32.mrf.mxu0
      %7552 = vmatprep.mubr.f32.mxu0 0.0
      %7553 = vmatmul.mubr.f32.gmra.mxu0 %v7331
      %v7554 = vpop.f32.mrf.mxu0
      %v7555 = vadd.f32 0.0, %v7554
      %v7556 = vpop.f32.mrf.mxu0
      %7557 = vdwg.mxu0
      %v7558 = vadd.f32 %v7289, %v7400
      %v7559 = vadd.f32 %v7290, %v7405
      %v7560 = vadd.f32 %v7291, %v7410
      %v7561 = vadd.f32 %v7292, %v7415
      %v7562 = vadd.f32 %v7293, %v7420
      %v7563 = vadd.f32 %v7294, %v7425
      %v7564 = vadd.f32 %v7295, %v7430
      %v7565 = vadd.f32 %v7296, %v7435
      %v7566 = vadd.f32 %v7297, %v7440
      %v7567 = vadd.f32 %v7298, %v7445
      %v7568 = vadd.f32 %v7299, %v7450
      %v7569 = vadd.f32 %v7300, %v7455
      %v7570 = vadd.f32 %v7301, %v7460
      %v7571 = vadd.f32 %v7302, %v7465
      %v7572 = vadd.f32 %v7303, %v7470
      %v7573 = vadd.f32 %v7304, %v7475
      %v7574 = vadd.f32 %v7305, %v7480
      %v7575 = vadd.f32 %v7306, %v7485
      %v7576 = vadd.f32 %v7307, %v7490
      %v7577 = vadd.f32 %v7308, %v7495
      %v7578 = vadd.f32 %v7309, %v7500
      %v7579 = vadd.f32 %v7310, %v7505
      %v7580 = vadd.f32 %v7311, %v7510
      %v7581 = vadd.f32 %v7312, %v7515
      %v7582 = vadd.f32 %v7313, %v7520
      %v7583 = vadd.f32 %v7314, %v7525
      %v7584 = vadd.f32 %v7315, %v7530
      %v7585 = vadd.f32 %v7316, %v7535
      %v7586 = vadd.f32 %v7317, %v7540
      %v7587 = vadd.f32 %v7318, %v7545
      %v7588 = vadd.f32 %v7319, %v7550
      %v7589 = vadd.f32 %v7320, %v7555
      %7590 = vst.msk [vmem:[#allocation4] sm:$0xff] %vm363, %v7558
      %7591 = vst.msk [vmem:[#allocation4 + $0x8] sm:$0xff] %vm363, %v7559
      %7592 = vst.msk [vmem:[#allocation4 + $0x10] sm:$0xff] %vm363, %v7560
      %7593 = vst.msk [vmem:[#allocation4 + $0x18] sm:$0xff] %vm363, %v7561
      %7594 = vst.msk [vmem:[#allocation4 + $0x20] sm:$0xff] %vm363, %v7562
      %7595 = vst.msk [vmem:[#allocation4 + $0x28] sm:$0xff] %vm363, %v7563
      %7596 = vst.msk [vmem:[#allocation4 + $0x30] sm:$0xff] %vm363, %v7564
      %7597 = vst.msk [vmem:[#allocation4 + $0x38] sm:$0xff] %vm363, %v7565
      %7598 = vst.msk [vmem:[#allocation4 + $0x40] sm:$0xff] %vm363, %v7566
      %7599 = vst.msk [vmem:[#allocation4 + $0x48] sm:$0xff] %vm363, %v7567
      %7600 = vst.msk [vmem:[#allocation4 + $0x50] sm:$0xff] %vm363, %v7568
      %7601 = vst.msk [vmem:[#allocation4 + $0x58] sm:$0xff] %vm363, %v7569
      %7602 = vst.msk [vmem:[#allocation4 + $0x60] sm:$0xff] %vm363, %v7570
      %7603 = vst.msk [vmem:[#allocation4 + $0x68] sm:$0xff] %vm363, %v7571
      %7604 = vst.msk [vmem:[#allocation4 + $0x70] sm:$0xff] %vm363, %v7572
      %7605 = vst.msk [vmem:[#allocation4 + $0x78] sm:$0xff] %vm363, %v7573
      %7606 = vst.msk [vmem:[#allocation4 + $0x80] sm:$0xff] %vm363, %v7574
      %7607 = vst.msk [vmem:[#allocation4 + $0x88] sm:$0xff] %vm363, %v7575
      %7608 = vst.msk [vmem:[#allocation4 + $0x90] sm:$0xff] %vm363, %v7576
      %7609 = vst.msk [vmem:[#allocation4 + $0x98] sm:$0xff] %vm363, %v7577
      %7610 = vst.msk [vmem:[#allocation4 + $0xa0] sm:$0xff] %vm363, %v7578
      %7611 = vst.msk [vmem:[#allocation4 + $0xa8] sm:$0xff] %vm363, %v7579
      %7612 = vst.msk [vmem:[#allocation4 + $0xb0] sm:$0xff] %vm363, %v7580
      %7613 = vst.msk [vmem:[#allocation4 + $0xb8] sm:$0xff] %vm363, %v7581
      %7614 = vst.msk [vmem:[#allocation4 + $0xc0] sm:$0xff] %vm363, %v7582
      %7615 = vst.msk [vmem:[#allocation4 + $0xc8] sm:$0xff] %vm363, %v7583
      %7616 = vst.msk [vmem:[#allocation4 + $0xd0] sm:$0xff] %vm363, %v7584
      %7617 = vst.msk [vmem:[#allocation4 + $0xd8] sm:$0xff] %vm363, %v7585
      %7618 = vst.msk [vmem:[#allocation4 + $0xe0] sm:$0xff] %vm363, %v7586
      %7619 = vst.msk [vmem:[#allocation4 + $0xe8] sm:$0xff] %vm363, %v7587
      %7620 = vst.msk [vmem:[#allocation4 + $0xf0] sm:$0xff] %vm363, %v7588
      %7621 = vst.msk [vmem:[#allocation4 + $0xf8] sm:$0xff] %vm363, %v7589
      %v7622 = vld [vmem:[#allocation4] sm:$0xff]
      %v7623 = vld [vmem:[#allocation4 + $0x8] sm:$0xff]
      %v7624 = vld [vmem:[#allocation4 + $0x10] sm:$0xff]
      %v7625 = vld [vmem:[#allocation4 + $0x18] sm:$0xff]
      %v7626 = vld [vmem:[#allocation4 + $0x20] sm:$0xff]
      %v7627 = vld [vmem:[#allocation4 + $0x28] sm:$0xff]
      %v7628 = vld [vmem:[#allocation4 + $0x30] sm:$0xff]
      %v7629 = vld [vmem:[#allocation4 + $0x38] sm:$0xff]
      %v7630 = vld [vmem:[#allocation4 + $0x40] sm:$0xff]
      %v7631 = vld [vmem:[#allocation4 + $0x48] sm:$0xff]
      %v7632 = vld [vmem:[#allocation4 + $0x50] sm:$0xff]
      %v7633 = vld [vmem:[#allocation4 + $0x58] sm:$0xff]
      %v7634 = vld [vmem:[#allocation4 + $0x60] sm:$0xff]
      %v7635 = vld [vmem:[#allocation4 + $0x68] sm:$0xff]
      %v7636 = vld [vmem:[#allocation4 + $0x70] sm:$0xff]
      %v7637 = vld [vmem:[#allocation4 + $0x78] sm:$0xff]
      %v7638 = vld [vmem:[#allocation4 + $0x80] sm:$0xff]
      %v7639 = vld [vmem:[#allocation4 + $0x88] sm:$0xff]
      %v7640 = vld [vmem:[#allocation4 + $0x90] sm:$0xff]
      %v7641 = vld [vmem:[#allocation4 + $0x98] sm:$0xff]
      %v7642 = vld [vmem:[#allocation4 + $0xa0] sm:$0xff]
      %v7643 = vld [vmem:[#allocation4 + $0xa8] sm:$0xff]
      %v7644 = vld [vmem:[#allocation4 + $0xb0] sm:$0xff]
      %v7645 = vld [vmem:[#allocation4 + $0xb8] sm:$0xff]
      %v7646 = vld [vmem:[#allocation4 + $0xc0] sm:$0xff]
      %v7647 = vld [vmem:[#allocation4 + $0xc8] sm:$0xff]
      %v7648 = vld [vmem:[#allocation4 + $0xd0] sm:$0xff]
      %v7649 = vld [vmem:[#allocation4 + $0xd8] sm:$0xff]
      %v7650 = vld [vmem:[#allocation4 + $0xe0] sm:$0xff]
      %v7651 = vld [vmem:[#allocation4 + $0xe8] sm:$0xff]
      %v7652 = vld [vmem:[#allocation4 + $0xf0] sm:$0xff]
      %v7653 = vld [vmem:[#allocation4 + $0xf8] sm:$0xff]
      %v7654 = vld [vmem:[%s4] sm:$0x1]
      %v7656 = vlaneseq
      %v7657 = vshrl.u32 %v7656, 7
      %v7658 = vsub.s32 0, %v7657
      %v7659 = vrot.slane %v7654, %v7658
      %v7661 = vadd.f32 %v7622, %v7659
      %v7662 = vadd.f32 %v7623, %v7659
      %v7663 = vadd.f32 %v7624, %v7659
      %v7664 = vadd.f32 %v7625, %v7659
      %v7665 = vadd.f32 %v7626, %v7659
      %v7666 = vadd.f32 %v7627, %v7659
      %v7667 = vadd.f32 %v7628, %v7659
      %v7668 = vadd.f32 %v7629, %v7659
      %v7669 = vadd.f32 %v7630, %v7659
      %v7670 = vadd.f32 %v7631, %v7659
      %v7671 = vadd.f32 %v7632, %v7659
      %v7672 = vadd.f32 %v7633, %v7659
      %v7673 = vadd.f32 %v7634, %v7659
      %v7674 = vadd.f32 %v7635, %v7659
      %v7675 = vadd.f32 %v7636, %v7659
      %v7676 = vadd.f32 %v7637, %v7659
      %v7677 = vadd.f32 %v7638, %v7659
      %v7678 = vadd.f32 %v7639, %v7659
      %v7679 = vadd.f32 %v7640, %v7659
      %v7680 = vadd.f32 %v7641, %v7659
      %v7681 = vadd.f32 %v7642, %v7659
      %v7682 = vadd.f32 %v7643, %v7659
      %v7683 = vadd.f32 %v7644, %v7659
      %v7684 = vadd.f32 %v7645, %v7659
      %v7685 = vadd.f32 %v7646, %v7659
      %v7686 = vadd.f32 %v7647, %v7659
      %v7687 = vadd.f32 %v7648, %v7659
      %v7688 = vadd.f32 %v7649, %v7659
      %v7689 = vadd.f32 %v7650, %v7659
      %v7690 = vadd.f32 %v7651, %v7659
      %v7691 = vadd.f32 %v7652, %v7659
      %v7692 = vadd.f32 %v7653, %v7659
      %vm7693 = vcmp.gt.f32.partialorder %v7661, 0.0
      %vm7694 = vcmp.gt.f32.partialorder %v7662, 0.0
      %vm7695 = vcmp.gt.f32.partialorder %v7663, 0.0
      %vm7696 = vcmp.gt.f32.partialorder %v7664, 0.0
      %vm7697 = vcmp.gt.f32.partialorder %v7665, 0.0
      %vm7698 = vcmp.gt.f32.partialorder %v7666, 0.0
      %vm7699 = vcmp.gt.f32.partialorder %v7667, 0.0
      %vm7700 = vcmp.gt.f32.partialorder %v7668, 0.0
      %vm7701 = vcmp.gt.f32.partialorder %v7669, 0.0
      %vm7702 = vcmp.gt.f32.partialorder %v7670, 0.0
      %vm7703 = vcmp.gt.f32.partialorder %v7671, 0.0
      %vm7704 = vcmp.gt.f32.partialorder %v7672, 0.0
      %vm7705 = vcmp.gt.f32.partialorder %v7673, 0.0
      %vm7706 = vcmp.gt.f32.partialorder %v7674, 0.0
      %vm7707 = vcmp.gt.f32.partialorder %v7675, 0.0
      %vm7708 = vcmp.gt.f32.partialorder %v7676, 0.0
      %vm7709 = vcmp.gt.f32.partialorder %v7677, 0.0
      %vm7710 = vcmp.gt.f32.partialorder %v7678, 0.0
      %vm7711 = vcmp.gt.f32.partialorder %v7679, 0.0
      %vm7712 = vcmp.gt.f32.partialorder %v7680, 0.0
      %vm7713 = vcmp.gt.f32.partialorder %v7681, 0.0
      %vm7714 = vcmp.gt.f32.partialorder %v7682, 0.0
      %vm7715 = vcmp.gt.f32.partialorder %v7683, 0.0
      %vm7716 = vcmp.gt.f32.partialorder %v7684, 0.0
      %vm7717 = vcmp.gt.f32.partialorder %v7685, 0.0
      %vm7718 = vcmp.gt.f32.partialorder %v7686, 0.0
      %vm7719 = vcmp.gt.f32.partialorder %v7687, 0.0
      %vm7720 = vcmp.gt.f32.partialorder %v7688, 0.0
      %vm7721 = vcmp.gt.f32.partialorder %v7689, 0.0
      %vm7722 = vcmp.gt.f32.partialorder %v7690, 0.0
      %vm7723 = vcmp.gt.f32.partialorder %v7691, 0.0
      %vm7724 = vcmp.gt.f32.partialorder %v7692, 0.0
      %v7725 = vmul.f32 %v7661, 0.01
      %v7726 = vmul.f32 %v7662, 0.01
      %v7727 = vmul.f32 %v7663, 0.01
      %v7728 = vmul.f32 %v7664, 0.01
      %v7729 = vmul.f32 %v7665, 0.01
      %v7730 = vmul.f32 %v7666, 0.01
      %v7731 = vmul.f32 %v7667, 0.01
      %v7732 = vmul.f32 %v7668, 0.01
      %v7733 = vmul.f32 %v7669, 0.01
      %v7734 = vmul.f32 %v7670, 0.01
      %v7735 = vmul.f32 %v7671, 0.01
      %v7736 = vmul.f32 %v7672, 0.01
      %v7737 = vmul.f32 %v7673, 0.01
      %v7738 = vmul.f32 %v7674, 0.01
      %v7739 = vmul.f32 %v7675, 0.01
      %v7740 = vmul.f32 %v7676, 0.01
      %v7741 = vmul.f32 %v7677, 0.01
      %v7742 = vmul.f32 %v7678, 0.01
      %v7743 = vmul.f32 %v7679, 0.01
      %v7744 = vmul.f32 %v7680, 0.01
      %v7745 = vmul.f32 %v7681, 0.01
      %v7746 = vmul.f32 %v7682, 0.01
      %v7747 = vmul.f32 %v7683, 0.01
      %v7748 = vmul.f32 %v7684, 0.01
      %v7749 = vmul.f32 %v7685, 0.01
      %v7750 = vmul.f32 %v7686, 0.01
      %v7751 = vmul.f32 %v7687, 0.01
      %v7752 = vmul.f32 %v7688, 0.01
      %v7753 = vmul.f32 %v7689, 0.01
      %v7754 = vmul.f32 %v7690, 0.01
      %v7755 = vmul.f32 %v7691, 0.01
      %v7756 = vmul.f32 %v7692, 0.01
      %v7757 = vsel %vm7693, %v7661, %v7725
      %v7758 = vsel %vm7694, %v7662, %v7726
      %v7759 = vsel %vm7695, %v7663, %v7727
      %v7760 = vsel %vm7696, %v7664, %v7728
      %v7761 = vsel %vm7697, %v7665, %v7729
      %v7762 = vsel %vm7698, %v7666, %v7730
      %v7763 = vsel %vm7699, %v7667, %v7731
      %v7764 = vsel %vm7700, %v7668, %v7732
      %v7765 = vsel %vm7701, %v7669, %v7733
      %v7766 = vsel %vm7702, %v7670, %v7734
      %v7767 = vsel %vm7703, %v7671, %v7735
      %v7768 = vsel %vm7704, %v7672, %v7736
      %v7769 = vsel %vm7705, %v7673, %v7737
      %v7770 = vsel %vm7706, %v7674, %v7738
      %v7771 = vsel %vm7707, %v7675, %v7739
      %v7772 = vsel %vm7708, %v7676, %v7740
      %v7773 = vsel %vm7709, %v7677, %v7741
      %v7774 = vsel %vm7710, %v7678, %v7742
      %v7775 = vsel %vm7711, %v7679, %v7743
      %v7776 = vsel %vm7712, %v7680, %v7744
      %v7777 = vsel %vm7713, %v7681, %v7745
      %v7778 = vsel %vm7714, %v7682, %v7746
      %v7779 = vsel %vm7715, %v7683, %v7747
      %v7780 = vsel %vm7716, %v7684, %v7748
      %v7781 = vsel %vm7717, %v7685, %v7749
      %v7782 = vsel %vm7718, %v7686, %v7750
      %v7783 = vsel %vm7719, %v7687, %v7751
      %v7784 = vsel %vm7720, %v7688, %v7752
      %v7785 = vsel %vm7721, %v7689, %v7753
      %v7786 = vsel %vm7722, %v7690, %v7754
      %v7787 = vsel %vm7723, %v7691, %v7755
      %v7788 = vsel %vm7724, %v7692, %v7756
      %7789 = vst.msk [vmem:[%s224] sm:$0xff] %vm363, %v7757
      %7790 = vst.msk [vmem:[%s224 + $0x8] sm:$0xff] %vm363, %v7758
      %7791 = vst.msk [vmem:[%s224 + $0x10] sm:$0xff] %vm363, %v7759
      %7792 = vst.msk [vmem:[%s224 + $0x18] sm:$0xff] %vm363, %v7760
      %7793 = vst.msk [vmem:[%s224 + $0x20] sm:$0xff] %vm363, %v7761
      %7794 = vst.msk [vmem:[%s224 + $0x28] sm:$0xff] %vm363, %v7762
      %7795 = vst.msk [vmem:[%s224 + $0x30] sm:$0xff] %vm363, %v7763
      %7796 = vst.msk [vmem:[%s224 + $0x38] sm:$0xff] %vm363, %v7764
      %7797 = vst.msk [vmem:[%s224 + $0x40] sm:$0xff] %vm363, %v7765
      %7798 = vst.msk [vmem:[%s224 + $0x48] sm:$0xff] %vm363, %v7766
      %7799 = vst.msk [vmem:[%s224 + $0x50] sm:$0xff] %vm363, %v7767
      %7800 = vst.msk [vmem:[%s224 + $0x58] sm:$0xff] %vm363, %v7768
      %7801 = vst.msk [vmem:[%s224 + $0x60] sm:$0xff] %vm363, %v7769
      %7802 = vst.msk [vmem:[%s224 + $0x68] sm:$0xff] %vm363, %v7770
      %7803 = vst.msk [vmem:[%s224 + $0x70] sm:$0xff] %vm363, %v7771
      %7804 = vst.msk [vmem:[%s224 + $0x78] sm:$0xff] %vm363, %v7772
      %7805 = vst.msk [vmem:[%s224 + $0x80] sm:$0xff] %vm363, %v7773
      %7806 = vst.msk [vmem:[%s224 + $0x88] sm:$0xff] %vm363, %v7774
      %7807 = vst.msk [vmem:[%s224 + $0x90] sm:$0xff] %vm363, %v7775
      %7808 = vst.msk [vmem:[%s224 + $0x98] sm:$0xff] %vm363, %v7776
      %7809 = vst.msk [vmem:[%s224 + $0xa0] sm:$0xff] %vm363, %v7777
      %7810 = vst.msk [vmem:[%s224 + $0xa8] sm:$0xff] %vm363, %v7778
      %7811 = vst.msk [vmem:[%s224 + $0xb0] sm:$0xff] %vm363, %v7779
      %7812 = vst.msk [vmem:[%s224 + $0xb8] sm:$0xff] %vm363, %v7780
      %7813 = vst.msk [vmem:[%s224 + $0xc0] sm:$0xff] %vm363, %v7781
      %7814 = vst.msk [vmem:[%s224 + $0xc8] sm:$0xff] %vm363, %v7782
      %7815 = vst.msk [vmem:[%s224 + $0xd0] sm:$0xff] %vm363, %v7783
      %7816 = vst.msk [vmem:[%s224 + $0xd8] sm:$0xff] %vm363, %v7784
      %7817 = vst.msk [vmem:[%s224 + $0xe0] sm:$0xff] %vm363, %v7785
      %7818 = vst.msk [vmem:[%s224 + $0xe8] sm:$0xff] %vm363, %v7786
      %7819 = vst.msk [vmem:[%s224 + $0xf0] sm:$0xff] %vm363, %v7787
      %7820 = vst.msk [vmem:[%s224 + $0xf8] sm:$0xff] %vm363, %v7788
      %p7821 = scmp.lt.s32.totalorder %s16, 1
      %s7822 = scalar_select %p7821, %s16, 1
      %s7823 = smul.addr %s7822, 32
      %s7824 = smul.addr %s7823, 8
      %s7825 = scalar_lea.vmem %s5, %s7824
      // Predicated region
      $region41: #{a_call__.1} parent=39 // pred_check
        %p7826 = pneg %p144
      $region42: #{a_call__.1} parent=39 // pred_check_branch
        %7828 = sbr.rel (%p7826) target = $region44
      $region43: #{a_call__.1} parent=39 // pred_region
        _
      $region44: #{a_call__.1} parent=39 // pred_fallthru
        _
    $region40: #{a_call__.1} parent=5 // pred_fallthru
      _
    %p7829 = scmp.le.s32.totalorder 2, %s11
    // Predicated region
    $region45: #{a_call__.1} parent=5 // pred_check
      %p7830 = pneg %p7829
    $region46: #{a_call__.1} parent=5 // pred_check_branch
      %7832 = sbr.rel (%p7830) target = $region48
    $region47: #{a_call__.1} parent=5 // pred_region
      %s7833 = ssub.s32 %s11, 2
      // Predicated region
      $region49: #{a_call__.1} parent=47 // pred_check
        %p7834 = pneg %p150
      $region50: #{a_call__.1} parent=47 // pred_check_branch
        %7836 = sbr.rel (%p7834) target = $region52
      $region51: #{a_call__.1} parent=47 // pred_region
        %p7837 = scmp.lt.s32.totalorder %s17, 1
        %s7838 = scalar_select %p7837, %s17, 1
        %s7839 = smul.addr %s7838, 32
        %s7840 = smul.addr %s7839, 8
        %s7841 = scalar_lea.vmem %s5, %s7840
      $region52: #{a_call__.1} parent=47 // pred_fallthru
        _
    $region48: #{a_call__.1} parent=5 // pred_fallthru
      _
  $region6: #{a_call__.1} parent=0 // loop_footer
    %s15 = sadd.s32 1, %s11
  $region7: #{a_call__.1} parent=0 // loop_footer_branch
    %10 = sbr.rel target = $region3
  $region8: #{a_call__.1} parent=0 // loop_exit
    _

</llo_original>
